<compile_context>
chip_gen: v5e
topology: v5e:2x2
jax: 0.10.0
libtpu: 0.0.40
codegen_flags: <defaults>
</compile_context>

<pallas_src>
import math
import functools

import numpy as np
import jax
import jax.numpy as jnp
from jax.experimental import pallas as pl
from jax.experimental.pallas import tpu as pltpu


# -----------------------------------------------------------------------------
# Packed-parameter layout planning (shared by wrapper packing & kernel slicing)
# -----------------------------------------------------------------------------
def _round_up(v, m):
    return ((v + m - 1) // m) * m


def _plan_layout(latent_dim, base, out_ch):
    # matrix-style params (rows, cols) packed side-by-side along the lane axis
    mats = [
        ("conv_in0", latent_dim, latent_dim),        # 1x1 conv: (Cout, Cin)
        ("conv_in1", base, 9 * latent_dim),          # 3x3 conv: (Cout, 9*Cin) tap-major
        ("res1_conv1", base, 9 * base),
        ("res1_conv2", base, 9 * base),
        ("att_wqkvT", 3 * base, base),
        ("att_wo", base, base),
        ("up_conv", base, 9 * base),
        ("res2_conv1", base, 9 * base),
        ("res2_conv2", base, 9 * base),
        ("conv_out", out_ch, 9 * base),
        ("gmat", base, base),                        # GroupNorm group-sum matrix
    ]
    w_off = {}
    col = 0
    max_r = 0
    for name, r, c in mats:
        w_off[name] = (col, r, c)
        col += c
        max_r = max(max_r, r)
    w_shape = (_round_up(max_r, 8), _round_up(col, 128))

    # per-channel vectors, one column each, stored from row 0
    vec_names = [
        "conv_in0_b", "conv_in1_b",
        "res1_gn1_g", "res1_gn1_b", "res1_conv1_b",
        "res1_gn2_g", "res1_gn2_b", "res1_conv2_b",
        "att_gn_g", "att_gn_b", "att_bqkv", "att_bo",
        "up_conv_b",
        "res2_gn1_g", "res2_gn1_b", "res2_conv1_b",
        "res2_gn2_g", "res2_gn2_b", "res2_conv2_b",
        "gn_out_g", "gn_out_b", "conv_out_b",
    ]
    v_off = {n: i for i, n in enumerate(vec_names)}
    v_shape = (_round_up(3 * base, 8), _round_up(len(vec_names), 128))
    return w_off, w_shape, v_off, v_shape


# -----------------------------------------------------------------------------
# Fused whole-decoder kernel (one grid step == one sample).
# In-kernel activations use a lane-major canonical (C, H*(W+2)) f32 layout:
# the flattened spatial axis (with 2 zero halo columns per row) sits on lanes,
# channels on sublanes.  The zero-halo invariant makes GN sums and the conv
# staging store correct without any gather/scatter.
# -----------------------------------------------------------------------------
def _make_decoder_kernel(H0, W0, latent_dim, base, out_ch, groups, num_heads,
                         rescale, w_off, v_off, pad_rows):
    H1, W1 = 2 * H0, 2 * W0
    W0p, W1p = W0 + 2, W1 + 2
    P0, P1 = H0 * W0p, H1 * W1p
    cg = base // groups

    def kernel(x_ref, w_ref, v_ref, m_ref, up_ref, out_ref, pad_ref):
        def vec(name, n):                              # (n, 1) per-channel vector
            j = v_off[name]
            return v_ref[0:n, j:j + 1]

        def mat(name):                                 # (r, c) packed matrix
            c0, r, c = w_off[name]
            return w_ref[0:r, c0:c0 + c]

        gmat = mat("gmat")                             # (C, C) group-sum matrix

        m1 = m_ref[0:1, 0:P0]                          # interior mask, H0 stage
        m2 = m_ref[1:2, 0:P1]                          # interior mask, H1 stage

        # One scratch clear per sample (only margins actually need zeroing, but a
        # full (8, 384) clear is a handful of stores and keeps the invariant simple).
        pad_ref[...] = jnp.zeros(pad_ref.shape, jnp.float32)

        def conv(xin, name, H, W, Cin, Cout, ksize, mask):
            """'same' conv on the canonical layout via per-tap MXU dots."""
            Wp = W + 2
            P = H * Wp
            c0 = w_off[name][0]
            b = vec(name + "_b", Cout)
            if ksize == 1:
                acc = jnp.dot(w_ref[0:Cout, c0:c0 + Cin], xin,
                              preferred_element_type=jnp.float32)
            else:
                # Stage into the zero-margined scratch; x's own zero halo columns
                # provide the inter-row padding, the scratch margins the top/bottom.
                M = Wp + 1
                pad_ref[0:Cin, M:M + P] = xin
                acc = None
                for t in range(9):                     # static 9-tap loop
                    dy, dx = divmod(t, 3)
                    off = dy * Wp + dx
                    tap = pad_ref[0:Cin, off:off + P]                       # (Cin, P)
                    wt = w_ref[0:Cout, c0 + t * Cin:c0 + (t + 1) * Cin]     # (Cout, Cin)
                    d = jnp.dot(wt, tap, preferred_element_type=jnp.float32)
                    acc = d if acc is None else acc + d
            return (acc + b) * mask                    # bias lands everywhere -> re-zero halo

        def gn(xin, gname, bname, hw, mask, act, eps=1e-5):
            """GroupNorm (+ optional fused SiLU); sums are exact because halo cols are 0."""
            g = vec(gname, base)
            b = vec(bname, base)
            inv_cnt = 1.0 / float(cg * hw)
            gs1 = jnp.dot(gmat, xin, preferred_element_type=jnp.float32)
            gs2 = jnp.dot(gmat, xin * xin, preferred_element_type=jnp.float32)
            mean = jnp.sum(gs1, axis=1, keepdims=True) * inv_cnt
            msq = jnp.sum(gs2, axis=1, keepdims=True) * inv_cnt
            inv = jax.lax.rsqrt(msq - mean * mean + eps)
            y = (xin - mean) * (inv * g) + b
            if act:
                y = y * jax.nn.sigmoid(y)              # SiLU
            return y * mask                            # keep the zero-halo invariant

        def attention(xin, mask, hw):
            Dh = base // num_heads
            scale = 1.0 / math.sqrt(Dh)
            h = gn(xin, "att_gn_g", "att_gn_b", hw, mask, act=False)
            qkv = jnp.dot(mat("att_wqkvT"), h,
                          preferred_element_type=jnp.float32) + vec("att_bqkv", 3 * base)
            wo = mat("att_wo")                         # (C_in(head-concat), C_out)
            kvalid = mask > 0.0                        # interior keys only
            yT = None
            for hd in range(num_heads):                # static (2 heads)
                q = qkv[hd * Dh:(hd + 1) * Dh, :]
                k = qkv[base + hd * Dh:base + (hd + 1) * Dh, :]
                v = qkv[2 * base + hd * Dh:2 * base + (hd + 1) * Dh, :]
                s = jax.lax.dot_general(q, k, (((0,), (0,)), ((), ())),
                                        preferred_element_type=jnp.float32) * scale
                s = jnp.where(kvalid, s, -1e30)        # mask halo-column keys (f32-safe)
                s = s - jnp.max(s, axis=-1, keepdims=True)
                p = jnp.exp(s)
                p = p * pl.reciprocal(jnp.sum(p, axis=-1, keepdims=True), approx=True)
                o = jax.lax.dot_general(p, v, (((1,), (1,)), ((), ())),
                                        preferred_element_type=jnp.float32)   # (P, Dh)
                c = jnp.dot(o, wo[hd * Dh:(hd + 1) * Dh, :],
                            preferred_element_type=jnp.float32)               # (P, C)
                yT = c if yT is None else yT + c
            # TODO(synk): dropout (p=0.0 in this config) is identity at inference.
            # Halo columns of the result carry bias/attn garbage; the all-zero halo
            # rows of the upsample selector annihilate them, so no mask is needed.
            return yT.T + vec("att_bo", base) + xin

        def res_block(xin, prefix, H, W, mask):
            hw = H * W
            h = gn(xin, prefix + "_gn1_g", prefix + "_gn1_b", hw, mask, act=True)
            h = conv(h, prefix + "_conv1", H, W, base, base, 3, mask)
            h = gn(h, prefix + "_gn2_g", prefix + "_gn2_b", hw, mask, act=True)
            # TODO(synk): dropout (p=0.0 in this config) is identity at inference.
            h = conv(h, prefix + "_conv2", H, W, base, base, 3, mask)
            return h + xin                             # in_c == out_c -> identity skip

        x = x_ref[0].astype(jnp.float32)
        if rescale:
            x = x * (1.0 / 0.18215)
        # input halo columns are already exactly zero (wrapper pad) -> no mask needed

        x = conv(x, "conv_in0", H0, W0, latent_dim, latent_dim, 1, m1)
        x = conv(x, "conv_in1", H0, W0, latent_dim, base, 3, m1)
        x = res_block(x, "res1", H0, W0, m1)
        x = attention(x, m1, H0 * W0)

        # 2x nearest upsample as a constant 0/1 selection matmul (MXU, VMEM-resident);
        # halo rows/columns of the selector are zero, so the result's halos are zero.
        x = jnp.dot(x, up_ref[...], preferred_element_type=jnp.float32)

        # The H0 staging dirtied scratch columns [W0p+1, W0p+1+P0); only the slice
        # overlapping the H1 left margin needs re-zeroing (the H1 interior is fully
        # overwritten by each H1 staging store, the right margin was never touched).
        pad_ref[:, 0:W1p + 1] = jnp.zeros((pad_rows, W1p + 1), jnp.float32)

        x = conv(x, "up_conv", H1, W1, base, base, 3, m2)
        x = res_block(x, "res2", H1, W1, m2)
        x = gn(x, "gn_out_g", "gn_out_b", H1 * W1, m2, act=True)
        x = conv(x, "conv_out", H1, W1, base, out_ch, 3, m2)

        out_ref[0] = x.astype(out_ref.dtype)

    return kernel


# -----------------------------------------------------------------------------
# Public wrapper: NCHW in, NCHW out
# -----------------------------------------------------------------------------
def va_decoder_forward(x_nchw, params, *, groups=4, num_heads=2, rescale=True):
    N, Clat, H0, W0 = x_nchw.shape
    H1, W1 = 2 * H0, 2 * W0
    W0p, W1p = W0 + 2, W1 + 2
    P0, P1 = H0 * W0p, H1 * W1p
    base = params["conv_in1"]["w"].shape[3]
    out_ch = params["conv_out"]["w"].shape[3]
    cg = base // groups

    w_off, w_shape, v_off, v_shape = _plan_layout(Clat, base, out_ch)

    # canonical activation layout: (N, C, H*(W+2)) with 2 zero halo columns / row
    x = jnp.pad(x_nchw, ((0, 0), (0, 0), (0, 0), (0, 2))).reshape(N, Clat, P0)

    # ---- single packed matrix buffer (tap-major conv blocks, attn mats, gmat) ----
    def conv_block(w):  # (kh, kw, Cin, Cout) -> (Cout, kh*kw*Cin), tap-major columns
        kh, kw, ci, co = w.shape
        return jnp.transpose(w, (3, 0, 1, 2)).reshape(co, kh * kw * ci)

    p = params
    gmat = np.zeros((base, base), np.float32)
    for i in range(base):
        gmat[i, (i // cg) * cg:(i // cg + 1) * cg] = 1.0

    w_blocks = {
        "conv_in0": conv_block(p["conv_in0"]["w"]),
        "conv_in1": conv_block(p["conv_in1"]["w"]),
        "res1_conv1": conv_block(p["res1"]["conv1_w"]),
        "res1_conv2": conv_block(p["res1"]["conv2_w"]),
        "att_wqkvT": jnp.transpose(p["att1"]["wqkv"]),
        "att_wo": p["att1"]["wo"],
        "up_conv": conv_block(p["up"]["w"]),
        "res2_conv1": conv_block(p["res2"]["conv1_w"]),
        "res2_conv2": conv_block(p["res2"]["conv2_w"]),
        "conv_out": conv_block(p["conv_out"]["w"]),
        "gmat": jnp.asarray(gmat),
    }
    wbuf = jnp.zeros(w_shape, jnp.float32)
    for name, blk in w_blocks.items():
        c0, r, c = w_off[name]
        assert blk.shape == (r, c), (name, blk.shape, (r, c))
        wbuf = jax.lax.dynamic_update_slice(wbuf, blk.astype(jnp.float32), (0, c0))

    # ---- single packed vector buffer (biases / GN affine), one column each ----
    v_vals = {
        "conv_in0_b": p["conv_in0"]["b"], "conv_in1_b": p["conv_in1"]["b"],
        "res1_gn1_g": p["res1"]["gn1_g"], "res1_gn1_b": p["res1"]["gn1_b"],
        "res1_conv1_b": p["res1"]["conv1_b"],
        "res1_gn2_g": p["res1"]["gn2_g"], "res1_gn2_b": p["res1"]["gn2_b"],
        "res1_conv2_b": p["res1"]["conv2_b"],
        "att_gn_g": p["att1"]["gn_g"], "att_gn_b": p["att1"]["gn_b"],
        "att_bqkv": p["att1"]["bqkv"], "att_bo": p["att1"]["bo"],
        "up_conv_b": p["up"]["b"],
        "res2_gn1_g": p["res2"]["gn1_g"], "res2_gn1_b": p["res2"]["gn1_b"],
        "res2_conv1_b": p["res2"]["conv1_b"],
        "res2_gn2_g": p["res2"]["gn2_g"], "res2_gn2_b": p["res2"]["gn2_b"],
        "res2_conv2_b": p["res2"]["conv2_b"],
        "gn_out_g": p["gn_out"]["g"], "gn_out_b": p["gn_out"]["b"],
        "conv_out_b": p["conv_out"]["b"],
    }
    vbuf = jnp.zeros(v_shape, jnp.float32)
    for name, val in v_vals.items():
        vbuf = jax.lax.dynamic_update_slice(
            vbuf, val.reshape(-1, 1).astype(jnp.float32), (0, v_off[name]))

    # ---- interior masks and the 2x nearest-upsample selection matrix (constants) ----
    mb = np.zeros((2, P1), np.float32)
    for y in range(H0):
        mb[0, y * W0p:y * W0p + W0] = 1.0
    for y in range(H1):
        mb[1, y * W1p:y * W1p + W1] = 1.0
    up = np.zeros((P0, P1), np.float32)
    for Y in range(H1):
        for X in range(W1):
            up[(Y // 2) * W0p + (X // 2), Y * W1p + X] = 1.0

    pad_rows = _round_up(max(8, Clat, base), 8)
    pad_cols = _round_up(2 * (W1p + 1) + P1, 128)

    kernel = _make_decoder_kernel(H0, W0, Clat, base, out_ch, groups, num_heads,
                                  rescale, w_off, v_off, pad_rows)

    out = pl.pallas_call(
        kernel,
        out_shape=jax.ShapeDtypeStruct((N, out_ch, P1), x_nchw.dtype),
        grid=(N,),
        in_specs=[
            pl.BlockSpec((1, Clat, P0), lambda n: (n, 0, 0)),
            pl.BlockSpec(w_shape, lambda n: (0, 0)),
            pl.BlockSpec(v_shape, lambda n: (0, 0)),
            pl.BlockSpec((2, P1), lambda n: (0, 0)),
            pl.BlockSpec((P0, P1), lambda n: (0, 0)),
        ],
        out_specs=pl.BlockSpec((1, out_ch, P1), lambda n: (n, 0, 0)),
        scratch_shapes=[pltpu.VMEM((pad_rows, pad_cols), jnp.float32)],
        compiler_params=pltpu.CompilerParams(
            dimension_semantics=("parallel",)),
    )(x, wbuf, vbuf, jnp.asarray(mb), jnp.asarray(up))

    # strip the 2 zero halo columns per spatial row -> NCHW
    return out.reshape(N, out_ch, H1, W1p)[..., :W1]


# -----------------------------------------------------------------------------
# Deterministic parameter initialization (PyTorch-like layouts)
# -----------------------------------------------------------------------------
def init_params(key, *, latent_dim=4, base=8, out_channels=3):
    keys = iter(jax.random.split(key, 64))

    def w(shape, scale=0.1):
        return scale * jax.random.normal(next(keys), shape, jnp.float32)

    def conv(kh, kw, cin, cout):
        return {"w": w((kh, kw, cin, cout)), "b": w((cout,), 0.01)}

    def res(c):
        return {
            "gn1_g": jnp.ones((c,), jnp.float32), "gn1_b": jnp.zeros((c,), jnp.float32),
            "conv1_w": w((3, 3, c, c)), "conv1_b": w((c,), 0.01),
            "gn2_g": jnp.ones((c,), jnp.float32), "gn2_b": jnp.zeros((c,), jnp.float32),
            "conv2_w": w((3, 3, c, c)), "conv2_b": w((c,), 0.01),
        }

    def att(c):
        return {
            "gn_g": jnp.ones((c,), jnp.float32), "gn_b": jnp.zeros((c,), jnp.float32),
            "wqkv": w((c, 3 * c)), "bqkv": w((3 * c,), 0.01),
            "wo": w((c, c)), "bo": w((c,), 0.01),
        }

    return {
        "conv_in0": conv(1, 1, latent_dim, latent_dim),
        "conv_in1": conv(3, 3, latent_dim, base),
        "res1": res(base),
        "att1": att(base),
        "up": conv(3, 3, base, base),
        "res2": res(base),
        "gn_out": {"g": jnp.ones((base,), jnp.float32),
                   "b": jnp.zeros((base,), jnp.float32)},
        "conv_out": conv(3, 3, base, out_channels),
    }


# -----------------------------------------------------------------------------
# Pure-JAX (non-Pallas) NCHW reference for numerical cross-checking
# -----------------------------------------------------------------------------
def _reference_forward(x, params, *, groups=4, num_heads=2, rescale=True, eps=1e-5):
    hp = jax.lax.Precision.HIGHEST

    def conv(x, w, b):
        kh = w.shape[0]
        pad = [(kh // 2, kh // 2), (kh // 2, kh // 2)]
        y = jax.lax.conv_general_dilated(
            x, w, (1, 1), pad,
            dimension_numbers=("NCHW", "HWIO", "NCHW"), precision=hp)
        return y + b[None, :, None, None]

    def gn(x, g, b, act):
        N, C, H, W = x.shape
        xg = x.reshape(N, groups, (C // groups) * H * W)
        m = xg.mean(-1, keepdims=True)
        v = ((xg - m) ** 2).mean(-1, keepdims=True)
        xn = ((xg - m) * jax.lax.rsqrt(v + eps)).reshape(N, C, H, W)
        y = xn * g[None, :, None, None] + b[None, :, None, None]
        return y * jax.nn.sigmoid(y) if act else y

    def res(x, pp):
        h = gn(x, pp["gn1_g"], pp["gn1_b"], True)
        h = conv(h, pp["conv1_w"], pp["conv1_b"])
        h = gn(h, pp["gn2_g"], pp["gn2_b"], True)
        h = conv(h, pp["conv2_w"], pp["conv2_b"])
        return h + x

    def att(x, pp):
        N, C, H, W = x.shape
        Dh = C // num_heads
        h = gn(x, pp["gn_g"], pp["gn_b"], False)
        h = h.reshape(N, C, H * W).transpose(0, 2, 1)          # (N, HW, C)
        qkv = jnp.einsum("nsc,cd->nsd", h, pp["wqkv"], precision=hp) + pp["bqkv"]
        q, k, v = jnp.split(qkv, 3, axis=-1)
        q = q.reshape(N, H * W, num_heads, Dh)
        k = k.reshape(N, H * W, num_heads, Dh)
        v = v.reshape(N, H * W, num_heads, Dh)
        s = jnp.einsum("nqhd,nkhd->nhqk", q, k, precision=hp) / math.sqrt(Dh)
        a = jax.nn.softmax(s, axis=-1)
        o = jnp.einsum("nhqk,nkhd->nqhd", a, v, precision=hp).reshape(N, H * W, C)
        y = jnp.einsum("nsc,cd->nsd", o, pp["wo"], precision=hp) + pp["bo"]
        return y.transpose(0, 2, 1).reshape(N, C, H, W) + x

    if rescale:
        x = x / 0.18215
    x = conv(x, params["conv_in0"]["w"], params["conv_in0"]["b"])
    x = conv(x, params["conv_in1"]["w"], params["conv_in1"]["b"])
    x = res(x, params["res1"])
    x = att(x, params["att1"])
    x = jnp.repeat(jnp.repeat(x, 2, axis=2), 2, axis=3)        # nearest 2x
    x = conv(x, params["up"]["w"], params["up"]["b"])
    x = res(x, params["res2"])
    x = gn(x, params["gn_out"]["g"], params["gn_out"]["b"], True)
    x = conv(x, params["conv_out"]["w"], params["conv_out"]["b"])
    return x


# -----------------------------------------------------------------------------
if __name__ == "__main__":
    key = jax.random.PRNGKey(0)
    pkey, xkey = jax.random.split(key)

    params = init_params(pkey, latent_dim=4, base=8, out_channels=3)
    # latent input: (batch, latent_dim, H', W')
    x = jax.random.normal(xkey, (2, 4, 8, 8), jnp.float32)

    fwd = jax.jit(functools.partial(va_decoder_forward, groups=4,
                                    num_heads=2, rescale=True))
    out = jax.block_until_ready(fwd(x, params))

    assert out.shape == (2, 3, 16, 16), out.shape
    assert out.dtype == jnp.float32
    assert bool(jnp.all(jnp.isfinite(out)))

    # numerical cross-check against the pure-JAX reference
    ref = _reference_forward(x, params, groups=4, num_heads=2, rescale=True)
    assert float(jnp.max(jnp.abs(out - ref))) < 2e-2

    print("KERNEL_OK")
</pallas_src>

<mosaic_0001>
module attributes {stable_mosaic.version = 11 : i64} {
  func.func @kernel(%arg0: i32, %arg1: memref<1x4x80xf32, #tpu.memory_space<vmem>>, %arg2: memref<24x512xf32, #tpu.memory_space<vmem>>, %arg3: memref<24x128xf32, #tpu.memory_space<vmem>>, %arg4: memref<2x288xf32, #tpu.memory_space<vmem>>, %arg5: memref<80x288xf32, #tpu.memory_space<vmem>>, %arg6: memref<1x3x288xf32, #tpu.memory_space<vmem>>, %arg7: memref<8x384xf32, #tpu.memory_space<vmem>>) attributes {dimension_semantics = [#tpu.dimension_semantics<parallel>], iteration_bounds = array<i64: 2>, scalar_prefetch = 0 : i64, scratch_operands = 1 : i64, tpu.core_type = #tpu.core_type<tc>, window_params = [{transform_indices = @transform_0, window_bounds = array<i64: 1, 4, 80>}, {pipeline_mode = #tpu.pipeline_mode<synchronous>, transform_indices = @transform_1, window_bounds = array<i64: 24, 512>}, {pipeline_mode = #tpu.pipeline_mode<synchronous>, transform_indices = @transform_2, window_bounds = array<i64: 24, 128>}, {pipeline_mode = #tpu.pipeline_mode<synchronous>, transform_indices = @transform_3, window_bounds = array<i64: 2, 288>}, {pipeline_mode = #tpu.pipeline_mode<synchronous>, transform_indices = @transform_4, window_bounds = array<i64: 80, 288>}, {transform_indices = @transform_5, window_bounds = array<i64: 1, 3, 288>}]} {
    %c0 = arith.constant 0 : index
    %c488 = arith.constant 488 : index
    %0 = vector.load %arg2[%c0, %c488] : memref<24x512xf32, #tpu.memory_space<vmem>>, vector<8x8xf32>
    %c0_0 = arith.constant 0 : index
    %c0_1 = arith.constant 0 : index
    %1 = vector.load %arg4[%c0_0, %c0_1] : memref<2x288xf32, #tpu.memory_space<vmem>>, vector<1x80xf32>
    %c1 = arith.constant 1 : index
    %c0_2 = arith.constant 0 : index
    %2 = vector.load %arg4[%c1, %c0_2] : memref<2x288xf32, #tpu.memory_space<vmem>>, vector<1x288xf32>
    %cst = arith.constant 0.000000e+00 : f32
    %3 = vector.broadcast %cst : f32 to vector<8x384xf32>
    %c0_3 = arith.constant 0 : index
    %c0_4 = arith.constant 0 : index
    %4 = vector.load %arg7[%c0_3, %c0_4] : memref<8x384xf32, #tpu.memory_space<vmem>>, vector<8x384xf32>
    tpu.vector_store %arg7[%c0_3, %c0_4], %3 {strides = array<i32>} : memref<8x384xf32, #tpu.memory_space<vmem>>, vector<8x384xf32>,
    %c0_5 = arith.constant 0 : index
    %c0_6 = arith.constant 0 : index
    %c0_7 = arith.constant 0 : index
    %5 = vector.load %arg1[%c0_5, %c0_6, %c0_7] : memref<1x4x80xf32, #tpu.memory_space<vmem>>, vector<1x4x80xf32>
    %6 = vector.shape_cast %5 : vector<1x4x80xf32> to vector<4x80xf32>
    %cst_8 = arith.constant 5.4899807 : f32
    %7 = vector.broadcast %cst_8 : f32 to vector<4x80xf32>
    %8 = arith.mulf %6, %7 : vector<4x80xf32>
    %c0_9 = arith.constant 0 : index
    %c0_10 = arith.constant 0 : index
    %9 = vector.load %arg3[%c0_9, %c0_10] : memref<24x128xf32, #tpu.memory_space<vmem>>, vector<4x1xf32>
    %c0_11 = arith.constant 0 : index
    %c0_12 = arith.constant 0 : index
    %10 = vector.load %arg2[%c0_11, %c0_12] : memref<24x512xf32, #tpu.memory_space<vmem>>, vector<4x4xf32>
    %cst_13 = arith.constant dense<0.000000e+00> : vector<4x80xf32>
    %11 = tpu.matmul %10, %8, %cst_13 {dimension_numbers = #tpu.dot_dimension_numbers<[1], [0], [0], [1], [0, 0, 1, 1], [], []>} : vector<4x4xf32>, vector<4x80xf32>, vector<4x80xf32> -> vector<4x80xf32>
    %12 = vector.broadcast %9 : vector<4x1xf32> to vector<4x80xf32>
    %13 = arith.addf %11, %12 : vector<4x80xf32>
    %14 = vector.broadcast %1 : vector<1x80xf32> to vector<4x80xf32>
    %15 = arith.mulf %13, %14 : vector<4x80xf32>
    %c0_14 = arith.constant 0 : index
    %c1_15 = arith.constant 1 : index
    %16 = vector.load %arg3[%c0_14, %c1_15] : memref<24x128xf32, #tpu.memory_space<vmem>>, vector<8x1xf32>
    %c0_16 = arith.constant 0 : index
    %c11 = arith.constant 11 : index
    %17 = vector.load %arg7[%c0_16, %c11] : memref<8x384xf32, #tpu.memory_space<vmem>>, vector<4x80xf32>
    tpu.vector_store %arg7[%c0_16, %c11], %15 {strides = array<i32>} : memref<8x384xf32, #tpu.memory_space<vmem>>, vector<4x80xf32>,
    %c0_17 = arith.constant 0 : index
    %c0_18 = arith.constant 0 : index
    %18 = vector.load %arg7[%c0_17, %c0_18] : memref<8x384xf32, #tpu.memory_space<vmem>>, vector<4x80xf32>
    %c0_19 = arith.constant 0 : index
    %c4 = arith.constant 4 : index
    %19 = vector.load %arg2[%c0_19, %c4] : memref<24x512xf32, #tpu.memory_space<vmem>>, vector<8x4xf32>
    %cst_20 = arith.constant dense<0.000000e+00> : vector<8x80xf32>
    %20 = tpu.matmul %19, %18, %cst_20 {dimension_numbers = #tpu.dot_dimension_numbers<[1], [0], [0], [1], [0, 0, 1, 1], [], []>} : vector<8x4xf32>, vector<4x80xf32>, vector<8x80xf32> -> vector<8x80xf32>
    %c0_21 = arith.constant 0 : index
    %c1_22 = arith.constant 1 : index
    %21 = vector.load %arg7[%c0_21, %c1_22] : memref<8x384xf32, #tpu.memory_space<vmem>>, vector<4x80xf32>
    %c0_23 = arith.constant 0 : index
    %c8 = arith.constant 8 : index
    %22 = vector.load %arg2[%c0_23, %c8] : memref<24x512xf32, #tpu.memory_space<vmem>>, vector<8x4xf32>
    %cst_24 = arith.constant dense<0.000000e+00> : vector<8x80xf32>
    %23 = tpu.matmul %22, %21, %cst_24 {dimension_numbers = #tpu.dot_dimension_numbers<[1], [0], [0], [1], [0, 0, 1, 1], [], []>} : vector<8x4xf32>, vector<4x80xf32>, vector<8x80xf32> -> vector<8x80xf32>
    %24 = arith.addf %20, %23 : vector<8x80xf32>
    %c0_25 = arith.constant 0 : index
    %c2 = arith.constant 2 : index
    %25 = vector.load %arg7[%c0_25, %c2] : memref<8x384xf32, #tpu.memory_space<vmem>>, vector<4x80xf32>
    %c0_26 = arith.constant 0 : index
    %c12 = arith.constant 12 : index
    %26 = vector.load %arg2[%c0_26, %c12] : memref<24x512xf32, #tpu.memory_space<vmem>>, vector<8x4xf32>
    %cst_27 = arith.constant dense<0.000000e+00> : vector<8x80xf32>
    %27 = tpu.matmul %26, %25, %cst_27 {dimension_numbers = #tpu.dot_dimension_numbers<[1], [0], [0], [1], [0, 0, 1, 1], [], []>} : vector<8x4xf32>, vector<4x80xf32>, vector<8x80xf32> -> vector<8x80xf32>
    %28 = arith.addf %24, %27 : vector<8x80xf32>
    %c0_28 = arith.constant 0 : index
    %c10 = arith.constant 10 : index
    %29 = vector.load %arg7[%c0_28, %c10] : memref<8x384xf32, #tpu.memory_space<vmem>>, vector<4x80xf32>
    %c0_29 = arith.constant 0 : index
    %c16 = arith.constant 16 : index
    %30 = vector.load %arg2[%c0_29, %c16] : memref<24x512xf32, #tpu.memory_space<vmem>>, vector<8x4xf32>
    %cst_30 = arith.constant dense<0.000000e+00> : vector<8x80xf32>
    %31 = tpu.matmul %30, %29, %cst_30 {dimension_numbers = #tpu.dot_dimension_numbers<[1], [0], [0], [1], [0, 0, 1, 1], [], []>} : vector<8x4xf32>, vector<4x80xf32>, vector<8x80xf32> -> vector<8x80xf32>
    %32 = arith.addf %28, %31 : vector<8x80xf32>
    %c0_31 = arith.constant 0 : index
    %c11_32 = arith.constant 11 : index
    %33 = vector.load %arg7[%c0_31, %c11_32] : memref<8x384xf32, #tpu.memory_space<vmem>>, vector<4x80xf32>
    %c0_33 = arith.constant 0 : index
    %c20 = arith.constant 20 : index
    %34 = vector.load %arg2[%c0_33, %c20] : memref<24x512xf32, #tpu.memory_space<vmem>>, vector<8x4xf32>
    %cst_34 = arith.constant dense<0.000000e+00> : vector<8x80xf32>
    %35 = tpu.matmul %34, %33, %cst_34 {dimension_numbers = #tpu.dot_dimension_numbers<[1], [0], [0], [1], [0, 0, 1, 1], [], []>} : vector<8x4xf32>, vector<4x80xf32>, vector<8x80xf32> -> vector<8x80xf32>
    %36 = arith.addf %32, %35 : vector<8x80xf32>
    %c0_35 = arith.constant 0 : index
    %c12_36 = arith.constant 12 : index
    %37 = vector.load %arg7[%c0_35, %c12_36] : memref<8x384xf32, #tpu.memory_space<vmem>>, vector<4x80xf32>
    %c0_37 = arith.constant 0 : index
    %c24 = arith.constant 24 : index
    %38 = vector.load %arg2[%c0_37, %c24] : memref<24x512xf32, #tpu.memory_space<vmem>>, vector<8x4xf32>
    %cst_38 = arith.constant dense<0.000000e+00> : vector<8x80xf32>
    %39 = tpu.matmul %38, %37, %cst_38 {dimension_numbers = #tpu.dot_dimension_numbers<[1], [0], [0], [1], [0, 0, 1, 1], [], []>} : vector<8x4xf32>, vector<4x80xf32>, vector<8x80xf32> -> vector<8x80xf32>
    %40 = arith.addf %36, %39 : vector<8x80xf32>
    %c0_39 = arith.constant 0 : index
    %c20_40 = arith.constant 20 : index
    %41 = vector.load %arg7[%c0_39, %c20_40] : memref<8x384xf32, #tpu.memory_space<vmem>>, vector<4x80xf32>
    %c0_41 = arith.constant 0 : index
    %c28 = arith.constant 28 : index
    %42 = vector.load %arg2[%c0_41, %c28] : memref<24x512xf32, #tpu.memory_space<vmem>>, vector<8x4xf32>
    %cst_42 = arith.constant dense<0.000000e+00> : vector<8x80xf32>
    %43 = tpu.matmul %42, %41, %cst_42 {dimension_numbers = #tpu.dot_dimension_numbers<[1], [0], [0], [1], [0, 0, 1, 1], [], []>} : vector<8x4xf32>, vector<4x80xf32>, vector<8x80xf32> -> vector<8x80xf32>
    %44 = arith.addf %40, %43 : vector<8x80xf32>
    %c0_43 = arith.constant 0 : index
    %c21 = arith.constant 21 : index
    %45 = vector.load %arg7[%c0_43, %c21] : memref<8x384xf32, #tpu.memory_space<vmem>>, vector<4x80xf32>
    %c0_44 = arith.constant 0 : index
    %c32 = arith.constant 32 : index
    %46 = vector.load %arg2[%c0_44, %c32] : memref<24x512xf32, #tpu.memory_space<vmem>>, vector<8x4xf32>
    %cst_45 = arith.constant dense<0.000000e+00> : vector<8x80xf32>
    %47 = tpu.matmul %46, %45, %cst_45 {dimension_numbers = #tpu.dot_dimension_numbers<[1], [0], [0], [1], [0, 0, 1, 1], [], []>} : vector<8x4xf32>, vector<4x80xf32>, vector<8x80xf32> -> vector<8x80xf32>
    %48 = arith.addf %44, %47 : vector<8x80xf32>
    %c0_46 = arith.constant 0 : index
    %c22 = arith.constant 22 : index
    %49 = vector.load %arg7[%c0_46, %c22] : memref<8x384xf32, #tpu.memory_space<vmem>>, vector<4x80xf32>
    %c0_47 = arith.constant 0 : index
    %c36 = arith.constant 36 : index
    %50 = vector.load %arg2[%c0_47, %c36] : memref<24x512xf32, #tpu.memory_space<vmem>>, vector<8x4xf32>
    %cst_48 = arith.constant dense<0.000000e+00> : vector<8x80xf32>
    %51 = tpu.matmul %50, %49, %cst_48 {dimension_numbers = #tpu.dot_dimension_numbers<[1], [0], [0], [1], [0, 0, 1, 1], [], []>} : vector<8x4xf32>, vector<4x80xf32>, vector<8x80xf32> -> vector<8x80xf32>
    %52 = arith.addf %48, %51 : vector<8x80xf32>
    %53 = vector.broadcast %16 : vector<8x1xf32> to vector<8x80xf32>
    %54 = arith.addf %52, %53 : vector<8x80xf32>
    %55 = vector.broadcast %1 : vector<1x80xf32> to vector<8x80xf32>
    %56 = arith.mulf %54, %55 : vector<8x80xf32>
    %c0_49 = arith.constant 0 : index
    %c2_50 = arith.constant 2 : index
    %57 = vector.load %arg3[%c0_49, %c2_50] : memref<24x128xf32, #tpu.memory_space<vmem>>, vector<8x1xf32>
    %c0_51 = arith.constant 0 : index
    %c3 = arith.constant 3 : index
    %58 = vector.load %arg3[%c0_51, %c3] : memref<24x128xf32, #tpu.memory_space<vmem>>, vector<8x1xf32>
    %cst_52 = arith.constant dense<0.000000e+00> : vector<8x80xf32>
    %59 = tpu.matmul %0, %56, %cst_52 {dimension_numbers = #tpu.dot_dimension_numbers<[1], [0], [0], [1], [0, 0, 1, 1], [], []>} : vector<8x8xf32>, vector<8x80xf32>, vector<8x80xf32> -> vector<8x80xf32>
    %60 = arith.mulf %56, %56 : vector<8x80xf32>
    %cst_53 = arith.constant dense<0.000000e+00> : vector<8x80xf32>
    %61 = tpu.matmul %0, %60, %cst_53 {dimension_numbers = #tpu.dot_dimension_numbers<[1], [0], [0], [1], [0, 0, 1, 1], [], []>} : vector<8x8xf32>, vector<8x80xf32>, vector<8x80xf32> -> vector<8x80xf32>
    %cst_54 = arith.constant dense<0.000000e+00> : vector<8xf32>
    %62 = vector.multi_reduction <add>, %59, %cst_54 [1] : vector<8x80xf32> to vector<8xf32>
    %63 = vector.shape_cast %62 : vector<8xf32> to vector<8x1xf32>
    %cst_55 = arith.constant 7.812500e-03 : f32
    %64 = vector.broadcast %cst_55 : f32 to vector<8x1xf32>
    %65 = arith.mulf %63, %64 : vector<8x1xf32>
    %cst_56 = arith.constant dense<0.000000e+00> : vector<8xf32>
    %66 = vector.multi_reduction <add>, %61, %cst_56 [1] : vector<8x80xf32> to vector<8xf32>
    %67 = vector.shape_cast %66 : vector<8xf32> to vector<8x1xf32>
    %cst_57 = arith.constant 7.812500e-03 : f32
    %68 = vector.broadcast %cst_57 : f32 to vector<8x1xf32>
    %69 = arith.mulf %67, %68 : vector<8x1xf32>
    %70 = arith.mulf %65, %65 : vector<8x1xf32>
    %71 = arith.subf %69, %70 : vector<8x1xf32>
    %cst_58 = arith.constant 9.99999974E-6 : f32
    %72 = vector.broadcast %cst_58 : f32 to vector<8x1xf32>
    %73 = arith.addf %71, %72 : vector<8x1xf32>
    %74 = math.rsqrt %73 : vector<8x1xf32>
    %75 = vector.broadcast %65 : vector<8x1xf32> to vector<8x80xf32>
    %76 = arith.subf %56, %75 : vector<8x80xf32>
    %77 = arith.mulf %74, %57 : vector<8x1xf32>
    %78 = vector.broadcast %77 : vector<8x1xf32> to vector<8x80xf32>
    %79 = arith.mulf %76, %78 : vector<8x80xf32>
    %80 = vector.broadcast %58 : vector<8x1xf32> to vector<8x80xf32>
    %81 = arith.addf %79, %80 : vector<8x80xf32>
    %82 = arith.negf %81 : vector<8x80xf32>
    %83 = math.exp %82 : vector<8x80xf32>
    %cst_59 = arith.constant 1.000000e+00 : f32
    %84 = vector.broadcast %cst_59 : f32 to vector<8x80xf32>
    %85 = arith.addf %84, %83 : vector<8x80xf32>
    %86 = arith.divf %84, %85 : vector<8x80xf32>
    %87 = arith.mulf %81, %86 : vector<8x80xf32>
    %88 = vector.broadcast %1 : vector<1x80xf32> to vector<8x80xf32>
    %89 = arith.mulf %87, %88 : vector<8x80xf32>
    %c0_60 = arith.constant 0 : index
    %c4_61 = arith.constant 4 : index
    %90 = vector.load %arg3[%c0_60, %c4_61] : memref<24x128xf32, #tpu.memory_space<vmem>>, vector<8x1xf32>
    %c0_62 = arith.constant 0 : index
    %c11_63 = arith.constant 11 : index
    %91 = vector.load %arg7[%c0_62, %c11_63] : memref<8x384xf32, #tpu.memory_space<vmem>>, vector<8x80xf32>
    tpu.vector_store %arg7[%c0_62, %c11_63], %89 {strides = array<i32>} : memref<8x384xf32, #tpu.memory_space<vmem>>, vector<8x80xf32>,
    %c0_64 = arith.constant 0 : index
    %c0_65 = arith.constant 0 : index
    %92 = vector.load %arg7[%c0_64, %c0_65] : memref<8x384xf32, #tpu.memory_space<vmem>>, vector<8x80xf32>
    %c0_66 = arith.constant 0 : index
    %c40 = arith.constant 40 : index
    %93 = vector.load %arg2[%c0_66, %c40] : memref<24x512xf32, #tpu.memory_space<vmem>>, vector<8x8xf32>
    %cst_67 = arith.constant dense<0.000000e+00> : vector<8x80xf32>
    %94 = tpu.matmul %93, %92, %cst_67 {dimension_numbers = #tpu.dot_dimension_numbers<[1], [0], [0], [1], [0, 0, 1, 1], [], []>} : vector<8x8xf32>, vector<8x80xf32>, vector<8x80xf32> -> vector<8x80xf32>
    %c0_68 = arith.constant 0 : index
    %c1_69 = arith.constant 1 : index
    %95 = vector.load %arg7[%c0_68, %c1_69] : memref<8x384xf32, #tpu.memory_space<vmem>>, vector<8x80xf32>
    %c0_70 = arith.constant 0 : index
    %c48 = arith.constant 48 : index
    %96 = vector.load %arg2[%c0_70, %c48] : memref<24x512xf32, #tpu.memory_space<vmem>>, vector<8x8xf32>
    %cst_71 = arith.constant dense<0.000000e+00> : vector<8x80xf32>
    %97 = tpu.matmul %96, %95, %cst_71 {dimension_numbers = #tpu.dot_dimension_numbers<[1], [0], [0], [1], [0, 0, 1, 1], [], []>} : vector<8x8xf32>, vector<8x80xf32>, vector<8x80xf32> -> vector<8x80xf32>
    %98 = arith.addf %94, %97 : vector<8x80xf32>
    %c0_72 = arith.constant 0 : index
    %c2_73 = arith.constant 2 : index
    %99 = vector.load %arg7[%c0_72, %c2_73] : memref<8x384xf32, #tpu.memory_space<vmem>>, vector<8x80xf32>
    %c0_74 = arith.constant 0 : index
    %c56 = arith.constant 56 : index
    %100 = vector.load %arg2[%c0_74, %c56] : memref<24x512xf32, #tpu.memory_space<vmem>>, vector<8x8xf32>
    %cst_75 = arith.constant dense<0.000000e+00> : vector<8x80xf32>
    %101 = tpu.matmul %100, %99, %cst_75 {dimension_numbers = #tpu.dot_dimension_numbers<[1], [0], [0], [1], [0, 0, 1, 1], [], []>} : vector<8x8xf32>, vector<8x80xf32>, vector<8x80xf32> -> vector<8x80xf32>
    %102 = arith.addf %98, %101 : vector<8x80xf32>
    %c0_76 = arith.constant 0 : index
    %c10_77 = arith.constant 10 : index
    %103 = vector.load %arg7[%c0_76, %c10_77] : memref<8x384xf32, #tpu.memory_space<vmem>>, vector<8x80xf32>
    %c0_78 = arith.constant 0 : index
    %c64 = arith.constant 64 : index
    %104 = vector.load %arg2[%c0_78, %c64] : memref<24x512xf32, #tpu.memory_space<vmem>>, vector<8x8xf32>
    %cst_79 = arith.constant dense<0.000000e+00> : vector<8x80xf32>
    %105 = tpu.matmul %104, %103, %cst_79 {dimension_numbers = #tpu.dot_dimension_numbers<[1], [0], [0], [1], [0, 0, 1, 1], [], []>} : vector<8x8xf32>, vector<8x80xf32>, vector<8x80xf32> -> vector<8x80xf32>
    %106 = arith.addf %102, %105 : vector<8x80xf32>
    %c0_80 = arith.constant 0 : index
    %c11_81 = arith.constant 11 : index
    %107 = vector.load %arg7[%c0_80, %c11_81] : memref<8x384xf32, #tpu.memory_space<vmem>>, vector<8x80xf32>
    %c0_82 = arith.constant 0 : index
    %c72 = arith.constant 72 : index
    %108 = vector.load %arg2[%c0_82, %c72] : memref<24x512xf32, #tpu.memory_space<vmem>>, vector<8x8xf32>
    %cst_83 = arith.constant dense<0.000000e+00> : vector<8x80xf32>
    %109 = tpu.matmul %108, %107, %cst_83 {dimension_numbers = #tpu.dot_dimension_numbers<[1], [0], [0], [1], [0, 0, 1, 1], [], []>} : vector<8x8xf32>, vector<8x80xf32>, vector<8x80xf32> -> vector<8x80xf32>
    %110 = arith.addf %106, %109 : vector<8x80xf32>
    %c0_84 = arith.constant 0 : index
    %c12_85 = arith.constant 12 : index
    %111 = vector.load %arg7[%c0_84, %c12_85] : memref<8x384xf32, #tpu.memory_space<vmem>>, vector<8x80xf32>
    %c0_86 = arith.constant 0 : index
    %c80 = arith.constant 80 : index
    %112 = vector.load %arg2[%c0_86, %c80] : memref<24x512xf32, #tpu.memory_space<vmem>>, vector<8x8xf32>
    %cst_87 = arith.constant dense<0.000000e+00> : vector<8x80xf32>
    %113 = tpu.matmul %112, %111, %cst_87 {dimension_numbers = #tpu.dot_dimension_numbers<[1], [0], [0], [1], [0, 0, 1, 1], [], []>} : vector<8x8xf32>, vector<8x80xf32>, vector<8x80xf32> -> vector<8x80xf32>
    %114 = arith.addf %110, %113 : vector<8x80xf32>
    %c0_88 = arith.constant 0 : index
    %c20_89 = arith.constant 20 : index
    %115 = vector.load %arg7[%c0_88, %c20_89] : memref<8x384xf32, #tpu.memory_space<vmem>>, vector<8x80xf32>
    %c0_90 = arith.constant 0 : index
    %c88 = arith.constant 88 : index
    %116 = vector.load %arg2[%c0_90, %c88] : memref<24x512xf32, #tpu.memory_space<vmem>>, vector<8x8xf32>
    %cst_91 = arith.constant dense<0.000000e+00> : vector<8x80xf32>
    %117 = tpu.matmul %116, %115, %cst_91 {dimension_numbers = #tpu.dot_dimension_numbers<[1], [0], [0], [1], [0, 0, 1, 1], [], []>} : vector<8x8xf32>, vector<8x80xf32>, vector<8x80xf32> -> vector<8x80xf32>
    %118 = arith.addf %114, %117 : vector<8x80xf32>
    %c0_92 = arith.constant 0 : index
    %c21_93 = arith.constant 21 : index
    %119 = vector.load %arg7[%c0_92, %c21_93] : memref<8x384xf32, #tpu.memory_space<vmem>>, vector<8x80xf32>
    %c0_94 = arith.constant 0 : index
    %c96 = arith.constant 96 : index
    %120 = vector.load %arg2[%c0_94, %c96] : memref<24x512xf32, #tpu.memory_space<vmem>>, vector<8x8xf32>
    %cst_95 = arith.constant dense<0.000000e+00> : vector<8x80xf32>
    %121 = tpu.matmul %120, %119, %cst_95 {dimension_numbers = #tpu.dot_dimension_numbers<[1], [0], [0], [1], [0, 0, 1, 1], [], []>} : vector<8x8xf32>, vector<8x80xf32>, vector<8x80xf32> -> vector<8x80xf32>
    %122 = arith.addf %118, %121 : vector<8x80xf32>
    %c0_96 = arith.constant 0 : index
    %c22_97 = arith.constant 22 : index
    %123 = vector.load %arg7[%c0_96, %c22_97] : memref<8x384xf32, #tpu.memory_space<vmem>>, vector<8x80xf32>
    %c0_98 = arith.constant 0 : index
    %c104 = arith.constant 104 : index
    %124 = vector.load %arg2[%c0_98, %c104] : memref<24x512xf32, #tpu.memory_space<vmem>>, vector<8x8xf32>
    %cst_99 = arith.constant dense<0.000000e+00> : vector<8x80xf32>
    %125 = tpu.matmul %124, %123, %cst_99 {dimension_numbers = #tpu.dot_dimension_numbers<[1], [0], [0], [1], [0, 0, 1, 1], [], []>} : vector<8x8xf32>, vector<8x80xf32>, vector<8x80xf32> -> vector<8x80xf32>
    %126 = arith.addf %122, %125 : vector<8x80xf32>
    %127 = vector.broadcast %90 : vector<8x1xf32> to vector<8x80xf32>
    %128 = arith.addf %126, %127 : vector<8x80xf32>
    %129 = vector.broadcast %1 : vector<1x80xf32> to vector<8x80xf32>
    %130 = arith.mulf %128, %129 : vector<8x80xf32>
    %c0_100 = arith.constant 0 : index
    %c5 = arith.constant 5 : index
    %131 = vector.load %arg3[%c0_100, %c5] : memref<24x128xf32, #tpu.memory_space<vmem>>, vector<8x1xf32>
    %c0_101 = arith.constant 0 : index
    %c6 = arith.constant 6 : index
    %132 = vector.load %arg3[%c0_101, %c6] : memref<24x128xf32, #tpu.memory_space<vmem>>, vector<8x1xf32>
    %cst_102 = arith.constant dense<0.000000e+00> : vector<8x80xf32>
    %133 = tpu.matmul %0, %130, %cst_102 {dimension_numbers = #tpu.dot_dimension_numbers<[1], [0], [0], [1], [0, 0, 1, 1], [], []>} : vector<8x8xf32>, vector<8x80xf32>, vector<8x80xf32> -> vector<8x80xf32>
    %134 = arith.mulf %130, %130 : vector<8x80xf32>
    %cst_103 = arith.constant dense<0.000000e+00> : vector<8x80xf32>
    %135 = tpu.matmul %0, %134, %cst_103 {dimension_numbers = #tpu.dot_dimension_numbers<[1], [0], [0], [1], [0, 0, 1, 1], [], []>} : vector<8x8xf32>, vector<8x80xf32>, vector<8x80xf32> -> vector<8x80xf32>
    %cst_104 = arith.constant dense<0.000000e+00> : vector<8xf32>
    %136 = vector.multi_reduction <add>, %133, %cst_104 [1] : vector<8x80xf32> to vector<8xf32>
    %137 = vector.shape_cast %136 : vector<8xf32> to vector<8x1xf32>
    %cst_105 = arith.constant 7.812500e-03 : f32
    %138 = vector.broadcast %cst_105 : f32 to vector<8x1xf32>
    %139 = arith.mulf %137, %138 : vector<8x1xf32>
    %cst_106 = arith.constant dense<0.000000e+00> : vector<8xf32>
    %140 = vector.multi_reduction <add>, %135, %cst_106 [1] : vector<8x80xf32> to vector<8xf32>
    %141 = vector.shape_cast %140 : vector<8xf32> to vector<8x1xf32>
    %cst_107 = arith.constant 7.812500e-03 : f32
    %142 = vector.broadcast %cst_107 : f32 to vector<8x1xf32>
    %143 = arith.mulf %141, %142 : vector<8x1xf32>
    %144 = arith.mulf %139, %139 : vector<8x1xf32>
    %145 = arith.subf %143, %144 : vector<8x1xf32>
    %cst_108 = arith.constant 9.99999974E-6 : f32
    %146 = vector.broadcast %cst_108 : f32 to vector<8x1xf32>
    %147 = arith.addf %145, %146 : vector<8x1xf32>
    %148 = math.rsqrt %147 : vector<8x1xf32>
    %149 = vector.broadcast %139 : vector<8x1xf32> to vector<8x80xf32>
    %150 = arith.subf %130, %149 : vector<8x80xf32>
    %151 = arith.mulf %148, %131 : vector<8x1xf32>
    %152 = vector.broadcast %151 : vector<8x1xf32> to vector<8x80xf32>
    %153 = arith.mulf %150, %152 : vector<8x80xf32>
    %154 = vector.broadcast %132 : vector<8x1xf32> to vector<8x80xf32>
    %155 = arith.addf %153, %154 : vector<8x80xf32>
    %156 = arith.negf %155 : vector<8x80xf32>
    %157 = math.exp %156 : vector<8x80xf32>
    %cst_109 = arith.constant 1.000000e+00 : f32
    %158 = vector.broadcast %cst_109 : f32 to vector<8x80xf32>
    %159 = arith.addf %158, %157 : vector<8x80xf32>
    %160 = arith.divf %158, %159 : vector<8x80xf32>
    %161 = arith.mulf %155, %160 : vector<8x80xf32>
    %162 = vector.broadcast %1 : vector<1x80xf32> to vector<8x80xf32>
    %163 = arith.mulf %161, %162 : vector<8x80xf32>
    %c0_110 = arith.constant 0 : index
    %c7 = arith.constant 7 : index
    %164 = vector.load %arg3[%c0_110, %c7] : memref<24x128xf32, #tpu.memory_space<vmem>>, vector<8x1xf32>
    %c0_111 = arith.constant 0 : index
    %c11_112 = arith.constant 11 : index
    %165 = vector.load %arg7[%c0_111, %c11_112] : memref<8x384xf32, #tpu.memory_space<vmem>>, vector<8x80xf32>
    tpu.vector_store %arg7[%c0_111, %c11_112], %163 {strides = array<i32>} : memref<8x384xf32, #tpu.memory_space<vmem>>, vector<8x80xf32>,
    %c0_113 = arith.constant 0 : index
    %c0_114 = arith.constant 0 : index
    %166 = vector.load %arg7[%c0_113, %c0_114] : memref<8x384xf32, #tpu.memory_space<vmem>>, vector<8x80xf32>
    %c0_115 = arith.constant 0 : index
    %c112 = arith.constant 112 : index
    %167 = vector.load %arg2[%c0_115, %c112] : memref<24x512xf32, #tpu.memory_space<vmem>>, vector<8x8xf32>
    %cst_116 = arith.constant dense<0.000000e+00> : vector<8x80xf32>
    %168 = tpu.matmul %167, %166, %cst_116 {dimension_numbers = #tpu.dot_dimension_numbers<[1], [0], [0], [1], [0, 0, 1, 1], [], []>} : vector<8x8xf32>, vector<8x80xf32>, vector<8x80xf32> -> vector<8x80xf32>
    %c0_117 = arith.constant 0 : index
    %c1_118 = arith.constant 1 : index
    %169 = vector.load %arg7[%c0_117, %c1_118] : memref<8x384xf32, #tpu.memory_space<vmem>>, vector<8x80xf32>
    %c0_119 = arith.constant 0 : index
    %c120 = arith.constant 120 : index
    %170 = vector.load %arg2[%c0_119, %c120] : memref<24x512xf32, #tpu.memory_space<vmem>>, vector<8x8xf32>
    %cst_120 = arith.constant dense<0.000000e+00> : vector<8x80xf32>
    %171 = tpu.matmul %170, %169, %cst_120 {dimension_numbers = #tpu.dot_dimension_numbers<[1], [0], [0], [1], [0, 0, 1, 1], [], []>} : vector<8x8xf32>, vector<8x80xf32>, vector<8x80xf32> -> vector<8x80xf32>
    %172 = arith.addf %168, %171 : vector<8x80xf32>
    %c0_121 = arith.constant 0 : index
    %c2_122 = arith.constant 2 : index
    %173 = vector.load %arg7[%c0_121, %c2_122] : memref<8x384xf32, #tpu.memory_space<vmem>>, vector<8x80xf32>
    %c0_123 = arith.constant 0 : index
    %c128 = arith.constant 128 : index
    %174 = vector.load %arg2[%c0_123, %c128] : memref<24x512xf32, #tpu.memory_space<vmem>>, vector<8x8xf32>
    %cst_124 = arith.constant dense<0.000000e+00> : vector<8x80xf32>
    %175 = tpu.matmul %174, %173, %cst_124 {dimension_numbers = #tpu.dot_dimension_numbers<[1], [0], [0], [1], [0, 0, 1, 1], [], []>} : vector<8x8xf32>, vector<8x80xf32>, vector<8x80xf32> -> vector<8x80xf32>
    %176 = arith.addf %172, %175 : vector<8x80xf32>
    %c0_125 = arith.constant 0 : index
    %c10_126 = arith.constant 10 : index
    %177 = vector.load %arg7[%c0_125, %c10_126] : memref<8x384xf32, #tpu.memory_space<vmem>>, vector<8x80xf32>
    %c0_127 = arith.constant 0 : index
    %c136 = arith.constant 136 : index
    %178 = vector.load %arg2[%c0_127, %c136] : memref<24x512xf32, #tpu.memory_space<vmem>>, vector<8x8xf32>
    %cst_128 = arith.constant dense<0.000000e+00> : vector<8x80xf32>
    %179 = tpu.matmul %178, %177, %cst_128 {dimension_numbers = #tpu.dot_dimension_numbers<[1], [0], [0], [1], [0, 0, 1, 1], [], []>} : vector<8x8xf32>, vector<8x80xf32>, vector<8x80xf32> -> vector<8x80xf32>
    %180 = arith.addf %176, %179 : vector<8x80xf32>
    %c0_129 = arith.constant 0 : index
    %c11_130 = arith.constant 11 : index
    %181 = vector.load %arg7[%c0_129, %c11_130] : memref<8x384xf32, #tpu.memory_space<vmem>>, vector<8x80xf32>
    %c0_131 = arith.constant 0 : index
    %c144 = arith.constant 144 : index
    %182 = vector.load %arg2[%c0_131, %c144] : memref<24x512xf32, #tpu.memory_space<vmem>>, vector<8x8xf32>
    %cst_132 = arith.constant dense<0.000000e+00> : vector<8x80xf32>
    %183 = tpu.matmul %182, %181, %cst_132 {dimension_numbers = #tpu.dot_dimension_numbers<[1], [0], [0], [1], [0, 0, 1, 1], [], []>} : vector<8x8xf32>, vector<8x80xf32>, vector<8x80xf32> -> vector<8x80xf32>
    %184 = arith.addf %180, %183 : vector<8x80xf32>
    %c0_133 = arith.constant 0 : index
    %c12_134 = arith.constant 12 : index
    %185 = vector.load %arg7[%c0_133, %c12_134] : memref<8x384xf32, #tpu.memory_space<vmem>>, vector<8x80xf32>
    %c0_135 = arith.constant 0 : index
    %c152 = arith.constant 152 : index
    %186 = vector.load %arg2[%c0_135, %c152] : memref<24x512xf32, #tpu.memory_space<vmem>>, vector<8x8xf32>
    %cst_136 = arith.constant dense<0.000000e+00> : vector<8x80xf32>
    %187 = tpu.matmul %186, %185, %cst_136 {dimension_numbers = #tpu.dot_dimension_numbers<[1], [0], [0], [1], [0, 0, 1, 1], [], []>} : vector<8x8xf32>, vector<8x80xf32>, vector<8x80xf32> -> vector<8x80xf32>
    %188 = arith.addf %184, %187 : vector<8x80xf32>
    %c0_137 = arith.constant 0 : index
    %c20_138 = arith.constant 20 : index
    %189 = vector.load %arg7[%c0_137, %c20_138] : memref<8x384xf32, #tpu.memory_space<vmem>>, vector<8x80xf32>
    %c0_139 = arith.constant 0 : index
    %c160 = arith.constant 160 : index
    %190 = vector.load %arg2[%c0_139, %c160] : memref<24x512xf32, #tpu.memory_space<vmem>>, vector<8x8xf32>
    %cst_140 = arith.constant dense<0.000000e+00> : vector<8x80xf32>
    %191 = tpu.matmul %190, %189, %cst_140 {dimension_numbers = #tpu.dot_dimension_numbers<[1], [0], [0], [1], [0, 0, 1, 1], [], []>} : vector<8x8xf32>, vector<8x80xf32>, vector<8x80xf32> -> vector<8x80xf32>
    %192 = arith.addf %188, %191 : vector<8x80xf32>
    %c0_141 = arith.constant 0 : index
    %c21_142 = arith.constant 21 : index
    %193 = vector.load %arg7[%c0_141, %c21_142] : memref<8x384xf32, #tpu.memory_space<vmem>>, vector<8x80xf32>
    %c0_143 = arith.constant 0 : index
    %c168 = arith.constant 168 : index
    %194 = vector.load %arg2[%c0_143, %c168] : memref<24x512xf32, #tpu.memory_space<vmem>>, vector<8x8xf32>
    %cst_144 = arith.constant dense<0.000000e+00> : vector<8x80xf32>
    %195 = tpu.matmul %194, %193, %cst_144 {dimension_numbers = #tpu.dot_dimension_numbers<[1], [0], [0], [1], [0, 0, 1, 1], [], []>} : vector<8x8xf32>, vector<8x80xf32>, vector<8x80xf32> -> vector<8x80xf32>
    %196 = arith.addf %192, %195 : vector<8x80xf32>
    %c0_145 = arith.constant 0 : index
    %c22_146 = arith.constant 22 : index
    %197 = vector.load %arg7[%c0_145, %c22_146] : memref<8x384xf32, #tpu.memory_space<vmem>>, vector<8x80xf32>
    %c0_147 = arith.constant 0 : index
    %c176 = arith.constant 176 : index
    %198 = vector.load %arg2[%c0_147, %c176] : memref<24x512xf32, #tpu.memory_space<vmem>>, vector<8x8xf32>
    %cst_148 = arith.constant dense<0.000000e+00> : vector<8x80xf32>
    %199 = tpu.matmul %198, %197, %cst_148 {dimension_numbers = #tpu.dot_dimension_numbers<[1], [0], [0], [1], [0, 0, 1, 1], [], []>} : vector<8x8xf32>, vector<8x80xf32>, vector<8x80xf32> -> vector<8x80xf32>
    %200 = arith.addf %196, %199 : vector<8x80xf32>
    %201 = vector.broadcast %164 : vector<8x1xf32> to vector<8x80xf32>
    %202 = arith.addf %200, %201 : vector<8x80xf32>
    %203 = vector.broadcast %1 : vector<1x80xf32> to vector<8x80xf32>
    %204 = arith.mulf %202, %203 : vector<8x80xf32>
    %205 = arith.addf %204, %56 : vector<8x80xf32>
    %c0_149 = arith.constant 0 : index
    %c8_150 = arith.constant 8 : index
    %206 = vector.load %arg3[%c0_149, %c8_150] : memref<24x128xf32, #tpu.memory_space<vmem>>, vector<8x1xf32>
    %c0_151 = arith.constant 0 : index
    %c9 = arith.constant 9 : index
    %207 = vector.load %arg3[%c0_151, %c9] : memref<24x128xf32, #tpu.memory_space<vmem>>, vector<8x1xf32>
    %cst_152 = arith.constant dense<0.000000e+00> : vector<8x80xf32>
    %208 = tpu.matmul %0, %205, %cst_152 {dimension_numbers = #tpu.dot_dimension_numbers<[1], [0], [0], [1], [0, 0, 1, 1], [], []>} : vector<8x8xf32>, vector<8x80xf32>, vector<8x80xf32> -> vector<8x80xf32>
    %209 = arith.mulf %205, %205 : vector<8x80xf32>
    %cst_153 = arith.constant dense<0.000000e+00> : vector<8x80xf32>
    %210 = tpu.matmul %0, %209, %cst_153 {dimension_numbers = #tpu.dot_dimension_numbers<[1], [0], [0], [1], [0, 0, 1, 1], [], []>} : vector<8x8xf32>, vector<8x80xf32>, vector<8x80xf32> -> vector<8x80xf32>
    %cst_154 = arith.constant dense<0.000000e+00> : vector<8xf32>
    %211 = vector.multi_reduction <add>, %208, %cst_154 [1] : vector<8x80xf32> to vector<8xf32>
    %212 = vector.shape_cast %211 : vector<8xf32> to vector<8x1xf32>
    %cst_155 = arith.constant 7.812500e-03 : f32
    %213 = vector.broadcast %cst_155 : f32 to vector<8x1xf32>
    %214 = arith.mulf %212, %213 : vector<8x1xf32>
    %cst_156 = arith.constant dense<0.000000e+00> : vector<8xf32>
    %215 = vector.multi_reduction <add>, %210, %cst_156 [1] : vector<8x80xf32> to vector<8xf32>
    %216 = vector.shape_cast %215 : vector<8xf32> to vector<8x1xf32>
    %cst_157 = arith.constant 7.812500e-03 : f32
    %217 = vector.broadcast %cst_157 : f32 to vector<8x1xf32>
    %218 = arith.mulf %216, %217 : vector<8x1xf32>
    %219 = arith.mulf %214, %214 : vector<8x1xf32>
    %220 = arith.subf %218, %219 : vector<8x1xf32>
    %cst_158 = arith.constant 9.99999974E-6 : f32
    %221 = vector.broadcast %cst_158 : f32 to vector<8x1xf32>
    %222 = arith.addf %220, %221 : vector<8x1xf32>
    %223 = math.rsqrt %222 : vector<8x1xf32>
    %224 = vector.broadcast %214 : vector<8x1xf32> to vector<8x80xf32>
    %225 = arith.subf %205, %224 : vector<8x80xf32>
    %226 = arith.mulf %223, %206 : vector<8x1xf32>
    %227 = vector.broadcast %226 : vector<8x1xf32> to vector<8x80xf32>
    %228 = arith.mulf %225, %227 : vector<8x80xf32>
    %229 = vector.broadcast %207 : vector<8x1xf32> to vector<8x80xf32>
    %230 = arith.addf %228, %229 : vector<8x80xf32>
    %231 = vector.broadcast %1 : vector<1x80xf32> to vector<8x80xf32>
    %232 = arith.mulf %230, %231 : vector<8x80xf32>
    %c0_159 = arith.constant 0 : index
    %c184 = arith.constant 184 : index
    %233 = vector.load %arg2[%c0_159, %c184] : memref<24x512xf32, #tpu.memory_space<vmem>>, vector<24x8xf32>
    %cst_160 = arith.constant dense<0.000000e+00> : vector<24x80xf32>
    %234 = tpu.matmul %233, %232, %cst_160 {dimension_numbers = #tpu.dot_dimension_numbers<[1], [0], [0], [1], [0, 0, 1, 1], [], []>} : vector<24x8xf32>, vector<8x80xf32>, vector<24x80xf32> -> vector<24x80xf32>
    %c0_161 = arith.constant 0 : index
    %c10_162 = arith.constant 10 : index
    %235 = vector.load %arg3[%c0_161, %c10_162] : memref<24x128xf32, #tpu.memory_space<vmem>>, vector<24x1xf32>
    %236 = vector.broadcast %235 : vector<24x1xf32> to vector<24x80xf32>
    %237 = arith.addf %234, %236 : vector<24x80xf32>
    %c0_163 = arith.constant 0 : index
    %c192 = arith.constant 192 : index
    %238 = vector.load %arg2[%c0_163, %c192] : memref<24x512xf32, #tpu.memory_space<vmem>>, vector<8x8xf32>
    %cst_164 = arith.constant 0.000000e+00 : f32
    %239 = vector.broadcast %cst_164 : f32 to vector<1x80xf32>
    %240 = arith.cmpf ogt, %1, %239 : vector<1x80xf32>
    %241 = vector.extract_strided_slice %237 {offsets = [0, 0], sizes = [4, 80], strides = [1, 1]} : vector<24x80xf32> to vector<4x80xf32>
    %242 = vector.extract_strided_slice %237 {offsets = [8, 0], sizes = [4, 80], strides = [1, 1]} : vector<24x80xf32> to vector<4x80xf32>
    %243 = vector.extract_strided_slice %237 {offsets = [16, 0], sizes = [4, 80], strides = [1, 1]} : vector<24x80xf32> to vector<4x80xf32>
    %cst_165 = arith.constant dense<0.000000e+00> : vector<80x80xf32>
    %244 = tpu.matmul %241, %242, %cst_165 {dimension_numbers = #tpu.dot_dimension_numbers<[0], [0], [1], [1], [0, 1, 1, 1], [], []>} : vector<4x80xf32>, vector<4x80xf32>, vector<80x80xf32> -> vector<80x80xf32>
    %cst_166 = arith.constant 5.000000e-01 : f32
    %245 = vector.broadcast %cst_166 : f32 to vector<80x80xf32>
    %246 = arith.mulf %244, %245 : vector<80x80xf32>
    %cst_167 = arith.constant -1.000000e+30 : f32
    %247 = vector.shape_cast %240 : vector<1x80xi1> to vector<1x80xi1>
    %248 = vector.broadcast %247 : vector<1x80xi1> to vector<80x80xi1>
    %249 = vector.broadcast %cst_167 : f32 to vector<80x80xf32>
    %250 = arith.select %248, %246, %249 : vector<80x80xi1>, vector<80x80xf32>
    %cst_168 = arith.constant dense<0xFF800000> : vector<80xf32>
    %251 = vector.multi_reduction <maximumf>, %250, %cst_168 [1] : vector<80x80xf32> to vector<80xf32>
    %252 = vector.shape_cast %251 : vector<80xf32> to vector<80x1xf32>
    %253 = vector.broadcast %252 : vector<80x1xf32> to vector<80x80xf32>
    %254 = arith.subf %250, %253 : vector<80x80xf32>
    %255 = math.exp %254 : vector<80x80xf32>
    %cst_169 = arith.constant dense<0.000000e+00> : vector<80xf32>
    %256 = vector.multi_reduction <add>, %255, %cst_169 [1] : vector<80x80xf32> to vector<80xf32>
    %257 = vector.shape_cast %256 : vector<80xf32> to vector<80x1xf32>
    %258 = tpu.reciprocal %257 {approx = true} : vector<80x1xf32> -> vector<80x1xf32>
    %259 = vector.broadcast %258 : vector<80x1xf32> to vector<80x80xf32>
    %260 = arith.mulf %255, %259 : vector<80x80xf32>
    %cst_170 = arith.constant dense<0.000000e+00> : vector<80x4xf32>
    %261 = tpu.matmul %260, %243, %cst_170 {dimension_numbers = #tpu.dot_dimension_numbers<[1], [1], [0], [0], [0, 0, 1, 0], [], []>} : vector<80x80xf32>, vector<4x80xf32>, vector<80x4xf32> -> vector<80x4xf32>
    %262 = vector.extract_strided_slice %238 {offsets = [0, 0], sizes = [4, 8], strides = [1, 1]} : vector<8x8xf32> to vector<4x8xf32>
    %cst_171 = arith.constant dense<0.000000e+00> : vector<80x8xf32>
    %263 = tpu.matmul %261, %262, %cst_171 {dimension_numbers = #tpu.dot_dimension_numbers<[1], [0], [0], [1], [0, 0, 1, 1], [], []>} : vector<80x4xf32>, vector<4x8xf32>, vector<80x8xf32> -> vector<80x8xf32>
    %264 = vector.extract_strided_slice %237 {offsets = [4, 0], sizes = [4, 80], strides = [1, 1]} : vector<24x80xf32> to vector<4x80xf32>
    %265 = vector.extract_strided_slice %237 {offsets = [12, 0], sizes = [4, 80], strides = [1, 1]} : vector<24x80xf32> to vector<4x80xf32>
    %266 = vector.extract_strided_slice %237 {offsets = [20, 0], sizes = [4, 80], strides = [1, 1]} : vector<24x80xf32> to vector<4x80xf32>
    %cst_172 = arith.constant dense<0.000000e+00> : vector<80x80xf32>
    %267 = tpu.matmul %264, %265, %cst_172 {dimension_numbers = #tpu.dot_dimension_numbers<[0], [0], [1], [1], [0, 1, 1, 1], [], []>} : vector<4x80xf32>, vector<4x80xf32>, vector<80x80xf32> -> vector<80x80xf32>
    %cst_173 = arith.constant 5.000000e-01 : f32
    %268 = vector.broadcast %cst_173 : f32 to vector<80x80xf32>
    %269 = arith.mulf %267, %268 : vector<80x80xf32>
    %cst_174 = arith.constant -1.000000e+30 : f32
    %270 = vector.shape_cast %240 : vector<1x80xi1> to vector<1x80xi1>
    %271 = vector.broadcast %270 : vector<1x80xi1> to vector<80x80xi1>
    %272 = vector.broadcast %cst_174 : f32 to vector<80x80xf32>
    %273 = arith.select %271, %269, %272 : vector<80x80xi1>, vector<80x80xf32>
    %cst_175 = arith.constant dense<0xFF800000> : vector<80xf32>
    %274 = vector.multi_reduction <maximumf>, %273, %cst_175 [1] : vector<80x80xf32> to vector<80xf32>
    %275 = vector.shape_cast %274 : vector<80xf32> to vector<80x1xf32>
    %276 = vector.broadcast %275 : vector<80x1xf32> to vector<80x80xf32>
    %277 = arith.subf %273, %276 : vector<80x80xf32>
    %278 = math.exp %277 : vector<80x80xf32>
    %cst_176 = arith.constant dense<0.000000e+00> : vector<80xf32>
    %279 = vector.multi_reduction <add>, %278, %cst_176 [1] : vector<80x80xf32> to vector<80xf32>
    %280 = vector.shape_cast %279 : vector<80xf32> to vector<80x1xf32>
    %281 = tpu.reciprocal %280 {approx = true} : vector<80x1xf32> -> vector<80x1xf32>
    %282 = vector.broadcast %281 : vector<80x1xf32> to vector<80x80xf32>
    %283 = arith.mulf %278, %282 : vector<80x80xf32>
    %cst_177 = arith.constant dense<0.000000e+00> : vector<80x4xf32>
    %284 = tpu.matmul %283, %266, %cst_177 {dimension_numbers = #tpu.dot_dimension_numbers<[1], [1], [0], [0], [0, 0, 1, 0], [], []>} : vector<80x80xf32>, vector<4x80xf32>, vector<80x4xf32> -> vector<80x4xf32>
    %285 = vector.extract_strided_slice %238 {offsets = [4, 0], sizes = [4, 8], strides = [1, 1]} : vector<8x8xf32> to vector<4x8xf32>
    %cst_178 = arith.constant dense<0.000000e+00> : vector<80x8xf32>
    %286 = tpu.matmul %284, %285, %cst_178 {dimension_numbers = #tpu.dot_dimension_numbers<[1], [0], [0], [1], [0, 0, 1, 1], [], []>} : vector<80x4xf32>, vector<4x8xf32>, vector<80x8xf32> -> vector<80x8xf32>
    %287 = arith.addf %263, %286 : vector<80x8xf32>
    %288 = tpu.transpose %287, [1, 0] : vector<80x8xf32> -> vector<8x80xf32>
    %c0_179 = arith.constant 0 : index
    %c11_180 = arith.constant 11 : index
    %289 = vector.load %arg3[%c0_179, %c11_180] : memref<24x128xf32, #tpu.memory_space<vmem>>, vector<8x1xf32>
    %290 = vector.broadcast %289 : vector<8x1xf32> to vector<8x80xf32>
    %291 = arith.addf %288, %290 : vector<8x80xf32>
    %292 = arith.addf %291, %205 : vector<8x80xf32>
    %c0_181 = arith.constant 0 : index
    %c0_182 = arith.constant 0 : index
    %293 = vector.load %arg5[%c0_181, %c0_182] : memref<80x288xf32, #tpu.memory_space<vmem>>, vector<80x288xf32>
    %cst_183 = arith.constant dense<0.000000e+00> : vector<8x288xf32>
    %294 = tpu.matmul %292, %293, %cst_183 {dimension_numbers = #tpu.dot_dimension_numbers<[1], [0], [0], [1], [0, 0, 1, 1], [], []>} : vector<8x80xf32>, vector<80x288xf32>, vector<8x288xf32> -> vector<8x288xf32>
    %cst_184 = arith.constant 0.000000e+00 : f32
    %295 = vector.broadcast %cst_184 : f32 to vector<8x19xf32>
    %c0_185 = arith.constant 0 : index
    %c0_186 = arith.constant 0 : index
    %296 = vector.load %arg7[%c0_185, %c0_186] : memref<8x384xf32, #tpu.memory_space<vmem>>, vector<8x19xf32>
    tpu.vector_store %arg7[%c0_185, %c0_186], %295 {strides = array<i32>} : memref<8x384xf32, #tpu.memory_space<vmem>>, vector<8x19xf32>,
    %c0_187 = arith.constant 0 : index
    %c12_188 = arith.constant 12 : index
    %297 = vector.load %arg3[%c0_187, %c12_188] : memref<24x128xf32, #tpu.memory_space<vmem>>, vector<8x1xf32>
    %c0_189 = arith.constant 0 : index
    %c19 = arith.constant 19 : index
    %298 = vector.load %arg7[%c0_189, %c19] : memref<8x384xf32, #tpu.memory_space<vmem>>, vector<8x288xf32>
    tpu.vector_store %arg7[%c0_189, %c19], %294 {strides = array<i32>} : memref<8x384xf32, #tpu.memory_space<vmem>>, vector<8x288xf32>,
    %c0_190 = arith.constant 0 : index
    %c0_191 = arith.constant 0 : index
    %299 = vector.load %arg7[%c0_190, %c0_191] : memref<8x384xf32, #tpu.memory_space<vmem>>, vector<8x288xf32>
    %c0_192 = arith.constant 0 : index
    %c200 = arith.constant 200 : index
    %300 = vector.load %arg2[%c0_192, %c200] : memref<24x512xf32, #tpu.memory_space<vmem>>, vector<8x8xf32>
    %cst_193 = arith.constant dense<0.000000e+00> : vector<8x288xf32>
    %301 = tpu.matmul %300, %299, %cst_193 {dimension_numbers = #tpu.dot_dimension_numbers<[1], [0], [0], [1], [0, 0, 1, 1], [], []>} : vector<8x8xf32>, vector<8x288xf32>, vector<8x288xf32> -> vector<8x288xf32>
    %c0_194 = arith.constant 0 : index
    %c1_195 = arith.constant 1 : index
    %302 = vector.load %arg7[%c0_194, %c1_195] : memref<8x384xf32, #tpu.memory_space<vmem>>, vector<8x288xf32>
    %c0_196 = arith.constant 0 : index
    %c208 = arith.constant 208 : index
    %303 = vector.load %arg2[%c0_196, %c208] : memref<24x512xf32, #tpu.memory_space<vmem>>, vector<8x8xf32>
    %cst_197 = arith.constant dense<0.000000e+00> : vector<8x288xf32>
    %304 = tpu.matmul %303, %302, %cst_197 {dimension_numbers = #tpu.dot_dimension_numbers<[1], [0], [0], [1], [0, 0, 1, 1], [], []>} : vector<8x8xf32>, vector<8x288xf32>, vector<8x288xf32> -> vector<8x288xf32>
    %305 = arith.addf %301, %304 : vector<8x288xf32>
    %c0_198 = arith.constant 0 : index
    %c2_199 = arith.constant 2 : index
    %306 = vector.load %arg7[%c0_198, %c2_199] : memref<8x384xf32, #tpu.memory_space<vmem>>, vector<8x288xf32>
    %c0_200 = arith.constant 0 : index
    %c216 = arith.constant 216 : index
    %307 = vector.load %arg2[%c0_200, %c216] : memref<24x512xf32, #tpu.memory_space<vmem>>, vector<8x8xf32>
    %cst_201 = arith.constant dense<0.000000e+00> : vector<8x288xf32>
    %308 = tpu.matmul %307, %306, %cst_201 {dimension_numbers = #tpu.dot_dimension_numbers<[1], [0], [0], [1], [0, 0, 1, 1], [], []>} : vector<8x8xf32>, vector<8x288xf32>, vector<8x288xf32> -> vector<8x288xf32>
    %309 = arith.addf %305, %308 : vector<8x288xf32>
    %c0_202 = arith.constant 0 : index
    %c18 = arith.constant 18 : index
    %310 = vector.load %arg7[%c0_202, %c18] : memref<8x384xf32, #tpu.memory_space<vmem>>, vector<8x288xf32>
    %c0_203 = arith.constant 0 : index
    %c224 = arith.constant 224 : index
    %311 = vector.load %arg2[%c0_203, %c224] : memref<24x512xf32, #tpu.memory_space<vmem>>, vector<8x8xf32>
    %cst_204 = arith.constant dense<0.000000e+00> : vector<8x288xf32>
    %312 = tpu.matmul %311, %310, %cst_204 {dimension_numbers = #tpu.dot_dimension_numbers<[1], [0], [0], [1], [0, 0, 1, 1], [], []>} : vector<8x8xf32>, vector<8x288xf32>, vector<8x288xf32> -> vector<8x288xf32>
    %313 = arith.addf %309, %312 : vector<8x288xf32>
    %c0_205 = arith.constant 0 : index
    %c19_206 = arith.constant 19 : index
    %314 = vector.load %arg7[%c0_205, %c19_206] : memref<8x384xf32, #tpu.memory_space<vmem>>, vector<8x288xf32>
    %c0_207 = arith.constant 0 : index
    %c232 = arith.constant 232 : index
    %315 = vector.load %arg2[%c0_207, %c232] : memref<24x512xf32, #tpu.memory_space<vmem>>, vector<8x8xf32>
    %cst_208 = arith.constant dense<0.000000e+00> : vector<8x288xf32>
    %316 = tpu.matmul %315, %314, %cst_208 {dimension_numbers = #tpu.dot_dimension_numbers<[1], [0], [0], [1], [0, 0, 1, 1], [], []>} : vector<8x8xf32>, vector<8x288xf32>, vector<8x288xf32> -> vector<8x288xf32>
    %317 = arith.addf %313, %316 : vector<8x288xf32>
    %c0_209 = arith.constant 0 : index
    %c20_210 = arith.constant 20 : index
    %318 = vector.load %arg7[%c0_209, %c20_210] : memref<8x384xf32, #tpu.memory_space<vmem>>, vector<8x288xf32>
    %c0_211 = arith.constant 0 : index
    %c240 = arith.constant 240 : index
    %319 = vector.load %arg2[%c0_211, %c240] : memref<24x512xf32, #tpu.memory_space<vmem>>, vector<8x8xf32>
    %cst_212 = arith.constant dense<0.000000e+00> : vector<8x288xf32>
    %320 = tpu.matmul %319, %318, %cst_212 {dimension_numbers = #tpu.dot_dimension_numbers<[1], [0], [0], [1], [0, 0, 1, 1], [], []>} : vector<8x8xf32>, vector<8x288xf32>, vector<8x288xf32> -> vector<8x288xf32>
    %321 = arith.addf %317, %320 : vector<8x288xf32>
    %c0_213 = arith.constant 0 : index
    %c36_214 = arith.constant 36 : index
    %322 = vector.load %arg7[%c0_213, %c36_214] : memref<8x384xf32, #tpu.memory_space<vmem>>, vector<8x288xf32>
    %c0_215 = arith.constant 0 : index
    %c248 = arith.constant 248 : index
    %323 = vector.load %arg2[%c0_215, %c248] : memref<24x512xf32, #tpu.memory_space<vmem>>, vector<8x8xf32>
    %cst_216 = arith.constant dense<0.000000e+00> : vector<8x288xf32>
    %324 = tpu.matmul %323, %322, %cst_216 {dimension_numbers = #tpu.dot_dimension_numbers<[1], [0], [0], [1], [0, 0, 1, 1], [], []>} : vector<8x8xf32>, vector<8x288xf32>, vector<8x288xf32> -> vector<8x288xf32>
    %325 = arith.addf %321, %324 : vector<8x288xf32>
    %c0_217 = arith.constant 0 : index
    %c37 = arith.constant 37 : index
    %326 = vector.load %arg7[%c0_217, %c37] : memref<8x384xf32, #tpu.memory_space<vmem>>, vector<8x288xf32>
    %c0_218 = arith.constant 0 : index
    %c256 = arith.constant 256 : index
    %327 = vector.load %arg2[%c0_218, %c256] : memref<24x512xf32, #tpu.memory_space<vmem>>, vector<8x8xf32>
    %cst_219 = arith.constant dense<0.000000e+00> : vector<8x288xf32>
    %328 = tpu.matmul %327, %326, %cst_219 {dimension_numbers = #tpu.dot_dimension_numbers<[1], [0], [0], [1], [0, 0, 1, 1], [], []>} : vector<8x8xf32>, vector<8x288xf32>, vector<8x288xf32> -> vector<8x288xf32>
    %329 = arith.addf %325, %328 : vector<8x288xf32>
    %c0_220 = arith.constant 0 : index
    %c38 = arith.constant 38 : index
    %330 = vector.load %arg7[%c0_220, %c38] : memref<8x384xf32, #tpu.memory_space<vmem>>, vector<8x288xf32>
    %c0_221 = arith.constant 0 : index
    %c264 = arith.constant 264 : index
    %331 = vector.load %arg2[%c0_221, %c264] : memref<24x512xf32, #tpu.memory_space<vmem>>, vector<8x8xf32>
    %cst_222 = arith.constant dense<0.000000e+00> : vector<8x288xf32>
    %332 = tpu.matmul %331, %330, %cst_222 {dimension_numbers = #tpu.dot_dimension_numbers<[1], [0], [0], [1], [0, 0, 1, 1], [], []>} : vector<8x8xf32>, vector<8x288xf32>, vector<8x288xf32> -> vector<8x288xf32>
    %333 = arith.addf %329, %332 : vector<8x288xf32>
    %334 = vector.broadcast %297 : vector<8x1xf32> to vector<8x288xf32>
    %335 = arith.addf %333, %334 : vector<8x288xf32>
    %336 = vector.broadcast %2 : vector<1x288xf32> to vector<8x288xf32>
    %337 = arith.mulf %335, %336 : vector<8x288xf32>
    %c0_223 = arith.constant 0 : index
    %c13 = arith.constant 13 : index
    %338 = vector.load %arg3[%c0_223, %c13] : memref<24x128xf32, #tpu.memory_space<vmem>>, vector<8x1xf32>
    %c0_224 = arith.constant 0 : index
    %c14 = arith.constant 14 : index
    %339 = vector.load %arg3[%c0_224, %c14] : memref<24x128xf32, #tpu.memory_space<vmem>>, vector<8x1xf32>
    %cst_225 = arith.constant dense<0.000000e+00> : vector<8x288xf32>
    %340 = tpu.matmul %0, %337, %cst_225 {dimension_numbers = #tpu.dot_dimension_numbers<[1], [0], [0], [1], [0, 0, 1, 1], [], []>} : vector<8x8xf32>, vector<8x288xf32>, vector<8x288xf32> -> vector<8x288xf32>
    %341 = arith.mulf %337, %337 : vector<8x288xf32>
    %cst_226 = arith.constant dense<0.000000e+00> : vector<8x288xf32>
    %342 = tpu.matmul %0, %341, %cst_226 {dimension_numbers = #tpu.dot_dimension_numbers<[1], [0], [0], [1], [0, 0, 1, 1], [], []>} : vector<8x8xf32>, vector<8x288xf32>, vector<8x288xf32> -> vector<8x288xf32>
    %cst_227 = arith.constant dense<0.000000e+00> : vector<8xf32>
    %343 = vector.multi_reduction <add>, %340, %cst_227 [1] : vector<8x288xf32> to vector<8xf32>
    %344 = vector.shape_cast %343 : vector<8xf32> to vector<8x1xf32>
    %cst_228 = arith.constant 0.001953125 : f32
    %345 = vector.broadcast %cst_228 : f32 to vector<8x1xf32>
    %346 = arith.mulf %344, %345 : vector<8x1xf32>
    %cst_229 = arith.constant dense<0.000000e+00> : vector<8xf32>
    %347 = vector.multi_reduction <add>, %342, %cst_229 [1] : vector<8x288xf32> to vector<8xf32>
    %348 = vector.shape_cast %347 : vector<8xf32> to vector<8x1xf32>
    %cst_230 = arith.constant 0.001953125 : f32
    %349 = vector.broadcast %cst_230 : f32 to vector<8x1xf32>
    %350 = arith.mulf %348, %349 : vector<8x1xf32>
    %351 = arith.mulf %346, %346 : vector<8x1xf32>
    %352 = arith.subf %350, %351 : vector<8x1xf32>
    %cst_231 = arith.constant 9.99999974E-6 : f32
    %353 = vector.broadcast %cst_231 : f32 to vector<8x1xf32>
    %354 = arith.addf %352, %353 : vector<8x1xf32>
    %355 = math.rsqrt %354 : vector<8x1xf32>
    %356 = vector.broadcast %346 : vector<8x1xf32> to vector<8x288xf32>
    %357 = arith.subf %337, %356 : vector<8x288xf32>
    %358 = arith.mulf %355, %338 : vector<8x1xf32>
    %359 = vector.broadcast %358 : vector<8x1xf32> to vector<8x288xf32>
    %360 = arith.mulf %357, %359 : vector<8x288xf32>
    %361 = vector.broadcast %339 : vector<8x1xf32> to vector<8x288xf32>
    %362 = arith.addf %360, %361 : vector<8x288xf32>
    %363 = arith.negf %362 : vector<8x288xf32>
    %364 = math.exp %363 : vector<8x288xf32>
    %cst_232 = arith.constant 1.000000e+00 : f32
    %365 = vector.broadcast %cst_232 : f32 to vector<8x288xf32>
    %366 = arith.addf %365, %364 : vector<8x288xf32>
    %367 = arith.divf %365, %366 : vector<8x288xf32>
    %368 = arith.mulf %362, %367 : vector<8x288xf32>
    %369 = vector.broadcast %2 : vector<1x288xf32> to vector<8x288xf32>
    %370 = arith.mulf %368, %369 : vector<8x288xf32>
    %c0_233 = arith.constant 0 : index
    %c15 = arith.constant 15 : index
    %371 = vector.load %arg3[%c0_233, %c15] : memref<24x128xf32, #tpu.memory_space<vmem>>, vector<8x1xf32>
    %c0_234 = arith.constant 0 : index
    %c19_235 = arith.constant 19 : index
    %372 = vector.load %arg7[%c0_234, %c19_235] : memref<8x384xf32, #tpu.memory_space<vmem>>, vector<8x288xf32>
    tpu.vector_store %arg7[%c0_234, %c19_235], %370 {strides = array<i32>} : memref<8x384xf32, #tpu.memory_space<vmem>>, vector<8x288xf32>,
    %c0_236 = arith.constant 0 : index
    %c0_237 = arith.constant 0 : index
    %373 = vector.load %arg7[%c0_236, %c0_237] : memref<8x384xf32, #tpu.memory_space<vmem>>, vector<8x288xf32>
    %c0_238 = arith.constant 0 : index
    %c272 = arith.constant 272 : index
    %374 = vector.load %arg2[%c0_238, %c272] : memref<24x512xf32, #tpu.memory_space<vmem>>, vector<8x8xf32>
    %cst_239 = arith.constant dense<0.000000e+00> : vector<8x288xf32>
    %375 = tpu.matmul %374, %373, %cst_239 {dimension_numbers = #tpu.dot_dimension_numbers<[1], [0], [0], [1], [0, 0, 1, 1], [], []>} : vector<8x8xf32>, vector<8x288xf32>, vector<8x288xf32> -> vector<8x288xf32>
    %c0_240 = arith.constant 0 : index
    %c1_241 = arith.constant 1 : index
    %376 = vector.load %arg7[%c0_240, %c1_241] : memref<8x384xf32, #tpu.memory_space<vmem>>, vector<8x288xf32>
    %c0_242 = arith.constant 0 : index
    %c280 = arith.constant 280 : index
    %377 = vector.load %arg2[%c0_242, %c280] : memref<24x512xf32, #tpu.memory_space<vmem>>, vector<8x8xf32>
    %cst_243 = arith.constant dense<0.000000e+00> : vector<8x288xf32>
    %378 = tpu.matmul %377, %376, %cst_243 {dimension_numbers = #tpu.dot_dimension_numbers<[1], [0], [0], [1], [0, 0, 1, 1], [], []>} : vector<8x8xf32>, vector<8x288xf32>, vector<8x288xf32> -> vector<8x288xf32>
    %379 = arith.addf %375, %378 : vector<8x288xf32>
    %c0_244 = arith.constant 0 : index
    %c2_245 = arith.constant 2 : index
    %380 = vector.load %arg7[%c0_244, %c2_245] : memref<8x384xf32, #tpu.memory_space<vmem>>, vector<8x288xf32>
    %c0_246 = arith.constant 0 : index
    %c288 = arith.constant 288 : index
    %381 = vector.load %arg2[%c0_246, %c288] : memref<24x512xf32, #tpu.memory_space<vmem>>, vector<8x8xf32>
    %cst_247 = arith.constant dense<0.000000e+00> : vector<8x288xf32>
    %382 = tpu.matmul %381, %380, %cst_247 {dimension_numbers = #tpu.dot_dimension_numbers<[1], [0], [0], [1], [0, 0, 1, 1], [], []>} : vector<8x8xf32>, vector<8x288xf32>, vector<8x288xf32> -> vector<8x288xf32>
    %383 = arith.addf %379, %382 : vector<8x288xf32>
    %c0_248 = arith.constant 0 : index
    %c18_249 = arith.constant 18 : index
    %384 = vector.load %arg7[%c0_248, %c18_249] : memref<8x384xf32, #tpu.memory_space<vmem>>, vector<8x288xf32>
    %c0_250 = arith.constant 0 : index
    %c296 = arith.constant 296 : index
    %385 = vector.load %arg2[%c0_250, %c296] : memref<24x512xf32, #tpu.memory_space<vmem>>, vector<8x8xf32>
    %cst_251 = arith.constant dense<0.000000e+00> : vector<8x288xf32>
    %386 = tpu.matmul %385, %384, %cst_251 {dimension_numbers = #tpu.dot_dimension_numbers<[1], [0], [0], [1], [0, 0, 1, 1], [], []>} : vector<8x8xf32>, vector<8x288xf32>, vector<8x288xf32> -> vector<8x288xf32>
    %387 = arith.addf %383, %386 : vector<8x288xf32>
    %c0_252 = arith.constant 0 : index
    %c19_253 = arith.constant 19 : index
    %388 = vector.load %arg7[%c0_252, %c19_253] : memref<8x384xf32, #tpu.memory_space<vmem>>, vector<8x288xf32>
    %c0_254 = arith.constant 0 : index
    %c304 = arith.constant 304 : index
    %389 = vector.load %arg2[%c0_254, %c304] : memref<24x512xf32, #tpu.memory_space<vmem>>, vector<8x8xf32>
    %cst_255 = arith.constant dense<0.000000e+00> : vector<8x288xf32>
    %390 = tpu.matmul %389, %388, %cst_255 {dimension_numbers = #tpu.dot_dimension_numbers<[1], [0], [0], [1], [0, 0, 1, 1], [], []>} : vector<8x8xf32>, vector<8x288xf32>, vector<8x288xf32> -> vector<8x288xf32>
    %391 = arith.addf %387, %390 : vector<8x288xf32>
    %c0_256 = arith.constant 0 : index
    %c20_257 = arith.constant 20 : index
    %392 = vector.load %arg7[%c0_256, %c20_257] : memref<8x384xf32, #tpu.memory_space<vmem>>, vector<8x288xf32>
    %c0_258 = arith.constant 0 : index
    %c312 = arith.constant 312 : index
    %393 = vector.load %arg2[%c0_258, %c312] : memref<24x512xf32, #tpu.memory_space<vmem>>, vector<8x8xf32>
    %cst_259 = arith.constant dense<0.000000e+00> : vector<8x288xf32>
    %394 = tpu.matmul %393, %392, %cst_259 {dimension_numbers = #tpu.dot_dimension_numbers<[1], [0], [0], [1], [0, 0, 1, 1], [], []>} : vector<8x8xf32>, vector<8x288xf32>, vector<8x288xf32> -> vector<8x288xf32>
    %395 = arith.addf %391, %394 : vector<8x288xf32>
    %c0_260 = arith.constant 0 : index
    %c36_261 = arith.constant 36 : index
    %396 = vector.load %arg7[%c0_260, %c36_261] : memref<8x384xf32, #tpu.memory_space<vmem>>, vector<8x288xf32>
    %c0_262 = arith.constant 0 : index
    %c320 = arith.constant 320 : index
    %397 = vector.load %arg2[%c0_262, %c320] : memref<24x512xf32, #tpu.memory_space<vmem>>, vector<8x8xf32>
    %cst_263 = arith.constant dense<0.000000e+00> : vector<8x288xf32>
    %398 = tpu.matmul %397, %396, %cst_263 {dimension_numbers = #tpu.dot_dimension_numbers<[1], [0], [0], [1], [0, 0, 1, 1], [], []>} : vector<8x8xf32>, vector<8x288xf32>, vector<8x288xf32> -> vector<8x288xf32>
    %399 = arith.addf %395, %398 : vector<8x288xf32>
    %c0_264 = arith.constant 0 : index
    %c37_265 = arith.constant 37 : index
    %400 = vector.load %arg7[%c0_264, %c37_265] : memref<8x384xf32, #tpu.memory_space<vmem>>, vector<8x288xf32>
    %c0_266 = arith.constant 0 : index
    %c328 = arith.constant 328 : index
    %401 = vector.load %arg2[%c0_266, %c328] : memref<24x512xf32, #tpu.memory_space<vmem>>, vector<8x8xf32>
    %cst_267 = arith.constant dense<0.000000e+00> : vector<8x288xf32>
    %402 = tpu.matmul %401, %400, %cst_267 {dimension_numbers = #tpu.dot_dimension_numbers<[1], [0], [0], [1], [0, 0, 1, 1], [], []>} : vector<8x8xf32>, vector<8x288xf32>, vector<8x288xf32> -> vector<8x288xf32>
    %403 = arith.addf %399, %402 : vector<8x288xf32>
    %c0_268 = arith.constant 0 : index
    %c38_269 = arith.constant 38 : index
    %404 = vector.load %arg7[%c0_268, %c38_269] : memref<8x384xf32, #tpu.memory_space<vmem>>, vector<8x288xf32>
    %c0_270 = arith.constant 0 : index
    %c336 = arith.constant 336 : index
    %405 = vector.load %arg2[%c0_270, %c336] : memref<24x512xf32, #tpu.memory_space<vmem>>, vector<8x8xf32>
    %cst_271 = arith.constant dense<0.000000e+00> : vector<8x288xf32>
    %406 = tpu.matmul %405, %404, %cst_271 {dimension_numbers = #tpu.dot_dimension_numbers<[1], [0], [0], [1], [0, 0, 1, 1], [], []>} : vector<8x8xf32>, vector<8x288xf32>, vector<8x288xf32> -> vector<8x288xf32>
    %407 = arith.addf %403, %406 : vector<8x288xf32>
    %408 = vector.broadcast %371 : vector<8x1xf32> to vector<8x288xf32>
    %409 = arith.addf %407, %408 : vector<8x288xf32>
    %410 = vector.broadcast %2 : vector<1x288xf32> to vector<8x288xf32>
    %411 = arith.mulf %409, %410 : vector<8x288xf32>
    %c0_272 = arith.constant 0 : index
    %c16_273 = arith.constant 16 : index
    %412 = vector.load %arg3[%c0_272, %c16_273] : memref<24x128xf32, #tpu.memory_space<vmem>>, vector<8x1xf32>
    %c0_274 = arith.constant 0 : index
    %c17 = arith.constant 17 : index
    %413 = vector.load %arg3[%c0_274, %c17] : memref<24x128xf32, #tpu.memory_space<vmem>>, vector<8x1xf32>
    %cst_275 = arith.constant dense<0.000000e+00> : vector<8x288xf32>
    %414 = tpu.matmul %0, %411, %cst_275 {dimension_numbers = #tpu.dot_dimension_numbers<[1], [0], [0], [1], [0, 0, 1, 1], [], []>} : vector<8x8xf32>, vector<8x288xf32>, vector<8x288xf32> -> vector<8x288xf32>
    %415 = arith.mulf %411, %411 : vector<8x288xf32>
    %cst_276 = arith.constant dense<0.000000e+00> : vector<8x288xf32>
    %416 = tpu.matmul %0, %415, %cst_276 {dimension_numbers = #tpu.dot_dimension_numbers<[1], [0], [0], [1], [0, 0, 1, 1], [], []>} : vector<8x8xf32>, vector<8x288xf32>, vector<8x288xf32> -> vector<8x288xf32>
    %cst_277 = arith.constant dense<0.000000e+00> : vector<8xf32>
    %417 = vector.multi_reduction <add>, %414, %cst_277 [1] : vector<8x288xf32> to vector<8xf32>
    %418 = vector.shape_cast %417 : vector<8xf32> to vector<8x1xf32>
    %cst_278 = arith.constant 0.001953125 : f32
    %419 = vector.broadcast %cst_278 : f32 to vector<8x1xf32>
    %420 = arith.mulf %418, %419 : vector<8x1xf32>
    %cst_279 = arith.constant dense<0.000000e+00> : vector<8xf32>
    %421 = vector.multi_reduction <add>, %416, %cst_279 [1] : vector<8x288xf32> to vector<8xf32>
    %422 = vector.shape_cast %421 : vector<8xf32> to vector<8x1xf32>
    %cst_280 = arith.constant 0.001953125 : f32
    %423 = vector.broadcast %cst_280 : f32 to vector<8x1xf32>
    %424 = arith.mulf %422, %423 : vector<8x1xf32>
    %425 = arith.mulf %420, %420 : vector<8x1xf32>
    %426 = arith.subf %424, %425 : vector<8x1xf32>
    %cst_281 = arith.constant 9.99999974E-6 : f32
    %427 = vector.broadcast %cst_281 : f32 to vector<8x1xf32>
    %428 = arith.addf %426, %427 : vector<8x1xf32>
    %429 = math.rsqrt %428 : vector<8x1xf32>
    %430 = vector.broadcast %420 : vector<8x1xf32> to vector<8x288xf32>
    %431 = arith.subf %411, %430 : vector<8x288xf32>
    %432 = arith.mulf %429, %412 : vector<8x1xf32>
    %433 = vector.broadcast %432 : vector<8x1xf32> to vector<8x288xf32>
    %434 = arith.mulf %431, %433 : vector<8x288xf32>
    %435 = vector.broadcast %413 : vector<8x1xf32> to vector<8x288xf32>
    %436 = arith.addf %434, %435 : vector<8x288xf32>
    %437 = arith.negf %436 : vector<8x288xf32>
    %438 = math.exp %437 : vector<8x288xf32>
    %cst_282 = arith.constant 1.000000e+00 : f32
    %439 = vector.broadcast %cst_282 : f32 to vector<8x288xf32>
    %440 = arith.addf %439, %438 : vector<8x288xf32>
    %441 = arith.divf %439, %440 : vector<8x288xf32>
    %442 = arith.mulf %436, %441 : vector<8x288xf32>
    %443 = vector.broadcast %2 : vector<1x288xf32> to vector<8x288xf32>
    %444 = arith.mulf %442, %443 : vector<8x288xf32>
    %c0_283 = arith.constant 0 : index
    %c18_284 = arith.constant 18 : index
    %445 = vector.load %arg3[%c0_283, %c18_284] : memref<24x128xf32, #tpu.memory_space<vmem>>, vector<8x1xf32>
    %c0_285 = arith.constant 0 : index
    %c19_286 = arith.constant 19 : index
    %446 = vector.load %arg7[%c0_285, %c19_286] : memref<8x384xf32, #tpu.memory_space<vmem>>, vector<8x288xf32>
    tpu.vector_store %arg7[%c0_285, %c19_286], %444 {strides = array<i32>} : memref<8x384xf32, #tpu.memory_space<vmem>>, vector<8x288xf32>,
    %c0_287 = arith.constant 0 : index
    %c0_288 = arith.constant 0 : index
    %447 = vector.load %arg7[%c0_287, %c0_288] : memref<8x384xf32, #tpu.memory_space<vmem>>, vector<8x288xf32>
    %c0_289 = arith.constant 0 : index
    %c344 = arith.constant 344 : index
    %448 = vector.load %arg2[%c0_289, %c344] : memref<24x512xf32, #tpu.memory_space<vmem>>, vector<8x8xf32>
    %cst_290 = arith.constant dense<0.000000e+00> : vector<8x288xf32>
    %449 = tpu.matmul %448, %447, %cst_290 {dimension_numbers = #tpu.dot_dimension_numbers<[1], [0], [0], [1], [0, 0, 1, 1], [], []>} : vector<8x8xf32>, vector<8x288xf32>, vector<8x288xf32> -> vector<8x288xf32>
    %c0_291 = arith.constant 0 : index
    %c1_292 = arith.constant 1 : index
    %450 = vector.load %arg7[%c0_291, %c1_292] : memref<8x384xf32, #tpu.memory_space<vmem>>, vector<8x288xf32>
    %c0_293 = arith.constant 0 : index
    %c352 = arith.constant 352 : index
    %451 = vector.load %arg2[%c0_293, %c352] : memref<24x512xf32, #tpu.memory_space<vmem>>, vector<8x8xf32>
    %cst_294 = arith.constant dense<0.000000e+00> : vector<8x288xf32>
    %452 = tpu.matmul %451, %450, %cst_294 {dimension_numbers = #tpu.dot_dimension_numbers<[1], [0], [0], [1], [0, 0, 1, 1], [], []>} : vector<8x8xf32>, vector<8x288xf32>, vector<8x288xf32> -> vector<8x288xf32>
    %453 = arith.addf %449, %452 : vector<8x288xf32>
    %c0_295 = arith.constant 0 : index
    %c2_296 = arith.constant 2 : index
    %454 = vector.load %arg7[%c0_295, %c2_296] : memref<8x384xf32, #tpu.memory_space<vmem>>, vector<8x288xf32>
    %c0_297 = arith.constant 0 : index
    %c360 = arith.constant 360 : index
    %455 = vector.load %arg2[%c0_297, %c360] : memref<24x512xf32, #tpu.memory_space<vmem>>, vector<8x8xf32>
    %cst_298 = arith.constant dense<0.000000e+00> : vector<8x288xf32>
    %456 = tpu.matmul %455, %454, %cst_298 {dimension_numbers = #tpu.dot_dimension_numbers<[1], [0], [0], [1], [0, 0, 1, 1], [], []>} : vector<8x8xf32>, vector<8x288xf32>, vector<8x288xf32> -> vector<8x288xf32>
    %457 = arith.addf %453, %456 : vector<8x288xf32>
    %c0_299 = arith.constant 0 : index
    %c18_300 = arith.constant 18 : index
    %458 = vector.load %arg7[%c0_299, %c18_300] : memref<8x384xf32, #tpu.memory_space<vmem>>, vector<8x288xf32>
    %c0_301 = arith.constant 0 : index
    %c368 = arith.constant 368 : index
    %459 = vector.load %arg2[%c0_301, %c368] : memref<24x512xf32, #tpu.memory_space<vmem>>, vector<8x8xf32>
    %cst_302 = arith.constant dense<0.000000e+00> : vector<8x288xf32>
    %460 = tpu.matmul %459, %458, %cst_302 {dimension_numbers = #tpu.dot_dimension_numbers<[1], [0], [0], [1], [0, 0, 1, 1], [], []>} : vector<8x8xf32>, vector<8x288xf32>, vector<8x288xf32> -> vector<8x288xf32>
    %461 = arith.addf %457, %460 : vector<8x288xf32>
    %c0_303 = arith.constant 0 : index
    %c19_304 = arith.constant 19 : index
    %462 = vector.load %arg7[%c0_303, %c19_304] : memref<8x384xf32, #tpu.memory_space<vmem>>, vector<8x288xf32>
    %c0_305 = arith.constant 0 : index
    %c376 = arith.constant 376 : index
    %463 = vector.load %arg2[%c0_305, %c376] : memref<24x512xf32, #tpu.memory_space<vmem>>, vector<8x8xf32>
    %cst_306 = arith.constant dense<0.000000e+00> : vector<8x288xf32>
    %464 = tpu.matmul %463, %462, %cst_306 {dimension_numbers = #tpu.dot_dimension_numbers<[1], [0], [0], [1], [0, 0, 1, 1], [], []>} : vector<8x8xf32>, vector<8x288xf32>, vector<8x288xf32> -> vector<8x288xf32>
    %465 = arith.addf %461, %464 : vector<8x288xf32>
    %c0_307 = arith.constant 0 : index
    %c20_308 = arith.constant 20 : index
    %466 = vector.load %arg7[%c0_307, %c20_308] : memref<8x384xf32, #tpu.memory_space<vmem>>, vector<8x288xf32>
    %c0_309 = arith.constant 0 : index
    %c384 = arith.constant 384 : index
    %467 = vector.load %arg2[%c0_309, %c384] : memref<24x512xf32, #tpu.memory_space<vmem>>, vector<8x8xf32>
    %cst_310 = arith.constant dense<0.000000e+00> : vector<8x288xf32>
    %468 = tpu.matmul %467, %466, %cst_310 {dimension_numbers = #tpu.dot_dimension_numbers<[1], [0], [0], [1], [0, 0, 1, 1], [], []>} : vector<8x8xf32>, vector<8x288xf32>, vector<8x288xf32> -> vector<8x288xf32>
    %469 = arith.addf %465, %468 : vector<8x288xf32>
    %c0_311 = arith.constant 0 : index
    %c36_312 = arith.constant 36 : index
    %470 = vector.load %arg7[%c0_311, %c36_312] : memref<8x384xf32, #tpu.memory_space<vmem>>, vector<8x288xf32>
    %c0_313 = arith.constant 0 : index
    %c392 = arith.constant 392 : index
    %471 = vector.load %arg2[%c0_313, %c392] : memref<24x512xf32, #tpu.memory_space<vmem>>, vector<8x8xf32>
    %cst_314 = arith.constant dense<0.000000e+00> : vector<8x288xf32>
    %472 = tpu.matmul %471, %470, %cst_314 {dimension_numbers = #tpu.dot_dimension_numbers<[1], [0], [0], [1], [0, 0, 1, 1], [], []>} : vector<8x8xf32>, vector<8x288xf32>, vector<8x288xf32> -> vector<8x288xf32>
    %473 = arith.addf %469, %472 : vector<8x288xf32>
    %c0_315 = arith.constant 0 : index
    %c37_316 = arith.constant 37 : index
    %474 = vector.load %arg7[%c0_315, %c37_316] : memref<8x384xf32, #tpu.memory_space<vmem>>, vector<8x288xf32>
    %c0_317 = arith.constant 0 : index
    %c400 = arith.constant 400 : index
    %475 = vector.load %arg2[%c0_317, %c400] : memref<24x512xf32, #tpu.memory_space<vmem>>, vector<8x8xf32>
    %cst_318 = arith.constant dense<0.000000e+00> : vector<8x288xf32>
    %476 = tpu.matmul %475, %474, %cst_318 {dimension_numbers = #tpu.dot_dimension_numbers<[1], [0], [0], [1], [0, 0, 1, 1], [], []>} : vector<8x8xf32>, vector<8x288xf32>, vector<8x288xf32> -> vector<8x288xf32>
    %477 = arith.addf %473, %476 : vector<8x288xf32>
    %c0_319 = arith.constant 0 : index
    %c38_320 = arith.constant 38 : index
    %478 = vector.load %arg7[%c0_319, %c38_320] : memref<8x384xf32, #tpu.memory_space<vmem>>, vector<8x288xf32>
    %c0_321 = arith.constant 0 : index
    %c408 = arith.constant 408 : index
    %479 = vector.load %arg2[%c0_321, %c408] : memref<24x512xf32, #tpu.memory_space<vmem>>, vector<8x8xf32>
    %cst_322 = arith.constant dense<0.000000e+00> : vector<8x288xf32>
    %480 = tpu.matmul %479, %478, %cst_322 {dimension_numbers = #tpu.dot_dimension_numbers<[1], [0], [0], [1], [0, 0, 1, 1], [], []>} : vector<8x8xf32>, vector<8x288xf32>, vector<8x288xf32> -> vector<8x288xf32>
    %481 = arith.addf %477, %480 : vector<8x288xf32>
    %482 = vector.broadcast %445 : vector<8x1xf32> to vector<8x288xf32>
    %483 = arith.addf %481, %482 : vector<8x288xf32>
    %484 = vector.broadcast %2 : vector<1x288xf32> to vector<8x288xf32>
    %485 = arith.mulf %483, %484 : vector<8x288xf32>
    %486 = arith.addf %485, %337 : vector<8x288xf32>
    %c0_323 = arith.constant 0 : index
    %c19_324 = arith.constant 19 : index
    %487 = vector.load %arg3[%c0_323, %c19_324] : memref<24x128xf32, #tpu.memory_space<vmem>>, vector<8x1xf32>
    %c0_325 = arith.constant 0 : index
    %c20_326 = arith.constant 20 : index
    %488 = vector.load %arg3[%c0_325, %c20_326] : memref<24x128xf32, #tpu.memory_space<vmem>>, vector<8x1xf32>
    %cst_327 = arith.constant dense<0.000000e+00> : vector<8x288xf32>
    %489 = tpu.matmul %0, %486, %cst_327 {dimension_numbers = #tpu.dot_dimension_numbers<[1], [0], [0], [1], [0, 0, 1, 1], [], []>} : vector<8x8xf32>, vector<8x288xf32>, vector<8x288xf32> -> vector<8x288xf32>
    %490 = arith.mulf %486, %486 : vector<8x288xf32>
    %cst_328 = arith.constant dense<0.000000e+00> : vector<8x288xf32>
    %491 = tpu.matmul %0, %490, %cst_328 {dimension_numbers = #tpu.dot_dimension_numbers<[1], [0], [0], [1], [0, 0, 1, 1], [], []>} : vector<8x8xf32>, vector<8x288xf32>, vector<8x288xf32> -> vector<8x288xf32>
    %cst_329 = arith.constant dense<0.000000e+00> : vector<8xf32>
    %492 = vector.multi_reduction <add>, %489, %cst_329 [1] : vector<8x288xf32> to vector<8xf32>
    %493 = vector.shape_cast %492 : vector<8xf32> to vector<8x1xf32>
    %cst_330 = arith.constant 0.001953125 : f32
    %494 = vector.broadcast %cst_330 : f32 to vector<8x1xf32>
    %495 = arith.mulf %493, %494 : vector<8x1xf32>
    %cst_331 = arith.constant dense<0.000000e+00> : vector<8xf32>
    %496 = vector.multi_reduction <add>, %491, %cst_331 [1] : vector<8x288xf32> to vector<8xf32>
    %497 = vector.shape_cast %496 : vector<8xf32> to vector<8x1xf32>
    %cst_332 = arith.constant 0.001953125 : f32
    %498 = vector.broadcast %cst_332 : f32 to vector<8x1xf32>
    %499 = arith.mulf %497, %498 : vector<8x1xf32>
    %500 = arith.mulf %495, %495 : vector<8x1xf32>
    %501 = arith.subf %499, %500 : vector<8x1xf32>
    %cst_333 = arith.constant 9.99999974E-6 : f32
    %502 = vector.broadcast %cst_333 : f32 to vector<8x1xf32>
    %503 = arith.addf %501, %502 : vector<8x1xf32>
    %504 = math.rsqrt %503 : vector<8x1xf32>
    %505 = vector.broadcast %495 : vector<8x1xf32> to vector<8x288xf32>
    %506 = arith.subf %486, %505 : vector<8x288xf32>
    %507 = arith.mulf %504, %487 : vector<8x1xf32>
    %508 = vector.broadcast %507 : vector<8x1xf32> to vector<8x288xf32>
    %509 = arith.mulf %506, %508 : vector<8x288xf32>
    %510 = vector.broadcast %488 : vector<8x1xf32> to vector<8x288xf32>
    %511 = arith.addf %509, %510 : vector<8x288xf32>
    %512 = arith.negf %511 : vector<8x288xf32>
    %513 = math.exp %512 : vector<8x288xf32>
    %cst_334 = arith.constant 1.000000e+00 : f32
    %514 = vector.broadcast %cst_334 : f32 to vector<8x288xf32>
    %515 = arith.addf %514, %513 : vector<8x288xf32>
    %516 = arith.divf %514, %515 : vector<8x288xf32>
    %517 = arith.mulf %511, %516 : vector<8x288xf32>
    %518 = vector.broadcast %2 : vector<1x288xf32> to vector<8x288xf32>
    %519 = arith.mulf %517, %518 : vector<8x288xf32>
    %c0_335 = arith.constant 0 : index
    %c21_336 = arith.constant 21 : index
    %520 = vector.load %arg3[%c0_335, %c21_336] : memref<24x128xf32, #tpu.memory_space<vmem>>, vector<3x1xf32>
    %c0_337 = arith.constant 0 : index
    %c19_338 = arith.constant 19 : index
    %521 = vector.load %arg7[%c0_337, %c19_338] : memref<8x384xf32, #tpu.memory_space<vmem>>, vector<8x288xf32>
    tpu.vector_store %arg7[%c0_337, %c19_338], %519 {strides = array<i32>} : memref<8x384xf32, #tpu.memory_space<vmem>>, vector<8x288xf32>,
    %c0_339 = arith.constant 0 : index
    %c0_340 = arith.constant 0 : index
    %522 = vector.load %arg7[%c0_339, %c0_340] : memref<8x384xf32, #tpu.memory_space<vmem>>, vector<8x288xf32>
    %c0_341 = arith.constant 0 : index
    %c416 = arith.constant 416 : index
    %523 = vector.load %arg2[%c0_341, %c416] : memref<24x512xf32, #tpu.memory_space<vmem>>, vector<3x8xf32>
    %cst_342 = arith.constant dense<0.000000e+00> : vector<3x288xf32>
    %524 = tpu.matmul %523, %522, %cst_342 {dimension_numbers = #tpu.dot_dimension_numbers<[1], [0], [0], [1], [0, 0, 1, 1], [], []>} : vector<3x8xf32>, vector<8x288xf32>, vector<3x288xf32> -> vector<3x288xf32>
    %c0_343 = arith.constant 0 : index
    %c1_344 = arith.constant 1 : index
    %525 = vector.load %arg7[%c0_343, %c1_344] : memref<8x384xf32, #tpu.memory_space<vmem>>, vector<8x288xf32>
    %c0_345 = arith.constant 0 : index
    %c424 = arith.constant 424 : index
    %526 = vector.load %arg2[%c0_345, %c424] : memref<24x512xf32, #tpu.memory_space<vmem>>, vector<3x8xf32>
    %cst_346 = arith.constant dense<0.000000e+00> : vector<3x288xf32>
    %527 = tpu.matmul %526, %525, %cst_346 {dimension_numbers = #tpu.dot_dimension_numbers<[1], [0], [0], [1], [0, 0, 1, 1], [], []>} : vector<3x8xf32>, vector<8x288xf32>, vector<3x288xf32> -> vector<3x288xf32>
    %528 = arith.addf %524, %527 : vector<3x288xf32>
    %c0_347 = arith.constant 0 : index
    %c2_348 = arith.constant 2 : index
    %529 = vector.load %arg7[%c0_347, %c2_348] : memref<8x384xf32, #tpu.memory_space<vmem>>, vector<8x288xf32>
    %c0_349 = arith.constant 0 : index
    %c432 = arith.constant 432 : index
    %530 = vector.load %arg2[%c0_349, %c432] : memref<24x512xf32, #tpu.memory_space<vmem>>, vector<3x8xf32>
    %cst_350 = arith.constant dense<0.000000e+00> : vector<3x288xf32>
    %531 = tpu.matmul %530, %529, %cst_350 {dimension_numbers = #tpu.dot_dimension_numbers<[1], [0], [0], [1], [0, 0, 1, 1], [], []>} : vector<3x8xf32>, vector<8x288xf32>, vector<3x288xf32> -> vector<3x288xf32>
    %532 = arith.addf %528, %531 : vector<3x288xf32>
    %c0_351 = arith.constant 0 : index
    %c18_352 = arith.constant 18 : index
    %533 = vector.load %arg7[%c0_351, %c18_352] : memref<8x384xf32, #tpu.memory_space<vmem>>, vector<8x288xf32>
    %c0_353 = arith.constant 0 : index
    %c440 = arith.constant 440 : index
    %534 = vector.load %arg2[%c0_353, %c440] : memref<24x512xf32, #tpu.memory_space<vmem>>, vector<3x8xf32>
    %cst_354 = arith.constant dense<0.000000e+00> : vector<3x288xf32>
    %535 = tpu.matmul %534, %533, %cst_354 {dimension_numbers = #tpu.dot_dimension_numbers<[1], [0], [0], [1], [0, 0, 1, 1], [], []>} : vector<3x8xf32>, vector<8x288xf32>, vector<3x288xf32> -> vector<3x288xf32>
    %536 = arith.addf %532, %535 : vector<3x288xf32>
    %c0_355 = arith.constant 0 : index
    %c19_356 = arith.constant 19 : index
    %537 = vector.load %arg7[%c0_355, %c19_356] : memref<8x384xf32, #tpu.memory_space<vmem>>, vector<8x288xf32>
    %c0_357 = arith.constant 0 : index
    %c448 = arith.constant 448 : index
    %538 = vector.load %arg2[%c0_357, %c448] : memref<24x512xf32, #tpu.memory_space<vmem>>, vector<3x8xf32>
    %cst_358 = arith.constant dense<0.000000e+00> : vector<3x288xf32>
    %539 = tpu.matmul %538, %537, %cst_358 {dimension_numbers = #tpu.dot_dimension_numbers<[1], [0], [0], [1], [0, 0, 1, 1], [], []>} : vector<3x8xf32>, vector<8x288xf32>, vector<3x288xf32> -> vector<3x288xf32>
    %540 = arith.addf %536, %539 : vector<3x288xf32>
    %c0_359 = arith.constant 0 : index
    %c20_360 = arith.constant 20 : index
    %541 = vector.load %arg7[%c0_359, %c20_360] : memref<8x384xf32, #tpu.memory_space<vmem>>, vector<8x288xf32>
    %c0_361 = arith.constant 0 : index
    %c456 = arith.constant 456 : index
    %542 = vector.load %arg2[%c0_361, %c456] : memref<24x512xf32, #tpu.memory_space<vmem>>, vector<3x8xf32>
    %cst_362 = arith.constant dense<0.000000e+00> : vector<3x288xf32>
    %543 = tpu.matmul %542, %541, %cst_362 {dimension_numbers = #tpu.dot_dimension_numbers<[1], [0], [0], [1], [0, 0, 1, 1], [], []>} : vector<3x8xf32>, vector<8x288xf32>, vector<3x288xf32> -> vector<3x288xf32>
    %544 = arith.addf %540, %543 : vector<3x288xf32>
    %c0_363 = arith.constant 0 : index
    %c36_364 = arith.constant 36 : index
    %545 = vector.load %arg7[%c0_363, %c36_364] : memref<8x384xf32, #tpu.memory_space<vmem>>, vector<8x288xf32>
    %c0_365 = arith.constant 0 : index
    %c464 = arith.constant 464 : index
    %546 = vector.load %arg2[%c0_365, %c464] : memref<24x512xf32, #tpu.memory_space<vmem>>, vector<3x8xf32>
    %cst_366 = arith.constant dense<0.000000e+00> : vector<3x288xf32>
    %547 = tpu.matmul %546, %545, %cst_366 {dimension_numbers = #tpu.dot_dimension_numbers<[1], [0], [0], [1], [0, 0, 1, 1], [], []>} : vector<3x8xf32>, vector<8x288xf32>, vector<3x288xf32> -> vector<3x288xf32>
    %548 = arith.addf %544, %547 : vector<3x288xf32>
    %c0_367 = arith.constant 0 : index
    %c37_368 = arith.constant 37 : index
    %549 = vector.load %arg7[%c0_367, %c37_368] : memref<8x384xf32, #tpu.memory_space<vmem>>, vector<8x288xf32>
    %c0_369 = arith.constant 0 : index
    %c472 = arith.constant 472 : index
    %550 = vector.load %arg2[%c0_369, %c472] : memref<24x512xf32, #tpu.memory_space<vmem>>, vector<3x8xf32>
    %cst_370 = arith.constant dense<0.000000e+00> : vector<3x288xf32>
    %551 = tpu.matmul %550, %549, %cst_370 {dimension_numbers = #tpu.dot_dimension_numbers<[1], [0], [0], [1], [0, 0, 1, 1], [], []>} : vector<3x8xf32>, vector<8x288xf32>, vector<3x288xf32> -> vector<3x288xf32>
    %552 = arith.addf %548, %551 : vector<3x288xf32>
    %c0_371 = arith.constant 0 : index
    %c38_372 = arith.constant 38 : index
    %553 = vector.load %arg7[%c0_371, %c38_372] : memref<8x384xf32, #tpu.memory_space<vmem>>, vector<8x288xf32>
    %c0_373 = arith.constant 0 : index
    %c480 = arith.constant 480 : index
    %554 = vector.load %arg2[%c0_373, %c480] : memref<24x512xf32, #tpu.memory_space<vmem>>, vector<3x8xf32>
    %cst_374 = arith.constant dense<0.000000e+00> : vector<3x288xf32>
    %555 = tpu.matmul %554, %553, %cst_374 {dimension_numbers = #tpu.dot_dimension_numbers<[1], [0], [0], [1], [0, 0, 1, 1], [], []>} : vector<3x8xf32>, vector<8x288xf32>, vector<3x288xf32> -> vector<3x288xf32>
    %556 = arith.addf %552, %555 : vector<3x288xf32>
    %557 = vector.broadcast %520 : vector<3x1xf32> to vector<3x288xf32>
    %558 = arith.addf %556, %557 : vector<3x288xf32>
    %559 = vector.broadcast %2 : vector<1x288xf32> to vector<3x288xf32>
    %560 = arith.mulf %558, %559 : vector<3x288xf32>
    %c0_375 = arith.constant 0 : index
    %c0_376 = arith.constant 0 : index
    %c0_377 = arith.constant 0 : index
    %561 = vector.load %arg6[%c0_375, %c0_376, %c0_377] : memref<1x3x288xf32, #tpu.memory_space<vmem>>, vector<1x3x288xf32>
    %562 = vector.shape_cast %561 : vector<1x3x288xf32> to vector<3x288xf32>
    %563 = vector.shape_cast %560 : vector<3x288xf32> to vector<1x3x288xf32>
    tpu.vector_store %arg6[%c0_375, %c0_376, %c0_377], %563 {strides = array<i32>} : memref<1x3x288xf32, #tpu.memory_space<vmem>>, vector<1x3x288xf32>,
    return
  }
  func.func @transform_0(%arg0: i32) -> (i32, i32, i32) {
    %c0_i32 = arith.constant 0 : i32
    %c0_i32_0 = arith.constant 0 : i32
    %c0_i32_1 = arith.constant 0 : i32
    return %arg0, %c0_i32, %c0_i32_0 : i32, i32, i32
  }
  func.func @transform_1(%arg0: i32) -> (i32, i32) {
    %c0_i32 = arith.constant 0 : i32
    %c0_i32_0 = arith.constant 0 : i32
    %c0_i32_1 = arith.constant 0 : i32
    return %c0_i32, %c0_i32_0 : i32, i32
  }
  func.func @transform_2(%arg0: i32) -> (i32, i32) {
    %c0_i32 = arith.constant 0 : i32
    %c0_i32_0 = arith.constant 0 : i32
    %c0_i32_1 = arith.constant 0 : i32
    return %c0_i32, %c0_i32_0 : i32, i32
  }
  func.func @transform_3(%arg0: i32) -> (i32, i32) {
    %c0_i32 = arith.constant 0 : i32
    %c0_i32_0 = arith.constant 0 : i32
    %c0_i32_1 = arith.constant 0 : i32
    return %c0_i32, %c0_i32_0 : i32, i32
  }
  func.func @transform_4(%arg0: i32) -> (i32, i32) {
    %c0_i32 = arith.constant 0 : i32
    %c0_i32_0 = arith.constant 0 : i32
    %c0_i32_1 = arith.constant 0 : i32
    return %c0_i32, %c0_i32_0 : i32, i32
  }
  func.func @transform_5(%arg0: i32) -> (i32, i32, i32) {
    %c0_i32 = arith.constant 0 : i32
    %c0_i32_0 = arith.constant 0 : i32
    %c0_i32_1 = arith.constant 0 : i32
    return %arg0, %c0_i32, %c0_i32_0 : i32, i32, i32
  }
}

</mosaic_0001>

<llo_original>
// kernel: va_decoder_forward.1
$region0: #{va_decoder_forward.1}
  #allocation0 [shape = 'u32[]', space=smem, size = 0x4, offset = 0x4, fixed_abs, tag = 'smem constant byte address 0x4 - core index']
  #allocation1 [shape = 'u32[72,128]{1,0:T(1,128)}', space=vmem, size = 0x9000, scoped, tag = 'internal scratch']
  #allocation2 [shape = 'f32[8,384]{1,0:T(8,128)}', space=vmem, size = 0x3000, scoped, tag = 'scratch operand']
  %s0 = inlined_call_operand.vmem [shape: f32[2,4,80], index: 0, kind: input, shape index: {}]
  %s1 = inlined_call_operand.vmem [shape: f32[24,512], index: 1, kind: input, shape index: {}]
  %s2 = inlined_call_operand.vmem [shape: f32[24,128], index: 2, kind: input, shape index: {}]
  %s3 = inlined_call_operand.vmem [shape: f32[2,288], index: 3, kind: input, shape index: {}]
  %s4 = inlined_call_operand.hbm [shape: f32[80,288], index: 4, kind: input, shape index: {}]
  %s5 = inlined_call_operand.vmem [shape: f32[2,3,288], index: 5, kind: output, shape index: {}]
  %s6 = sld [smem:[#allocation0]]
  $region57: #{va_decoder_forward.1} parent=0
    _
  %s8 = ssub.s32 1, %s6
  %s9 = scalar_select 0, %s8, %s6
  $region1: #{va_decoder_forward.1} parent=0
    #allocation3 [shape = 'u8[122880]{0}', space=vmem, size = 0x1e000, scoped, tag = 'input window, operand 4, single buffered']
    #allocation4 [shape = 's32[2]{0}', space=sflag, size = 0x8, scoped, tag = 'scoped memory for va_decoder_forward.1']
    %10 = vsyncpa [#allocation4], 0
    loop: start=0, step=1, limit=4
    $region2: #{va_decoder_forward.1} parent=1 // loop_pre_header
      _
    $region3: #{va_decoder_forward.1} parent=1 // loop_header
      %s12 = sphi 0, %s16
      %p13 = scmp.ge.s32.totalorder %s12, 4
      %s22 = sphi 0, %s24
      %s25 = sphi 0, %s22
      %s26 = sphi 0, %s25
      %s42 = sphi 0, %s26
      %s46 = sphi 0, %s46
      %s48 = sphi 0, %s46
      %s49 = sphi 0, %s48
      %s63 = sphi 0, %s49
      %s67 = sphi 0, %s67
      %s69 = sphi 0, %s67
      %s70 = sphi 0, %s69
      %s84 = sphi 0, %s70
      %s88 = sphi 0, %s88
      %s90 = sphi 0, %s88
      %s91 = sphi 0, %s90
      %s105 = sphi 0, %s91
      %s109 = sphi 0, %s109
      %s111 = sphi 0, %s109
      %s112 = sphi 0, %s111
      %s126 = sphi 0, %s112
      %s132 = sphi 0, %s134
      %s135 = sphi 0, %s132
      %s136 = sphi 0, %s135
      %s152 = sphi 0, %s136
    $region4: #{va_decoder_forward.1} parent=1 // loop_header_branch
      %15 = sbr.rel (%p13) target = $region8
    $region5: #{va_decoder_forward.1} parent=1 // loop_body
      %s17 = ssub.s32 %s12, 1
      %s18 = ssub.s32 %s12, 2
      %s19 = sadd.s32 %s12, 1
      %s20 = ssub.s32 %s12, %s19
      %p21 = scmp.eq.s32.totalorder %s20, 0
      %s23 = sadd.s32 %s22, 1
      %s24 = scalar_select %p21, %s22, %s23
      %p27 = pneg %p21
      %p28 = scmp.eq.s32.totalorder %s12, 1
      %p29 = por %p27, %p28
      %p30 = scmp.ne.s32.totalorder %s22, %s25
      %p31 = scmp.eq.s32.totalorder %s12, 0
      %p32 = por %p30, %p31
      %p33 = scmp.ne.s32.totalorder %s22, %s25
      %p34 = scmp.eq.s32.totalorder %s17, 1
      %p35 = por %p33, %p34
      %p36 = scmp.ne.s32.totalorder %s25, %s26
      %p37 = scmp.eq.s32.totalorder %s17, 0
      %p38 = por %p36, %p37
      %p39 = scmp.ne.s32.totalorder %s25, %s26
      %p40 = scmp.eq.s32.totalorder %s18, 1
      %p41 = por %p39, %p40
      %p43 = scmp.ne.s32.totalorder %s26, %s42
      %p44 = scmp.eq.s32.totalorder %s18, 0
      %p45 = por %p43, %p44
      %s47 = sadd.s32 %s46, 1
      %p50 = scmp.eq.s32.totalorder %s12, 1
      %p51 = scmp.ne.s32.totalorder %s46, %s48
      %p52 = scmp.eq.s32.totalorder %s12, 0
      %p53 = por %p51, %p52
      %p54 = scmp.ne.s32.totalorder %s46, %s48
      %p55 = scmp.eq.s32.totalorder %s17, 1
      %p56 = por %p54, %p55
      %p57 = scmp.ne.s32.totalorder %s48, %s49
      %p58 = scmp.eq.s32.totalorder %s17, 0
      %p59 = por %p57, %p58
      %p60 = scmp.ne.s32.totalorder %s48, %s49
      %p61 = scmp.eq.s32.totalorder %s18, 1
      %p62 = por %p60, %p61
      %p64 = scmp.ne.s32.totalorder %s49, %s63
      %p65 = scmp.eq.s32.totalorder %s18, 0
      %p66 = por %p64, %p65
      %s68 = sadd.s32 %s67, 1
      %p71 = scmp.eq.s32.totalorder %s12, 1
      %p72 = scmp.ne.s32.totalorder %s67, %s69
      %p73 = scmp.eq.s32.totalorder %s12, 0
      %p74 = por %p72, %p73
      %p75 = scmp.ne.s32.totalorder %s67, %s69
      %p76 = scmp.eq.s32.totalorder %s17, 1
      %p77 = por %p75, %p76
      %p78 = scmp.ne.s32.totalorder %s69, %s70
      %p79 = scmp.eq.s32.totalorder %s17, 0
      %p80 = por %p78, %p79
      %p81 = scmp.ne.s32.totalorder %s69, %s70
      %p82 = scmp.eq.s32.totalorder %s18, 1
      %p83 = por %p81, %p82
      %p85 = scmp.ne.s32.totalorder %s70, %s84
      %p86 = scmp.eq.s32.totalorder %s18, 0
      %p87 = por %p85, %p86
      %s89 = sadd.s32 %s88, 1
      %p92 = scmp.eq.s32.totalorder %s12, 1
      %p93 = scmp.ne.s32.totalorder %s88, %s90
      %p94 = scmp.eq.s32.totalorder %s12, 0
      %p95 = por %p93, %p94
      %p96 = scmp.ne.s32.totalorder %s88, %s90
      %p97 = scmp.eq.s32.totalorder %s17, 1
      %p98 = por %p96, %p97
      %p99 = scmp.ne.s32.totalorder %s90, %s91
      %p100 = scmp.eq.s32.totalorder %s17, 0
      %p101 = por %p99, %p100
      %p102 = scmp.ne.s32.totalorder %s90, %s91
      %p103 = scmp.eq.s32.totalorder %s18, 1
      %p104 = por %p102, %p103
      %p106 = scmp.ne.s32.totalorder %s91, %s105
      %p107 = scmp.eq.s32.totalorder %s18, 0
      %p108 = por %p106, %p107
      %s110 = sadd.s32 %s109, 1
      %p113 = scmp.eq.s32.totalorder %s12, 1
      %p114 = scmp.ne.s32.totalorder %s109, %s111
      %p115 = scmp.eq.s32.totalorder %s12, 0
      %p116 = por %p114, %p115
      %p117 = scmp.ne.s32.totalorder %s109, %s111
      %p118 = scmp.eq.s32.totalorder %s17, 1
      %p119 = por %p117, %p118
      %p120 = scmp.ne.s32.totalorder %s111, %s112
      %p121 = scmp.eq.s32.totalorder %s17, 0
      %p122 = por %p120, %p121
      %p123 = scmp.ne.s32.totalorder %s111, %s112
      %p124 = scmp.eq.s32.totalorder %s18, 1
      %p125 = por %p123, %p124
      %p127 = scmp.ne.s32.totalorder %s112, %s126
      %p128 = scmp.eq.s32.totalorder %s18, 0
      %p129 = por %p127, %p128
      %s130 = ssub.s32 %s12, %s19
      %p131 = scmp.eq.s32.totalorder %s130, 0
      %s133 = sadd.s32 %s132, 1
      %s134 = scalar_select %p131, %s132, %s133
      %p137 = pneg %p131
      %p138 = scmp.eq.s32.totalorder %s12, 1
      %p139 = por %p137, %p138
      %p140 = scmp.ne.s32.totalorder %s132, %s135
      %p141 = scmp.eq.s32.totalorder %s12, 0
      %p142 = por %p140, %p141
      %p143 = scmp.ne.s32.totalorder %s132, %s135
      %p144 = scmp.eq.s32.totalorder %s17, 1
      %p145 = por %p143, %p144
      %p146 = scmp.ne.s32.totalorder %s135, %s136
      %p147 = scmp.eq.s32.totalorder %s17, 0
      %p148 = por %p146, %p147
      %p149 = scmp.ne.s32.totalorder %s135, %s136
      %p150 = scmp.eq.s32.totalorder %s18, 1
      %p151 = por %p149, %p150
      %p153 = scmp.ne.s32.totalorder %s136, %s152
      %p154 = scmp.eq.s32.totalorder %s18, 0
      %p155 = por %p153, %p154
      %p156 = scmp.le.s32.totalorder 1, %s12
      %p157 = scmp.lt.s32.totalorder %s12, 3
      %p158 = pnand %p156, %p157
      %p159 = pneg %p158
      // Predicated region
      $region9: #{va_decoder_forward.1} parent=5 // pred_check
        _
      $region10: #{va_decoder_forward.1} parent=5 // pred_check_branch
        %161 = sbr.rel (%p158) target = $region12
      $region11: #{va_decoder_forward.1} parent=5 // pred_region
        %s162 = ssub.s32 %s12, 1
        // Predicated region
        $region13: #{va_decoder_forward.1} parent=11 // pred_check
          %p163 = pneg %p59
        $region14: #{va_decoder_forward.1} parent=11 // pred_check_branch
          %165 = sbr.rel (%p163) target = $region16
        $region15: #{va_decoder_forward.1} parent=11 // pred_region
          _
        $region16: #{va_decoder_forward.1} parent=11 // pred_fallthru
          _
        // Predicated region
        $region17: #{va_decoder_forward.1} parent=11 // pred_check
          %p166 = pneg %p80
        $region18: #{va_decoder_forward.1} parent=11 // pred_check_branch
          %168 = sbr.rel (%p166) target = $region20
        $region19: #{va_decoder_forward.1} parent=11 // pred_region
          _
        $region20: #{va_decoder_forward.1} parent=11 // pred_fallthru
          _
        // Predicated region
        $region21: #{va_decoder_forward.1} parent=11 // pred_check
          %p169 = pneg %p101
        $region22: #{va_decoder_forward.1} parent=11 // pred_check_branch
          %171 = sbr.rel (%p169) target = $region24
        $region23: #{va_decoder_forward.1} parent=11 // pred_region
          _
        $region24: #{va_decoder_forward.1} parent=11 // pred_fallthru
          _
        // Predicated region
        $region25: #{va_decoder_forward.1} parent=11 // pred_check
          %p172 = pneg %p122
        $region26: #{va_decoder_forward.1} parent=11 // pred_check_branch
          %174 = sbr.rel (%p172) target = $region28
        $region27: #{va_decoder_forward.1} parent=11 // pred_region
          %176 = vsyncadd [#allocation4], 0
          %s177 = sshll.u32 %s4, 4
          %s178 = int_to_ptr.hbm [resolvable:$true] %s177
          %s179 = sshll.u32 [#allocation3], 4
          %s180 = int_to_ptr.vmem [resolvable:$true] %s179
          %185 = dma.hbm_to_vmem [thread:$0]  %s178, 3840, %s180, [#allocation4], 384, 384, 24
        $region28: #{va_decoder_forward.1} parent=11 // pred_fallthru
          _
      $region12: #{va_decoder_forward.1} parent=5 // pred_fallthru
        _
      %p186 = scmp.lt.s32.totalorder %s12, 2
      // Predicated region
      $region29: #{va_decoder_forward.1} parent=5 // pred_check
        %p187 = pneg %p186
      $region30: #{va_decoder_forward.1} parent=5 // pred_check_branch
        %189 = sbr.rel (%p187) target = $region32
      $region31: #{va_decoder_forward.1} parent=5 // pred_region
        // Predicated region
        $region33: #{va_decoder_forward.1} parent=31 // pred_check
          %p190 = pneg %p32
        $region34: #{va_decoder_forward.1} parent=31 // pred_check_branch
          %192 = sbr.rel (%p190) target = $region36
        $region35: #{va_decoder_forward.1} parent=31 // pred_region
          %p193 = scmp.lt.s32.totalorder %s12, 1
          %s194 = scalar_select %p193, %s12, 1
          %s195 = smul.addr %s194, 4
          %s196 = scalar_lea.vmem %s0, %s195
        $region36: #{va_decoder_forward.1} parent=31 // pred_fallthru
          _
      $region32: #{va_decoder_forward.1} parent=5 // pred_fallthru
        _
      %p197 = scmp.le.s32.totalorder 1, %s12
      %p198 = scmp.lt.s32.totalorder %s12, 3
      %p199 = pnand %p197, %p198
      %p200 = pneg %p199
      // Predicated region
      $region37: #{va_decoder_forward.1} parent=5 // pred_check
        _
      $region38: #{va_decoder_forward.1} parent=5 // pred_check_branch
        %202 = sbr.rel (%p199) target = $region40
      $region39: #{va_decoder_forward.1} parent=5 // pred_region
        %s203 = ssub.s32 %s12, 1
        // Predicated region
        $region41: #{va_decoder_forward.1} parent=39 // pred_check
          %p204 = pneg %p122
        $region42: #{va_decoder_forward.1} parent=39 // pred_check_branch
          %206 = sbr.rel (%p204) target = $region44
        $region43: #{va_decoder_forward.1} parent=39 // pred_region
          %208 = dma.done [#allocation4], 3840
        $region44: #{va_decoder_forward.1} parent=39 // pred_fallthru
          _
        %p209 = scmp.lt.s32.totalorder %s17, 1
        %s210 = scalar_select %p209, %s17, 1
        %s211 = smul.addr %s210, 4
        %s212 = scalar_lea.vmem %s0, %s211
        %p213 = pneg %p38
        %p214 = pneg %p35
        %p215 = pneg %p59
        %p216 = pneg %p56
        %p217 = pneg %p80
        %p218 = pneg %p77
        %p219 = pneg %p101
        %p220 = pneg %p98
        %p221 = pneg %p122
        %p222 = pneg %p119
        %p223 = pneg %p148
        %p224 = pneg %p145
        %p225 = scmp.lt.s32.totalorder %s17, 1
        %s226 = scalar_select %p225, %s17, 1
        %s227 = smul.addr %s226, 3
        %s228 = smul.addr %s227, 4
        %s229 = scalar_lea.vmem %s5, %s228
        %p230 = scmp.lt.s32.totalorder %s17, 1
        %s231 = scalar_select %p230, %s17, 1
        %s232 = smul.addr %s231, 4
        %s233 = scalar_lea.vmem %s0, %s232
        %p234 = scmp.lt.s32.totalorder %s17, 1
        %s235 = scalar_select %p234, %s17, 1
        %s236 = smul.addr %s235, 3
        %s237 = smul.addr %s236, 4
        %s238 = scalar_lea.vmem %s5, %s237
        %v239 = vld [vmem:[%s1 + $0x18] sm:$0xff]
        %v240 = vld [vmem:[%s3] sm:$0x1]
        %s241 = scalar_lea.vmem %s3, 1
        %v242 = vld [vmem:[%s241] ss:$2 sm:$0x7]
        %243 = vst [vmem:[#allocation2] sm:$0xff] 0.0
        %244 = vst [vmem:[#allocation2 + $0x8] sm:$0xff] 0.0
        %245 = vst [vmem:[#allocation2 + $0x10] sm:$0xff] 0.0
        %v246 = vld [vmem:[%s233] sm:$0xf]
        %v247 = vmul.f32 %v246, 5.4899807
        %v248 = vld [vmem:[%s2] sm:$0xf]
        %v249 = vld [vmem:[%s1] sm:$0xf]
        %251 = vset.pattern.permute.xlu0 0
        %252 = vperm.xlu0 %251, %v248
        %v253 = vpop.permute.xlu0 %252
        %vm255 = vcmask 31744
        %v257 = vsel %vm255, %v249, 0
        %vm259 = vcmask 1043456
        %v261 = vsel %vm259, %v247, 0
        %263 = vmatpush.msra.mxu0 0.0
        %264 = vmatpush.msra.mxu0 0.0
        %265 = vmatpush.msra.mxu0 0.0
        %266 = vmatpush.msra.mxu0 0.0
        %267 = vmatpush.msra.mxu0 0.0
        %268 = vmatpush.msra.mxu0 0.0
        %269 = vmatpush.msra.mxu0 0.0
        %270 = vmatpush.msra.mxu0 0.0
        %271 = vmatpush.msra.mxu0 0.0
        %272 = vmatpush.msra.mxu0 0.0
        %273 = vmatpush.msra.mxu0 0.0
        %274 = vmatpush.msra.mxu0 0.0
        %275 = vmatpush.msra.mxu0 0.0
        %276 = vmatpush.msra.mxu0 0.0
        %277 = vmatpush.msra.mxu0 0.0
        %278 = vmatpush.msra.mxu0 %v261
        %279 = vmatmul.f32.gmra.mxu0 %v257
        %v280 = vpop.f32.mrf.mxu0
        %v281 = vadd.f32 %v253, %v280
        %282 = vdwg.mxu0
        %v283 = vperm.slane %v240, 0
        %v284 = vmul.f32 %v281, %v283
        %v285 = vld [vmem:[%s2] sm:$0xff]
        %287 = vrot.lane.b32.xlu0 %v284, 11
        %v288 = vpop.permute.xlu0 %287
        %vm290 = vcmask 740440
        %291 = vst.msk [vmem:[#allocation2] sm:$0xf] %vm290, %v288
        %v292 = vld [vmem:[#allocation2] sm:$0xf]
        %v293 = vld [vmem:[%s1] sm:$0xff]
        %295 = vrot.lane.b32.xlu0 %v293, 120
        %v296 = vpop.permute.xlu0 %295
        %298 = vrot.lane.b32.xlu0 %v292, 127
        %v299 = vpop.permute.xlu0 %298
        %v300 = vsel %vm255, %v296, 0
        %v302 = vsel %vm259, %v299, 0
        %304 = vmatpush.msra.mxu0 0.0
        %305 = vmatpush.msra.mxu0 0.0
        %306 = vmatpush.msra.mxu0 0.0
        %307 = vmatpush.msra.mxu0 0.0
        %308 = vmatpush.msra.mxu0 0.0
        %309 = vmatpush.msra.mxu0 0.0
        %310 = vmatpush.msra.mxu0 0.0
        %311 = vmatpush.msra.mxu0 0.0
        %312 = vmatpush.msra.mxu0 0.0
        %313 = vmatpush.msra.mxu0 0.0
        %314 = vmatpush.msra.mxu0 0.0
        %315 = vmatpush.msra.mxu0 0.0
        %316 = vmatpush.msra.mxu0 0.0
        %317 = vmatpush.msra.mxu0 0.0
        %318 = vmatpush.msra.mxu0 0.0
        %319 = vmatpush.msra.mxu0 %v302
        %320 = vmatmul.f32.gmra.mxu0 %v300
        %v321 = vpop.f32.mrf.mxu0
        %v322 = vadd.f32 0.0, %v321
        %323 = vdwg.mxu0
        %324 = vrot.lane.b32.xlu0 %v293, 124
        %v325 = vpop.permute.xlu0 %324
        %v326 = vsel %vm255, %v325, 0
        %v328 = vsel %vm259, %v292, 0
        %330 = vmatpush.msra.mxu0 0.0
        %331 = vmatpush.msra.mxu0 0.0
        %332 = vmatpush.msra.mxu0 0.0
        %333 = vmatpush.msra.mxu0 0.0
        %334 = vmatpush.msra.mxu0 0.0
        %335 = vmatpush.msra.mxu0 0.0
        %336 = vmatpush.msra.mxu0 0.0
        %337 = vmatpush.msra.mxu0 0.0
        %338 = vmatpush.msra.mxu0 0.0
        %339 = vmatpush.msra.mxu0 0.0
        %340 = vmatpush.msra.mxu0 0.0
        %341 = vmatpush.msra.mxu0 0.0
        %342 = vmatpush.msra.mxu0 0.0
        %343 = vmatpush.msra.mxu0 0.0
        %344 = vmatpush.msra.mxu0 0.0
        %345 = vmatpush.msra.mxu0 %v328
        %346 = vmatmul.f32.gmra.mxu0 %v326
        %v347 = vpop.f32.mrf.mxu0
        %v348 = vadd.f32 %v322, %v347
        %349 = vdwg.mxu0
        %350 = vrot.lane.b32.xlu0 %v293, 116
        %v351 = vpop.permute.xlu0 %350
        %352 = vrot.lane.b32.xlu0 %v292, 126
        %v353 = vpop.permute.xlu0 %352
        %v354 = vsel %vm255, %v351, 0
        %v356 = vsel %vm259, %v353, 0
        %358 = vmatpush.msra.mxu0 0.0
        %359 = vmatpush.msra.mxu0 0.0
        %360 = vmatpush.msra.mxu0 0.0
        %361 = vmatpush.msra.mxu0 0.0
        %362 = vmatpush.msra.mxu0 0.0
        %363 = vmatpush.msra.mxu0 0.0
        %364 = vmatpush.msra.mxu0 0.0
        %365 = vmatpush.msra.mxu0 0.0
        %366 = vmatpush.msra.mxu0 0.0
        %367 = vmatpush.msra.mxu0 0.0
        %368 = vmatpush.msra.mxu0 0.0
        %369 = vmatpush.msra.mxu0 0.0
        %370 = vmatpush.msra.mxu0 0.0
        %371 = vmatpush.msra.mxu0 0.0
        %372 = vmatpush.msra.mxu0 0.0
        %373 = vmatpush.msra.mxu0 %v356
        %374 = vmatmul.f32.gmra.mxu0 %v354
        %v375 = vpop.f32.mrf.mxu0
        %v376 = vadd.f32 0.0, %v375
        %377 = vdwg.mxu0
        %v378 = vadd.f32 %v348, %v376
        %379 = vrot.lane.b32.xlu0 %v293, 112
        %v380 = vpop.permute.xlu0 %379
        %381 = vrot.lane.b32.xlu0 %v292, 118
        %v382 = vpop.permute.xlu0 %381
        %v383 = vsel %vm255, %v380, 0
        %v385 = vsel %vm259, %v382, 0
        %387 = vmatpush.msra.mxu0 0.0
        %388 = vmatpush.msra.mxu0 0.0
        %389 = vmatpush.msra.mxu0 0.0
        %390 = vmatpush.msra.mxu0 0.0
        %391 = vmatpush.msra.mxu0 0.0
        %392 = vmatpush.msra.mxu0 0.0
        %393 = vmatpush.msra.mxu0 0.0
        %394 = vmatpush.msra.mxu0 0.0
        %395 = vmatpush.msra.mxu0 0.0
        %396 = vmatpush.msra.mxu0 0.0
        %397 = vmatpush.msra.mxu0 0.0
        %398 = vmatpush.msra.mxu0 0.0
        %399 = vmatpush.msra.mxu0 0.0
        %400 = vmatpush.msra.mxu0 0.0
        %401 = vmatpush.msra.mxu0 0.0
        %402 = vmatpush.msra.mxu0 %v385
        %403 = vmatmul.f32.gmra.mxu0 %v383
        %v404 = vpop.f32.mrf.mxu0
        %v405 = vadd.f32 0.0, %v404
        %406 = vdwg.mxu0
        %v407 = vadd.f32 %v378, %v405
        %408 = vrot.lane.b32.xlu0 %v293, 108
        %v409 = vpop.permute.xlu0 %408
        %410 = vrot.lane.b32.xlu0 %v292, 117
        %v411 = vpop.permute.xlu0 %410
        %v412 = vsel %vm255, %v409, 0
        %v414 = vsel %vm259, %v411, 0
        %416 = vmatpush.msra.mxu0 0.0
        %417 = vmatpush.msra.mxu0 0.0
        %418 = vmatpush.msra.mxu0 0.0
        %419 = vmatpush.msra.mxu0 0.0
        %420 = vmatpush.msra.mxu0 0.0
        %421 = vmatpush.msra.mxu0 0.0
        %422 = vmatpush.msra.mxu0 0.0
        %423 = vmatpush.msra.mxu0 0.0
        %424 = vmatpush.msra.mxu0 0.0
        %425 = vmatpush.msra.mxu0 0.0
        %426 = vmatpush.msra.mxu0 0.0
        %427 = vmatpush.msra.mxu0 0.0
        %428 = vmatpush.msra.mxu0 0.0
        %429 = vmatpush.msra.mxu0 0.0
        %430 = vmatpush.msra.mxu0 0.0
        %431 = vmatpush.msra.mxu0 %v414
        %432 = vmatmul.f32.gmra.mxu0 %v412
        %v433 = vpop.f32.mrf.mxu0
        %v434 = vadd.f32 0.0, %v433
        %435 = vdwg.mxu0
        %v436 = vadd.f32 %v407, %v434
        %437 = vrot.lane.b32.xlu0 %v293, 104
        %v438 = vpop.permute.xlu0 %437
        %439 = vrot.lane.b32.xlu0 %v292, 116
        %v440 = vpop.permute.xlu0 %439
        %v441 = vsel %vm255, %v438, 0
        %v443 = vsel %vm259, %v440, 0
        %445 = vmatpush.msra.mxu0 0.0
        %446 = vmatpush.msra.mxu0 0.0
        %447 = vmatpush.msra.mxu0 0.0
        %448 = vmatpush.msra.mxu0 0.0
        %449 = vmatpush.msra.mxu0 0.0
        %450 = vmatpush.msra.mxu0 0.0
        %451 = vmatpush.msra.mxu0 0.0
        %452 = vmatpush.msra.mxu0 0.0
        %453 = vmatpush.msra.mxu0 0.0
        %454 = vmatpush.msra.mxu0 0.0
        %455 = vmatpush.msra.mxu0 0.0
        %456 = vmatpush.msra.mxu0 0.0
        %457 = vmatpush.msra.mxu0 0.0
        %458 = vmatpush.msra.mxu0 0.0
        %459 = vmatpush.msra.mxu0 0.0
        %460 = vmatpush.msra.mxu0 %v443
        %461 = vmatmul.f32.gmra.mxu0 %v441
        %v462 = vpop.f32.mrf.mxu0
        %v463 = vadd.f32 0.0, %v462
        %464 = vdwg.mxu0
        %v465 = vadd.f32 %v436, %v463
        %466 = vrot.lane.b32.xlu0 %v293, 100
        %v467 = vpop.permute.xlu0 %466
        %468 = vrot.lane.b32.xlu0 %v292, 108
        %v469 = vpop.permute.xlu0 %468
        %v470 = vsel %vm255, %v467, 0
        %v472 = vsel %vm259, %v469, 0
        %474 = vmatpush.msra.mxu0 0.0
        %475 = vmatpush.msra.mxu0 0.0
        %476 = vmatpush.msra.mxu0 0.0
        %477 = vmatpush.msra.mxu0 0.0
        %478 = vmatpush.msra.mxu0 0.0
        %479 = vmatpush.msra.mxu0 0.0
        %480 = vmatpush.msra.mxu0 0.0
        %481 = vmatpush.msra.mxu0 0.0
        %482 = vmatpush.msra.mxu0 0.0
        %483 = vmatpush.msra.mxu0 0.0
        %484 = vmatpush.msra.mxu0 0.0
        %485 = vmatpush.msra.mxu0 0.0
        %486 = vmatpush.msra.mxu0 0.0
        %487 = vmatpush.msra.mxu0 0.0
        %488 = vmatpush.msra.mxu0 0.0
        %489 = vmatpush.msra.mxu0 %v472
        %490 = vmatmul.f32.gmra.mxu0 %v470
        %v491 = vpop.f32.mrf.mxu0
        %v492 = vadd.f32 0.0, %v491
        %493 = vdwg.mxu0
        %v494 = vadd.f32 %v465, %v492
        %495 = vrot.lane.b32.xlu0 %v293, 96
        %v496 = vpop.permute.xlu0 %495
        %497 = vrot.lane.b32.xlu0 %v292, 107
        %v498 = vpop.permute.xlu0 %497
        %v499 = vsel %vm255, %v496, 0
        %v501 = vsel %vm259, %v498, 0
        %503 = vmatpush.msra.mxu0 0.0
        %504 = vmatpush.msra.mxu0 0.0
        %505 = vmatpush.msra.mxu0 0.0
        %506 = vmatpush.msra.mxu0 0.0
        %507 = vmatpush.msra.mxu0 0.0
        %508 = vmatpush.msra.mxu0 0.0
        %509 = vmatpush.msra.mxu0 0.0
        %510 = vmatpush.msra.mxu0 0.0
        %511 = vmatpush.msra.mxu0 0.0
        %512 = vmatpush.msra.mxu0 0.0
        %513 = vmatpush.msra.mxu0 0.0
        %514 = vmatpush.msra.mxu0 0.0
        %515 = vmatpush.msra.mxu0 0.0
        %516 = vmatpush.msra.mxu0 0.0
        %517 = vmatpush.msra.mxu0 0.0
        %518 = vmatpush.msra.mxu0 %v501
        %519 = vmatmul.f32.gmra.mxu0 %v499
        %v520 = vpop.f32.mrf.mxu0
        %v521 = vadd.f32 0.0, %v520
        %522 = vdwg.mxu0
        %v523 = vadd.f32 %v494, %v521
        %524 = vrot.lane.b32.xlu0 %v293, 92
        %v525 = vpop.permute.xlu0 %524
        %526 = vrot.lane.b32.xlu0 %v292, 106
        %v527 = vpop.permute.xlu0 %526
        %v528 = vsel %vm255, %v525, 0
        %v530 = vsel %vm259, %v527, 0
        %532 = vmatpush.msra.mxu0 0.0
        %533 = vmatpush.msra.mxu0 0.0
        %534 = vmatpush.msra.mxu0 0.0
        %535 = vmatpush.msra.mxu0 0.0
        %536 = vmatpush.msra.mxu0 0.0
        %537 = vmatpush.msra.mxu0 0.0
        %538 = vmatpush.msra.mxu0 0.0
        %539 = vmatpush.msra.mxu0 0.0
        %540 = vmatpush.msra.mxu0 0.0
        %541 = vmatpush.msra.mxu0 0.0
        %542 = vmatpush.msra.mxu0 0.0
        %543 = vmatpush.msra.mxu0 0.0
        %544 = vmatpush.msra.mxu0 0.0
        %545 = vmatpush.msra.mxu0 0.0
        %546 = vmatpush.msra.mxu0 0.0
        %547 = vmatpush.msra.mxu0 %v530
        %548 = vmatmul.f32.gmra.mxu0 %v528
        %v549 = vpop.f32.mrf.mxu0
        %v550 = vadd.f32 0.0, %v549
        %551 = vdwg.mxu0
        %v552 = vadd.f32 %v523, %v550
        %554 = vset.pattern.permute.xlu0 1
        %555 = vperm.xlu0 %554, %v285
        %v556 = vpop.permute.xlu0 %555
        %v558 = vadd.f32 %v552, %v556
        %v559 = vmul.f32 %v558, %v283
        %v560 = vld [vmem:[%s2] sm:$0xff]
        %562 = vrot.lane.b32.xlu0 %v239, 24
        %v563 = vpop.permute.xlu0 %562
        %vm564 = vcmask 64512
        %v565 = vsel %vm564, %v563, 0
        %567 = vmatpush.msra.mxu0 0.0
        %568 = vmatpush.msra.mxu0 0.0
        %569 = vmatpush.msra.mxu0 0.0
        %570 = vmatpush.msra.mxu0 0.0
        %571 = vmatpush.msra.mxu0 0.0
        %572 = vmatpush.msra.mxu0 0.0
        %573 = vmatpush.msra.mxu0 0.0
        %574 = vmatpush.msra.mxu0 0.0
        %575 = vmatpush.msra.mxu0 0.0
        %576 = vmatpush.msra.mxu0 0.0
        %577 = vmatpush.msra.mxu0 0.0
        %578 = vmatpush.msra.mxu0 0.0
        %579 = vmatpush.msra.mxu0 0.0
        %580 = vmatpush.msra.mxu0 0.0
        %581 = vmatpush.msra.mxu0 0.0
        %582 = vmatpush.msra.mxu0 %v559
        %583 = vmatmul.f32.gmra.mxu0 %v565
        %v584 = vpop.f32.mrf.mxu0
        %v585 = vadd.f32 0.0, %v584
        %586 = vdwg.mxu0
        %v587 = vmul.f32 %v559, %v559
        %588 = vmatpush.msra.mxu0 0.0
        %589 = vmatpush.msra.mxu0 0.0
        %590 = vmatpush.msra.mxu0 0.0
        %591 = vmatpush.msra.mxu0 0.0
        %592 = vmatpush.msra.mxu0 0.0
        %593 = vmatpush.msra.mxu0 0.0
        %594 = vmatpush.msra.mxu0 0.0
        %595 = vmatpush.msra.mxu0 0.0
        %596 = vmatpush.msra.mxu0 0.0
        %597 = vmatpush.msra.mxu0 0.0
        %598 = vmatpush.msra.mxu0 0.0
        %599 = vmatpush.msra.mxu0 0.0
        %600 = vmatpush.msra.mxu0 0.0
        %601 = vmatpush.msra.mxu0 0.0
        %602 = vmatpush.msra.mxu0 0.0
        %603 = vmatpush.msra.mxu0 %v587
        %604 = vmatmul.f32.gmra.mxu0 %v565
        %v605 = vpop.f32.mrf.mxu0
        %v606 = vadd.f32 0.0, %v605
        %607 = vdwg.mxu0
        %vm608 = vcmask 654336
        %v609 = vsel %vm608, %v585, 0.0
        %610 = vadd.xlane.f32.xlu0 %v609
        %v611 = vpop.xlane.xlu0 %610
        %v612 = vmul.f32 %v611, 0.0078125
        %v613 = vsel %vm608, %v606, 0.0
        %614 = vadd.xlane.f32.xlu0 %v613
        %v615 = vpop.xlane.xlu0 %614
        %v616 = vmul.f32 %v615, 0.0078125
        %v617 = vmul.f32 %v612, %v612
        %v618 = vsub.f32 %v616, %v617
        %v619 = vadd.f32 %v618, 1e-05
        %v620 = vrsqrt.pop %v619
        %v621 = vmul.f32 %v620, %v619
        %v622 = vmul.f32 %v621, %v620
        %v623 = vmul.f32 0.5, %v622
        %v624 = vsub.f32 1.5, %v623
        %v625 = vmul.f32 %v620, %v624
        %vm626 = vweird.f32 %v619
        %vm627 = vweird.f32 %v620
        %vm628 = vmor %vm626, %vm627
        %v629 = vsel %vm628, %v620, %v625
        %v630 = vsub.f32 %v559, %v612
        %v631 = vmul.f32 %v629, %v560
        %633 = vset.pattern.permute.xlu0 2
        %634 = vperm.xlu0 %633, %v631
        %v635 = vpop.permute.xlu0 %634
        %v637 = vmul.f32 %v630, %v635
        %639 = vset.pattern.permute.xlu0 3
        %640 = vperm.xlu0 %639, %v560
        %v641 = vpop.permute.xlu0 %640
        %v643 = vadd.f32 %v637, %v641
        %v644 = vxor.u32 %v643, 2147483648
        %v645 = vmul.f32 %v644, 1.442695
        %v646 = vpow.pop %v645
        %v647 = vadd.f32 %v646, 1.0
        %v648 = vrcp.pop %v647
        %v649 = vmul.f32 %v647, %v648
        %v650 = vsub.f32 1.0, %v649
        %v651 = vmul.f32 %v648, %v650
        %v652 = vadd.f32 %v648, %v651
        %vm653 = vweird.f32 %v647
        %vm654 = vweird.f32 %v648
        %vm655 = vmor %vm653, %vm654
        %v656 = vsel %vm655, %v648, %v652
        %v657 = vand.u32 2147483647, %v647
        %vm658 = vcmp.eq.f32.partialorder %v657, 8.507059e+37
        %v659 = vand.u32 %v647, 2147483648
        %v660 = vor.u32 1.1754944e-38, %v659
        %v661 = vsel %vm658, %v660, %v656
        %v662 = vmul.f32 1.0, %v661
        %v663 = vmul.f32 %v643, %v662
        %v664 = vmul.f32 %v663, %v283
        %666 = vrot.lane.b32.xlu0 %v664, 11
        %v667 = vpop.permute.xlu0 %666
        %vm669 = vcmask 744536
        %670 = vst.msk [vmem:[#allocation2] sm:$0xff] %vm669, %v667
        %v671 = vld [vmem:[#allocation2] sm:$0xff]
        %v672 = vld [vmem:[%s1] sm:$0xff]
        %674 = vrot.lane.b32.xlu0 %v672, 80
        %v675 = vpop.permute.xlu0 %674
        %677 = vrot.lane.b32.xlu0 %v671, 127
        %v678 = vpop.permute.xlu0 %677
        %v680 = vsel %vm564, %v675, 0
        %682 = vmatpush.msra.mxu0 0.0
        %683 = vmatpush.msra.mxu0 0.0
        %684 = vmatpush.msra.mxu0 0.0
        %685 = vmatpush.msra.mxu0 0.0
        %686 = vmatpush.msra.mxu0 0.0
        %687 = vmatpush.msra.mxu0 0.0
        %688 = vmatpush.msra.mxu0 0.0
        %689 = vmatpush.msra.mxu0 0.0
        %690 = vmatpush.msra.mxu0 0.0
        %691 = vmatpush.msra.mxu0 0.0
        %692 = vmatpush.msra.mxu0 0.0
        %693 = vmatpush.msra.mxu0 0.0
        %694 = vmatpush.msra.mxu0 0.0
        %695 = vmatpush.msra.mxu0 0.0
        %696 = vmatpush.msra.mxu0 0.0
        %697 = vmatpush.msra.mxu0 %v678
        %698 = vmatmul.f32.gmra.mxu0 %v680
        %v699 = vpop.f32.mrf.mxu0
        %v700 = vadd.f32 0.0, %v699
        %701 = vdwg.mxu0
        %702 = vrot.lane.b32.xlu0 %v672, 88
        %v703 = vpop.permute.xlu0 %702
        %v704 = vsel %vm564, %v703, 0
        %706 = vmatpush.msra.mxu0 0.0
        %707 = vmatpush.msra.mxu0 0.0
        %708 = vmatpush.msra.mxu0 0.0
        %709 = vmatpush.msra.mxu0 0.0
        %710 = vmatpush.msra.mxu0 0.0
        %711 = vmatpush.msra.mxu0 0.0
        %712 = vmatpush.msra.mxu0 0.0
        %713 = vmatpush.msra.mxu0 0.0
        %714 = vmatpush.msra.mxu0 0.0
        %715 = vmatpush.msra.mxu0 0.0
        %716 = vmatpush.msra.mxu0 0.0
        %717 = vmatpush.msra.mxu0 0.0
        %718 = vmatpush.msra.mxu0 0.0
        %719 = vmatpush.msra.mxu0 0.0
        %720 = vmatpush.msra.mxu0 0.0
        %721 = vmatpush.msra.mxu0 %v671
        %722 = vmatmul.f32.gmra.mxu0 %v704
        %v723 = vpop.f32.mrf.mxu0
        %v724 = vadd.f32 %v700, %v723
        %725 = vdwg.mxu0
        %726 = vrot.lane.b32.xlu0 %v672, 72
        %v727 = vpop.permute.xlu0 %726
        %728 = vrot.lane.b32.xlu0 %v671, 126
        %v729 = vpop.permute.xlu0 %728
        %v731 = vsel %vm564, %v727, 0
        %733 = vmatpush.msra.mxu0 0.0
        %734 = vmatpush.msra.mxu0 0.0
        %735 = vmatpush.msra.mxu0 0.0
        %736 = vmatpush.msra.mxu0 0.0
        %737 = vmatpush.msra.mxu0 0.0
        %738 = vmatpush.msra.mxu0 0.0
        %739 = vmatpush.msra.mxu0 0.0
        %740 = vmatpush.msra.mxu0 0.0
        %741 = vmatpush.msra.mxu0 0.0
        %742 = vmatpush.msra.mxu0 0.0
        %743 = vmatpush.msra.mxu0 0.0
        %744 = vmatpush.msra.mxu0 0.0
        %745 = vmatpush.msra.mxu0 0.0
        %746 = vmatpush.msra.mxu0 0.0
        %747 = vmatpush.msra.mxu0 0.0
        %748 = vmatpush.msra.mxu0 %v729
        %749 = vmatmul.f32.gmra.mxu0 %v731
        %v750 = vpop.f32.mrf.mxu0
        %v751 = vadd.f32 0.0, %v750
        %752 = vdwg.mxu0
        %v753 = vadd.f32 %v724, %v751
        %754 = vrot.lane.b32.xlu0 %v672, 64
        %v755 = vpop.permute.xlu0 %754
        %756 = vrot.lane.b32.xlu0 %v671, 118
        %v757 = vpop.permute.xlu0 %756
        %v759 = vsel %vm564, %v755, 0
        %761 = vmatpush.msra.mxu0 0.0
        %762 = vmatpush.msra.mxu0 0.0
        %763 = vmatpush.msra.mxu0 0.0
        %764 = vmatpush.msra.mxu0 0.0
        %765 = vmatpush.msra.mxu0 0.0
        %766 = vmatpush.msra.mxu0 0.0
        %767 = vmatpush.msra.mxu0 0.0
        %768 = vmatpush.msra.mxu0 0.0
        %769 = vmatpush.msra.mxu0 0.0
        %770 = vmatpush.msra.mxu0 0.0
        %771 = vmatpush.msra.mxu0 0.0
        %772 = vmatpush.msra.mxu0 0.0
        %773 = vmatpush.msra.mxu0 0.0
        %774 = vmatpush.msra.mxu0 0.0
        %775 = vmatpush.msra.mxu0 0.0
        %776 = vmatpush.msra.mxu0 %v757
        %777 = vmatmul.f32.gmra.mxu0 %v759
        %v778 = vpop.f32.mrf.mxu0
        %v779 = vadd.f32 0.0, %v778
        %780 = vdwg.mxu0
        %v781 = vadd.f32 %v753, %v779
        %782 = vrot.lane.b32.xlu0 %v672, 56
        %v783 = vpop.permute.xlu0 %782
        %784 = vrot.lane.b32.xlu0 %v671, 117
        %v785 = vpop.permute.xlu0 %784
        %v787 = vsel %vm564, %v783, 0
        %789 = vmatpush.msra.mxu0 0.0
        %790 = vmatpush.msra.mxu0 0.0
        %791 = vmatpush.msra.mxu0 0.0
        %792 = vmatpush.msra.mxu0 0.0
        %793 = vmatpush.msra.mxu0 0.0
        %794 = vmatpush.msra.mxu0 0.0
        %795 = vmatpush.msra.mxu0 0.0
        %796 = vmatpush.msra.mxu0 0.0
        %797 = vmatpush.msra.mxu0 0.0
        %798 = vmatpush.msra.mxu0 0.0
        %799 = vmatpush.msra.mxu0 0.0
        %800 = vmatpush.msra.mxu0 0.0
        %801 = vmatpush.msra.mxu0 0.0
        %802 = vmatpush.msra.mxu0 0.0
        %803 = vmatpush.msra.mxu0 0.0
        %804 = vmatpush.msra.mxu0 %v785
        %805 = vmatmul.f32.gmra.mxu0 %v787
        %v806 = vpop.f32.mrf.mxu0
        %v807 = vadd.f32 0.0, %v806
        %808 = vdwg.mxu0
        %v809 = vadd.f32 %v781, %v807
        %810 = vrot.lane.b32.xlu0 %v672, 48
        %v811 = vpop.permute.xlu0 %810
        %812 = vrot.lane.b32.xlu0 %v671, 116
        %v813 = vpop.permute.xlu0 %812
        %v815 = vsel %vm564, %v811, 0
        %817 = vmatpush.msra.mxu0 0.0
        %818 = vmatpush.msra.mxu0 0.0
        %819 = vmatpush.msra.mxu0 0.0
        %820 = vmatpush.msra.mxu0 0.0
        %821 = vmatpush.msra.mxu0 0.0
        %822 = vmatpush.msra.mxu0 0.0
        %823 = vmatpush.msra.mxu0 0.0
        %824 = vmatpush.msra.mxu0 0.0
        %825 = vmatpush.msra.mxu0 0.0
        %826 = vmatpush.msra.mxu0 0.0
        %827 = vmatpush.msra.mxu0 0.0
        %828 = vmatpush.msra.mxu0 0.0
        %829 = vmatpush.msra.mxu0 0.0
        %830 = vmatpush.msra.mxu0 0.0
        %831 = vmatpush.msra.mxu0 0.0
        %832 = vmatpush.msra.mxu0 %v813
        %833 = vmatmul.f32.gmra.mxu0 %v815
        %v834 = vpop.f32.mrf.mxu0
        %v835 = vadd.f32 0.0, %v834
        %836 = vdwg.mxu0
        %v837 = vadd.f32 %v809, %v835
        %838 = vrot.lane.b32.xlu0 %v672, 40
        %v839 = vpop.permute.xlu0 %838
        %840 = vrot.lane.b32.xlu0 %v671, 108
        %v841 = vpop.permute.xlu0 %840
        %v843 = vsel %vm564, %v839, 0
        %845 = vmatpush.msra.mxu0 0.0
        %846 = vmatpush.msra.mxu0 0.0
        %847 = vmatpush.msra.mxu0 0.0
        %848 = vmatpush.msra.mxu0 0.0
        %849 = vmatpush.msra.mxu0 0.0
        %850 = vmatpush.msra.mxu0 0.0
        %851 = vmatpush.msra.mxu0 0.0
        %852 = vmatpush.msra.mxu0 0.0
        %853 = vmatpush.msra.mxu0 0.0
        %854 = vmatpush.msra.mxu0 0.0
        %855 = vmatpush.msra.mxu0 0.0
        %856 = vmatpush.msra.mxu0 0.0
        %857 = vmatpush.msra.mxu0 0.0
        %858 = vmatpush.msra.mxu0 0.0
        %859 = vmatpush.msra.mxu0 0.0
        %860 = vmatpush.msra.mxu0 %v841
        %861 = vmatmul.f32.gmra.mxu0 %v843
        %v862 = vpop.f32.mrf.mxu0
        %v863 = vadd.f32 0.0, %v862
        %864 = vdwg.mxu0
        %v865 = vadd.f32 %v837, %v863
        %866 = vrot.lane.b32.xlu0 %v672, 32
        %v867 = vpop.permute.xlu0 %866
        %868 = vrot.lane.b32.xlu0 %v671, 107
        %v869 = vpop.permute.xlu0 %868
        %v871 = vsel %vm564, %v867, 0
        %873 = vmatpush.msra.mxu0 0.0
        %874 = vmatpush.msra.mxu0 0.0
        %875 = vmatpush.msra.mxu0 0.0
        %876 = vmatpush.msra.mxu0 0.0
        %877 = vmatpush.msra.mxu0 0.0
        %878 = vmatpush.msra.mxu0 0.0
        %879 = vmatpush.msra.mxu0 0.0
        %880 = vmatpush.msra.mxu0 0.0
        %881 = vmatpush.msra.mxu0 0.0
        %882 = vmatpush.msra.mxu0 0.0
        %883 = vmatpush.msra.mxu0 0.0
        %884 = vmatpush.msra.mxu0 0.0
        %885 = vmatpush.msra.mxu0 0.0
        %886 = vmatpush.msra.mxu0 0.0
        %887 = vmatpush.msra.mxu0 0.0
        %888 = vmatpush.msra.mxu0 %v869
        %889 = vmatmul.f32.gmra.mxu0 %v871
        %v890 = vpop.f32.mrf.mxu0
        %v891 = vadd.f32 0.0, %v890
        %892 = vdwg.mxu0
        %v893 = vadd.f32 %v865, %v891
        %894 = vrot.lane.b32.xlu0 %v672, 24
        %v895 = vpop.permute.xlu0 %894
        %896 = vrot.lane.b32.xlu0 %v671, 106
        %v897 = vpop.permute.xlu0 %896
        %v899 = vsel %vm564, %v895, 0
        %901 = vmatpush.msra.mxu0 0.0
        %902 = vmatpush.msra.mxu0 0.0
        %903 = vmatpush.msra.mxu0 0.0
        %904 = vmatpush.msra.mxu0 0.0
        %905 = vmatpush.msra.mxu0 0.0
        %906 = vmatpush.msra.mxu0 0.0
        %907 = vmatpush.msra.mxu0 0.0
        %908 = vmatpush.msra.mxu0 0.0
        %909 = vmatpush.msra.mxu0 0.0
        %910 = vmatpush.msra.mxu0 0.0
        %911 = vmatpush.msra.mxu0 0.0
        %912 = vmatpush.msra.mxu0 0.0
        %913 = vmatpush.msra.mxu0 0.0
        %914 = vmatpush.msra.mxu0 0.0
        %915 = vmatpush.msra.mxu0 0.0
        %916 = vmatpush.msra.mxu0 %v897
        %917 = vmatmul.f32.gmra.mxu0 %v899
        %v918 = vpop.f32.mrf.mxu0
        %v919 = vadd.f32 0.0, %v918
        %920 = vdwg.mxu0
        %v921 = vadd.f32 %v893, %v919
        %922 = vset.pattern.permute.xlu0 4
        %923 = vperm.xlu0 %922, %v560
        %v924 = vpop.permute.xlu0 %923
        %v926 = vadd.f32 %v921, %v924
        %v927 = vmul.f32 %v926, %v283
        %v928 = vld [vmem:[%s2] sm:$0xff]
        %929 = vmatpush.msra.mxu0 0.0
        %930 = vmatpush.msra.mxu0 0.0
        %931 = vmatpush.msra.mxu0 0.0
        %932 = vmatpush.msra.mxu0 0.0
        %933 = vmatpush.msra.mxu0 0.0
        %934 = vmatpush.msra.mxu0 0.0
        %935 = vmatpush.msra.mxu0 0.0
        %936 = vmatpush.msra.mxu0 0.0
        %937 = vmatpush.msra.mxu0 0.0
        %938 = vmatpush.msra.mxu0 0.0
        %939 = vmatpush.msra.mxu0 0.0
        %940 = vmatpush.msra.mxu0 0.0
        %941 = vmatpush.msra.mxu0 0.0
        %942 = vmatpush.msra.mxu0 0.0
        %943 = vmatpush.msra.mxu0 0.0
        %944 = vmatpush.msra.mxu0 %v927
        %945 = vmatmul.f32.gmra.mxu0 %v565
        %v946 = vpop.f32.mrf.mxu0
        %v947 = vadd.f32 0.0, %v946
        %948 = vdwg.mxu0
        %v949 = vmul.f32 %v927, %v927
        %950 = vmatpush.msra.mxu0 0.0
        %951 = vmatpush.msra.mxu0 0.0
        %952 = vmatpush.msra.mxu0 0.0
        %953 = vmatpush.msra.mxu0 0.0
        %954 = vmatpush.msra.mxu0 0.0
        %955 = vmatpush.msra.mxu0 0.0
        %956 = vmatpush.msra.mxu0 0.0
        %957 = vmatpush.msra.mxu0 0.0
        %958 = vmatpush.msra.mxu0 0.0
        %959 = vmatpush.msra.mxu0 0.0
        %960 = vmatpush.msra.mxu0 0.0
        %961 = vmatpush.msra.mxu0 0.0
        %962 = vmatpush.msra.mxu0 0.0
        %963 = vmatpush.msra.mxu0 0.0
        %964 = vmatpush.msra.mxu0 0.0
        %965 = vmatpush.msra.mxu0 %v949
        %966 = vmatmul.f32.gmra.mxu0 %v565
        %v967 = vpop.f32.mrf.mxu0
        %v968 = vadd.f32 0.0, %v967
        %969 = vdwg.mxu0
        %v970 = vsel %vm608, %v947, 0.0
        %971 = vadd.xlane.f32.xlu0 %v970
        %v972 = vpop.xlane.xlu0 %971
        %v973 = vmul.f32 %v972, 0.0078125
        %v974 = vsel %vm608, %v968, 0.0
        %975 = vadd.xlane.f32.xlu0 %v974
        %v976 = vpop.xlane.xlu0 %975
        %v977 = vmul.f32 %v976, 0.0078125
        %v978 = vmul.f32 %v973, %v973
        %v979 = vsub.f32 %v977, %v978
        %v980 = vadd.f32 %v979, 1e-05
        %v981 = vrsqrt.pop %v980
        %v982 = vmul.f32 %v981, %v980
        %v983 = vmul.f32 %v982, %v981
        %v984 = vmul.f32 0.5, %v983
        %v985 = vsub.f32 1.5, %v984
        %v986 = vmul.f32 %v981, %v985
        %vm987 = vweird.f32 %v980
        %vm988 = vweird.f32 %v981
        %vm989 = vmor %vm987, %vm988
        %v990 = vsel %vm989, %v981, %v986
        %v991 = vsub.f32 %v927, %v973
        %v992 = vmul.f32 %v990, %v928
        %994 = vset.pattern.permute.xlu0 5
        %995 = vperm.xlu0 %994, %v992
        %v996 = vpop.permute.xlu0 %995
        %v998 = vmul.f32 %v991, %v996
        %1000 = vset.pattern.permute.xlu0 6
        %1001 = vperm.xlu0 %1000, %v928
        %v1002 = vpop.permute.xlu0 %1001
        %v1004 = vadd.f32 %v998, %v1002
        %v1005 = vxor.u32 %v1004, 2147483648
        %v1006 = vmul.f32 %v1005, 1.442695
        %v1007 = vpow.pop %v1006
        %v1008 = vadd.f32 %v1007, 1.0
        %v1009 = vrcp.pop %v1008
        %v1010 = vmul.f32 %v1008, %v1009
        %v1011 = vsub.f32 1.0, %v1010
        %v1012 = vmul.f32 %v1009, %v1011
        %v1013 = vadd.f32 %v1009, %v1012
        %vm1014 = vweird.f32 %v1008
        %vm1015 = vweird.f32 %v1009
        %vm1016 = vmor %vm1014, %vm1015
        %v1017 = vsel %vm1016, %v1009, %v1013
        %v1018 = vand.u32 2147483647, %v1008
        %vm1019 = vcmp.eq.f32.partialorder %v1018, 8.507059e+37
        %v1020 = vand.u32 %v1008, 2147483648
        %v1021 = vor.u32 1.1754944e-38, %v1020
        %v1022 = vsel %vm1019, %v1021, %v1017
        %v1023 = vmul.f32 1.0, %v1022
        %v1024 = vmul.f32 %v1004, %v1023
        %v1025 = vmul.f32 %v1024, %v283
        %1027 = vrot.lane.b32.xlu0 %v1025, 11
        %v1028 = vpop.permute.xlu0 %1027
        %1030 = vst.msk [vmem:[#allocation2] sm:$0xff] %vm669, %v1028
        %v1031 = vld [vmem:[#allocation2] sm:$0xff]
        %v1032 = vld [vmem:[%s1] sm:$0xff]
        %1034 = vrot.lane.b32.xlu0 %v1032, 8
        %v1035 = vpop.permute.xlu0 %1034
        %1037 = vrot.lane.b32.xlu0 %v1031, 127
        %v1038 = vpop.permute.xlu0 %1037
        %v1040 = vsel %vm564, %v1035, 0
        %1042 = vmatpush.msra.mxu0 0.0
        %1043 = vmatpush.msra.mxu0 0.0
        %1044 = vmatpush.msra.mxu0 0.0
        %1045 = vmatpush.msra.mxu0 0.0
        %1046 = vmatpush.msra.mxu0 0.0
        %1047 = vmatpush.msra.mxu0 0.0
        %1048 = vmatpush.msra.mxu0 0.0
        %1049 = vmatpush.msra.mxu0 0.0
        %1050 = vmatpush.msra.mxu0 0.0
        %1051 = vmatpush.msra.mxu0 0.0
        %1052 = vmatpush.msra.mxu0 0.0
        %1053 = vmatpush.msra.mxu0 0.0
        %1054 = vmatpush.msra.mxu0 0.0
        %1055 = vmatpush.msra.mxu0 0.0
        %1056 = vmatpush.msra.mxu0 0.0
        %1057 = vmatpush.msra.mxu0 %v1038
        %1058 = vmatmul.f32.gmra.mxu0 %v1040
        %v1059 = vpop.f32.mrf.mxu0
        %v1060 = vadd.f32 0.0, %v1059
        %1061 = vdwg.mxu0
        %1062 = vrot.lane.b32.xlu0 %v1032, 16
        %v1063 = vpop.permute.xlu0 %1062
        %v1064 = vsel %vm564, %v1063, 0
        %1066 = vmatpush.msra.mxu0 0.0
        %1067 = vmatpush.msra.mxu0 0.0
        %1068 = vmatpush.msra.mxu0 0.0
        %1069 = vmatpush.msra.mxu0 0.0
        %1070 = vmatpush.msra.mxu0 0.0
        %1071 = vmatpush.msra.mxu0 0.0
        %1072 = vmatpush.msra.mxu0 0.0
        %1073 = vmatpush.msra.mxu0 0.0
        %1074 = vmatpush.msra.mxu0 0.0
        %1075 = vmatpush.msra.mxu0 0.0
        %1076 = vmatpush.msra.mxu0 0.0
        %1077 = vmatpush.msra.mxu0 0.0
        %1078 = vmatpush.msra.mxu0 0.0
        %1079 = vmatpush.msra.mxu0 0.0
        %1080 = vmatpush.msra.mxu0 0.0
        %1081 = vmatpush.msra.mxu0 %v1031
        %1082 = vmatmul.f32.gmra.mxu0 %v1064
        %v1083 = vpop.f32.mrf.mxu0
        %v1084 = vadd.f32 %v1060, %v1083
        %1085 = vdwg.mxu0
        %v1086 = vld [vmem:[%s1 + $0x8] sm:$0xff]
        %1087 = vrot.lane.b32.xlu0 %v1031, 126
        %v1088 = vpop.permute.xlu0 %1087
        %v1091 = vsel %vm564, %v1086, 0
        %1093 = vmatpush.msra.mxu0 0.0
        %1094 = vmatpush.msra.mxu0 0.0
        %1095 = vmatpush.msra.mxu0 0.0
        %1096 = vmatpush.msra.mxu0 0.0
        %1097 = vmatpush.msra.mxu0 0.0
        %1098 = vmatpush.msra.mxu0 0.0
        %1099 = vmatpush.msra.mxu0 0.0
        %1100 = vmatpush.msra.mxu0 0.0
        %1101 = vmatpush.msra.mxu0 0.0
        %1102 = vmatpush.msra.mxu0 0.0
        %1103 = vmatpush.msra.mxu0 0.0
        %1104 = vmatpush.msra.mxu0 0.0
        %1105 = vmatpush.msra.mxu0 0.0
        %1106 = vmatpush.msra.mxu0 0.0
        %1107 = vmatpush.msra.mxu0 0.0
        %1108 = vmatpush.msra.mxu0 %v1088
        %1109 = vmatmul.f32.gmra.mxu0 %v1091
        %v1110 = vpop.f32.mrf.mxu0
        %v1111 = vadd.f32 0.0, %v1110
        %1112 = vdwg.mxu0
        %v1113 = vadd.f32 %v1084, %v1111
        %1114 = vrot.lane.b32.xlu0 %v1086, 120
        %v1115 = vpop.permute.xlu0 %1114
        %1116 = vrot.lane.b32.xlu0 %v1031, 118
        %v1117 = vpop.permute.xlu0 %1116
        %v1119 = vsel %vm564, %v1115, 0
        %1121 = vmatpush.msra.mxu0 0.0
        %1122 = vmatpush.msra.mxu0 0.0
        %1123 = vmatpush.msra.mxu0 0.0
        %1124 = vmatpush.msra.mxu0 0.0
        %1125 = vmatpush.msra.mxu0 0.0
        %1126 = vmatpush.msra.mxu0 0.0
        %1127 = vmatpush.msra.mxu0 0.0
        %1128 = vmatpush.msra.mxu0 0.0
        %1129 = vmatpush.msra.mxu0 0.0
        %1130 = vmatpush.msra.mxu0 0.0
        %1131 = vmatpush.msra.mxu0 0.0
        %1132 = vmatpush.msra.mxu0 0.0
        %1133 = vmatpush.msra.mxu0 0.0
        %1134 = vmatpush.msra.mxu0 0.0
        %1135 = vmatpush.msra.mxu0 0.0
        %1136 = vmatpush.msra.mxu0 %v1117
        %1137 = vmatmul.f32.gmra.mxu0 %v1119
        %v1138 = vpop.f32.mrf.mxu0
        %v1139 = vadd.f32 0.0, %v1138
        %1140 = vdwg.mxu0
        %v1141 = vadd.f32 %v1113, %v1139
        %1142 = vrot.lane.b32.xlu0 %v1086, 112
        %v1143 = vpop.permute.xlu0 %1142
        %1144 = vrot.lane.b32.xlu0 %v1031, 117
        %v1145 = vpop.permute.xlu0 %1144
        %v1147 = vsel %vm564, %v1143, 0
        %1149 = vmatpush.msra.mxu0 0.0
        %1150 = vmatpush.msra.mxu0 0.0
        %1151 = vmatpush.msra.mxu0 0.0
        %1152 = vmatpush.msra.mxu0 0.0
        %1153 = vmatpush.msra.mxu0 0.0
        %1154 = vmatpush.msra.mxu0 0.0
        %1155 = vmatpush.msra.mxu0 0.0
        %1156 = vmatpush.msra.mxu0 0.0
        %1157 = vmatpush.msra.mxu0 0.0
        %1158 = vmatpush.msra.mxu0 0.0
        %1159 = vmatpush.msra.mxu0 0.0
        %1160 = vmatpush.msra.mxu0 0.0
        %1161 = vmatpush.msra.mxu0 0.0
        %1162 = vmatpush.msra.mxu0 0.0
        %1163 = vmatpush.msra.mxu0 0.0
        %1164 = vmatpush.msra.mxu0 %v1145
        %1165 = vmatmul.f32.gmra.mxu0 %v1147
        %v1166 = vpop.f32.mrf.mxu0
        %v1167 = vadd.f32 0.0, %v1166
        %1168 = vdwg.mxu0
        %v1169 = vadd.f32 %v1141, %v1167
        %1170 = vrot.lane.b32.xlu0 %v1086, 104
        %v1171 = vpop.permute.xlu0 %1170
        %1172 = vrot.lane.b32.xlu0 %v1031, 116
        %v1173 = vpop.permute.xlu0 %1172
        %v1175 = vsel %vm564, %v1171, 0
        %1177 = vmatpush.msra.mxu0 0.0
        %1178 = vmatpush.msra.mxu0 0.0
        %1179 = vmatpush.msra.mxu0 0.0
        %1180 = vmatpush.msra.mxu0 0.0
        %1181 = vmatpush.msra.mxu0 0.0
        %1182 = vmatpush.msra.mxu0 0.0
        %1183 = vmatpush.msra.mxu0 0.0
        %1184 = vmatpush.msra.mxu0 0.0
        %1185 = vmatpush.msra.mxu0 0.0
        %1186 = vmatpush.msra.mxu0 0.0
        %1187 = vmatpush.msra.mxu0 0.0
        %1188 = vmatpush.msra.mxu0 0.0
        %1189 = vmatpush.msra.mxu0 0.0
        %1190 = vmatpush.msra.mxu0 0.0
        %1191 = vmatpush.msra.mxu0 0.0
        %1192 = vmatpush.msra.mxu0 %v1173
        %1193 = vmatmul.f32.gmra.mxu0 %v1175
        %v1194 = vpop.f32.mrf.mxu0
        %v1195 = vadd.f32 0.0, %v1194
        %1196 = vdwg.mxu0
        %v1197 = vadd.f32 %v1169, %v1195
        %1198 = vrot.lane.b32.xlu0 %v1086, 96
        %v1199 = vpop.permute.xlu0 %1198
        %1200 = vrot.lane.b32.xlu0 %v1031, 108
        %v1201 = vpop.permute.xlu0 %1200
        %v1203 = vsel %vm564, %v1199, 0
        %1205 = vmatpush.msra.mxu0 0.0
        %1206 = vmatpush.msra.mxu0 0.0
        %1207 = vmatpush.msra.mxu0 0.0
        %1208 = vmatpush.msra.mxu0 0.0
        %1209 = vmatpush.msra.mxu0 0.0
        %1210 = vmatpush.msra.mxu0 0.0
        %1211 = vmatpush.msra.mxu0 0.0
        %1212 = vmatpush.msra.mxu0 0.0
        %1213 = vmatpush.msra.mxu0 0.0
        %1214 = vmatpush.msra.mxu0 0.0
        %1215 = vmatpush.msra.mxu0 0.0
        %1216 = vmatpush.msra.mxu0 0.0
        %1217 = vmatpush.msra.mxu0 0.0
        %1218 = vmatpush.msra.mxu0 0.0
        %1219 = vmatpush.msra.mxu0 0.0
        %1220 = vmatpush.msra.mxu0 %v1201
        %1221 = vmatmul.f32.gmra.mxu0 %v1203
        %v1222 = vpop.f32.mrf.mxu0
        %v1223 = vadd.f32 0.0, %v1222
        %1224 = vdwg.mxu0
        %v1225 = vadd.f32 %v1197, %v1223
        %1226 = vrot.lane.b32.xlu0 %v1086, 88
        %v1227 = vpop.permute.xlu0 %1226
        %1228 = vrot.lane.b32.xlu0 %v1031, 107
        %v1229 = vpop.permute.xlu0 %1228
        %v1231 = vsel %vm564, %v1227, 0
        %1233 = vmatpush.msra.mxu0 0.0
        %1234 = vmatpush.msra.mxu0 0.0
        %1235 = vmatpush.msra.mxu0 0.0
        %1236 = vmatpush.msra.mxu0 0.0
        %1237 = vmatpush.msra.mxu0 0.0
        %1238 = vmatpush.msra.mxu0 0.0
        %1239 = vmatpush.msra.mxu0 0.0
        %1240 = vmatpush.msra.mxu0 0.0
        %1241 = vmatpush.msra.mxu0 0.0
        %1242 = vmatpush.msra.mxu0 0.0
        %1243 = vmatpush.msra.mxu0 0.0
        %1244 = vmatpush.msra.mxu0 0.0
        %1245 = vmatpush.msra.mxu0 0.0
        %1246 = vmatpush.msra.mxu0 0.0
        %1247 = vmatpush.msra.mxu0 0.0
        %1248 = vmatpush.msra.mxu0 %v1229
        %1249 = vmatmul.f32.gmra.mxu0 %v1231
        %v1250 = vpop.f32.mrf.mxu0
        %v1251 = vadd.f32 0.0, %v1250
        %1252 = vdwg.mxu0
        %v1253 = vadd.f32 %v1225, %v1251
        %1254 = vrot.lane.b32.xlu0 %v1086, 80
        %v1255 = vpop.permute.xlu0 %1254
        %1256 = vrot.lane.b32.xlu0 %v1031, 106
        %v1257 = vpop.permute.xlu0 %1256
        %v1259 = vsel %vm564, %v1255, 0
        %1261 = vmatpush.msra.mxu0 0.0
        %1262 = vmatpush.msra.mxu0 0.0
        %1263 = vmatpush.msra.mxu0 0.0
        %1264 = vmatpush.msra.mxu0 0.0
        %1265 = vmatpush.msra.mxu0 0.0
        %1266 = vmatpush.msra.mxu0 0.0
        %1267 = vmatpush.msra.mxu0 0.0
        %1268 = vmatpush.msra.mxu0 0.0
        %1269 = vmatpush.msra.mxu0 0.0
        %1270 = vmatpush.msra.mxu0 0.0
        %1271 = vmatpush.msra.mxu0 0.0
        %1272 = vmatpush.msra.mxu0 0.0
        %1273 = vmatpush.msra.mxu0 0.0
        %1274 = vmatpush.msra.mxu0 0.0
        %1275 = vmatpush.msra.mxu0 0.0
        %1276 = vmatpush.msra.mxu0 %v1257
        %1277 = vmatmul.f32.gmra.mxu0 %v1259
        %v1278 = vpop.f32.mrf.mxu0
        %v1279 = vadd.f32 0.0, %v1278
        %1280 = vdwg.mxu0
        %v1281 = vadd.f32 %v1253, %v1279
        %1282 = vset.pattern.permute.xlu0 7
        %1283 = vperm.xlu0 %1282, %v928
        %v1284 = vpop.permute.xlu0 %1283
        %v1286 = vadd.f32 %v1281, %v1284
        %v1287 = vmul.f32 %v1286, %v283
        %v1288 = vadd.f32 %v1287, %v559
        %v1289 = vld [vmem:[%s2] sm:$0xff]
        %1290 = vmatpush.msra.mxu0 0.0
        %1291 = vmatpush.msra.mxu0 0.0
        %1292 = vmatpush.msra.mxu0 0.0
        %1293 = vmatpush.msra.mxu0 0.0
        %1294 = vmatpush.msra.mxu0 0.0
        %1295 = vmatpush.msra.mxu0 0.0
        %1296 = vmatpush.msra.mxu0 0.0
        %1297 = vmatpush.msra.mxu0 0.0
        %1298 = vmatpush.msra.mxu0 0.0
        %1299 = vmatpush.msra.mxu0 0.0
        %1300 = vmatpush.msra.mxu0 0.0
        %1301 = vmatpush.msra.mxu0 0.0
        %1302 = vmatpush.msra.mxu0 0.0
        %1303 = vmatpush.msra.mxu0 0.0
        %1304 = vmatpush.msra.mxu0 0.0
        %1305 = vmatpush.msra.mxu0 %v1288
        %1306 = vmatmul.f32.gmra.mxu0 %v565
        %v1307 = vpop.f32.mrf.mxu0
        %v1308 = vadd.f32 0.0, %v1307
        %1309 = vdwg.mxu0
        %v1310 = vmul.f32 %v1288, %v1288
        %1311 = vmatpush.msra.mxu0 0.0
        %1312 = vmatpush.msra.mxu0 0.0
        %1313 = vmatpush.msra.mxu0 0.0
        %1314 = vmatpush.msra.mxu0 0.0
        %1315 = vmatpush.msra.mxu0 0.0
        %1316 = vmatpush.msra.mxu0 0.0
        %1317 = vmatpush.msra.mxu0 0.0
        %1318 = vmatpush.msra.mxu0 0.0
        %1319 = vmatpush.msra.mxu0 0.0
        %1320 = vmatpush.msra.mxu0 0.0
        %1321 = vmatpush.msra.mxu0 0.0
        %1322 = vmatpush.msra.mxu0 0.0
        %1323 = vmatpush.msra.mxu0 0.0
        %1324 = vmatpush.msra.mxu0 0.0
        %1325 = vmatpush.msra.mxu0 0.0
        %1326 = vmatpush.msra.mxu0 %v1310
        %1327 = vmatmul.f32.gmra.mxu0 %v565
        %v1328 = vpop.f32.mrf.mxu0
        %v1329 = vadd.f32 0.0, %v1328
        %1330 = vdwg.mxu0
        %v1331 = vsel %vm608, %v1308, 0.0
        %1332 = vadd.xlane.f32.xlu0 %v1331
        %v1333 = vpop.xlane.xlu0 %1332
        %v1334 = vmul.f32 %v1333, 0.0078125
        %v1335 = vsel %vm608, %v1329, 0.0
        %1336 = vadd.xlane.f32.xlu0 %v1335
        %v1337 = vpop.xlane.xlu0 %1336
        %v1338 = vmul.f32 %v1337, 0.0078125
        %v1339 = vmul.f32 %v1334, %v1334
        %v1340 = vsub.f32 %v1338, %v1339
        %v1341 = vadd.f32 %v1340, 1e-05
        %v1342 = vrsqrt.pop %v1341
        %v1343 = vmul.f32 %v1342, %v1341
        %v1344 = vmul.f32 %v1343, %v1342
        %v1345 = vmul.f32 0.5, %v1344
        %v1346 = vsub.f32 1.5, %v1345
        %v1347 = vmul.f32 %v1342, %v1346
        %vm1348 = vweird.f32 %v1341
        %vm1349 = vweird.f32 %v1342
        %vm1350 = vmor %vm1348, %vm1349
        %v1351 = vsel %vm1350, %v1342, %v1347
        %v1352 = vsub.f32 %v1288, %v1334
        %v1353 = vmul.f32 %v1351, %v1289
        %1355 = vset.pattern.permute.xlu0 8
        %1356 = vperm.xlu0 %1355, %v1353
        %v1357 = vpop.permute.xlu0 %1356
        %v1359 = vmul.f32 %v1352, %v1357
        %1361 = vset.pattern.permute.xlu0 9
        %1362 = vperm.xlu0 %1361, %v1289
        %v1363 = vpop.permute.xlu0 %1362
        %v1365 = vadd.f32 %v1359, %v1363
        %v1366 = vmul.f32 %v1365, %v283
        %v1367 = vld [vmem:[%s1 + $0x8] sm:$0xff]
        %v1368 = vld [vmem:[%s1 + $0x28] sm:$0xff]
        %v1369 = vld [vmem:[%s1 + $0x48] sm:$0xff]
        %v1370 = vld [vmem:[%s2] sm:$0xff]
        %v1371 = vld [vmem:[%s2 + $0x8] sm:$0xff]
        %v1372 = vld [vmem:[%s2 + $0x10] sm:$0xff]
        %1374 = vset.pattern.permute.xlu0 10
        %1375 = vperm.xlu0 %1374, %v1370
        %v1376 = vpop.permute.xlu0 %1375
        %1379 = vset.pattern.permute.xlu0 10
        %1380 = vperm.xlu0 %1379, %v1371
        %v1381 = vpop.permute.xlu0 %1380
        %1384 = vset.pattern.permute.xlu0 10
        %1385 = vperm.xlu0 %1384, %v1372
        %v1386 = vpop.permute.xlu0 %1385
        %1391 = vrot.lane.b32.xlu0 %v1367, 72
        %v1392 = vpop.permute.xlu0 %1391
        %1393 = vrot.lane.b32.xlu0 %v1368, 72
        %v1394 = vpop.permute.xlu0 %1393
        %1395 = vrot.lane.b32.xlu0 %v1369, 72
        %v1396 = vpop.permute.xlu0 %1395
        %v1397 = vsel %vm564, %v1392, 0
        %v1399 = vsel %vm564, %v1394, 0
        %v1401 = vsel %vm564, %v1396, 0
        %1403 = vmatpush.msra.mxu0 0.0
        %1404 = vmatpush.msra.mxu0 0.0
        %1405 = vmatpush.msra.mxu0 0.0
        %1406 = vmatpush.msra.mxu0 0.0
        %1407 = vmatpush.msra.mxu0 0.0
        %1408 = vmatpush.msra.mxu0 0.0
        %1409 = vmatpush.msra.mxu0 0.0
        %1410 = vmatpush.msra.mxu0 0.0
        %1411 = vmatpush.msra.mxu0 0.0
        %1412 = vmatpush.msra.mxu0 0.0
        %1413 = vmatpush.msra.mxu0 0.0
        %1414 = vmatpush.msra.mxu0 0.0
        %1415 = vmatpush.msra.mxu0 0.0
        %1416 = vmatpush.msra.mxu0 0.0
        %1417 = vmatpush.msra.mxu0 0.0
        %1418 = vmatpush.msra.mxu0 %v1366
        %1419 = vmatmul.f32.gmra.mxu0 %v1397
        %v1420 = vpop.f32.mrf.mxu0
        %v1421 = vadd.f32 %v1376, %v1420
        %1422 = vmatmul.f32.gmra.mxu0 %v1399
        %v1423 = vpop.f32.mrf.mxu0
        %v1424 = vadd.f32 %v1381, %v1423
        %1425 = vmatmul.f32.gmra.mxu0 %v1401
        %v1426 = vpop.f32.mrf.mxu0
        %v1427 = vadd.f32 %v1386, %v1426
        %1428 = vdwg.mxu0
        %vm1429 = vcmp.gt.f32.partialorder %v240, 0.0
        %1430 = vxpose.xlu0.b32.start [1/16] %v1421, 128
        %1431 = vxpose.xlu0.b32.cont [2/16] 0.0, 128
        %1432 = vxpose.xlu0.b32.cont [3/16] 0.0, 128
        %1433 = vxpose.xlu0.b32.cont [4/16] 0.0, 128
        %1434 = vxpose.xlu0.b32.cont [5/16] 0.0, 128
        %1435 = vxpose.xlu0.b32.cont [6/16] 0.0, 128
        %1436 = vxpose.xlu0.b32.cont [7/16] 0.0, 128
        %1437 = vxpose.xlu0.b32.cont [8/16] 0.0, 128
        %1438 = vxpose.xlu0.b32.cont [9/16] 0.0, 128
        %1439 = vxpose.xlu0.b32.cont [10/16] 0.0, 128
        %1440 = vxpose.xlu0.b32.cont [11/16] 0.0, 128
        %1441 = vxpose.xlu0.b32.cont [12/16] 0.0, 128
        %1442 = vxpose.xlu0.b32.cont [13/16] 0.0, 128
        %1443 = vxpose.xlu0.b32.cont [14/16] 0.0, 128
        %1444 = vxpose.xlu0.b32.cont [15/16] 0.0, 128
        %1445 = vxpose.xlu0.b32.end [16/16] 0.0, 128
        %v1446 = vpop.trf.xlu0
        %v1447 = vpop.trf.xlu0
        %v1448 = vpop.trf.xlu0
        %v1449 = vpop.trf.xlu0
        %v1450 = vpop.trf.xlu0
        %v1451 = vpop.trf.xlu0
        %v1452 = vpop.trf.xlu0
        %v1453 = vpop.trf.xlu0
        %v1454 = vpop.trf.xlu0
        %v1455 = vpop.trf.xlu0
        %v1456 = vpop.trf.xlu0
        %v1457 = vpop.trf.xlu0
        %v1458 = vpop.trf.xlu0
        %v1459 = vpop.trf.xlu0
        %v1460 = vpop.trf.xlu0
        %v1461 = vpop.trf.xlu0
        %v1463 = vsel %vm255, %v1446, 0
        %v1466 = vsel %vm255, %v1447, 0
        %v1469 = vsel %vm255, %v1448, 0
        %v1472 = vsel %vm255, %v1449, 0
        %v1475 = vsel %vm255, %v1450, 0
        %v1478 = vsel %vm255, %v1451, 0
        %v1481 = vsel %vm255, %v1452, 0
        %v1484 = vsel %vm255, %v1453, 0
        %v1487 = vsel %vm255, %v1454, 0
        %v1490 = vsel %vm255, %v1455, 0
        %v1493 = vsel %vm259, %v1424, 0
        %1495 = vmatpush.msra.mxu0 0.0
        %1496 = vmatpush.msra.mxu0 0.0
        %1497 = vmatpush.msra.mxu0 0.0
        %1498 = vmatpush.msra.mxu0 0.0
        %1499 = vmatpush.msra.mxu0 0.0
        %1500 = vmatpush.msra.mxu0 0.0
        %1501 = vmatpush.msra.mxu0 0.0
        %1502 = vmatpush.msra.mxu0 0.0
        %1503 = vmatpush.msra.mxu0 0.0
        %1504 = vmatpush.msra.mxu0 0.0
        %1505 = vmatpush.msra.mxu0 0.0
        %1506 = vmatpush.msra.mxu0 0.0
        %1507 = vmatpush.msra.mxu0 0.0
        %1508 = vmatpush.msra.mxu0 0.0
        %1509 = vmatpush.msra.mxu0 0.0
        %1510 = vmatpush.msra.mxu0 %v1493
        %1511 = vmatmul.f32.gmra.mxu0 %v1463
        %v1512 = vpop.f32.mrf.mxu0
        %v1513 = vadd.f32 0.0, %v1512
        %1514 = vmatmul.f32.gmra.mxu0 %v1466
        %v1515 = vpop.f32.mrf.mxu0
        %v1516 = vadd.f32 0.0, %v1515
        %1517 = vmatmul.f32.gmra.mxu0 %v1469
        %v1518 = vpop.f32.mrf.mxu0
        %v1519 = vadd.f32 0.0, %v1518
        %1520 = vmatmul.f32.gmra.mxu0 %v1472
        %v1521 = vpop.f32.mrf.mxu0
        %v1522 = vadd.f32 0.0, %v1521
        %1523 = vmatmul.f32.gmra.mxu0 %v1475
        %v1524 = vpop.f32.mrf.mxu0
        %v1525 = vadd.f32 0.0, %v1524
        %1526 = vmatmul.f32.gmra.mxu0 %v1478
        %v1527 = vpop.f32.mrf.mxu0
        %v1528 = vadd.f32 0.0, %v1527
        %1529 = vmatmul.f32.gmra.mxu0 %v1481
        %v1530 = vpop.f32.mrf.mxu0
        %v1531 = vadd.f32 0.0, %v1530
        %1532 = vmatmul.f32.gmra.mxu0 %v1484
        %v1533 = vpop.f32.mrf.mxu0
        %v1534 = vadd.f32 0.0, %v1533
        %1535 = vmatmul.f32.gmra.mxu0 %v1487
        %v1536 = vpop.f32.mrf.mxu0
        %v1537 = vadd.f32 0.0, %v1536
        %1538 = vmatmul.f32.gmra.mxu0 %v1490
        %v1539 = vpop.f32.mrf.mxu0
        %v1540 = vadd.f32 0.0, %v1539
        %1541 = vdwg.mxu0
        %v1542 = vmul.f32 %v1513, 0.5
        %v1543 = vmul.f32 %v1516, 0.5
        %v1544 = vmul.f32 %v1519, 0.5
        %v1545 = vmul.f32 %v1522, 0.5
        %v1546 = vmul.f32 %v1525, 0.5
        %v1547 = vmul.f32 %v1528, 0.5
        %v1548 = vmul.f32 %v1531, 0.5
        %v1549 = vmul.f32 %v1534, 0.5
        %v1550 = vmul.f32 %v1537, 0.5
        %v1551 = vmul.f32 %v1540, 0.5
        %v1552 = vsel %vm1429, 1, 0
        %v1553 = vperm.slane %v1552, 0
        %vm1554 = vcmp.eq.s32.totalorder %v1553, 1
        %v1555 = vsel %vm1554, %v1542, -1e+30
        %v1556 = vsel %vm1554, %v1543, -1e+30
        %v1557 = vsel %vm1554, %v1544, -1e+30
        %v1558 = vsel %vm1554, %v1545, -1e+30
        %v1559 = vsel %vm1554, %v1546, -1e+30
        %v1560 = vsel %vm1554, %v1547, -1e+30
        %v1561 = vsel %vm1554, %v1548, -1e+30
        %v1562 = vsel %vm1554, %v1549, -1e+30
        %v1563 = vsel %vm1554, %v1550, -1e+30
        %v1564 = vsel %vm1554, %v1551, -1e+30
        %v1565 = vsel %vm608, %v1555, -inf
        %1566 = vmax.xlane.f32.xlu0 %v1565
        %v1567 = vpop.xlane.xlu0 %1566
        %v1568 = vsel %vm608, %v1556, -inf
        %1569 = vmax.xlane.f32.xlu0 %v1568
        %v1570 = vpop.xlane.xlu0 %1569
        %v1571 = vsel %vm608, %v1557, -inf
        %1572 = vmax.xlane.f32.xlu0 %v1571
        %v1573 = vpop.xlane.xlu0 %1572
        %v1574 = vsel %vm608, %v1558, -inf
        %1575 = vmax.xlane.f32.xlu0 %v1574
        %v1576 = vpop.xlane.xlu0 %1575
        %v1577 = vsel %vm608, %v1559, -inf
        %1578 = vmax.xlane.f32.xlu0 %v1577
        %v1579 = vpop.xlane.xlu0 %1578
        %v1580 = vsel %vm608, %v1560, -inf
        %1581 = vmax.xlane.f32.xlu0 %v1580
        %v1582 = vpop.xlane.xlu0 %1581
        %v1583 = vsel %vm608, %v1561, -inf
        %1584 = vmax.xlane.f32.xlu0 %v1583
        %v1585 = vpop.xlane.xlu0 %1584
        %v1586 = vsel %vm608, %v1562, -inf
        %1587 = vmax.xlane.f32.xlu0 %v1586
        %v1588 = vpop.xlane.xlu0 %1587
        %v1589 = vsel %vm608, %v1563, -inf
        %1590 = vmax.xlane.f32.xlu0 %v1589
        %v1591 = vpop.xlane.xlu0 %1590
        %v1592 = vsel %vm608, %v1564, -inf
        %1593 = vmax.xlane.f32.xlu0 %v1592
        %v1594 = vpop.xlane.xlu0 %1593
        %v1595 = vsub.f32 %v1555, %v1567
        %v1596 = vsub.f32 %v1556, %v1570
        %v1597 = vsub.f32 %v1557, %v1573
        %v1598 = vsub.f32 %v1558, %v1576
        %v1599 = vsub.f32 %v1559, %v1579
        %v1600 = vsub.f32 %v1560, %v1582
        %v1601 = vsub.f32 %v1561, %v1585
        %v1602 = vsub.f32 %v1562, %v1588
        %v1603 = vsub.f32 %v1563, %v1591
        %v1604 = vsub.f32 %v1564, %v1594
        %v1605 = vmul.f32 %v1595, 1.442695
        %v1606 = vpow.pop %v1605
        %v1607 = vmul.f32 %v1596, 1.442695
        %v1608 = vpow.pop %v1607
        %v1609 = vmul.f32 %v1597, 1.442695
        %v1610 = vpow.pop %v1609
        %v1611 = vmul.f32 %v1598, 1.442695
        %v1612 = vpow.pop %v1611
        %v1613 = vmul.f32 %v1599, 1.442695
        %v1614 = vpow.pop %v1613
        %v1615 = vmul.f32 %v1600, 1.442695
        %v1616 = vpow.pop %v1615
        %v1617 = vmul.f32 %v1601, 1.442695
        %v1618 = vpow.pop %v1617
        %v1619 = vmul.f32 %v1602, 1.442695
        %v1620 = vpow.pop %v1619
        %v1621 = vmul.f32 %v1603, 1.442695
        %v1622 = vpow.pop %v1621
        %v1623 = vmul.f32 %v1604, 1.442695
        %v1624 = vpow.pop %v1623
        %v1625 = vsel %vm608, %v1606, 0.0
        %1626 = vadd.xlane.f32.xlu0 %v1625
        %v1627 = vpop.xlane.xlu0 %1626
        %v1628 = vsel %vm608, %v1608, 0.0
        %1629 = vadd.xlane.f32.xlu0 %v1628
        %v1630 = vpop.xlane.xlu0 %1629
        %v1631 = vsel %vm608, %v1610, 0.0
        %1632 = vadd.xlane.f32.xlu0 %v1631
        %v1633 = vpop.xlane.xlu0 %1632
        %v1634 = vsel %vm608, %v1612, 0.0
        %1635 = vadd.xlane.f32.xlu0 %v1634
        %v1636 = vpop.xlane.xlu0 %1635
        %v1637 = vsel %vm608, %v1614, 0.0
        %1638 = vadd.xlane.f32.xlu0 %v1637
        %v1639 = vpop.xlane.xlu0 %1638
        %v1640 = vsel %vm608, %v1616, 0.0
        %1641 = vadd.xlane.f32.xlu0 %v1640
        %v1642 = vpop.xlane.xlu0 %1641
        %v1643 = vsel %vm608, %v1618, 0.0
        %1644 = vadd.xlane.f32.xlu0 %v1643
        %v1645 = vpop.xlane.xlu0 %1644
        %v1646 = vsel %vm608, %v1620, 0.0
        %1647 = vadd.xlane.f32.xlu0 %v1646
        %v1648 = vpop.xlane.xlu0 %1647
        %v1649 = vsel %vm608, %v1622, 0.0
        %1650 = vadd.xlane.f32.xlu0 %v1649
        %v1651 = vpop.xlane.xlu0 %1650
        %v1652 = vsel %vm608, %v1624, 0.0
        %1653 = vadd.xlane.f32.xlu0 %v1652
        %v1654 = vpop.xlane.xlu0 %1653
        %v1655 = vrcp.pop %v1627
        %v1656 = vrcp.pop %v1630
        %v1657 = vrcp.pop %v1633
        %v1658 = vrcp.pop %v1636
        %v1659 = vrcp.pop %v1639
        %v1660 = vrcp.pop %v1642
        %v1661 = vrcp.pop %v1645
        %v1662 = vrcp.pop %v1648
        %v1663 = vrcp.pop %v1651
        %v1664 = vrcp.pop %v1654
        %v1665 = vmul.f32 %v1606, %v1655
        %v1666 = vmul.f32 %v1608, %v1656
        %v1667 = vmul.f32 %v1610, %v1657
        %v1668 = vmul.f32 %v1612, %v1658
        %v1669 = vmul.f32 %v1614, %v1659
        %v1670 = vmul.f32 %v1616, %v1660
        %v1671 = vmul.f32 %v1618, %v1661
        %v1672 = vmul.f32 %v1620, %v1662
        %v1673 = vmul.f32 %v1622, %v1663
        %v1674 = vmul.f32 %v1624, %v1664
        %v1676 = vsel %vm608, %v1665, 0
        %v1679 = vsel %vm608, %v1666, 0
        %v1682 = vsel %vm608, %v1667, 0
        %v1685 = vsel %vm608, %v1668, 0
        %v1688 = vsel %vm608, %v1669, 0
        %v1691 = vsel %vm608, %v1670, 0
        %v1694 = vsel %vm608, %v1671, 0
        %v1697 = vsel %vm608, %v1672, 0
        %v1700 = vsel %vm608, %v1673, 0
        %v1703 = vsel %vm608, %v1674, 0
        %v1706 = vsel %vm608, %v1427, 0
        %1708 = vmatpush.xpose.msra.mxu0 0.0
        %1709 = vmatpush.xpose.msra.mxu0 0.0
        %1710 = vmatpush.xpose.msra.mxu0 0.0
        %1711 = vmatpush.xpose.msra.mxu0 0.0
        %1712 = vmatpush.xpose.msra.mxu0 0.0
        %1713 = vmatpush.xpose.msra.mxu0 0.0
        %1714 = vmatpush.xpose.msra.mxu0 0.0
        %1715 = vmatpush.xpose.msra.mxu0 0.0
        %1716 = vmatpush.xpose.msra.mxu0 0.0
        %1717 = vmatpush.xpose.msra.mxu0 0.0
        %1718 = vmatpush.xpose.msra.mxu0 0.0
        %1719 = vmatpush.xpose.msra.mxu0 0.0
        %1720 = vmatpush.xpose.msra.mxu0 0.0
        %1721 = vmatpush.xpose.msra.mxu0 0.0
        %1722 = vmatpush.xpose.msra.mxu0 0.0
        %1723 = vmatpush.xpose.msra.mxu0 %v1706
        %1724 = vmatmul.f32.gmra.mxu0 %v1676
        %v1725 = vpop.f32.mrf.mxu0
        %v1726 = vadd.f32 0.0, %v1725
        %1727 = vmatmul.f32.gmra.mxu0 %v1679
        %v1728 = vpop.f32.mrf.mxu0
        %v1729 = vadd.f32 0.0, %v1728
        %1730 = vmatmul.f32.gmra.mxu0 %v1682
        %v1731 = vpop.f32.mrf.mxu0
        %v1732 = vadd.f32 0.0, %v1731
        %1733 = vmatmul.f32.gmra.mxu0 %v1685
        %v1734 = vpop.f32.mrf.mxu0
        %v1735 = vadd.f32 0.0, %v1734
        %1736 = vmatmul.f32.gmra.mxu0 %v1688
        %v1737 = vpop.f32.mrf.mxu0
        %v1738 = vadd.f32 0.0, %v1737
        %1739 = vmatmul.f32.gmra.mxu0 %v1691
        %v1740 = vpop.f32.mrf.mxu0
        %v1741 = vadd.f32 0.0, %v1740
        %1742 = vmatmul.f32.gmra.mxu0 %v1694
        %v1743 = vpop.f32.mrf.mxu0
        %v1744 = vadd.f32 0.0, %v1743
        %1745 = vmatmul.f32.gmra.mxu0 %v1697
        %v1746 = vpop.f32.mrf.mxu0
        %v1747 = vadd.f32 0.0, %v1746
        %1748 = vmatmul.f32.gmra.mxu0 %v1700
        %v1749 = vpop.f32.mrf.mxu0
        %v1750 = vadd.f32 0.0, %v1749
        %1751 = vmatmul.f32.gmra.mxu0 %v1703
        %v1752 = vpop.f32.mrf.mxu0
        %v1753 = vadd.f32 0.0, %v1752
        %1754 = vdwg.mxu0
        %v1756 = vrot.slane %v1421, 4
        %1758 = vxpose.xlu0.b32.start [1/16] %v1756, 128
        %1759 = vxpose.xlu0.b32.cont [2/16] 0.0, 128
        %1760 = vxpose.xlu0.b32.cont [3/16] 0.0, 128
        %1761 = vxpose.xlu0.b32.cont [4/16] 0.0, 128
        %1762 = vxpose.xlu0.b32.cont [5/16] 0.0, 128
        %1763 = vxpose.xlu0.b32.cont [6/16] 0.0, 128
        %1764 = vxpose.xlu0.b32.cont [7/16] 0.0, 128
        %1765 = vxpose.xlu0.b32.cont [8/16] 0.0, 128
        %1766 = vxpose.xlu0.b32.cont [9/16] 0.0, 128
        %1767 = vxpose.xlu0.b32.cont [10/16] 0.0, 128
        %1768 = vxpose.xlu0.b32.cont [11/16] 0.0, 128
        %1769 = vxpose.xlu0.b32.cont [12/16] 0.0, 128
        %1770 = vxpose.xlu0.b32.cont [13/16] 0.0, 128
        %1771 = vxpose.xlu0.b32.cont [14/16] 0.0, 128
        %1772 = vxpose.xlu0.b32.cont [15/16] 0.0, 128
        %1773 = vxpose.xlu0.b32.end [16/16] 0.0, 128
        %v1774 = vpop.trf.xlu0
        %v1775 = vpop.trf.xlu0
        %v1776 = vpop.trf.xlu0
        %v1777 = vpop.trf.xlu0
        %v1778 = vpop.trf.xlu0
        %v1779 = vpop.trf.xlu0
        %v1780 = vpop.trf.xlu0
        %v1781 = vpop.trf.xlu0
        %v1782 = vpop.trf.xlu0
        %v1783 = vpop.trf.xlu0
        %v1784 = vpop.trf.xlu0
        %v1785 = vpop.trf.xlu0
        %v1786 = vpop.trf.xlu0
        %v1787 = vpop.trf.xlu0
        %v1788 = vpop.trf.xlu0
        %v1789 = vpop.trf.xlu0
        %v1790 = vrot.slane %v1424, 4
        %v1792 = vsel %vm255, %v1774, 0
        %v1795 = vsel %vm255, %v1775, 0
        %v1798 = vsel %vm255, %v1776, 0
        %v1801 = vsel %vm255, %v1777, 0
        %v1804 = vsel %vm255, %v1778, 0
        %v1807 = vsel %vm255, %v1779, 0
        %v1810 = vsel %vm255, %v1780, 0
        %v1813 = vsel %vm255, %v1781, 0
        %v1816 = vsel %vm255, %v1782, 0
        %v1819 = vsel %vm255, %v1783, 0
        %v1821 = vsel %vm259, %v1790, 0
        %1823 = vmatpush.msra.mxu0 0.0
        %1824 = vmatpush.msra.mxu0 0.0
        %1825 = vmatpush.msra.mxu0 0.0
        %1826 = vmatpush.msra.mxu0 0.0
        %1827 = vmatpush.msra.mxu0 0.0
        %1828 = vmatpush.msra.mxu0 0.0
        %1829 = vmatpush.msra.mxu0 0.0
        %1830 = vmatpush.msra.mxu0 0.0
        %1831 = vmatpush.msra.mxu0 0.0
        %1832 = vmatpush.msra.mxu0 0.0
        %1833 = vmatpush.msra.mxu0 0.0
        %1834 = vmatpush.msra.mxu0 0.0
        %1835 = vmatpush.msra.mxu0 0.0
        %1836 = vmatpush.msra.mxu0 0.0
        %1837 = vmatpush.msra.mxu0 0.0
        %1838 = vmatpush.msra.mxu0 %v1821
        %1839 = vmatmul.f32.gmra.mxu0 %v1792
        %v1840 = vpop.f32.mrf.mxu0
        %v1841 = vadd.f32 0.0, %v1840
        %1842 = vmatmul.f32.gmra.mxu0 %v1795
        %v1843 = vpop.f32.mrf.mxu0
        %v1844 = vadd.f32 0.0, %v1843
        %1845 = vmatmul.f32.gmra.mxu0 %v1798
        %v1846 = vpop.f32.mrf.mxu0
        %v1847 = vadd.f32 0.0, %v1846
        %1848 = vmatmul.f32.gmra.mxu0 %v1801
        %v1849 = vpop.f32.mrf.mxu0
        %v1850 = vadd.f32 0.0, %v1849
        %1851 = vmatmul.f32.gmra.mxu0 %v1804
        %v1852 = vpop.f32.mrf.mxu0
        %v1853 = vadd.f32 0.0, %v1852
        %1854 = vmatmul.f32.gmra.mxu0 %v1807
        %v1855 = vpop.f32.mrf.mxu0
        %v1856 = vadd.f32 0.0, %v1855
        %1857 = vmatmul.f32.gmra.mxu0 %v1810
        %v1858 = vpop.f32.mrf.mxu0
        %v1859 = vadd.f32 0.0, %v1858
        %1860 = vmatmul.f32.gmra.mxu0 %v1813
        %v1861 = vpop.f32.mrf.mxu0
        %v1862 = vadd.f32 0.0, %v1861
        %1863 = vmatmul.f32.gmra.mxu0 %v1816
        %v1864 = vpop.f32.mrf.mxu0
        %v1865 = vadd.f32 0.0, %v1864
        %1866 = vmatmul.f32.gmra.mxu0 %v1819
        %v1867 = vpop.f32.mrf.mxu0
        %v1868 = vadd.f32 0.0, %v1867
        %1869 = vdwg.mxu0
        %v1870 = vmul.f32 %v1841, 0.5
        %v1871 = vmul.f32 %v1844, 0.5
        %v1872 = vmul.f32 %v1847, 0.5
        %v1873 = vmul.f32 %v1850, 0.5
        %v1874 = vmul.f32 %v1853, 0.5
        %v1875 = vmul.f32 %v1856, 0.5
        %v1876 = vmul.f32 %v1859, 0.5
        %v1877 = vmul.f32 %v1862, 0.5
        %v1878 = vmul.f32 %v1865, 0.5
        %v1879 = vmul.f32 %v1868, 0.5
        %v1880 = vsel %vm1554, %v1870, -1e+30
        %v1881 = vsel %vm1554, %v1871, -1e+30
        %v1882 = vsel %vm1554, %v1872, -1e+30
        %v1883 = vsel %vm1554, %v1873, -1e+30
        %v1884 = vsel %vm1554, %v1874, -1e+30
        %v1885 = vsel %vm1554, %v1875, -1e+30
        %v1886 = vsel %vm1554, %v1876, -1e+30
        %v1887 = vsel %vm1554, %v1877, -1e+30
        %v1888 = vsel %vm1554, %v1878, -1e+30
        %v1889 = vsel %vm1554, %v1879, -1e+30
        %v1890 = vsel %vm608, %v1880, -inf
        %1891 = vmax.xlane.f32.xlu0 %v1890
        %v1892 = vpop.xlane.xlu0 %1891
        %v1893 = vsel %vm608, %v1881, -inf
        %1894 = vmax.xlane.f32.xlu0 %v1893
        %v1895 = vpop.xlane.xlu0 %1894
        %v1896 = vsel %vm608, %v1882, -inf
        %1897 = vmax.xlane.f32.xlu0 %v1896
        %v1898 = vpop.xlane.xlu0 %1897
        %v1899 = vsel %vm608, %v1883, -inf
        %1900 = vmax.xlane.f32.xlu0 %v1899
        %v1901 = vpop.xlane.xlu0 %1900
        %v1902 = vsel %vm608, %v1884, -inf
        %1903 = vmax.xlane.f32.xlu0 %v1902
        %v1904 = vpop.xlane.xlu0 %1903
        %v1905 = vsel %vm608, %v1885, -inf
        %1906 = vmax.xlane.f32.xlu0 %v1905
        %v1907 = vpop.xlane.xlu0 %1906
        %v1908 = vsel %vm608, %v1886, -inf
        %1909 = vmax.xlane.f32.xlu0 %v1908
        %v1910 = vpop.xlane.xlu0 %1909
        %v1911 = vsel %vm608, %v1887, -inf
        %1912 = vmax.xlane.f32.xlu0 %v1911
        %v1913 = vpop.xlane.xlu0 %1912
        %v1914 = vsel %vm608, %v1888, -inf
        %1915 = vmax.xlane.f32.xlu0 %v1914
        %v1916 = vpop.xlane.xlu0 %1915
        %v1917 = vsel %vm608, %v1889, -inf
        %1918 = vmax.xlane.f32.xlu0 %v1917
        %v1919 = vpop.xlane.xlu0 %1918
        %v1920 = vsub.f32 %v1880, %v1892
        %v1921 = vsub.f32 %v1881, %v1895
        %v1922 = vsub.f32 %v1882, %v1898
        %v1923 = vsub.f32 %v1883, %v1901
        %v1924 = vsub.f32 %v1884, %v1904
        %v1925 = vsub.f32 %v1885, %v1907
        %v1926 = vsub.f32 %v1886, %v1910
        %v1927 = vsub.f32 %v1887, %v1913
        %v1928 = vsub.f32 %v1888, %v1916
        %v1929 = vsub.f32 %v1889, %v1919
        %v1930 = vmul.f32 %v1920, 1.442695
        %v1931 = vpow.pop %v1930
        %v1932 = vmul.f32 %v1921, 1.442695
        %v1933 = vpow.pop %v1932
        %v1934 = vmul.f32 %v1922, 1.442695
        %v1935 = vpow.pop %v1934
        %v1936 = vmul.f32 %v1923, 1.442695
        %v1937 = vpow.pop %v1936
        %v1938 = vmul.f32 %v1924, 1.442695
        %v1939 = vpow.pop %v1938
        %v1940 = vmul.f32 %v1925, 1.442695
        %v1941 = vpow.pop %v1940
        %v1942 = vmul.f32 %v1926, 1.442695
        %v1943 = vpow.pop %v1942
        %v1944 = vmul.f32 %v1927, 1.442695
        %v1945 = vpow.pop %v1944
        %v1946 = vmul.f32 %v1928, 1.442695
        %v1947 = vpow.pop %v1946
        %v1948 = vmul.f32 %v1929, 1.442695
        %v1949 = vpow.pop %v1948
        %v1950 = vsel %vm608, %v1931, 0.0
        %1951 = vadd.xlane.f32.xlu0 %v1950
        %v1952 = vpop.xlane.xlu0 %1951
        %v1953 = vsel %vm608, %v1933, 0.0
        %1954 = vadd.xlane.f32.xlu0 %v1953
        %v1955 = vpop.xlane.xlu0 %1954
        %v1956 = vsel %vm608, %v1935, 0.0
        %1957 = vadd.xlane.f32.xlu0 %v1956
        %v1958 = vpop.xlane.xlu0 %1957
        %v1959 = vsel %vm608, %v1937, 0.0
        %1960 = vadd.xlane.f32.xlu0 %v1959
        %v1961 = vpop.xlane.xlu0 %1960
        %v1962 = vsel %vm608, %v1939, 0.0
        %1963 = vadd.xlane.f32.xlu0 %v1962
        %v1964 = vpop.xlane.xlu0 %1963
        %v1965 = vsel %vm608, %v1941, 0.0
        %1966 = vadd.xlane.f32.xlu0 %v1965
        %v1967 = vpop.xlane.xlu0 %1966
        %v1968 = vsel %vm608, %v1943, 0.0
        %1969 = vadd.xlane.f32.xlu0 %v1968
        %v1970 = vpop.xlane.xlu0 %1969
        %v1971 = vsel %vm608, %v1945, 0.0
        %1972 = vadd.xlane.f32.xlu0 %v1971
        %v1973 = vpop.xlane.xlu0 %1972
        %v1974 = vsel %vm608, %v1947, 0.0
        %1975 = vadd.xlane.f32.xlu0 %v1974
        %v1976 = vpop.xlane.xlu0 %1975
        %v1977 = vsel %vm608, %v1949, 0.0
        %1978 = vadd.xlane.f32.xlu0 %v1977
        %v1979 = vpop.xlane.xlu0 %1978
        %v1980 = vrcp.pop %v1952
        %v1981 = vrcp.pop %v1955
        %v1982 = vrcp.pop %v1958
        %v1983 = vrcp.pop %v1961
        %v1984 = vrcp.pop %v1964
        %v1985 = vrcp.pop %v1967
        %v1986 = vrcp.pop %v1970
        %v1987 = vrcp.pop %v1973
        %v1988 = vrcp.pop %v1976
        %v1989 = vrcp.pop %v1979
        %v1990 = vmul.f32 %v1931, %v1980
        %v1991 = vmul.f32 %v1933, %v1981
        %v1992 = vmul.f32 %v1935, %v1982
        %v1993 = vmul.f32 %v1937, %v1983
        %v1994 = vmul.f32 %v1939, %v1984
        %v1995 = vmul.f32 %v1941, %v1985
        %v1996 = vmul.f32 %v1943, %v1986
        %v1997 = vmul.f32 %v1945, %v1987
        %v1998 = vmul.f32 %v1947, %v1988
        %v1999 = vmul.f32 %v1949, %v1989
        %v2000 = vrot.slane %v1427, 4
        %v2002 = vsel %vm608, %v1990, 0
        %v2005 = vsel %vm608, %v1991, 0
        %v2008 = vsel %vm608, %v1992, 0
        %v2011 = vsel %vm608, %v1993, 0
        %v2014 = vsel %vm608, %v1994, 0
        %v2017 = vsel %vm608, %v1995, 0
        %v2020 = vsel %vm608, %v1996, 0
        %v2023 = vsel %vm608, %v1997, 0
        %v2026 = vsel %vm608, %v1998, 0
        %v2029 = vsel %vm608, %v1999, 0
        %v2031 = vsel %vm608, %v2000, 0
        %2033 = vmatpush.xpose.msra.mxu0 0.0
        %2034 = vmatpush.xpose.msra.mxu0 0.0
        %2035 = vmatpush.xpose.msra.mxu0 0.0
        %2036 = vmatpush.xpose.msra.mxu0 0.0
        %2037 = vmatpush.xpose.msra.mxu0 0.0
        %2038 = vmatpush.xpose.msra.mxu0 0.0
        %2039 = vmatpush.xpose.msra.mxu0 0.0
        %2040 = vmatpush.xpose.msra.mxu0 0.0
        %2041 = vmatpush.xpose.msra.mxu0 0.0
        %2042 = vmatpush.xpose.msra.mxu0 0.0
        %2043 = vmatpush.xpose.msra.mxu0 0.0
        %2044 = vmatpush.xpose.msra.mxu0 0.0
        %2045 = vmatpush.xpose.msra.mxu0 0.0
        %2046 = vmatpush.xpose.msra.mxu0 0.0
        %2047 = vmatpush.xpose.msra.mxu0 0.0
        %2048 = vmatpush.xpose.msra.mxu0 %v2031
        %2049 = vmatmul.f32.gmra.mxu0 %v2002
        %v2050 = vpop.f32.mrf.mxu0
        %v2051 = vadd.f32 0.0, %v2050
        %2052 = vmatmul.f32.gmra.mxu0 %v2005
        %v2053 = vpop.f32.mrf.mxu0
        %v2054 = vadd.f32 0.0, %v2053
        %2055 = vmatmul.f32.gmra.mxu0 %v2008
        %v2056 = vpop.f32.mrf.mxu0
        %v2057 = vadd.f32 0.0, %v2056
        %2058 = vmatmul.f32.gmra.mxu0 %v2011
        %v2059 = vpop.f32.mrf.mxu0
        %v2060 = vadd.f32 0.0, %v2059
        %2061 = vmatmul.f32.gmra.mxu0 %v2014
        %v2062 = vpop.f32.mrf.mxu0
        %v2063 = vadd.f32 0.0, %v2062
        %2064 = vmatmul.f32.gmra.mxu0 %v2017
        %v2065 = vpop.f32.mrf.mxu0
        %v2066 = vadd.f32 0.0, %v2065
        %2067 = vmatmul.f32.gmra.mxu0 %v2020
        %v2068 = vpop.f32.mrf.mxu0
        %v2069 = vadd.f32 0.0, %v2068
        %2070 = vmatmul.f32.gmra.mxu0 %v2023
        %v2071 = vpop.f32.mrf.mxu0
        %v2072 = vadd.f32 0.0, %v2071
        %2073 = vmatmul.f32.gmra.mxu0 %v2026
        %v2074 = vpop.f32.mrf.mxu0
        %v2075 = vadd.f32 0.0, %v2074
        %2076 = vmatmul.f32.gmra.mxu0 %v2029
        %v2077 = vpop.f32.mrf.mxu0
        %v2078 = vadd.f32 0.0, %v2077
        %2079 = vdwg.mxu0
        %v2080 = vrot.slane %v1086, 4
        %2081 = vrot.lane.b32.xlu0 %v2080, 64
        %v2082 = vpop.permute.xlu0 %2081
        %v2084 = vsel %vm255, %v2051, 0
        %v2087 = vsel %vm255, %v2054, 0
        %v2090 = vsel %vm255, %v2057, 0
        %v2093 = vsel %vm255, %v2060, 0
        %v2096 = vsel %vm255, %v2063, 0
        %v2099 = vsel %vm255, %v2066, 0
        %v2102 = vsel %vm255, %v2069, 0
        %v2105 = vsel %vm255, %v2072, 0
        %v2108 = vsel %vm255, %v2075, 0
        %v2111 = vsel %vm255, %v2078, 0
        %v2113 = vsel %vm259, %v2082, 0
        %2115 = vmatpush.msra.mxu0 0.0
        %2116 = vmatpush.msra.mxu0 0.0
        %2117 = vmatpush.msra.mxu0 0.0
        %2118 = vmatpush.msra.mxu0 0.0
        %2119 = vmatpush.msra.mxu0 0.0
        %2120 = vmatpush.msra.mxu0 0.0
        %2121 = vmatpush.msra.mxu0 0.0
        %2122 = vmatpush.msra.mxu0 0.0
        %2123 = vmatpush.msra.mxu0 0.0
        %2124 = vmatpush.msra.mxu0 0.0
        %2125 = vmatpush.msra.mxu0 0.0
        %2126 = vmatpush.msra.mxu0 0.0
        %2127 = vmatpush.msra.mxu0 0.0
        %2128 = vmatpush.msra.mxu0 0.0
        %2129 = vmatpush.msra.mxu0 0.0
        %2130 = vmatpush.msra.mxu0 %v2113
        %2131 = vmatmul.f32.gmra.mxu0 %v2084
        %v2132 = vpop.f32.mrf.mxu0
        %v2133 = vadd.f32 0.0, %v2132
        %2134 = vmatmul.f32.gmra.mxu0 %v2087
        %v2135 = vpop.f32.mrf.mxu0
        %v2136 = vadd.f32 0.0, %v2135
        %2137 = vmatmul.f32.gmra.mxu0 %v2090
        %v2138 = vpop.f32.mrf.mxu0
        %v2139 = vadd.f32 0.0, %v2138
        %2140 = vmatmul.f32.gmra.mxu0 %v2093
        %v2141 = vpop.f32.mrf.mxu0
        %v2142 = vadd.f32 0.0, %v2141
        %2143 = vmatmul.f32.gmra.mxu0 %v2096
        %v2144 = vpop.f32.mrf.mxu0
        %v2145 = vadd.f32 0.0, %v2144
        %2146 = vmatmul.f32.gmra.mxu0 %v2099
        %v2147 = vpop.f32.mrf.mxu0
        %v2148 = vadd.f32 0.0, %v2147
        %2149 = vmatmul.f32.gmra.mxu0 %v2102
        %v2150 = vpop.f32.mrf.mxu0
        %v2151 = vadd.f32 0.0, %v2150
        %2152 = vmatmul.f32.gmra.mxu0 %v2105
        %v2153 = vpop.f32.mrf.mxu0
        %v2154 = vadd.f32 0.0, %v2153
        %2155 = vmatmul.f32.gmra.mxu0 %v2108
        %v2156 = vpop.f32.mrf.mxu0
        %v2157 = vadd.f32 0.0, %v2156
        %2158 = vmatmul.f32.gmra.mxu0 %v2111
        %v2159 = vpop.f32.mrf.mxu0
        %v2160 = vadd.f32 0.0, %v2159
        %2161 = vdwg.mxu0
        %2162 = vrot.lane.b32.xlu0 %v1086, 64
        %v2163 = vpop.permute.xlu0 %2162
        %v2165 = vsel %vm255, %v1726, 0
        %v2168 = vsel %vm255, %v1729, 0
        %v2171 = vsel %vm255, %v1732, 0
        %v2174 = vsel %vm255, %v1735, 0
        %v2177 = vsel %vm255, %v1738, 0
        %v2180 = vsel %vm255, %v1741, 0
        %v2183 = vsel %vm255, %v1744, 0
        %v2186 = vsel %vm255, %v1747, 0
        %v2189 = vsel %vm255, %v1750, 0
        %v2192 = vsel %vm255, %v1753, 0
        %v2194 = vsel %vm259, %v2163, 0
        %2196 = vmatpush.msra.mxu0 0.0
        %2197 = vmatpush.msra.mxu0 0.0
        %2198 = vmatpush.msra.mxu0 0.0
        %2199 = vmatpush.msra.mxu0 0.0
        %2200 = vmatpush.msra.mxu0 0.0
        %2201 = vmatpush.msra.mxu0 0.0
        %2202 = vmatpush.msra.mxu0 0.0
        %2203 = vmatpush.msra.mxu0 0.0
        %2204 = vmatpush.msra.mxu0 0.0
        %2205 = vmatpush.msra.mxu0 0.0
        %2206 = vmatpush.msra.mxu0 0.0
        %2207 = vmatpush.msra.mxu0 0.0
        %2208 = vmatpush.msra.mxu0 0.0
        %2209 = vmatpush.msra.mxu0 0.0
        %2210 = vmatpush.msra.mxu0 0.0
        %2211 = vmatpush.msra.mxu0 %v2194
        %2212 = vmatmul.f32.gmra.mxu0 %v2165
        %v2213 = vpop.f32.mrf.mxu0
        %v2214 = vadd.f32 %v2133, %v2213
        %2215 = vmatmul.f32.gmra.mxu0 %v2168
        %v2216 = vpop.f32.mrf.mxu0
        %v2217 = vadd.f32 %v2136, %v2216
        %2218 = vmatmul.f32.gmra.mxu0 %v2171
        %v2219 = vpop.f32.mrf.mxu0
        %v2220 = vadd.f32 %v2139, %v2219
        %2221 = vmatmul.f32.gmra.mxu0 %v2174
        %v2222 = vpop.f32.mrf.mxu0
        %v2223 = vadd.f32 %v2142, %v2222
        %2224 = vmatmul.f32.gmra.mxu0 %v2177
        %v2225 = vpop.f32.mrf.mxu0
        %v2226 = vadd.f32 %v2145, %v2225
        %2227 = vmatmul.f32.gmra.mxu0 %v2180
        %v2228 = vpop.f32.mrf.mxu0
        %v2229 = vadd.f32 %v2148, %v2228
        %2230 = vmatmul.f32.gmra.mxu0 %v2183
        %v2231 = vpop.f32.mrf.mxu0
        %v2232 = vadd.f32 %v2151, %v2231
        %2233 = vmatmul.f32.gmra.mxu0 %v2186
        %v2234 = vpop.f32.mrf.mxu0
        %v2235 = vadd.f32 %v2154, %v2234
        %2236 = vmatmul.f32.gmra.mxu0 %v2189
        %v2237 = vpop.f32.mrf.mxu0
        %v2238 = vadd.f32 %v2157, %v2237
        %2239 = vmatmul.f32.gmra.mxu0 %v2192
        %v2240 = vpop.f32.mrf.mxu0
        %v2241 = vadd.f32 %v2160, %v2240
        %2242 = vdwg.mxu0
        %2243 = vxpose.xlu0.b32.start [1/16] %v2214, 128
        %2244 = vxpose.xlu0.b32.cont [2/16] %v2217, 128
        %2245 = vxpose.xlu0.b32.cont [3/16] %v2220, 128
        %2246 = vxpose.xlu0.b32.cont [4/16] %v2223, 128
        %2247 = vxpose.xlu0.b32.cont [5/16] %v2226, 128
        %2248 = vxpose.xlu0.b32.cont [6/16] %v2229, 128
        %2249 = vxpose.xlu0.b32.cont [7/16] %v2232, 128
        %2250 = vxpose.xlu0.b32.cont [8/16] %v2235, 128
        %2251 = vxpose.xlu0.b32.cont [9/16] %v2238, 128
        %2252 = vxpose.xlu0.b32.cont [10/16] %v2241, 128
        %2253 = vxpose.xlu0.b32.cont [11/16] 0.0, 128
        %2254 = vxpose.xlu0.b32.cont [12/16] 0.0, 128
        %2255 = vxpose.xlu0.b32.cont [13/16] 0.0, 128
        %2256 = vxpose.xlu0.b32.cont [14/16] 0.0, 128
        %2257 = vxpose.xlu0.b32.cont [15/16] 0.0, 128
        %2258 = vxpose.xlu0.b32.end [16/16] 0.0, 128
        %v2259 = vpop.trf.xlu0
        %v2260 = vpop.trf.xlu0
        %v2261 = vpop.trf.xlu0
        %v2262 = vpop.trf.xlu0
        %v2263 = vpop.trf.xlu0
        %v2264 = vpop.trf.xlu0
        %v2265 = vpop.trf.xlu0
        %v2266 = vpop.trf.xlu0
        %v2267 = vpop.trf.xlu0
        %v2268 = vpop.trf.xlu0
        %v2269 = vpop.trf.xlu0
        %v2270 = vpop.trf.xlu0
        %v2271 = vpop.trf.xlu0
        %v2272 = vpop.trf.xlu0
        %v2273 = vpop.trf.xlu0
        %v2274 = vpop.trf.xlu0
        %2275 = vset.pattern.permute.xlu0 11
        %2276 = vperm.xlu0 %2275, %v1289
        %v2277 = vpop.permute.xlu0 %2276
        %v2279 = vadd.f32 %v2259, %v2277
        %v2280 = vadd.f32 %v2279, %v1288
        %v2281 = vld [vmem:[#allocation3] sm:$0xff]
        %v2282 = vld [vmem:[#allocation3 + $0x8] sm:$0xff]
        %v2283 = vld [vmem:[#allocation3 + $0x10] sm:$0xff]
        %v2284 = vld [vmem:[#allocation3 + $0x18] sm:$0xff]
        %v2285 = vld [vmem:[#allocation3 + $0x20] sm:$0xff]
        %v2286 = vld [vmem:[#allocation3 + $0x28] sm:$0xff]
        %v2287 = vld [vmem:[#allocation3 + $0x30] sm:$0xff]
        %v2288 = vld [vmem:[#allocation3 + $0x38] sm:$0xff]
        %v2289 = vld [vmem:[#allocation3 + $0x40] sm:$0xff]
        %v2290 = vld [vmem:[#allocation3 + $0x48] sm:$0xff]
        %v2291 = vld [vmem:[#allocation3 + $0x50] sm:$0xff]
        %v2292 = vld [vmem:[#allocation3 + $0x58] sm:$0xff]
        %v2293 = vld [vmem:[#allocation3 + $0x60] sm:$0xff]
        %v2294 = vld [vmem:[#allocation3 + $0x68] sm:$0xff]
        %v2295 = vld [vmem:[#allocation3 + $0x70] sm:$0xff]
        %v2296 = vld [vmem:[#allocation3 + $0x78] sm:$0xff]
        %v2297 = vld [vmem:[#allocation3 + $0x80] sm:$0xff]
        %v2298 = vld [vmem:[#allocation3 + $0x88] sm:$0xff]
        %v2299 = vld [vmem:[#allocation3 + $0x90] sm:$0xff]
        %v2300 = vld [vmem:[#allocation3 + $0x98] sm:$0xff]
        %v2301 = vld [vmem:[#allocation3 + $0xa0] sm:$0xff]
        %v2302 = vld [vmem:[#allocation3 + $0xa8] sm:$0xff]
        %v2303 = vld [vmem:[#allocation3 + $0xb0] sm:$0xff]
        %v2304 = vld [vmem:[#allocation3 + $0xb8] sm:$0xff]
        %v2305 = vld [vmem:[#allocation3 + $0xc0] sm:$0xff]
        %v2306 = vld [vmem:[#allocation3 + $0xc8] sm:$0xff]
        %v2307 = vld [vmem:[#allocation3 + $0xd0] sm:$0xff]
        %v2308 = vld [vmem:[#allocation3 + $0xd8] sm:$0xff]
        %v2309 = vld [vmem:[#allocation3 + $0xe0] sm:$0xff]
        %v2310 = vld [vmem:[#allocation3 + $0xe8] sm:$0xff]
        %v2312 = vsel %vm608, %v2280, 0
        %2314 = vmatpush.msra.mxu0 0.0
        %2315 = vmatpush.msra.mxu0 0.0
        %2316 = vmatpush.msra.mxu0 0.0
        %2317 = vmatpush.msra.mxu0 0.0
        %2318 = vmatpush.msra.mxu0 0.0
        %2319 = vmatpush.msra.mxu0 0.0
        %2320 = vmatpush.msra.mxu0 %v2308
        %2321 = vmatpush.msra.mxu0 %v2305
        %2322 = vmatpush.msra.mxu0 %v2302
        %2323 = vmatpush.msra.mxu0 %v2299
        %2324 = vmatpush.msra.mxu0 %v2296
        %2325 = vmatpush.msra.mxu0 %v2293
        %2326 = vmatpush.msra.mxu0 %v2290
        %2327 = vmatpush.msra.mxu0 %v2287
        %2328 = vmatpush.msra.mxu0 %v2284
        %2329 = vmatpush.msra.mxu0 %v2281
        %2330 = vmatmul.f32.gmra.mxu0 %v2312
        %v2331 = vpop.f32.mrf.mxu0
        %v2332 = vadd.f32 0.0, %v2331
        %2333 = vdwg.mxu0
        %2334 = vmatpush.msra.mxu0 0.0
        %2335 = vmatpush.msra.mxu0 0.0
        %2336 = vmatpush.msra.mxu0 0.0
        %2337 = vmatpush.msra.mxu0 0.0
        %2338 = vmatpush.msra.mxu0 0.0
        %2339 = vmatpush.msra.mxu0 0.0
        %2340 = vmatpush.msra.mxu0 %v2309
        %2341 = vmatpush.msra.mxu0 %v2306
        %2342 = vmatpush.msra.mxu0 %v2303
        %2343 = vmatpush.msra.mxu0 %v2300
        %2344 = vmatpush.msra.mxu0 %v2297
        %2345 = vmatpush.msra.mxu0 %v2294
        %2346 = vmatpush.msra.mxu0 %v2291
        %2347 = vmatpush.msra.mxu0 %v2288
        %2348 = vmatpush.msra.mxu0 %v2285
        %2349 = vmatpush.msra.mxu0 %v2282
        %2350 = vmatmul.f32.gmra.mxu0 %v2312
        %v2351 = vpop.f32.mrf.mxu0
        %v2352 = vadd.f32 0.0, %v2351
        %2353 = vdwg.mxu0
        %2354 = vmatpush.msra.mxu0 0.0
        %2355 = vmatpush.msra.mxu0 0.0
        %2356 = vmatpush.msra.mxu0 0.0
        %2357 = vmatpush.msra.mxu0 0.0
        %2358 = vmatpush.msra.mxu0 0.0
        %2359 = vmatpush.msra.mxu0 0.0
        %2360 = vmatpush.msra.mxu0 %v2310
        %2361 = vmatpush.msra.mxu0 %v2307
        %2362 = vmatpush.msra.mxu0 %v2304
        %2363 = vmatpush.msra.mxu0 %v2301
        %2364 = vmatpush.msra.mxu0 %v2298
        %2365 = vmatpush.msra.mxu0 %v2295
        %2366 = vmatpush.msra.mxu0 %v2292
        %2367 = vmatpush.msra.mxu0 %v2289
        %2368 = vmatpush.msra.mxu0 %v2286
        %2369 = vmatpush.msra.mxu0 %v2283
        %2370 = vmatmul.f32.gmra.mxu0 %v2312
        %v2371 = vpop.f32.mrf.mxu0
        %v2372 = vadd.f32 0.0, %v2371
        %2373 = vdwg.mxu0
        %vm2374 = vcmask 154624
        %2375 = vst.msk [vmem:[#allocation2] sm:$0xff] %vm2374, 0.0
        %v2376 = vld [vmem:[%s2] sm:$0xff]
        %2380 = vrot.lane.b32.xlu0 %v2332, 19
        %v2381 = vpop.permute.xlu0 %2380
        %2382 = vrot.lane.b32.xlu0 %v2352, 19
        %v2383 = vpop.permute.xlu0 %2382
        %2384 = vrot.lane.b32.xlu0 %v2372, 19
        %v2385 = vpop.permute.xlu0 %2384
        %v2386 = vsel %vm2374, %v2381, %v2383
        %v2387 = vsel %vm2374, %v2383, %v2385
        %vm2391 = vcmask 1047704
        %2392 = vst.msk [vmem:[#allocation2] sm:$0xff] %vm2391, %v2381
        %2393 = vst [vmem:[#allocation2 + $0x8] sm:$0xff] %v2386
        %vm2394 = vcmask 416768
        %2395 = vst.msk [vmem:[#allocation2 + $0x10] sm:$0xff] %vm2394, %v2387
        %v2396 = vld [vmem:[#allocation2] sm:$0xff]
        %v2397 = vld [vmem:[#allocation2 + $0x8] sm:$0xff]
        %v2398 = vld [vmem:[#allocation2 + $0x10] sm:$0xff]
        %v2399 = vld [vmem:[%s1 + $0x8] sm:$0xff]
        %2401 = vrot.lane.b32.xlu0 %v2399, 48
        %v2402 = vpop.permute.xlu0 %2401
        %2406 = vrot.lane.b32.xlu0 %v2396, 127
        %v2407 = vpop.permute.xlu0 %2406
        %2408 = vrot.lane.b32.xlu0 %v2397, 127
        %v2409 = vpop.permute.xlu0 %2408
        %2410 = vrot.lane.b32.xlu0 %v2398, 127
        %v2411 = vpop.permute.xlu0 %2410
        %vm2412 = vcmask 1039360
        %v2413 = vsel %vm2412, %v2407, %v2409
        %v2414 = vsel %vm2412, %v2409, %v2411
        %v2418 = vsel %vm564, %v2402, 0
        %2420 = vmatpush.msra.mxu0 0.0
        %2421 = vmatpush.msra.mxu0 0.0
        %2422 = vmatpush.msra.mxu0 0.0
        %2423 = vmatpush.msra.mxu0 0.0
        %2424 = vmatpush.msra.mxu0 0.0
        %2425 = vmatpush.msra.mxu0 0.0
        %2426 = vmatpush.msra.mxu0 0.0
        %2427 = vmatpush.msra.mxu0 0.0
        %2428 = vmatpush.msra.mxu0 0.0
        %2429 = vmatpush.msra.mxu0 0.0
        %2430 = vmatpush.msra.mxu0 0.0
        %2431 = vmatpush.msra.mxu0 0.0
        %2432 = vmatpush.msra.mxu0 0.0
        %2433 = vmatpush.msra.mxu0 0.0
        %2434 = vmatpush.msra.mxu0 0.0
        %2435 = vmatpush.msra.mxu0 %v2413
        %2436 = vmatmul.f32.gmra.mxu0 %v2418
        %v2437 = vpop.f32.mrf.mxu0
        %v2438 = vadd.f32 0.0, %v2437
        %2439 = vdwg.mxu0
        %2440 = vmatpush.msra.mxu0 0.0
        %2441 = vmatpush.msra.mxu0 0.0
        %2442 = vmatpush.msra.mxu0 0.0
        %2443 = vmatpush.msra.mxu0 0.0
        %2444 = vmatpush.msra.mxu0 0.0
        %2445 = vmatpush.msra.mxu0 0.0
        %2446 = vmatpush.msra.mxu0 0.0
        %2447 = vmatpush.msra.mxu0 0.0
        %2448 = vmatpush.msra.mxu0 0.0
        %2449 = vmatpush.msra.mxu0 0.0
        %2450 = vmatpush.msra.mxu0 0.0
        %2451 = vmatpush.msra.mxu0 0.0
        %2452 = vmatpush.msra.mxu0 0.0
        %2453 = vmatpush.msra.mxu0 0.0
        %2454 = vmatpush.msra.mxu0 0.0
        %2455 = vmatpush.msra.mxu0 %v2414
        %2456 = vmatmul.f32.gmra.mxu0 %v2418
        %v2457 = vpop.f32.mrf.mxu0
        %v2458 = vadd.f32 0.0, %v2457
        %2459 = vdwg.mxu0
        %2460 = vmatpush.msra.mxu0 0.0
        %2461 = vmatpush.msra.mxu0 0.0
        %2462 = vmatpush.msra.mxu0 0.0
        %2463 = vmatpush.msra.mxu0 0.0
        %2464 = vmatpush.msra.mxu0 0.0
        %2465 = vmatpush.msra.mxu0 0.0
        %2466 = vmatpush.msra.mxu0 0.0
        %2467 = vmatpush.msra.mxu0 0.0
        %2468 = vmatpush.msra.mxu0 0.0
        %2469 = vmatpush.msra.mxu0 0.0
        %2470 = vmatpush.msra.mxu0 0.0
        %2471 = vmatpush.msra.mxu0 0.0
        %2472 = vmatpush.msra.mxu0 0.0
        %2473 = vmatpush.msra.mxu0 0.0
        %2474 = vmatpush.msra.mxu0 0.0
        %2475 = vmatpush.msra.mxu0 %v2411
        %2476 = vmatmul.f32.gmra.mxu0 %v2418
        %v2477 = vpop.f32.mrf.mxu0
        %v2478 = vadd.f32 0.0, %v2477
        %2479 = vdwg.mxu0
        %2480 = vrot.lane.b32.xlu0 %v2399, 56
        %v2481 = vpop.permute.xlu0 %2480
        %v2482 = vsel %vm564, %v2481, 0
        %2484 = vmatpush.msra.mxu0 0.0
        %2485 = vmatpush.msra.mxu0 0.0
        %2486 = vmatpush.msra.mxu0 0.0
        %2487 = vmatpush.msra.mxu0 0.0
        %2488 = vmatpush.msra.mxu0 0.0
        %2489 = vmatpush.msra.mxu0 0.0
        %2490 = vmatpush.msra.mxu0 0.0
        %2491 = vmatpush.msra.mxu0 0.0
        %2492 = vmatpush.msra.mxu0 0.0
        %2493 = vmatpush.msra.mxu0 0.0
        %2494 = vmatpush.msra.mxu0 0.0
        %2495 = vmatpush.msra.mxu0 0.0
        %2496 = vmatpush.msra.mxu0 0.0
        %2497 = vmatpush.msra.mxu0 0.0
        %2498 = vmatpush.msra.mxu0 0.0
        %2499 = vmatpush.msra.mxu0 %v2396
        %2500 = vmatmul.f32.gmra.mxu0 %v2482
        %v2501 = vpop.f32.mrf.mxu0
        %v2502 = vadd.f32 %v2438, %v2501
        %2503 = vdwg.mxu0
        %2504 = vmatpush.msra.mxu0 0.0
        %2505 = vmatpush.msra.mxu0 0.0
        %2506 = vmatpush.msra.mxu0 0.0
        %2507 = vmatpush.msra.mxu0 0.0
        %2508 = vmatpush.msra.mxu0 0.0
        %2509 = vmatpush.msra.mxu0 0.0
        %2510 = vmatpush.msra.mxu0 0.0
        %2511 = vmatpush.msra.mxu0 0.0
        %2512 = vmatpush.msra.mxu0 0.0
        %2513 = vmatpush.msra.mxu0 0.0
        %2514 = vmatpush.msra.mxu0 0.0
        %2515 = vmatpush.msra.mxu0 0.0
        %2516 = vmatpush.msra.mxu0 0.0
        %2517 = vmatpush.msra.mxu0 0.0
        %2518 = vmatpush.msra.mxu0 0.0
        %2519 = vmatpush.msra.mxu0 %v2397
        %2520 = vmatmul.f32.gmra.mxu0 %v2482
        %v2521 = vpop.f32.mrf.mxu0
        %v2522 = vadd.f32 %v2458, %v2521
        %2523 = vdwg.mxu0
        %2524 = vmatpush.msra.mxu0 0.0
        %2525 = vmatpush.msra.mxu0 0.0
        %2526 = vmatpush.msra.mxu0 0.0
        %2527 = vmatpush.msra.mxu0 0.0
        %2528 = vmatpush.msra.mxu0 0.0
        %2529 = vmatpush.msra.mxu0 0.0
        %2530 = vmatpush.msra.mxu0 0.0
        %2531 = vmatpush.msra.mxu0 0.0
        %2532 = vmatpush.msra.mxu0 0.0
        %2533 = vmatpush.msra.mxu0 0.0
        %2534 = vmatpush.msra.mxu0 0.0
        %2535 = vmatpush.msra.mxu0 0.0
        %2536 = vmatpush.msra.mxu0 0.0
        %2537 = vmatpush.msra.mxu0 0.0
        %2538 = vmatpush.msra.mxu0 0.0
        %2539 = vmatpush.msra.mxu0 %v2398
        %2540 = vmatmul.f32.gmra.mxu0 %v2482
        %v2541 = vpop.f32.mrf.mxu0
        %v2542 = vadd.f32 %v2478, %v2541
        %2543 = vdwg.mxu0
        %2544 = vrot.lane.b32.xlu0 %v2399, 40
        %v2545 = vpop.permute.xlu0 %2544
        %2546 = vrot.lane.b32.xlu0 %v2396, 126
        %v2547 = vpop.permute.xlu0 %2546
        %2548 = vrot.lane.b32.xlu0 %v2397, 126
        %v2549 = vpop.permute.xlu0 %2548
        %2550 = vrot.lane.b32.xlu0 %v2398, 126
        %v2551 = vpop.permute.xlu0 %2550
        %vm2552 = vcmask 1031168
        %v2553 = vsel %vm2552, %v2547, %v2549
        %v2554 = vsel %vm2552, %v2549, %v2551
        %v2558 = vsel %vm564, %v2545, 0
        %2560 = vmatpush.msra.mxu0 0.0
        %2561 = vmatpush.msra.mxu0 0.0
        %2562 = vmatpush.msra.mxu0 0.0
        %2563 = vmatpush.msra.mxu0 0.0
        %2564 = vmatpush.msra.mxu0 0.0
        %2565 = vmatpush.msra.mxu0 0.0
        %2566 = vmatpush.msra.mxu0 0.0
        %2567 = vmatpush.msra.mxu0 0.0
        %2568 = vmatpush.msra.mxu0 0.0
        %2569 = vmatpush.msra.mxu0 0.0
        %2570 = vmatpush.msra.mxu0 0.0
        %2571 = vmatpush.msra.mxu0 0.0
        %2572 = vmatpush.msra.mxu0 0.0
        %2573 = vmatpush.msra.mxu0 0.0
        %2574 = vmatpush.msra.mxu0 0.0
        %2575 = vmatpush.msra.mxu0 %v2553
        %2576 = vmatmul.f32.gmra.mxu0 %v2558
        %v2577 = vpop.f32.mrf.mxu0
        %v2578 = vadd.f32 0.0, %v2577
        %2579 = vdwg.mxu0
        %2580 = vmatpush.msra.mxu0 0.0
        %2581 = vmatpush.msra.mxu0 0.0
        %2582 = vmatpush.msra.mxu0 0.0
        %2583 = vmatpush.msra.mxu0 0.0
        %2584 = vmatpush.msra.mxu0 0.0
        %2585 = vmatpush.msra.mxu0 0.0
        %2586 = vmatpush.msra.mxu0 0.0
        %2587 = vmatpush.msra.mxu0 0.0
        %2588 = vmatpush.msra.mxu0 0.0
        %2589 = vmatpush.msra.mxu0 0.0
        %2590 = vmatpush.msra.mxu0 0.0
        %2591 = vmatpush.msra.mxu0 0.0
        %2592 = vmatpush.msra.mxu0 0.0
        %2593 = vmatpush.msra.mxu0 0.0
        %2594 = vmatpush.msra.mxu0 0.0
        %2595 = vmatpush.msra.mxu0 %v2554
        %2596 = vmatmul.f32.gmra.mxu0 %v2558
        %v2597 = vpop.f32.mrf.mxu0
        %v2598 = vadd.f32 0.0, %v2597
        %2599 = vdwg.mxu0
        %2600 = vmatpush.msra.mxu0 0.0
        %2601 = vmatpush.msra.mxu0 0.0
        %2602 = vmatpush.msra.mxu0 0.0
        %2603 = vmatpush.msra.mxu0 0.0
        %2604 = vmatpush.msra.mxu0 0.0
        %2605 = vmatpush.msra.mxu0 0.0
        %2606 = vmatpush.msra.mxu0 0.0
        %2607 = vmatpush.msra.mxu0 0.0
        %2608 = vmatpush.msra.mxu0 0.0
        %2609 = vmatpush.msra.mxu0 0.0
        %2610 = vmatpush.msra.mxu0 0.0
        %2611 = vmatpush.msra.mxu0 0.0
        %2612 = vmatpush.msra.mxu0 0.0
        %2613 = vmatpush.msra.mxu0 0.0
        %2614 = vmatpush.msra.mxu0 0.0
        %2615 = vmatpush.msra.mxu0 %v2551
        %2616 = vmatmul.f32.gmra.mxu0 %v2558
        %v2617 = vpop.f32.mrf.mxu0
        %v2618 = vadd.f32 0.0, %v2617
        %2619 = vdwg.mxu0
        %v2620 = vadd.f32 %v2502, %v2578
        %v2621 = vadd.f32 %v2522, %v2598
        %v2622 = vadd.f32 %v2542, %v2618
        %2623 = vrot.lane.b32.xlu0 %v2399, 32
        %v2624 = vpop.permute.xlu0 %2623
        %2625 = vrot.lane.b32.xlu0 %v2396, 110
        %v2626 = vpop.permute.xlu0 %2625
        %2627 = vrot.lane.b32.xlu0 %v2397, 110
        %v2628 = vpop.permute.xlu0 %2627
        %2629 = vrot.lane.b32.xlu0 %v2398, 110
        %v2630 = vpop.permute.xlu0 %2629
        %vm2631 = vcmask 900096
        %v2632 = vsel %vm2631, %v2626, %v2628
        %v2633 = vsel %vm2631, %v2628, %v2630
        %v2637 = vsel %vm564, %v2624, 0
        %2639 = vmatpush.msra.mxu0 0.0
        %2640 = vmatpush.msra.mxu0 0.0
        %2641 = vmatpush.msra.mxu0 0.0
        %2642 = vmatpush.msra.mxu0 0.0
        %2643 = vmatpush.msra.mxu0 0.0
        %2644 = vmatpush.msra.mxu0 0.0
        %2645 = vmatpush.msra.mxu0 0.0
        %2646 = vmatpush.msra.mxu0 0.0
        %2647 = vmatpush.msra.mxu0 0.0
        %2648 = vmatpush.msra.mxu0 0.0
        %2649 = vmatpush.msra.mxu0 0.0
        %2650 = vmatpush.msra.mxu0 0.0
        %2651 = vmatpush.msra.mxu0 0.0
        %2652 = vmatpush.msra.mxu0 0.0
        %2653 = vmatpush.msra.mxu0 0.0
        %2654 = vmatpush.msra.mxu0 %v2632
        %2655 = vmatmul.f32.gmra.mxu0 %v2637
        %v2656 = vpop.f32.mrf.mxu0
        %v2657 = vadd.f32 0.0, %v2656
        %2658 = vdwg.mxu0
        %2659 = vmatpush.msra.mxu0 0.0
        %2660 = vmatpush.msra.mxu0 0.0
        %2661 = vmatpush.msra.mxu0 0.0
        %2662 = vmatpush.msra.mxu0 0.0
        %2663 = vmatpush.msra.mxu0 0.0
        %2664 = vmatpush.msra.mxu0 0.0
        %2665 = vmatpush.msra.mxu0 0.0
        %2666 = vmatpush.msra.mxu0 0.0
        %2667 = vmatpush.msra.mxu0 0.0
        %2668 = vmatpush.msra.mxu0 0.0
        %2669 = vmatpush.msra.mxu0 0.0
        %2670 = vmatpush.msra.mxu0 0.0
        %2671 = vmatpush.msra.mxu0 0.0
        %2672 = vmatpush.msra.mxu0 0.0
        %2673 = vmatpush.msra.mxu0 0.0
        %2674 = vmatpush.msra.mxu0 %v2633
        %2675 = vmatmul.f32.gmra.mxu0 %v2637
        %v2676 = vpop.f32.mrf.mxu0
        %v2677 = vadd.f32 0.0, %v2676
        %2678 = vdwg.mxu0
        %2679 = vmatpush.msra.mxu0 0.0
        %2680 = vmatpush.msra.mxu0 0.0
        %2681 = vmatpush.msra.mxu0 0.0
        %2682 = vmatpush.msra.mxu0 0.0
        %2683 = vmatpush.msra.mxu0 0.0
        %2684 = vmatpush.msra.mxu0 0.0
        %2685 = vmatpush.msra.mxu0 0.0
        %2686 = vmatpush.msra.mxu0 0.0
        %2687 = vmatpush.msra.mxu0 0.0
        %2688 = vmatpush.msra.mxu0 0.0
        %2689 = vmatpush.msra.mxu0 0.0
        %2690 = vmatpush.msra.mxu0 0.0
        %2691 = vmatpush.msra.mxu0 0.0
        %2692 = vmatpush.msra.mxu0 0.0
        %2693 = vmatpush.msra.mxu0 0.0
        %2694 = vmatpush.msra.mxu0 %v2630
        %2695 = vmatmul.f32.gmra.mxu0 %v2637
        %v2696 = vpop.f32.mrf.mxu0
        %v2697 = vadd.f32 0.0, %v2696
        %2698 = vdwg.mxu0
        %v2699 = vadd.f32 %v2620, %v2657
        %v2700 = vadd.f32 %v2621, %v2677
        %v2701 = vadd.f32 %v2622, %v2697
        %2702 = vrot.lane.b32.xlu0 %v2399, 24
        %v2703 = vpop.permute.xlu0 %2702
        %2704 = vrot.lane.b32.xlu0 %v2396, 109
        %v2705 = vpop.permute.xlu0 %2704
        %2706 = vrot.lane.b32.xlu0 %v2397, 109
        %v2707 = vpop.permute.xlu0 %2706
        %2708 = vrot.lane.b32.xlu0 %v2398, 109
        %v2709 = vpop.permute.xlu0 %2708
        %vm2710 = vcmask 891904
        %v2711 = vsel %vm2710, %v2705, %v2707
        %v2712 = vsel %vm2710, %v2707, %v2709
        %v2716 = vsel %vm564, %v2703, 0
        %2718 = vmatpush.msra.mxu0 0.0
        %2719 = vmatpush.msra.mxu0 0.0
        %2720 = vmatpush.msra.mxu0 0.0
        %2721 = vmatpush.msra.mxu0 0.0
        %2722 = vmatpush.msra.mxu0 0.0
        %2723 = vmatpush.msra.mxu0 0.0
        %2724 = vmatpush.msra.mxu0 0.0
        %2725 = vmatpush.msra.mxu0 0.0
        %2726 = vmatpush.msra.mxu0 0.0
        %2727 = vmatpush.msra.mxu0 0.0
        %2728 = vmatpush.msra.mxu0 0.0
        %2729 = vmatpush.msra.mxu0 0.0
        %2730 = vmatpush.msra.mxu0 0.0
        %2731 = vmatpush.msra.mxu0 0.0
        %2732 = vmatpush.msra.mxu0 0.0
        %2733 = vmatpush.msra.mxu0 %v2711
        %2734 = vmatmul.f32.gmra.mxu0 %v2716
        %v2735 = vpop.f32.mrf.mxu0
        %v2736 = vadd.f32 0.0, %v2735
        %2737 = vdwg.mxu0
        %2738 = vmatpush.msra.mxu0 0.0
        %2739 = vmatpush.msra.mxu0 0.0
        %2740 = vmatpush.msra.mxu0 0.0
        %2741 = vmatpush.msra.mxu0 0.0
        %2742 = vmatpush.msra.mxu0 0.0
        %2743 = vmatpush.msra.mxu0 0.0
        %2744 = vmatpush.msra.mxu0 0.0
        %2745 = vmatpush.msra.mxu0 0.0
        %2746 = vmatpush.msra.mxu0 0.0
        %2747 = vmatpush.msra.mxu0 0.0
        %2748 = vmatpush.msra.mxu0 0.0
        %2749 = vmatpush.msra.mxu0 0.0
        %2750 = vmatpush.msra.mxu0 0.0
        %2751 = vmatpush.msra.mxu0 0.0
        %2752 = vmatpush.msra.mxu0 0.0
        %2753 = vmatpush.msra.mxu0 %v2712
        %2754 = vmatmul.f32.gmra.mxu0 %v2716
        %v2755 = vpop.f32.mrf.mxu0
        %v2756 = vadd.f32 0.0, %v2755
        %2757 = vdwg.mxu0
        %2758 = vmatpush.msra.mxu0 0.0
        %2759 = vmatpush.msra.mxu0 0.0
        %2760 = vmatpush.msra.mxu0 0.0
        %2761 = vmatpush.msra.mxu0 0.0
        %2762 = vmatpush.msra.mxu0 0.0
        %2763 = vmatpush.msra.mxu0 0.0
        %2764 = vmatpush.msra.mxu0 0.0
        %2765 = vmatpush.msra.mxu0 0.0
        %2766 = vmatpush.msra.mxu0 0.0
        %2767 = vmatpush.msra.mxu0 0.0
        %2768 = vmatpush.msra.mxu0 0.0
        %2769 = vmatpush.msra.mxu0 0.0
        %2770 = vmatpush.msra.mxu0 0.0
        %2771 = vmatpush.msra.mxu0 0.0
        %2772 = vmatpush.msra.mxu0 0.0
        %2773 = vmatpush.msra.mxu0 %v2709
        %2774 = vmatmul.f32.gmra.mxu0 %v2716
        %v2775 = vpop.f32.mrf.mxu0
        %v2776 = vadd.f32 0.0, %v2775
        %2777 = vdwg.mxu0
        %v2778 = vadd.f32 %v2699, %v2736
        %v2779 = vadd.f32 %v2700, %v2756
        %v2780 = vadd.f32 %v2701, %v2776
        %2781 = vrot.lane.b32.xlu0 %v2399, 16
        %v2782 = vpop.permute.xlu0 %2781
        %2783 = vrot.lane.b32.xlu0 %v2396, 108
        %v2784 = vpop.permute.xlu0 %2783
        %2785 = vrot.lane.b32.xlu0 %v2397, 108
        %v2786 = vpop.permute.xlu0 %2785
        %2787 = vrot.lane.b32.xlu0 %v2398, 108
        %v2788 = vpop.permute.xlu0 %2787
        %vm2789 = vcmask 883712
        %v2790 = vsel %vm2789, %v2784, %v2786
        %v2791 = vsel %vm2789, %v2786, %v2788
        %v2795 = vsel %vm564, %v2782, 0
        %2797 = vmatpush.msra.mxu0 0.0
        %2798 = vmatpush.msra.mxu0 0.0
        %2799 = vmatpush.msra.mxu0 0.0
        %2800 = vmatpush.msra.mxu0 0.0
        %2801 = vmatpush.msra.mxu0 0.0
        %2802 = vmatpush.msra.mxu0 0.0
        %2803 = vmatpush.msra.mxu0 0.0
        %2804 = vmatpush.msra.mxu0 0.0
        %2805 = vmatpush.msra.mxu0 0.0
        %2806 = vmatpush.msra.mxu0 0.0
        %2807 = vmatpush.msra.mxu0 0.0
        %2808 = vmatpush.msra.mxu0 0.0
        %2809 = vmatpush.msra.mxu0 0.0
        %2810 = vmatpush.msra.mxu0 0.0
        %2811 = vmatpush.msra.mxu0 0.0
        %2812 = vmatpush.msra.mxu0 %v2790
        %2813 = vmatmul.f32.gmra.mxu0 %v2795
        %v2814 = vpop.f32.mrf.mxu0
        %v2815 = vadd.f32 0.0, %v2814
        %2816 = vdwg.mxu0
        %2817 = vmatpush.msra.mxu0 0.0
        %2818 = vmatpush.msra.mxu0 0.0
        %2819 = vmatpush.msra.mxu0 0.0
        %2820 = vmatpush.msra.mxu0 0.0
        %2821 = vmatpush.msra.mxu0 0.0
        %2822 = vmatpush.msra.mxu0 0.0
        %2823 = vmatpush.msra.mxu0 0.0
        %2824 = vmatpush.msra.mxu0 0.0
        %2825 = vmatpush.msra.mxu0 0.0
        %2826 = vmatpush.msra.mxu0 0.0
        %2827 = vmatpush.msra.mxu0 0.0
        %2828 = vmatpush.msra.mxu0 0.0
        %2829 = vmatpush.msra.mxu0 0.0
        %2830 = vmatpush.msra.mxu0 0.0
        %2831 = vmatpush.msra.mxu0 0.0
        %2832 = vmatpush.msra.mxu0 %v2791
        %2833 = vmatmul.f32.gmra.mxu0 %v2795
        %v2834 = vpop.f32.mrf.mxu0
        %v2835 = vadd.f32 0.0, %v2834
        %2836 = vdwg.mxu0
        %2837 = vmatpush.msra.mxu0 0.0
        %2838 = vmatpush.msra.mxu0 0.0
        %2839 = vmatpush.msra.mxu0 0.0
        %2840 = vmatpush.msra.mxu0 0.0
        %2841 = vmatpush.msra.mxu0 0.0
        %2842 = vmatpush.msra.mxu0 0.0
        %2843 = vmatpush.msra.mxu0 0.0
        %2844 = vmatpush.msra.mxu0 0.0
        %2845 = vmatpush.msra.mxu0 0.0
        %2846 = vmatpush.msra.mxu0 0.0
        %2847 = vmatpush.msra.mxu0 0.0
        %2848 = vmatpush.msra.mxu0 0.0
        %2849 = vmatpush.msra.mxu0 0.0
        %2850 = vmatpush.msra.mxu0 0.0
        %2851 = vmatpush.msra.mxu0 0.0
        %2852 = vmatpush.msra.mxu0 %v2788
        %2853 = vmatmul.f32.gmra.mxu0 %v2795
        %v2854 = vpop.f32.mrf.mxu0
        %v2855 = vadd.f32 0.0, %v2854
        %2856 = vdwg.mxu0
        %v2857 = vadd.f32 %v2778, %v2815
        %v2858 = vadd.f32 %v2779, %v2835
        %v2859 = vadd.f32 %v2780, %v2855
        %2860 = vrot.lane.b32.xlu0 %v2399, 8
        %v2861 = vpop.permute.xlu0 %2860
        %2862 = vrot.lane.b32.xlu0 %v2396, 92
        %v2863 = vpop.permute.xlu0 %2862
        %2864 = vrot.lane.b32.xlu0 %v2397, 92
        %v2865 = vpop.permute.xlu0 %2864
        %2866 = vrot.lane.b32.xlu0 %v2398, 92
        %v2867 = vpop.permute.xlu0 %2866
        %vm2868 = vcmask 752640
        %v2869 = vsel %vm2868, %v2863, %v2865
        %v2870 = vsel %vm2868, %v2865, %v2867
        %v2874 = vsel %vm564, %v2861, 0
        %2876 = vmatpush.msra.mxu0 0.0
        %2877 = vmatpush.msra.mxu0 0.0
        %2878 = vmatpush.msra.mxu0 0.0
        %2879 = vmatpush.msra.mxu0 0.0
        %2880 = vmatpush.msra.mxu0 0.0
        %2881 = vmatpush.msra.mxu0 0.0
        %2882 = vmatpush.msra.mxu0 0.0
        %2883 = vmatpush.msra.mxu0 0.0
        %2884 = vmatpush.msra.mxu0 0.0
        %2885 = vmatpush.msra.mxu0 0.0
        %2886 = vmatpush.msra.mxu0 0.0
        %2887 = vmatpush.msra.mxu0 0.0
        %2888 = vmatpush.msra.mxu0 0.0
        %2889 = vmatpush.msra.mxu0 0.0
        %2890 = vmatpush.msra.mxu0 0.0
        %2891 = vmatpush.msra.mxu0 %v2869
        %2892 = vmatmul.f32.gmra.mxu0 %v2874
        %v2893 = vpop.f32.mrf.mxu0
        %v2894 = vadd.f32 0.0, %v2893
        %2895 = vdwg.mxu0
        %2896 = vmatpush.msra.mxu0 0.0
        %2897 = vmatpush.msra.mxu0 0.0
        %2898 = vmatpush.msra.mxu0 0.0
        %2899 = vmatpush.msra.mxu0 0.0
        %2900 = vmatpush.msra.mxu0 0.0
        %2901 = vmatpush.msra.mxu0 0.0
        %2902 = vmatpush.msra.mxu0 0.0
        %2903 = vmatpush.msra.mxu0 0.0
        %2904 = vmatpush.msra.mxu0 0.0
        %2905 = vmatpush.msra.mxu0 0.0
        %2906 = vmatpush.msra.mxu0 0.0
        %2907 = vmatpush.msra.mxu0 0.0
        %2908 = vmatpush.msra.mxu0 0.0
        %2909 = vmatpush.msra.mxu0 0.0
        %2910 = vmatpush.msra.mxu0 0.0
        %2911 = vmatpush.msra.mxu0 %v2870
        %2912 = vmatmul.f32.gmra.mxu0 %v2874
        %v2913 = vpop.f32.mrf.mxu0
        %v2914 = vadd.f32 0.0, %v2913
        %2915 = vdwg.mxu0
        %2916 = vmatpush.msra.mxu0 0.0
        %2917 = vmatpush.msra.mxu0 0.0
        %2918 = vmatpush.msra.mxu0 0.0
        %2919 = vmatpush.msra.mxu0 0.0
        %2920 = vmatpush.msra.mxu0 0.0
        %2921 = vmatpush.msra.mxu0 0.0
        %2922 = vmatpush.msra.mxu0 0.0
        %2923 = vmatpush.msra.mxu0 0.0
        %2924 = vmatpush.msra.mxu0 0.0
        %2925 = vmatpush.msra.mxu0 0.0
        %2926 = vmatpush.msra.mxu0 0.0
        %2927 = vmatpush.msra.mxu0 0.0
        %2928 = vmatpush.msra.mxu0 0.0
        %2929 = vmatpush.msra.mxu0 0.0
        %2930 = vmatpush.msra.mxu0 0.0
        %2931 = vmatpush.msra.mxu0 %v2867
        %2932 = vmatmul.f32.gmra.mxu0 %v2874
        %v2933 = vpop.f32.mrf.mxu0
        %v2934 = vadd.f32 0.0, %v2933
        %2935 = vdwg.mxu0
        %v2936 = vadd.f32 %v2857, %v2894
        %v2937 = vadd.f32 %v2858, %v2914
        %v2938 = vadd.f32 %v2859, %v2934
        %v2939 = vld [vmem:[%s1 + $0x10] sm:$0xff]
        %2940 = vrot.lane.b32.xlu0 %v2396, 91
        %v2941 = vpop.permute.xlu0 %2940
        %2942 = vrot.lane.b32.xlu0 %v2397, 91
        %v2943 = vpop.permute.xlu0 %2942
        %2944 = vrot.lane.b32.xlu0 %v2398, 91
        %v2945 = vpop.permute.xlu0 %2944
        %vm2946 = vcmask 744448
        %v2947 = vsel %vm2946, %v2941, %v2943
        %v2948 = vsel %vm2946, %v2943, %v2945
        %v2953 = vsel %vm564, %v2939, 0
        %2955 = vmatpush.msra.mxu0 0.0
        %2956 = vmatpush.msra.mxu0 0.0
        %2957 = vmatpush.msra.mxu0 0.0
        %2958 = vmatpush.msra.mxu0 0.0
        %2959 = vmatpush.msra.mxu0 0.0
        %2960 = vmatpush.msra.mxu0 0.0
        %2961 = vmatpush.msra.mxu0 0.0
        %2962 = vmatpush.msra.mxu0 0.0
        %2963 = vmatpush.msra.mxu0 0.0
        %2964 = vmatpush.msra.mxu0 0.0
        %2965 = vmatpush.msra.mxu0 0.0
        %2966 = vmatpush.msra.mxu0 0.0
        %2967 = vmatpush.msra.mxu0 0.0
        %2968 = vmatpush.msra.mxu0 0.0
        %2969 = vmatpush.msra.mxu0 0.0
        %2970 = vmatpush.msra.mxu0 %v2947
        %2971 = vmatmul.f32.gmra.mxu0 %v2953
        %v2972 = vpop.f32.mrf.mxu0
        %v2973 = vadd.f32 0.0, %v2972
        %2974 = vdwg.mxu0
        %2975 = vmatpush.msra.mxu0 0.0
        %2976 = vmatpush.msra.mxu0 0.0
        %2977 = vmatpush.msra.mxu0 0.0
        %2978 = vmatpush.msra.mxu0 0.0
        %2979 = vmatpush.msra.mxu0 0.0
        %2980 = vmatpush.msra.mxu0 0.0
        %2981 = vmatpush.msra.mxu0 0.0
        %2982 = vmatpush.msra.mxu0 0.0
        %2983 = vmatpush.msra.mxu0 0.0
        %2984 = vmatpush.msra.mxu0 0.0
        %2985 = vmatpush.msra.mxu0 0.0
        %2986 = vmatpush.msra.mxu0 0.0
        %2987 = vmatpush.msra.mxu0 0.0
        %2988 = vmatpush.msra.mxu0 0.0
        %2989 = vmatpush.msra.mxu0 0.0
        %2990 = vmatpush.msra.mxu0 %v2948
        %2991 = vmatmul.f32.gmra.mxu0 %v2953
        %v2992 = vpop.f32.mrf.mxu0
        %v2993 = vadd.f32 0.0, %v2992
        %2994 = vdwg.mxu0
        %2995 = vmatpush.msra.mxu0 0.0
        %2996 = vmatpush.msra.mxu0 0.0
        %2997 = vmatpush.msra.mxu0 0.0
        %2998 = vmatpush.msra.mxu0 0.0
        %2999 = vmatpush.msra.mxu0 0.0
        %3000 = vmatpush.msra.mxu0 0.0
        %3001 = vmatpush.msra.mxu0 0.0
        %3002 = vmatpush.msra.mxu0 0.0
        %3003 = vmatpush.msra.mxu0 0.0
        %3004 = vmatpush.msra.mxu0 0.0
        %3005 = vmatpush.msra.mxu0 0.0
        %3006 = vmatpush.msra.mxu0 0.0
        %3007 = vmatpush.msra.mxu0 0.0
        %3008 = vmatpush.msra.mxu0 0.0
        %3009 = vmatpush.msra.mxu0 0.0
        %3010 = vmatpush.msra.mxu0 %v2945
        %3011 = vmatmul.f32.gmra.mxu0 %v2953
        %v3012 = vpop.f32.mrf.mxu0
        %v3013 = vadd.f32 0.0, %v3012
        %3014 = vdwg.mxu0
        %v3015 = vadd.f32 %v2936, %v2973
        %v3016 = vadd.f32 %v2937, %v2993
        %v3017 = vadd.f32 %v2938, %v3013
        %3018 = vrot.lane.b32.xlu0 %v2939, 120
        %v3019 = vpop.permute.xlu0 %3018
        %3020 = vrot.lane.b32.xlu0 %v2396, 90
        %v3021 = vpop.permute.xlu0 %3020
        %3022 = vrot.lane.b32.xlu0 %v2397, 90
        %v3023 = vpop.permute.xlu0 %3022
        %3024 = vrot.lane.b32.xlu0 %v2398, 90
        %v3025 = vpop.permute.xlu0 %3024
        %vm3026 = vcmask 736256
        %v3027 = vsel %vm3026, %v3021, %v3023
        %v3028 = vsel %vm3026, %v3023, %v3025
        %v3032 = vsel %vm564, %v3019, 0
        %3034 = vmatpush.msra.mxu0 0.0
        %3035 = vmatpush.msra.mxu0 0.0
        %3036 = vmatpush.msra.mxu0 0.0
        %3037 = vmatpush.msra.mxu0 0.0
        %3038 = vmatpush.msra.mxu0 0.0
        %3039 = vmatpush.msra.mxu0 0.0
        %3040 = vmatpush.msra.mxu0 0.0
        %3041 = vmatpush.msra.mxu0 0.0
        %3042 = vmatpush.msra.mxu0 0.0
        %3043 = vmatpush.msra.mxu0 0.0
        %3044 = vmatpush.msra.mxu0 0.0
        %3045 = vmatpush.msra.mxu0 0.0
        %3046 = vmatpush.msra.mxu0 0.0
        %3047 = vmatpush.msra.mxu0 0.0
        %3048 = vmatpush.msra.mxu0 0.0
        %3049 = vmatpush.msra.mxu0 %v3027
        %3050 = vmatmul.f32.gmra.mxu0 %v3032
        %v3051 = vpop.f32.mrf.mxu0
        %v3052 = vadd.f32 0.0, %v3051
        %3053 = vdwg.mxu0
        %3054 = vmatpush.msra.mxu0 0.0
        %3055 = vmatpush.msra.mxu0 0.0
        %3056 = vmatpush.msra.mxu0 0.0
        %3057 = vmatpush.msra.mxu0 0.0
        %3058 = vmatpush.msra.mxu0 0.0
        %3059 = vmatpush.msra.mxu0 0.0
        %3060 = vmatpush.msra.mxu0 0.0
        %3061 = vmatpush.msra.mxu0 0.0
        %3062 = vmatpush.msra.mxu0 0.0
        %3063 = vmatpush.msra.mxu0 0.0
        %3064 = vmatpush.msra.mxu0 0.0
        %3065 = vmatpush.msra.mxu0 0.0
        %3066 = vmatpush.msra.mxu0 0.0
        %3067 = vmatpush.msra.mxu0 0.0
        %3068 = vmatpush.msra.mxu0 0.0
        %3069 = vmatpush.msra.mxu0 %v3028
        %3070 = vmatmul.f32.gmra.mxu0 %v3032
        %v3071 = vpop.f32.mrf.mxu0
        %v3072 = vadd.f32 0.0, %v3071
        %3073 = vdwg.mxu0
        %3074 = vmatpush.msra.mxu0 0.0
        %3075 = vmatpush.msra.mxu0 0.0
        %3076 = vmatpush.msra.mxu0 0.0
        %3077 = vmatpush.msra.mxu0 0.0
        %3078 = vmatpush.msra.mxu0 0.0
        %3079 = vmatpush.msra.mxu0 0.0
        %3080 = vmatpush.msra.mxu0 0.0
        %3081 = vmatpush.msra.mxu0 0.0
        %3082 = vmatpush.msra.mxu0 0.0
        %3083 = vmatpush.msra.mxu0 0.0
        %3084 = vmatpush.msra.mxu0 0.0
        %3085 = vmatpush.msra.mxu0 0.0
        %3086 = vmatpush.msra.mxu0 0.0
        %3087 = vmatpush.msra.mxu0 0.0
        %3088 = vmatpush.msra.mxu0 0.0
        %3089 = vmatpush.msra.mxu0 %v3025
        %3090 = vmatmul.f32.gmra.mxu0 %v3032
        %v3091 = vpop.f32.mrf.mxu0
        %v3092 = vadd.f32 0.0, %v3091
        %3093 = vdwg.mxu0
        %v3094 = vadd.f32 %v3015, %v3052
        %v3095 = vadd.f32 %v3016, %v3072
        %v3096 = vadd.f32 %v3017, %v3092
        %3098 = vset.pattern.permute.xlu0 12
        %3099 = vperm.xlu0 %3098, %v2376
        %v3100 = vpop.permute.xlu0 %3099
        %v3102 = vadd.f32 %v3094, %v3100
        %v3103 = vadd.f32 %v3095, %v3100
        %v3104 = vadd.f32 %v3096, %v3100
        %v3106 = vperm.slane %v242, 0
        %v3107 = vperm.slane %v242, 1
        %v3108 = vperm.slane %v242, 2
        %v3112 = vmul.f32 %v3102, %v3106
        %v3113 = vmul.f32 %v3103, %v3107
        %v3114 = vmul.f32 %v3104, %v3108
        %v3115 = vld [vmem:[%s2] sm:$0xff]
        %3116 = vmatpush.msra.mxu0 0.0
        %3117 = vmatpush.msra.mxu0 0.0
        %3118 = vmatpush.msra.mxu0 0.0
        %3119 = vmatpush.msra.mxu0 0.0
        %3120 = vmatpush.msra.mxu0 0.0
        %3121 = vmatpush.msra.mxu0 0.0
        %3122 = vmatpush.msra.mxu0 0.0
        %3123 = vmatpush.msra.mxu0 0.0
        %3124 = vmatpush.msra.mxu0 0.0
        %3125 = vmatpush.msra.mxu0 0.0
        %3126 = vmatpush.msra.mxu0 0.0
        %3127 = vmatpush.msra.mxu0 0.0
        %3128 = vmatpush.msra.mxu0 0.0
        %3129 = vmatpush.msra.mxu0 0.0
        %3130 = vmatpush.msra.mxu0 0.0
        %3131 = vmatpush.msra.mxu0 %v3112
        %3132 = vmatmul.f32.gmra.mxu0 %v565
        %v3133 = vpop.f32.mrf.mxu0
        %v3134 = vadd.f32 0.0, %v3133
        %3135 = vdwg.mxu0
        %3136 = vmatpush.msra.mxu0 0.0
        %3137 = vmatpush.msra.mxu0 0.0
        %3138 = vmatpush.msra.mxu0 0.0
        %3139 = vmatpush.msra.mxu0 0.0
        %3140 = vmatpush.msra.mxu0 0.0
        %3141 = vmatpush.msra.mxu0 0.0
        %3142 = vmatpush.msra.mxu0 0.0
        %3143 = vmatpush.msra.mxu0 0.0
        %3144 = vmatpush.msra.mxu0 0.0
        %3145 = vmatpush.msra.mxu0 0.0
        %3146 = vmatpush.msra.mxu0 0.0
        %3147 = vmatpush.msra.mxu0 0.0
        %3148 = vmatpush.msra.mxu0 0.0
        %3149 = vmatpush.msra.mxu0 0.0
        %3150 = vmatpush.msra.mxu0 0.0
        %3151 = vmatpush.msra.mxu0 %v3113
        %3152 = vmatmul.f32.gmra.mxu0 %v565
        %v3153 = vpop.f32.mrf.mxu0
        %v3154 = vadd.f32 0.0, %v3153
        %3155 = vdwg.mxu0
        %3156 = vmatpush.msra.mxu0 0.0
        %3157 = vmatpush.msra.mxu0 0.0
        %3158 = vmatpush.msra.mxu0 0.0
        %3159 = vmatpush.msra.mxu0 0.0
        %3160 = vmatpush.msra.mxu0 0.0
        %3161 = vmatpush.msra.mxu0 0.0
        %3162 = vmatpush.msra.mxu0 0.0
        %3163 = vmatpush.msra.mxu0 0.0
        %3164 = vmatpush.msra.mxu0 0.0
        %3165 = vmatpush.msra.mxu0 0.0
        %3166 = vmatpush.msra.mxu0 0.0
        %3167 = vmatpush.msra.mxu0 0.0
        %3168 = vmatpush.msra.mxu0 0.0
        %3169 = vmatpush.msra.mxu0 0.0
        %3170 = vmatpush.msra.mxu0 0.0
        %3171 = vmatpush.msra.mxu0 %v3114
        %3172 = vmatmul.f32.gmra.mxu0 %v565
        %v3173 = vpop.f32.mrf.mxu0
        %v3174 = vadd.f32 0.0, %v3173
        %3175 = vdwg.mxu0
        %v3176 = vmul.f32 %v3112, %v3112
        %v3177 = vmul.f32 %v3113, %v3113
        %v3178 = vmul.f32 %v3114, %v3114
        %3179 = vmatpush.msra.mxu0 0.0
        %3180 = vmatpush.msra.mxu0 0.0
        %3181 = vmatpush.msra.mxu0 0.0
        %3182 = vmatpush.msra.mxu0 0.0
        %3183 = vmatpush.msra.mxu0 0.0
        %3184 = vmatpush.msra.mxu0 0.0
        %3185 = vmatpush.msra.mxu0 0.0
        %3186 = vmatpush.msra.mxu0 0.0
        %3187 = vmatpush.msra.mxu0 0.0
        %3188 = vmatpush.msra.mxu0 0.0
        %3189 = vmatpush.msra.mxu0 0.0
        %3190 = vmatpush.msra.mxu0 0.0
        %3191 = vmatpush.msra.mxu0 0.0
        %3192 = vmatpush.msra.mxu0 0.0
        %3193 = vmatpush.msra.mxu0 0.0
        %3194 = vmatpush.msra.mxu0 %v3176
        %3195 = vmatmul.f32.gmra.mxu0 %v565
        %v3196 = vpop.f32.mrf.mxu0
        %v3197 = vadd.f32 0.0, %v3196
        %3198 = vdwg.mxu0
        %3199 = vmatpush.msra.mxu0 0.0
        %3200 = vmatpush.msra.mxu0 0.0
        %3201 = vmatpush.msra.mxu0 0.0
        %3202 = vmatpush.msra.mxu0 0.0
        %3203 = vmatpush.msra.mxu0 0.0
        %3204 = vmatpush.msra.mxu0 0.0
        %3205 = vmatpush.msra.mxu0 0.0
        %3206 = vmatpush.msra.mxu0 0.0
        %3207 = vmatpush.msra.mxu0 0.0
        %3208 = vmatpush.msra.mxu0 0.0
        %3209 = vmatpush.msra.mxu0 0.0
        %3210 = vmatpush.msra.mxu0 0.0
        %3211 = vmatpush.msra.mxu0 0.0
        %3212 = vmatpush.msra.mxu0 0.0
        %3213 = vmatpush.msra.mxu0 0.0
        %3214 = vmatpush.msra.mxu0 %v3177
        %3215 = vmatmul.f32.gmra.mxu0 %v565
        %v3216 = vpop.f32.mrf.mxu0
        %v3217 = vadd.f32 0.0, %v3216
        %3218 = vdwg.mxu0
        %3219 = vmatpush.msra.mxu0 0.0
        %3220 = vmatpush.msra.mxu0 0.0
        %3221 = vmatpush.msra.mxu0 0.0
        %3222 = vmatpush.msra.mxu0 0.0
        %3223 = vmatpush.msra.mxu0 0.0
        %3224 = vmatpush.msra.mxu0 0.0
        %3225 = vmatpush.msra.mxu0 0.0
        %3226 = vmatpush.msra.mxu0 0.0
        %3227 = vmatpush.msra.mxu0 0.0
        %3228 = vmatpush.msra.mxu0 0.0
        %3229 = vmatpush.msra.mxu0 0.0
        %3230 = vmatpush.msra.mxu0 0.0
        %3231 = vmatpush.msra.mxu0 0.0
        %3232 = vmatpush.msra.mxu0 0.0
        %3233 = vmatpush.msra.mxu0 0.0
        %3234 = vmatpush.msra.mxu0 %v3178
        %3235 = vmatmul.f32.gmra.mxu0 %v565
        %v3236 = vpop.f32.mrf.mxu0
        %v3237 = vadd.f32 0.0, %v3236
        %3238 = vdwg.mxu0
        %v3239 = vadd.f32 %v3134, %v3154
        %vm3240 = vcmask 261120
        %v3241 = vsel %vm3240, %v3174, 0.0
        %v3242 = vadd.f32 %v3239, %v3241
        %3243 = vadd.xlane.f32.xlu0 %v3242
        %v3244 = vpop.xlane.xlu0 %3243
        %v3245 = vmul.f32 %v3244, 0.001953125
        %v3246 = vadd.f32 %v3197, %v3217
        %v3247 = vsel %vm3240, %v3237, 0.0
        %v3248 = vadd.f32 %v3246, %v3247
        %3249 = vadd.xlane.f32.xlu0 %v3248
        %v3250 = vpop.xlane.xlu0 %3249
        %v3251 = vmul.f32 %v3250, 0.001953125
        %v3252 = vmul.f32 %v3245, %v3245
        %v3253 = vsub.f32 %v3251, %v3252
        %v3254 = vadd.f32 %v3253, 1e-05
        %v3255 = vrsqrt.pop %v3254
        %v3256 = vmul.f32 %v3255, %v3254
        %v3257 = vmul.f32 %v3256, %v3255
        %v3258 = vmul.f32 0.5, %v3257
        %v3259 = vsub.f32 1.5, %v3258
        %v3260 = vmul.f32 %v3255, %v3259
        %vm3261 = vweird.f32 %v3254
        %vm3262 = vweird.f32 %v3255
        %vm3263 = vmor %vm3261, %vm3262
        %v3264 = vsel %vm3263, %v3255, %v3260
        %v3265 = vsub.f32 %v3112, %v3245
        %v3266 = vsub.f32 %v3113, %v3245
        %v3267 = vsub.f32 %v3114, %v3245
        %v3268 = vmul.f32 %v3264, %v3115
        %3270 = vset.pattern.permute.xlu0 13
        %3271 = vperm.xlu0 %3270, %v3268
        %v3272 = vpop.permute.xlu0 %3271
        %v3274 = vmul.f32 %v3265, %v3272
        %v3275 = vmul.f32 %v3266, %v3272
        %v3276 = vmul.f32 %v3267, %v3272
        %3278 = vset.pattern.permute.xlu0 14
        %3279 = vperm.xlu0 %3278, %v3115
        %v3280 = vpop.permute.xlu0 %3279
        %v3282 = vadd.f32 %v3274, %v3280
        %v3283 = vadd.f32 %v3275, %v3280
        %v3284 = vadd.f32 %v3276, %v3280
        %v3285 = vxor.u32 %v3282, 2147483648
        %v3286 = vxor.u32 %v3283, 2147483648
        %v3287 = vxor.u32 %v3284, 2147483648
        %v3288 = vmul.f32 %v3285, 1.442695
        %v3289 = vpow.pop %v3288
        %v3290 = vmul.f32 %v3286, 1.442695
        %v3291 = vpow.pop %v3290
        %v3292 = vmul.f32 %v3287, 1.442695
        %v3293 = vpow.pop %v3292
        %v3294 = vadd.f32 %v3289, 1.0
        %v3295 = vadd.f32 %v3291, 1.0
        %v3296 = vadd.f32 %v3293, 1.0
        %v3297 = vrcp.pop %v3294
        %v3298 = vmul.f32 %v3294, %v3297
        %v3299 = vsub.f32 1.0, %v3298
        %v3300 = vmul.f32 %v3297, %v3299
        %v3301 = vadd.f32 %v3297, %v3300
        %vm3302 = vweird.f32 %v3294
        %vm3303 = vweird.f32 %v3297
        %vm3304 = vmor %vm3302, %vm3303
        %v3305 = vsel %vm3304, %v3297, %v3301
        %v3306 = vand.u32 2147483647, %v3294
        %vm3307 = vcmp.eq.f32.partialorder %v3306, 8.507059e+37
        %v3308 = vand.u32 %v3294, 2147483648
        %v3309 = vor.u32 1.1754944e-38, %v3308
        %v3310 = vsel %vm3307, %v3309, %v3305
        %v3311 = vmul.f32 1.0, %v3310
        %v3312 = vrcp.pop %v3295
        %v3313 = vmul.f32 %v3295, %v3312
        %v3314 = vsub.f32 1.0, %v3313
        %v3315 = vmul.f32 %v3312, %v3314
        %v3316 = vadd.f32 %v3312, %v3315
        %vm3317 = vweird.f32 %v3295
        %vm3318 = vweird.f32 %v3312
        %vm3319 = vmor %vm3317, %vm3318
        %v3320 = vsel %vm3319, %v3312, %v3316
        %v3321 = vand.u32 2147483647, %v3295
        %vm3322 = vcmp.eq.f32.partialorder %v3321, 8.507059e+37
        %v3323 = vand.u32 %v3295, 2147483648
        %v3324 = vor.u32 1.1754944e-38, %v3323
        %v3325 = vsel %vm3322, %v3324, %v3320
        %v3326 = vmul.f32 1.0, %v3325
        %v3327 = vrcp.pop %v3296
        %v3328 = vmul.f32 %v3296, %v3327
        %v3329 = vsub.f32 1.0, %v3328
        %v3330 = vmul.f32 %v3327, %v3329
        %v3331 = vadd.f32 %v3327, %v3330
        %vm3332 = vweird.f32 %v3296
        %vm3333 = vweird.f32 %v3327
        %vm3334 = vmor %vm3332, %vm3333
        %v3335 = vsel %vm3334, %v3327, %v3331
        %v3336 = vand.u32 2147483647, %v3296
        %vm3337 = vcmp.eq.f32.partialorder %v3336, 8.507059e+37
        %v3338 = vand.u32 %v3296, 2147483648
        %v3339 = vor.u32 1.1754944e-38, %v3338
        %v3340 = vsel %vm3337, %v3339, %v3335
        %v3341 = vmul.f32 1.0, %v3340
        %v3342 = vmul.f32 %v3282, %v3311
        %v3343 = vmul.f32 %v3283, %v3326
        %v3344 = vmul.f32 %v3284, %v3341
        %v3345 = vmul.f32 %v3342, %v3106
        %v3346 = vmul.f32 %v3343, %v3107
        %v3347 = vmul.f32 %v3344, %v3108
        %3351 = vrot.lane.b32.xlu0 %v3345, 19
        %v3352 = vpop.permute.xlu0 %3351
        %3353 = vrot.lane.b32.xlu0 %v3346, 19
        %v3354 = vpop.permute.xlu0 %3353
        %3355 = vrot.lane.b32.xlu0 %v3347, 19
        %v3356 = vpop.permute.xlu0 %3355
        %v3357 = vsel %vm2374, %v3352, %v3354
        %v3358 = vsel %vm2374, %v3354, %v3356
        %3362 = vst.msk [vmem:[#allocation2] sm:$0xff] %vm2391, %v3352
        %3363 = vst [vmem:[#allocation2 + $0x8] sm:$0xff] %v3357
        %3364 = vst.msk [vmem:[#allocation2 + $0x10] sm:$0xff] %vm2394, %v3358
        %v3365 = vld [vmem:[#allocation2] sm:$0xff]
        %v3366 = vld [vmem:[#allocation2 + $0x8] sm:$0xff]
        %v3367 = vld [vmem:[#allocation2 + $0x10] sm:$0xff]
        %v3368 = vld [vmem:[%s1 + $0x10] sm:$0xff]
        %3370 = vrot.lane.b32.xlu0 %v3368, 104
        %v3371 = vpop.permute.xlu0 %3370
        %3375 = vrot.lane.b32.xlu0 %v3365, 127
        %v3376 = vpop.permute.xlu0 %3375
        %3377 = vrot.lane.b32.xlu0 %v3366, 127
        %v3378 = vpop.permute.xlu0 %3377
        %3379 = vrot.lane.b32.xlu0 %v3367, 127
        %v3380 = vpop.permute.xlu0 %3379
        %v3381 = vsel %vm2412, %v3376, %v3378
        %v3382 = vsel %vm2412, %v3378, %v3380
        %v3386 = vsel %vm564, %v3371, 0
        %3388 = vmatpush.msra.mxu0 0.0
        %3389 = vmatpush.msra.mxu0 0.0
        %3390 = vmatpush.msra.mxu0 0.0
        %3391 = vmatpush.msra.mxu0 0.0
        %3392 = vmatpush.msra.mxu0 0.0
        %3393 = vmatpush.msra.mxu0 0.0
        %3394 = vmatpush.msra.mxu0 0.0
        %3395 = vmatpush.msra.mxu0 0.0
        %3396 = vmatpush.msra.mxu0 0.0
        %3397 = vmatpush.msra.mxu0 0.0
        %3398 = vmatpush.msra.mxu0 0.0
        %3399 = vmatpush.msra.mxu0 0.0
        %3400 = vmatpush.msra.mxu0 0.0
        %3401 = vmatpush.msra.mxu0 0.0
        %3402 = vmatpush.msra.mxu0 0.0
        %3403 = vmatpush.msra.mxu0 %v3381
        %3404 = vmatmul.f32.gmra.mxu0 %v3386
        %v3405 = vpop.f32.mrf.mxu0
        %v3406 = vadd.f32 0.0, %v3405
        %3407 = vdwg.mxu0
        %3408 = vmatpush.msra.mxu0 0.0
        %3409 = vmatpush.msra.mxu0 0.0
        %3410 = vmatpush.msra.mxu0 0.0
        %3411 = vmatpush.msra.mxu0 0.0
        %3412 = vmatpush.msra.mxu0 0.0
        %3413 = vmatpush.msra.mxu0 0.0
        %3414 = vmatpush.msra.mxu0 0.0
        %3415 = vmatpush.msra.mxu0 0.0
        %3416 = vmatpush.msra.mxu0 0.0
        %3417 = vmatpush.msra.mxu0 0.0
        %3418 = vmatpush.msra.mxu0 0.0
        %3419 = vmatpush.msra.mxu0 0.0
        %3420 = vmatpush.msra.mxu0 0.0
        %3421 = vmatpush.msra.mxu0 0.0
        %3422 = vmatpush.msra.mxu0 0.0
        %3423 = vmatpush.msra.mxu0 %v3382
        %3424 = vmatmul.f32.gmra.mxu0 %v3386
        %v3425 = vpop.f32.mrf.mxu0
        %v3426 = vadd.f32 0.0, %v3425
        %3427 = vdwg.mxu0
        %3428 = vmatpush.msra.mxu0 0.0
        %3429 = vmatpush.msra.mxu0 0.0
        %3430 = vmatpush.msra.mxu0 0.0
        %3431 = vmatpush.msra.mxu0 0.0
        %3432 = vmatpush.msra.mxu0 0.0
        %3433 = vmatpush.msra.mxu0 0.0
        %3434 = vmatpush.msra.mxu0 0.0
        %3435 = vmatpush.msra.mxu0 0.0
        %3436 = vmatpush.msra.mxu0 0.0
        %3437 = vmatpush.msra.mxu0 0.0
        %3438 = vmatpush.msra.mxu0 0.0
        %3439 = vmatpush.msra.mxu0 0.0
        %3440 = vmatpush.msra.mxu0 0.0
        %3441 = vmatpush.msra.mxu0 0.0
        %3442 = vmatpush.msra.mxu0 0.0
        %3443 = vmatpush.msra.mxu0 %v3380
        %3444 = vmatmul.f32.gmra.mxu0 %v3386
        %v3445 = vpop.f32.mrf.mxu0
        %v3446 = vadd.f32 0.0, %v3445
        %3447 = vdwg.mxu0
        %3448 = vrot.lane.b32.xlu0 %v3368, 112
        %v3449 = vpop.permute.xlu0 %3448
        %v3450 = vsel %vm564, %v3449, 0
        %3452 = vmatpush.msra.mxu0 0.0
        %3453 = vmatpush.msra.mxu0 0.0
        %3454 = vmatpush.msra.mxu0 0.0
        %3455 = vmatpush.msra.mxu0 0.0
        %3456 = vmatpush.msra.mxu0 0.0
        %3457 = vmatpush.msra.mxu0 0.0
        %3458 = vmatpush.msra.mxu0 0.0
        %3459 = vmatpush.msra.mxu0 0.0
        %3460 = vmatpush.msra.mxu0 0.0
        %3461 = vmatpush.msra.mxu0 0.0
        %3462 = vmatpush.msra.mxu0 0.0
        %3463 = vmatpush.msra.mxu0 0.0
        %3464 = vmatpush.msra.mxu0 0.0
        %3465 = vmatpush.msra.mxu0 0.0
        %3466 = vmatpush.msra.mxu0 0.0
        %3467 = vmatpush.msra.mxu0 %v3365
        %3468 = vmatmul.f32.gmra.mxu0 %v3450
        %v3469 = vpop.f32.mrf.mxu0
        %v3470 = vadd.f32 %v3406, %v3469
        %3471 = vdwg.mxu0
        %3472 = vmatpush.msra.mxu0 0.0
        %3473 = vmatpush.msra.mxu0 0.0
        %3474 = vmatpush.msra.mxu0 0.0
        %3475 = vmatpush.msra.mxu0 0.0
        %3476 = vmatpush.msra.mxu0 0.0
        %3477 = vmatpush.msra.mxu0 0.0
        %3478 = vmatpush.msra.mxu0 0.0
        %3479 = vmatpush.msra.mxu0 0.0
        %3480 = vmatpush.msra.mxu0 0.0
        %3481 = vmatpush.msra.mxu0 0.0
        %3482 = vmatpush.msra.mxu0 0.0
        %3483 = vmatpush.msra.mxu0 0.0
        %3484 = vmatpush.msra.mxu0 0.0
        %3485 = vmatpush.msra.mxu0 0.0
        %3486 = vmatpush.msra.mxu0 0.0
        %3487 = vmatpush.msra.mxu0 %v3366
        %3488 = vmatmul.f32.gmra.mxu0 %v3450
        %v3489 = vpop.f32.mrf.mxu0
        %v3490 = vadd.f32 %v3426, %v3489
        %3491 = vdwg.mxu0
        %3492 = vmatpush.msra.mxu0 0.0
        %3493 = vmatpush.msra.mxu0 0.0
        %3494 = vmatpush.msra.mxu0 0.0
        %3495 = vmatpush.msra.mxu0 0.0
        %3496 = vmatpush.msra.mxu0 0.0
        %3497 = vmatpush.msra.mxu0 0.0
        %3498 = vmatpush.msra.mxu0 0.0
        %3499 = vmatpush.msra.mxu0 0.0
        %3500 = vmatpush.msra.mxu0 0.0
        %3501 = vmatpush.msra.mxu0 0.0
        %3502 = vmatpush.msra.mxu0 0.0
        %3503 = vmatpush.msra.mxu0 0.0
        %3504 = vmatpush.msra.mxu0 0.0
        %3505 = vmatpush.msra.mxu0 0.0
        %3506 = vmatpush.msra.mxu0 0.0
        %3507 = vmatpush.msra.mxu0 %v3367
        %3508 = vmatmul.f32.gmra.mxu0 %v3450
        %v3509 = vpop.f32.mrf.mxu0
        %v3510 = vadd.f32 %v3446, %v3509
        %3511 = vdwg.mxu0
        %3512 = vrot.lane.b32.xlu0 %v3368, 96
        %v3513 = vpop.permute.xlu0 %3512
        %3514 = vrot.lane.b32.xlu0 %v3365, 126
        %v3515 = vpop.permute.xlu0 %3514
        %3516 = vrot.lane.b32.xlu0 %v3366, 126
        %v3517 = vpop.permute.xlu0 %3516
        %3518 = vrot.lane.b32.xlu0 %v3367, 126
        %v3519 = vpop.permute.xlu0 %3518
        %v3520 = vsel %vm2552, %v3515, %v3517
        %v3521 = vsel %vm2552, %v3517, %v3519
        %v3525 = vsel %vm564, %v3513, 0
        %3527 = vmatpush.msra.mxu0 0.0
        %3528 = vmatpush.msra.mxu0 0.0
        %3529 = vmatpush.msra.mxu0 0.0
        %3530 = vmatpush.msra.mxu0 0.0
        %3531 = vmatpush.msra.mxu0 0.0
        %3532 = vmatpush.msra.mxu0 0.0
        %3533 = vmatpush.msra.mxu0 0.0
        %3534 = vmatpush.msra.mxu0 0.0
        %3535 = vmatpush.msra.mxu0 0.0
        %3536 = vmatpush.msra.mxu0 0.0
        %3537 = vmatpush.msra.mxu0 0.0
        %3538 = vmatpush.msra.mxu0 0.0
        %3539 = vmatpush.msra.mxu0 0.0
        %3540 = vmatpush.msra.mxu0 0.0
        %3541 = vmatpush.msra.mxu0 0.0
        %3542 = vmatpush.msra.mxu0 %v3520
        %3543 = vmatmul.f32.gmra.mxu0 %v3525
        %v3544 = vpop.f32.mrf.mxu0
        %v3545 = vadd.f32 0.0, %v3544
        %3546 = vdwg.mxu0
        %3547 = vmatpush.msra.mxu0 0.0
        %3548 = vmatpush.msra.mxu0 0.0
        %3549 = vmatpush.msra.mxu0 0.0
        %3550 = vmatpush.msra.mxu0 0.0
        %3551 = vmatpush.msra.mxu0 0.0
        %3552 = vmatpush.msra.mxu0 0.0
        %3553 = vmatpush.msra.mxu0 0.0
        %3554 = vmatpush.msra.mxu0 0.0
        %3555 = vmatpush.msra.mxu0 0.0
        %3556 = vmatpush.msra.mxu0 0.0
        %3557 = vmatpush.msra.mxu0 0.0
        %3558 = vmatpush.msra.mxu0 0.0
        %3559 = vmatpush.msra.mxu0 0.0
        %3560 = vmatpush.msra.mxu0 0.0
        %3561 = vmatpush.msra.mxu0 0.0
        %3562 = vmatpush.msra.mxu0 %v3521
        %3563 = vmatmul.f32.gmra.mxu0 %v3525
        %v3564 = vpop.f32.mrf.mxu0
        %v3565 = vadd.f32 0.0, %v3564
        %3566 = vdwg.mxu0
        %3567 = vmatpush.msra.mxu0 0.0
        %3568 = vmatpush.msra.mxu0 0.0
        %3569 = vmatpush.msra.mxu0 0.0
        %3570 = vmatpush.msra.mxu0 0.0
        %3571 = vmatpush.msra.mxu0 0.0
        %3572 = vmatpush.msra.mxu0 0.0
        %3573 = vmatpush.msra.mxu0 0.0
        %3574 = vmatpush.msra.mxu0 0.0
        %3575 = vmatpush.msra.mxu0 0.0
        %3576 = vmatpush.msra.mxu0 0.0
        %3577 = vmatpush.msra.mxu0 0.0
        %3578 = vmatpush.msra.mxu0 0.0
        %3579 = vmatpush.msra.mxu0 0.0
        %3580 = vmatpush.msra.mxu0 0.0
        %3581 = vmatpush.msra.mxu0 0.0
        %3582 = vmatpush.msra.mxu0 %v3519
        %3583 = vmatmul.f32.gmra.mxu0 %v3525
        %v3584 = vpop.f32.mrf.mxu0
        %v3585 = vadd.f32 0.0, %v3584
        %3586 = vdwg.mxu0
        %v3587 = vadd.f32 %v3470, %v3545
        %v3588 = vadd.f32 %v3490, %v3565
        %v3589 = vadd.f32 %v3510, %v3585
        %3590 = vrot.lane.b32.xlu0 %v3368, 88
        %v3591 = vpop.permute.xlu0 %3590
        %3592 = vrot.lane.b32.xlu0 %v3365, 110
        %v3593 = vpop.permute.xlu0 %3592
        %3594 = vrot.lane.b32.xlu0 %v3366, 110
        %v3595 = vpop.permute.xlu0 %3594
        %3596 = vrot.lane.b32.xlu0 %v3367, 110
        %v3597 = vpop.permute.xlu0 %3596
        %v3598 = vsel %vm2631, %v3593, %v3595
        %v3599 = vsel %vm2631, %v3595, %v3597
        %v3603 = vsel %vm564, %v3591, 0
        %3605 = vmatpush.msra.mxu0 0.0
        %3606 = vmatpush.msra.mxu0 0.0
        %3607 = vmatpush.msra.mxu0 0.0
        %3608 = vmatpush.msra.mxu0 0.0
        %3609 = vmatpush.msra.mxu0 0.0
        %3610 = vmatpush.msra.mxu0 0.0
        %3611 = vmatpush.msra.mxu0 0.0
        %3612 = vmatpush.msra.mxu0 0.0
        %3613 = vmatpush.msra.mxu0 0.0
        %3614 = vmatpush.msra.mxu0 0.0
        %3615 = vmatpush.msra.mxu0 0.0
        %3616 = vmatpush.msra.mxu0 0.0
        %3617 = vmatpush.msra.mxu0 0.0
        %3618 = vmatpush.msra.mxu0 0.0
        %3619 = vmatpush.msra.mxu0 0.0
        %3620 = vmatpush.msra.mxu0 %v3598
        %3621 = vmatmul.f32.gmra.mxu0 %v3603
        %v3622 = vpop.f32.mrf.mxu0
        %v3623 = vadd.f32 0.0, %v3622
        %3624 = vdwg.mxu0
        %3625 = vmatpush.msra.mxu0 0.0
        %3626 = vmatpush.msra.mxu0 0.0
        %3627 = vmatpush.msra.mxu0 0.0
        %3628 = vmatpush.msra.mxu0 0.0
        %3629 = vmatpush.msra.mxu0 0.0
        %3630 = vmatpush.msra.mxu0 0.0
        %3631 = vmatpush.msra.mxu0 0.0
        %3632 = vmatpush.msra.mxu0 0.0
        %3633 = vmatpush.msra.mxu0 0.0
        %3634 = vmatpush.msra.mxu0 0.0
        %3635 = vmatpush.msra.mxu0 0.0
        %3636 = vmatpush.msra.mxu0 0.0
        %3637 = vmatpush.msra.mxu0 0.0
        %3638 = vmatpush.msra.mxu0 0.0
        %3639 = vmatpush.msra.mxu0 0.0
        %3640 = vmatpush.msra.mxu0 %v3599
        %3641 = vmatmul.f32.gmra.mxu0 %v3603
        %v3642 = vpop.f32.mrf.mxu0
        %v3643 = vadd.f32 0.0, %v3642
        %3644 = vdwg.mxu0
        %3645 = vmatpush.msra.mxu0 0.0
        %3646 = vmatpush.msra.mxu0 0.0
        %3647 = vmatpush.msra.mxu0 0.0
        %3648 = vmatpush.msra.mxu0 0.0
        %3649 = vmatpush.msra.mxu0 0.0
        %3650 = vmatpush.msra.mxu0 0.0
        %3651 = vmatpush.msra.mxu0 0.0
        %3652 = vmatpush.msra.mxu0 0.0
        %3653 = vmatpush.msra.mxu0 0.0
        %3654 = vmatpush.msra.mxu0 0.0
        %3655 = vmatpush.msra.mxu0 0.0
        %3656 = vmatpush.msra.mxu0 0.0
        %3657 = vmatpush.msra.mxu0 0.0
        %3658 = vmatpush.msra.mxu0 0.0
        %3659 = vmatpush.msra.mxu0 0.0
        %3660 = vmatpush.msra.mxu0 %v3597
        %3661 = vmatmul.f32.gmra.mxu0 %v3603
        %v3662 = vpop.f32.mrf.mxu0
        %v3663 = vadd.f32 0.0, %v3662
        %3664 = vdwg.mxu0
        %v3665 = vadd.f32 %v3587, %v3623
        %v3666 = vadd.f32 %v3588, %v3643
        %v3667 = vadd.f32 %v3589, %v3663
        %3668 = vrot.lane.b32.xlu0 %v3368, 80
        %v3669 = vpop.permute.xlu0 %3668
        %3670 = vrot.lane.b32.xlu0 %v3365, 109
        %v3671 = vpop.permute.xlu0 %3670
        %3672 = vrot.lane.b32.xlu0 %v3366, 109
        %v3673 = vpop.permute.xlu0 %3672
        %3674 = vrot.lane.b32.xlu0 %v3367, 109
        %v3675 = vpop.permute.xlu0 %3674
        %v3676 = vsel %vm2710, %v3671, %v3673
        %v3677 = vsel %vm2710, %v3673, %v3675
        %v3681 = vsel %vm564, %v3669, 0
        %3683 = vmatpush.msra.mxu0 0.0
        %3684 = vmatpush.msra.mxu0 0.0
        %3685 = vmatpush.msra.mxu0 0.0
        %3686 = vmatpush.msra.mxu0 0.0
        %3687 = vmatpush.msra.mxu0 0.0
        %3688 = vmatpush.msra.mxu0 0.0
        %3689 = vmatpush.msra.mxu0 0.0
        %3690 = vmatpush.msra.mxu0 0.0
        %3691 = vmatpush.msra.mxu0 0.0
        %3692 = vmatpush.msra.mxu0 0.0
        %3693 = vmatpush.msra.mxu0 0.0
        %3694 = vmatpush.msra.mxu0 0.0
        %3695 = vmatpush.msra.mxu0 0.0
        %3696 = vmatpush.msra.mxu0 0.0
        %3697 = vmatpush.msra.mxu0 0.0
        %3698 = vmatpush.msra.mxu0 %v3676
        %3699 = vmatmul.f32.gmra.mxu0 %v3681
        %v3700 = vpop.f32.mrf.mxu0
        %v3701 = vadd.f32 0.0, %v3700
        %3702 = vdwg.mxu0
        %3703 = vmatpush.msra.mxu0 0.0
        %3704 = vmatpush.msra.mxu0 0.0
        %3705 = vmatpush.msra.mxu0 0.0
        %3706 = vmatpush.msra.mxu0 0.0
        %3707 = vmatpush.msra.mxu0 0.0
        %3708 = vmatpush.msra.mxu0 0.0
        %3709 = vmatpush.msra.mxu0 0.0
        %3710 = vmatpush.msra.mxu0 0.0
        %3711 = vmatpush.msra.mxu0 0.0
        %3712 = vmatpush.msra.mxu0 0.0
        %3713 = vmatpush.msra.mxu0 0.0
        %3714 = vmatpush.msra.mxu0 0.0
        %3715 = vmatpush.msra.mxu0 0.0
        %3716 = vmatpush.msra.mxu0 0.0
        %3717 = vmatpush.msra.mxu0 0.0
        %3718 = vmatpush.msra.mxu0 %v3677
        %3719 = vmatmul.f32.gmra.mxu0 %v3681
        %v3720 = vpop.f32.mrf.mxu0
        %v3721 = vadd.f32 0.0, %v3720
        %3722 = vdwg.mxu0
        %3723 = vmatpush.msra.mxu0 0.0
        %3724 = vmatpush.msra.mxu0 0.0
        %3725 = vmatpush.msra.mxu0 0.0
        %3726 = vmatpush.msra.mxu0 0.0
        %3727 = vmatpush.msra.mxu0 0.0
        %3728 = vmatpush.msra.mxu0 0.0
        %3729 = vmatpush.msra.mxu0 0.0
        %3730 = vmatpush.msra.mxu0 0.0
        %3731 = vmatpush.msra.mxu0 0.0
        %3732 = vmatpush.msra.mxu0 0.0
        %3733 = vmatpush.msra.mxu0 0.0
        %3734 = vmatpush.msra.mxu0 0.0
        %3735 = vmatpush.msra.mxu0 0.0
        %3736 = vmatpush.msra.mxu0 0.0
        %3737 = vmatpush.msra.mxu0 0.0
        %3738 = vmatpush.msra.mxu0 %v3675
        %3739 = vmatmul.f32.gmra.mxu0 %v3681
        %v3740 = vpop.f32.mrf.mxu0
        %v3741 = vadd.f32 0.0, %v3740
        %3742 = vdwg.mxu0
        %v3743 = vadd.f32 %v3665, %v3701
        %v3744 = vadd.f32 %v3666, %v3721
        %v3745 = vadd.f32 %v3667, %v3741
        %3746 = vrot.lane.b32.xlu0 %v3368, 72
        %v3747 = vpop.permute.xlu0 %3746
        %3748 = vrot.lane.b32.xlu0 %v3365, 108
        %v3749 = vpop.permute.xlu0 %3748
        %3750 = vrot.lane.b32.xlu0 %v3366, 108
        %v3751 = vpop.permute.xlu0 %3750
        %3752 = vrot.lane.b32.xlu0 %v3367, 108
        %v3753 = vpop.permute.xlu0 %3752
        %v3754 = vsel %vm2789, %v3749, %v3751
        %v3755 = vsel %vm2789, %v3751, %v3753
        %v3759 = vsel %vm564, %v3747, 0
        %3761 = vmatpush.msra.mxu0 0.0
        %3762 = vmatpush.msra.mxu0 0.0
        %3763 = vmatpush.msra.mxu0 0.0
        %3764 = vmatpush.msra.mxu0 0.0
        %3765 = vmatpush.msra.mxu0 0.0
        %3766 = vmatpush.msra.mxu0 0.0
        %3767 = vmatpush.msra.mxu0 0.0
        %3768 = vmatpush.msra.mxu0 0.0
        %3769 = vmatpush.msra.mxu0 0.0
        %3770 = vmatpush.msra.mxu0 0.0
        %3771 = vmatpush.msra.mxu0 0.0
        %3772 = vmatpush.msra.mxu0 0.0
        %3773 = vmatpush.msra.mxu0 0.0
        %3774 = vmatpush.msra.mxu0 0.0
        %3775 = vmatpush.msra.mxu0 0.0
        %3776 = vmatpush.msra.mxu0 %v3754
        %3777 = vmatmul.f32.gmra.mxu0 %v3759
        %v3778 = vpop.f32.mrf.mxu0
        %v3779 = vadd.f32 0.0, %v3778
        %3780 = vdwg.mxu0
        %3781 = vmatpush.msra.mxu0 0.0
        %3782 = vmatpush.msra.mxu0 0.0
        %3783 = vmatpush.msra.mxu0 0.0
        %3784 = vmatpush.msra.mxu0 0.0
        %3785 = vmatpush.msra.mxu0 0.0
        %3786 = vmatpush.msra.mxu0 0.0
        %3787 = vmatpush.msra.mxu0 0.0
        %3788 = vmatpush.msra.mxu0 0.0
        %3789 = vmatpush.msra.mxu0 0.0
        %3790 = vmatpush.msra.mxu0 0.0
        %3791 = vmatpush.msra.mxu0 0.0
        %3792 = vmatpush.msra.mxu0 0.0
        %3793 = vmatpush.msra.mxu0 0.0
        %3794 = vmatpush.msra.mxu0 0.0
        %3795 = vmatpush.msra.mxu0 0.0
        %3796 = vmatpush.msra.mxu0 %v3755
        %3797 = vmatmul.f32.gmra.mxu0 %v3759
        %v3798 = vpop.f32.mrf.mxu0
        %v3799 = vadd.f32 0.0, %v3798
        %3800 = vdwg.mxu0
        %3801 = vmatpush.msra.mxu0 0.0
        %3802 = vmatpush.msra.mxu0 0.0
        %3803 = vmatpush.msra.mxu0 0.0
        %3804 = vmatpush.msra.mxu0 0.0
        %3805 = vmatpush.msra.mxu0 0.0
        %3806 = vmatpush.msra.mxu0 0.0
        %3807 = vmatpush.msra.mxu0 0.0
        %3808 = vmatpush.msra.mxu0 0.0
        %3809 = vmatpush.msra.mxu0 0.0
        %3810 = vmatpush.msra.mxu0 0.0
        %3811 = vmatpush.msra.mxu0 0.0
        %3812 = vmatpush.msra.mxu0 0.0
        %3813 = vmatpush.msra.mxu0 0.0
        %3814 = vmatpush.msra.mxu0 0.0
        %3815 = vmatpush.msra.mxu0 0.0
        %3816 = vmatpush.msra.mxu0 %v3753
        %3817 = vmatmul.f32.gmra.mxu0 %v3759
        %v3818 = vpop.f32.mrf.mxu0
        %v3819 = vadd.f32 0.0, %v3818
        %3820 = vdwg.mxu0
        %v3821 = vadd.f32 %v3743, %v3779
        %v3822 = vadd.f32 %v3744, %v3799
        %v3823 = vadd.f32 %v3745, %v3819
        %3824 = vrot.lane.b32.xlu0 %v3368, 64
        %v3825 = vpop.permute.xlu0 %3824
        %3826 = vrot.lane.b32.xlu0 %v3365, 92
        %v3827 = vpop.permute.xlu0 %3826
        %3828 = vrot.lane.b32.xlu0 %v3366, 92
        %v3829 = vpop.permute.xlu0 %3828
        %3830 = vrot.lane.b32.xlu0 %v3367, 92
        %v3831 = vpop.permute.xlu0 %3830
        %v3832 = vsel %vm2868, %v3827, %v3829
        %v3833 = vsel %vm2868, %v3829, %v3831
        %v3837 = vsel %vm564, %v3825, 0
        %3839 = vmatpush.msra.mxu0 0.0
        %3840 = vmatpush.msra.mxu0 0.0
        %3841 = vmatpush.msra.mxu0 0.0
        %3842 = vmatpush.msra.mxu0 0.0
        %3843 = vmatpush.msra.mxu0 0.0
        %3844 = vmatpush.msra.mxu0 0.0
        %3845 = vmatpush.msra.mxu0 0.0
        %3846 = vmatpush.msra.mxu0 0.0
        %3847 = vmatpush.msra.mxu0 0.0
        %3848 = vmatpush.msra.mxu0 0.0
        %3849 = vmatpush.msra.mxu0 0.0
        %3850 = vmatpush.msra.mxu0 0.0
        %3851 = vmatpush.msra.mxu0 0.0
        %3852 = vmatpush.msra.mxu0 0.0
        %3853 = vmatpush.msra.mxu0 0.0
        %3854 = vmatpush.msra.mxu0 %v3832
        %3855 = vmatmul.f32.gmra.mxu0 %v3837
        %v3856 = vpop.f32.mrf.mxu0
        %v3857 = vadd.f32 0.0, %v3856
        %3858 = vdwg.mxu0
        %3859 = vmatpush.msra.mxu0 0.0
        %3860 = vmatpush.msra.mxu0 0.0
        %3861 = vmatpush.msra.mxu0 0.0
        %3862 = vmatpush.msra.mxu0 0.0
        %3863 = vmatpush.msra.mxu0 0.0
        %3864 = vmatpush.msra.mxu0 0.0
        %3865 = vmatpush.msra.mxu0 0.0
        %3866 = vmatpush.msra.mxu0 0.0
        %3867 = vmatpush.msra.mxu0 0.0
        %3868 = vmatpush.msra.mxu0 0.0
        %3869 = vmatpush.msra.mxu0 0.0
        %3870 = vmatpush.msra.mxu0 0.0
        %3871 = vmatpush.msra.mxu0 0.0
        %3872 = vmatpush.msra.mxu0 0.0
        %3873 = vmatpush.msra.mxu0 0.0
        %3874 = vmatpush.msra.mxu0 %v3833
        %3875 = vmatmul.f32.gmra.mxu0 %v3837
        %v3876 = vpop.f32.mrf.mxu0
        %v3877 = vadd.f32 0.0, %v3876
        %3878 = vdwg.mxu0
        %3879 = vmatpush.msra.mxu0 0.0
        %3880 = vmatpush.msra.mxu0 0.0
        %3881 = vmatpush.msra.mxu0 0.0
        %3882 = vmatpush.msra.mxu0 0.0
        %3883 = vmatpush.msra.mxu0 0.0
        %3884 = vmatpush.msra.mxu0 0.0
        %3885 = vmatpush.msra.mxu0 0.0
        %3886 = vmatpush.msra.mxu0 0.0
        %3887 = vmatpush.msra.mxu0 0.0
        %3888 = vmatpush.msra.mxu0 0.0
        %3889 = vmatpush.msra.mxu0 0.0
        %3890 = vmatpush.msra.mxu0 0.0
        %3891 = vmatpush.msra.mxu0 0.0
        %3892 = vmatpush.msra.mxu0 0.0
        %3893 = vmatpush.msra.mxu0 0.0
        %3894 = vmatpush.msra.mxu0 %v3831
        %3895 = vmatmul.f32.gmra.mxu0 %v3837
        %v3896 = vpop.f32.mrf.mxu0
        %v3897 = vadd.f32 0.0, %v3896
        %3898 = vdwg.mxu0
        %v3899 = vadd.f32 %v3821, %v3857
        %v3900 = vadd.f32 %v3822, %v3877
        %v3901 = vadd.f32 %v3823, %v3897
        %3902 = vrot.lane.b32.xlu0 %v3368, 56
        %v3903 = vpop.permute.xlu0 %3902
        %3904 = vrot.lane.b32.xlu0 %v3365, 91
        %v3905 = vpop.permute.xlu0 %3904
        %3906 = vrot.lane.b32.xlu0 %v3366, 91
        %v3907 = vpop.permute.xlu0 %3906
        %3908 = vrot.lane.b32.xlu0 %v3367, 91
        %v3909 = vpop.permute.xlu0 %3908
        %v3910 = vsel %vm2946, %v3905, %v3907
        %v3911 = vsel %vm2946, %v3907, %v3909
        %v3915 = vsel %vm564, %v3903, 0
        %3917 = vmatpush.msra.mxu0 0.0
        %3918 = vmatpush.msra.mxu0 0.0
        %3919 = vmatpush.msra.mxu0 0.0
        %3920 = vmatpush.msra.mxu0 0.0
        %3921 = vmatpush.msra.mxu0 0.0
        %3922 = vmatpush.msra.mxu0 0.0
        %3923 = vmatpush.msra.mxu0 0.0
        %3924 = vmatpush.msra.mxu0 0.0
        %3925 = vmatpush.msra.mxu0 0.0
        %3926 = vmatpush.msra.mxu0 0.0
        %3927 = vmatpush.msra.mxu0 0.0
        %3928 = vmatpush.msra.mxu0 0.0
        %3929 = vmatpush.msra.mxu0 0.0
        %3930 = vmatpush.msra.mxu0 0.0
        %3931 = vmatpush.msra.mxu0 0.0
        %3932 = vmatpush.msra.mxu0 %v3910
        %3933 = vmatmul.f32.gmra.mxu0 %v3915
        %v3934 = vpop.f32.mrf.mxu0
        %v3935 = vadd.f32 0.0, %v3934
        %3936 = vdwg.mxu0
        %3937 = vmatpush.msra.mxu0 0.0
        %3938 = vmatpush.msra.mxu0 0.0
        %3939 = vmatpush.msra.mxu0 0.0
        %3940 = vmatpush.msra.mxu0 0.0
        %3941 = vmatpush.msra.mxu0 0.0
        %3942 = vmatpush.msra.mxu0 0.0
        %3943 = vmatpush.msra.mxu0 0.0
        %3944 = vmatpush.msra.mxu0 0.0
        %3945 = vmatpush.msra.mxu0 0.0
        %3946 = vmatpush.msra.mxu0 0.0
        %3947 = vmatpush.msra.mxu0 0.0
        %3948 = vmatpush.msra.mxu0 0.0
        %3949 = vmatpush.msra.mxu0 0.0
        %3950 = vmatpush.msra.mxu0 0.0
        %3951 = vmatpush.msra.mxu0 0.0
        %3952 = vmatpush.msra.mxu0 %v3911
        %3953 = vmatmul.f32.gmra.mxu0 %v3915
        %v3954 = vpop.f32.mrf.mxu0
        %v3955 = vadd.f32 0.0, %v3954
        %3956 = vdwg.mxu0
        %3957 = vmatpush.msra.mxu0 0.0
        %3958 = vmatpush.msra.mxu0 0.0
        %3959 = vmatpush.msra.mxu0 0.0
        %3960 = vmatpush.msra.mxu0 0.0
        %3961 = vmatpush.msra.mxu0 0.0
        %3962 = vmatpush.msra.mxu0 0.0
        %3963 = vmatpush.msra.mxu0 0.0
        %3964 = vmatpush.msra.mxu0 0.0
        %3965 = vmatpush.msra.mxu0 0.0
        %3966 = vmatpush.msra.mxu0 0.0
        %3967 = vmatpush.msra.mxu0 0.0
        %3968 = vmatpush.msra.mxu0 0.0
        %3969 = vmatpush.msra.mxu0 0.0
        %3970 = vmatpush.msra.mxu0 0.0
        %3971 = vmatpush.msra.mxu0 0.0
        %3972 = vmatpush.msra.mxu0 %v3909
        %3973 = vmatmul.f32.gmra.mxu0 %v3915
        %v3974 = vpop.f32.mrf.mxu0
        %v3975 = vadd.f32 0.0, %v3974
        %3976 = vdwg.mxu0
        %v3977 = vadd.f32 %v3899, %v3935
        %v3978 = vadd.f32 %v3900, %v3955
        %v3979 = vadd.f32 %v3901, %v3975
        %3980 = vrot.lane.b32.xlu0 %v3368, 48
        %v3981 = vpop.permute.xlu0 %3980
        %3982 = vrot.lane.b32.xlu0 %v3365, 90
        %v3983 = vpop.permute.xlu0 %3982
        %3984 = vrot.lane.b32.xlu0 %v3366, 90
        %v3985 = vpop.permute.xlu0 %3984
        %3986 = vrot.lane.b32.xlu0 %v3367, 90
        %v3987 = vpop.permute.xlu0 %3986
        %v3988 = vsel %vm3026, %v3983, %v3985
        %v3989 = vsel %vm3026, %v3985, %v3987
        %v3993 = vsel %vm564, %v3981, 0
        %3995 = vmatpush.msra.mxu0 0.0
        %3996 = vmatpush.msra.mxu0 0.0
        %3997 = vmatpush.msra.mxu0 0.0
        %3998 = vmatpush.msra.mxu0 0.0
        %3999 = vmatpush.msra.mxu0 0.0
        %4000 = vmatpush.msra.mxu0 0.0
        %4001 = vmatpush.msra.mxu0 0.0
        %4002 = vmatpush.msra.mxu0 0.0
        %4003 = vmatpush.msra.mxu0 0.0
        %4004 = vmatpush.msra.mxu0 0.0
        %4005 = vmatpush.msra.mxu0 0.0
        %4006 = vmatpush.msra.mxu0 0.0
        %4007 = vmatpush.msra.mxu0 0.0
        %4008 = vmatpush.msra.mxu0 0.0
        %4009 = vmatpush.msra.mxu0 0.0
        %4010 = vmatpush.msra.mxu0 %v3988
        %4011 = vmatmul.f32.gmra.mxu0 %v3993
        %v4012 = vpop.f32.mrf.mxu0
        %v4013 = vadd.f32 0.0, %v4012
        %4014 = vdwg.mxu0
        %4015 = vmatpush.msra.mxu0 0.0
        %4016 = vmatpush.msra.mxu0 0.0
        %4017 = vmatpush.msra.mxu0 0.0
        %4018 = vmatpush.msra.mxu0 0.0
        %4019 = vmatpush.msra.mxu0 0.0
        %4020 = vmatpush.msra.mxu0 0.0
        %4021 = vmatpush.msra.mxu0 0.0
        %4022 = vmatpush.msra.mxu0 0.0
        %4023 = vmatpush.msra.mxu0 0.0
        %4024 = vmatpush.msra.mxu0 0.0
        %4025 = vmatpush.msra.mxu0 0.0
        %4026 = vmatpush.msra.mxu0 0.0
        %4027 = vmatpush.msra.mxu0 0.0
        %4028 = vmatpush.msra.mxu0 0.0
        %4029 = vmatpush.msra.mxu0 0.0
        %4030 = vmatpush.msra.mxu0 %v3989
        %4031 = vmatmul.f32.gmra.mxu0 %v3993
        %v4032 = vpop.f32.mrf.mxu0
        %v4033 = vadd.f32 0.0, %v4032
        %4034 = vdwg.mxu0
        %4035 = vmatpush.msra.mxu0 0.0
        %4036 = vmatpush.msra.mxu0 0.0
        %4037 = vmatpush.msra.mxu0 0.0
        %4038 = vmatpush.msra.mxu0 0.0
        %4039 = vmatpush.msra.mxu0 0.0
        %4040 = vmatpush.msra.mxu0 0.0
        %4041 = vmatpush.msra.mxu0 0.0
        %4042 = vmatpush.msra.mxu0 0.0
        %4043 = vmatpush.msra.mxu0 0.0
        %4044 = vmatpush.msra.mxu0 0.0
        %4045 = vmatpush.msra.mxu0 0.0
        %4046 = vmatpush.msra.mxu0 0.0
        %4047 = vmatpush.msra.mxu0 0.0
        %4048 = vmatpush.msra.mxu0 0.0
        %4049 = vmatpush.msra.mxu0 0.0
        %4050 = vmatpush.msra.mxu0 %v3987
        %4051 = vmatmul.f32.gmra.mxu0 %v3993
        %v4052 = vpop.f32.mrf.mxu0
        %v4053 = vadd.f32 0.0, %v4052
        %4054 = vdwg.mxu0
        %v4055 = vadd.f32 %v3977, %v4013
        %v4056 = vadd.f32 %v3978, %v4033
        %v4057 = vadd.f32 %v3979, %v4053
        %4058 = vset.pattern.permute.xlu0 15
        %4059 = vperm.xlu0 %4058, %v3115
        %v4060 = vpop.permute.xlu0 %4059
        %v4062 = vadd.f32 %v4055, %v4060
        %v4063 = vadd.f32 %v4056, %v4060
        %v4064 = vadd.f32 %v4057, %v4060
        %v4065 = vmul.f32 %v4062, %v3106
        %v4066 = vmul.f32 %v4063, %v3107
        %v4067 = vmul.f32 %v4064, %v3108
        %v4068 = vld [vmem:[%s2] sm:$0xff]
        %4069 = vmatpush.msra.mxu0 0.0
        %4070 = vmatpush.msra.mxu0 0.0
        %4071 = vmatpush.msra.mxu0 0.0
        %4072 = vmatpush.msra.mxu0 0.0
        %4073 = vmatpush.msra.mxu0 0.0
        %4074 = vmatpush.msra.mxu0 0.0
        %4075 = vmatpush.msra.mxu0 0.0
        %4076 = vmatpush.msra.mxu0 0.0
        %4077 = vmatpush.msra.mxu0 0.0
        %4078 = vmatpush.msra.mxu0 0.0
        %4079 = vmatpush.msra.mxu0 0.0
        %4080 = vmatpush.msra.mxu0 0.0
        %4081 = vmatpush.msra.mxu0 0.0
        %4082 = vmatpush.msra.mxu0 0.0
        %4083 = vmatpush.msra.mxu0 0.0
        %4084 = vmatpush.msra.mxu0 %v4065
        %4085 = vmatmul.f32.gmra.mxu0 %v565
        %v4086 = vpop.f32.mrf.mxu0
        %v4087 = vadd.f32 0.0, %v4086
        %4088 = vdwg.mxu0
        %4089 = vmatpush.msra.mxu0 0.0
        %4090 = vmatpush.msra.mxu0 0.0
        %4091 = vmatpush.msra.mxu0 0.0
        %4092 = vmatpush.msra.mxu0 0.0
        %4093 = vmatpush.msra.mxu0 0.0
        %4094 = vmatpush.msra.mxu0 0.0
        %4095 = vmatpush.msra.mxu0 0.0
        %4096 = vmatpush.msra.mxu0 0.0
        %4097 = vmatpush.msra.mxu0 0.0
        %4098 = vmatpush.msra.mxu0 0.0
        %4099 = vmatpush.msra.mxu0 0.0
        %4100 = vmatpush.msra.mxu0 0.0
        %4101 = vmatpush.msra.mxu0 0.0
        %4102 = vmatpush.msra.mxu0 0.0
        %4103 = vmatpush.msra.mxu0 0.0
        %4104 = vmatpush.msra.mxu0 %v4066
        %4105 = vmatmul.f32.gmra.mxu0 %v565
        %v4106 = vpop.f32.mrf.mxu0
        %v4107 = vadd.f32 0.0, %v4106
        %4108 = vdwg.mxu0
        %4109 = vmatpush.msra.mxu0 0.0
        %4110 = vmatpush.msra.mxu0 0.0
        %4111 = vmatpush.msra.mxu0 0.0
        %4112 = vmatpush.msra.mxu0 0.0
        %4113 = vmatpush.msra.mxu0 0.0
        %4114 = vmatpush.msra.mxu0 0.0
        %4115 = vmatpush.msra.mxu0 0.0
        %4116 = vmatpush.msra.mxu0 0.0
        %4117 = vmatpush.msra.mxu0 0.0
        %4118 = vmatpush.msra.mxu0 0.0
        %4119 = vmatpush.msra.mxu0 0.0
        %4120 = vmatpush.msra.mxu0 0.0
        %4121 = vmatpush.msra.mxu0 0.0
        %4122 = vmatpush.msra.mxu0 0.0
        %4123 = vmatpush.msra.mxu0 0.0
        %4124 = vmatpush.msra.mxu0 %v4067
        %4125 = vmatmul.f32.gmra.mxu0 %v565
        %v4126 = vpop.f32.mrf.mxu0
        %v4127 = vadd.f32 0.0, %v4126
        %4128 = vdwg.mxu0
        %v4129 = vmul.f32 %v4065, %v4065
        %v4130 = vmul.f32 %v4066, %v4066
        %v4131 = vmul.f32 %v4067, %v4067
        %4132 = vmatpush.msra.mxu0 0.0
        %4133 = vmatpush.msra.mxu0 0.0
        %4134 = vmatpush.msra.mxu0 0.0
        %4135 = vmatpush.msra.mxu0 0.0
        %4136 = vmatpush.msra.mxu0 0.0
        %4137 = vmatpush.msra.mxu0 0.0
        %4138 = vmatpush.msra.mxu0 0.0
        %4139 = vmatpush.msra.mxu0 0.0
        %4140 = vmatpush.msra.mxu0 0.0
        %4141 = vmatpush.msra.mxu0 0.0
        %4142 = vmatpush.msra.mxu0 0.0
        %4143 = vmatpush.msra.mxu0 0.0
        %4144 = vmatpush.msra.mxu0 0.0
        %4145 = vmatpush.msra.mxu0 0.0
        %4146 = vmatpush.msra.mxu0 0.0
        %4147 = vmatpush.msra.mxu0 %v4129
        %4148 = vmatmul.f32.gmra.mxu0 %v565
        %v4149 = vpop.f32.mrf.mxu0
        %v4150 = vadd.f32 0.0, %v4149
        %4151 = vdwg.mxu0
        %4152 = vmatpush.msra.mxu0 0.0
        %4153 = vmatpush.msra.mxu0 0.0
        %4154 = vmatpush.msra.mxu0 0.0
        %4155 = vmatpush.msra.mxu0 0.0
        %4156 = vmatpush.msra.mxu0 0.0
        %4157 = vmatpush.msra.mxu0 0.0
        %4158 = vmatpush.msra.mxu0 0.0
        %4159 = vmatpush.msra.mxu0 0.0
        %4160 = vmatpush.msra.mxu0 0.0
        %4161 = vmatpush.msra.mxu0 0.0
        %4162 = vmatpush.msra.mxu0 0.0
        %4163 = vmatpush.msra.mxu0 0.0
        %4164 = vmatpush.msra.mxu0 0.0
        %4165 = vmatpush.msra.mxu0 0.0
        %4166 = vmatpush.msra.mxu0 0.0
        %4167 = vmatpush.msra.mxu0 %v4130
        %4168 = vmatmul.f32.gmra.mxu0 %v565
        %v4169 = vpop.f32.mrf.mxu0
        %v4170 = vadd.f32 0.0, %v4169
        %4171 = vdwg.mxu0
        %4172 = vmatpush.msra.mxu0 0.0
        %4173 = vmatpush.msra.mxu0 0.0
        %4174 = vmatpush.msra.mxu0 0.0
        %4175 = vmatpush.msra.mxu0 0.0
        %4176 = vmatpush.msra.mxu0 0.0
        %4177 = vmatpush.msra.mxu0 0.0
        %4178 = vmatpush.msra.mxu0 0.0
        %4179 = vmatpush.msra.mxu0 0.0
        %4180 = vmatpush.msra.mxu0 0.0
        %4181 = vmatpush.msra.mxu0 0.0
        %4182 = vmatpush.msra.mxu0 0.0
        %4183 = vmatpush.msra.mxu0 0.0
        %4184 = vmatpush.msra.mxu0 0.0
        %4185 = vmatpush.msra.mxu0 0.0
        %4186 = vmatpush.msra.mxu0 0.0
        %4187 = vmatpush.msra.mxu0 %v4131
        %4188 = vmatmul.f32.gmra.mxu0 %v565
        %v4189 = vpop.f32.mrf.mxu0
        %v4190 = vadd.f32 0.0, %v4189
        %4191 = vdwg.mxu0
        %v4192 = vadd.f32 %v4087, %v4107
        %v4193 = vsel %vm3240, %v4127, 0.0
        %v4194 = vadd.f32 %v4192, %v4193
        %4195 = vadd.xlane.f32.xlu0 %v4194
        %v4196 = vpop.xlane.xlu0 %4195
        %v4197 = vmul.f32 %v4196, 0.001953125
        %v4198 = vadd.f32 %v4150, %v4170
        %v4199 = vsel %vm3240, %v4190, 0.0
        %v4200 = vadd.f32 %v4198, %v4199
        %4201 = vadd.xlane.f32.xlu0 %v4200
        %v4202 = vpop.xlane.xlu0 %4201
        %v4203 = vmul.f32 %v4202, 0.001953125
        %v4204 = vmul.f32 %v4197, %v4197
        %v4205 = vsub.f32 %v4203, %v4204
        %v4206 = vadd.f32 %v4205, 1e-05
        %v4207 = vrsqrt.pop %v4206
        %v4208 = vmul.f32 %v4207, %v4206
        %v4209 = vmul.f32 %v4208, %v4207
        %v4210 = vmul.f32 0.5, %v4209
        %v4211 = vsub.f32 1.5, %v4210
        %v4212 = vmul.f32 %v4207, %v4211
        %vm4213 = vweird.f32 %v4206
        %vm4214 = vweird.f32 %v4207
        %vm4215 = vmor %vm4213, %vm4214
        %v4216 = vsel %vm4215, %v4207, %v4212
        %v4217 = vsub.f32 %v4065, %v4197
        %v4218 = vsub.f32 %v4066, %v4197
        %v4219 = vsub.f32 %v4067, %v4197
        %v4220 = vmul.f32 %v4216, %v4068
        %4222 = vset.pattern.permute.xlu0 16
        %4223 = vperm.xlu0 %4222, %v4220
        %v4224 = vpop.permute.xlu0 %4223
        %v4226 = vmul.f32 %v4217, %v4224
        %v4227 = vmul.f32 %v4218, %v4224
        %v4228 = vmul.f32 %v4219, %v4224
        %4230 = vset.pattern.permute.xlu0 17
        %4231 = vperm.xlu0 %4230, %v4068
        %v4232 = vpop.permute.xlu0 %4231
        %v4234 = vadd.f32 %v4226, %v4232
        %v4235 = vadd.f32 %v4227, %v4232
        %v4236 = vadd.f32 %v4228, %v4232
        %v4237 = vxor.u32 %v4234, 2147483648
        %v4238 = vxor.u32 %v4235, 2147483648
        %v4239 = vxor.u32 %v4236, 2147483648
        %v4240 = vmul.f32 %v4237, 1.442695
        %v4241 = vpow.pop %v4240
        %v4242 = vmul.f32 %v4238, 1.442695
        %v4243 = vpow.pop %v4242
        %v4244 = vmul.f32 %v4239, 1.442695
        %v4245 = vpow.pop %v4244
        %v4246 = vadd.f32 %v4241, 1.0
        %v4247 = vadd.f32 %v4243, 1.0
        %v4248 = vadd.f32 %v4245, 1.0
        %v4249 = vrcp.pop %v4246
        %v4250 = vmul.f32 %v4246, %v4249
        %v4251 = vsub.f32 1.0, %v4250
        %v4252 = vmul.f32 %v4249, %v4251
        %v4253 = vadd.f32 %v4249, %v4252
        %vm4254 = vweird.f32 %v4246
        %vm4255 = vweird.f32 %v4249
        %vm4256 = vmor %vm4254, %vm4255
        %v4257 = vsel %vm4256, %v4249, %v4253
        %v4258 = vand.u32 2147483647, %v4246
        %vm4259 = vcmp.eq.f32.partialorder %v4258, 8.507059e+37
        %v4260 = vand.u32 %v4246, 2147483648
        %v4261 = vor.u32 1.1754944e-38, %v4260
        %v4262 = vsel %vm4259, %v4261, %v4257
        %v4263 = vmul.f32 1.0, %v4262
        %v4264 = vrcp.pop %v4247
        %v4265 = vmul.f32 %v4247, %v4264
        %v4266 = vsub.f32 1.0, %v4265
        %v4267 = vmul.f32 %v4264, %v4266
        %v4268 = vadd.f32 %v4264, %v4267
        %vm4269 = vweird.f32 %v4247
        %vm4270 = vweird.f32 %v4264
        %vm4271 = vmor %vm4269, %vm4270
        %v4272 = vsel %vm4271, %v4264, %v4268
        %v4273 = vand.u32 2147483647, %v4247
        %vm4274 = vcmp.eq.f32.partialorder %v4273, 8.507059e+37
        %v4275 = vand.u32 %v4247, 2147483648
        %v4276 = vor.u32 1.1754944e-38, %v4275
        %v4277 = vsel %vm4274, %v4276, %v4272
        %v4278 = vmul.f32 1.0, %v4277
        %v4279 = vrcp.pop %v4248
        %v4280 = vmul.f32 %v4248, %v4279
        %v4281 = vsub.f32 1.0, %v4280
        %v4282 = vmul.f32 %v4279, %v4281
        %v4283 = vadd.f32 %v4279, %v4282
        %vm4284 = vweird.f32 %v4248
        %vm4285 = vweird.f32 %v4279
        %vm4286 = vmor %vm4284, %vm4285
        %v4287 = vsel %vm4286, %v4279, %v4283
        %v4288 = vand.u32 2147483647, %v4248
        %vm4289 = vcmp.eq.f32.partialorder %v4288, 8.507059e+37
        %v4290 = vand.u32 %v4248, 2147483648
        %v4291 = vor.u32 1.1754944e-38, %v4290
        %v4292 = vsel %vm4289, %v4291, %v4287
        %v4293 = vmul.f32 1.0, %v4292
        %v4294 = vmul.f32 %v4234, %v4263
        %v4295 = vmul.f32 %v4235, %v4278
        %v4296 = vmul.f32 %v4236, %v4293
        %v4297 = vmul.f32 %v4294, %v3106
        %v4298 = vmul.f32 %v4295, %v3107
        %v4299 = vmul.f32 %v4296, %v3108
        %4303 = vrot.lane.b32.xlu0 %v4297, 19
        %v4304 = vpop.permute.xlu0 %4303
        %4305 = vrot.lane.b32.xlu0 %v4298, 19
        %v4306 = vpop.permute.xlu0 %4305
        %4307 = vrot.lane.b32.xlu0 %v4299, 19
        %v4308 = vpop.permute.xlu0 %4307
        %v4309 = vsel %vm2374, %v4304, %v4306
        %v4310 = vsel %vm2374, %v4306, %v4308
        %4314 = vst.msk [vmem:[#allocation2] sm:$0xff] %vm2391, %v4304
        %4315 = vst [vmem:[#allocation2 + $0x8] sm:$0xff] %v4309
        %4316 = vst.msk [vmem:[#allocation2 + $0x10] sm:$0xff] %vm2394, %v4310
        %v4317 = vld [vmem:[#allocation2] sm:$0xff]
        %v4318 = vld [vmem:[#allocation2 + $0x8] sm:$0xff]
        %v4319 = vld [vmem:[#allocation2 + $0x10] sm:$0xff]
        %v4320 = vld [vmem:[%s1 + $0x10] sm:$0xff]
        %4322 = vrot.lane.b32.xlu0 %v4320, 32
        %v4323 = vpop.permute.xlu0 %4322
        %4327 = vrot.lane.b32.xlu0 %v4317, 127
        %v4328 = vpop.permute.xlu0 %4327
        %4329 = vrot.lane.b32.xlu0 %v4318, 127
        %v4330 = vpop.permute.xlu0 %4329
        %4331 = vrot.lane.b32.xlu0 %v4319, 127
        %v4332 = vpop.permute.xlu0 %4331
        %v4333 = vsel %vm2412, %v4328, %v4330
        %v4334 = vsel %vm2412, %v4330, %v4332
        %v4338 = vsel %vm564, %v4323, 0
        %4340 = vmatpush.msra.mxu0 0.0
        %4341 = vmatpush.msra.mxu0 0.0
        %4342 = vmatpush.msra.mxu0 0.0
        %4343 = vmatpush.msra.mxu0 0.0
        %4344 = vmatpush.msra.mxu0 0.0
        %4345 = vmatpush.msra.mxu0 0.0
        %4346 = vmatpush.msra.mxu0 0.0
        %4347 = vmatpush.msra.mxu0 0.0
        %4348 = vmatpush.msra.mxu0 0.0
        %4349 = vmatpush.msra.mxu0 0.0
        %4350 = vmatpush.msra.mxu0 0.0
        %4351 = vmatpush.msra.mxu0 0.0
        %4352 = vmatpush.msra.mxu0 0.0
        %4353 = vmatpush.msra.mxu0 0.0
        %4354 = vmatpush.msra.mxu0 0.0
        %4355 = vmatpush.msra.mxu0 %v4333
        %4356 = vmatmul.f32.gmra.mxu0 %v4338
        %v4357 = vpop.f32.mrf.mxu0
        %v4358 = vadd.f32 0.0, %v4357
        %4359 = vdwg.mxu0
        %4360 = vmatpush.msra.mxu0 0.0
        %4361 = vmatpush.msra.mxu0 0.0
        %4362 = vmatpush.msra.mxu0 0.0
        %4363 = vmatpush.msra.mxu0 0.0
        %4364 = vmatpush.msra.mxu0 0.0
        %4365 = vmatpush.msra.mxu0 0.0
        %4366 = vmatpush.msra.mxu0 0.0
        %4367 = vmatpush.msra.mxu0 0.0
        %4368 = vmatpush.msra.mxu0 0.0
        %4369 = vmatpush.msra.mxu0 0.0
        %4370 = vmatpush.msra.mxu0 0.0
        %4371 = vmatpush.msra.mxu0 0.0
        %4372 = vmatpush.msra.mxu0 0.0
        %4373 = vmatpush.msra.mxu0 0.0
        %4374 = vmatpush.msra.mxu0 0.0
        %4375 = vmatpush.msra.mxu0 %v4334
        %4376 = vmatmul.f32.gmra.mxu0 %v4338
        %v4377 = vpop.f32.mrf.mxu0
        %v4378 = vadd.f32 0.0, %v4377
        %4379 = vdwg.mxu0
        %4380 = vmatpush.msra.mxu0 0.0
        %4381 = vmatpush.msra.mxu0 0.0
        %4382 = vmatpush.msra.mxu0 0.0
        %4383 = vmatpush.msra.mxu0 0.0
        %4384 = vmatpush.msra.mxu0 0.0
        %4385 = vmatpush.msra.mxu0 0.0
        %4386 = vmatpush.msra.mxu0 0.0
        %4387 = vmatpush.msra.mxu0 0.0
        %4388 = vmatpush.msra.mxu0 0.0
        %4389 = vmatpush.msra.mxu0 0.0
        %4390 = vmatpush.msra.mxu0 0.0
        %4391 = vmatpush.msra.mxu0 0.0
        %4392 = vmatpush.msra.mxu0 0.0
        %4393 = vmatpush.msra.mxu0 0.0
        %4394 = vmatpush.msra.mxu0 0.0
        %4395 = vmatpush.msra.mxu0 %v4332
        %4396 = vmatmul.f32.gmra.mxu0 %v4338
        %v4397 = vpop.f32.mrf.mxu0
        %v4398 = vadd.f32 0.0, %v4397
        %4399 = vdwg.mxu0
        %4400 = vrot.lane.b32.xlu0 %v4320, 40
        %v4401 = vpop.permute.xlu0 %4400
        %v4402 = vsel %vm564, %v4401, 0
        %4404 = vmatpush.msra.mxu0 0.0
        %4405 = vmatpush.msra.mxu0 0.0
        %4406 = vmatpush.msra.mxu0 0.0
        %4407 = vmatpush.msra.mxu0 0.0
        %4408 = vmatpush.msra.mxu0 0.0
        %4409 = vmatpush.msra.mxu0 0.0
        %4410 = vmatpush.msra.mxu0 0.0
        %4411 = vmatpush.msra.mxu0 0.0
        %4412 = vmatpush.msra.mxu0 0.0
        %4413 = vmatpush.msra.mxu0 0.0
        %4414 = vmatpush.msra.mxu0 0.0
        %4415 = vmatpush.msra.mxu0 0.0
        %4416 = vmatpush.msra.mxu0 0.0
        %4417 = vmatpush.msra.mxu0 0.0
        %4418 = vmatpush.msra.mxu0 0.0
        %4419 = vmatpush.msra.mxu0 %v4317
        %4420 = vmatmul.f32.gmra.mxu0 %v4402
        %v4421 = vpop.f32.mrf.mxu0
        %v4422 = vadd.f32 %v4358, %v4421
        %4423 = vdwg.mxu0
        %4424 = vmatpush.msra.mxu0 0.0
        %4425 = vmatpush.msra.mxu0 0.0
        %4426 = vmatpush.msra.mxu0 0.0
        %4427 = vmatpush.msra.mxu0 0.0
        %4428 = vmatpush.msra.mxu0 0.0
        %4429 = vmatpush.msra.mxu0 0.0
        %4430 = vmatpush.msra.mxu0 0.0
        %4431 = vmatpush.msra.mxu0 0.0
        %4432 = vmatpush.msra.mxu0 0.0
        %4433 = vmatpush.msra.mxu0 0.0
        %4434 = vmatpush.msra.mxu0 0.0
        %4435 = vmatpush.msra.mxu0 0.0
        %4436 = vmatpush.msra.mxu0 0.0
        %4437 = vmatpush.msra.mxu0 0.0
        %4438 = vmatpush.msra.mxu0 0.0
        %4439 = vmatpush.msra.mxu0 %v4318
        %4440 = vmatmul.f32.gmra.mxu0 %v4402
        %v4441 = vpop.f32.mrf.mxu0
        %v4442 = vadd.f32 %v4378, %v4441
        %4443 = vdwg.mxu0
        %4444 = vmatpush.msra.mxu0 0.0
        %4445 = vmatpush.msra.mxu0 0.0
        %4446 = vmatpush.msra.mxu0 0.0
        %4447 = vmatpush.msra.mxu0 0.0
        %4448 = vmatpush.msra.mxu0 0.0
        %4449 = vmatpush.msra.mxu0 0.0
        %4450 = vmatpush.msra.mxu0 0.0
        %4451 = vmatpush.msra.mxu0 0.0
        %4452 = vmatpush.msra.mxu0 0.0
        %4453 = vmatpush.msra.mxu0 0.0
        %4454 = vmatpush.msra.mxu0 0.0
        %4455 = vmatpush.msra.mxu0 0.0
        %4456 = vmatpush.msra.mxu0 0.0
        %4457 = vmatpush.msra.mxu0 0.0
        %4458 = vmatpush.msra.mxu0 0.0
        %4459 = vmatpush.msra.mxu0 %v4319
        %4460 = vmatmul.f32.gmra.mxu0 %v4402
        %v4461 = vpop.f32.mrf.mxu0
        %v4462 = vadd.f32 %v4398, %v4461
        %4463 = vdwg.mxu0
        %4464 = vrot.lane.b32.xlu0 %v4320, 24
        %v4465 = vpop.permute.xlu0 %4464
        %4466 = vrot.lane.b32.xlu0 %v4317, 126
        %v4467 = vpop.permute.xlu0 %4466
        %4468 = vrot.lane.b32.xlu0 %v4318, 126
        %v4469 = vpop.permute.xlu0 %4468
        %4470 = vrot.lane.b32.xlu0 %v4319, 126
        %v4471 = vpop.permute.xlu0 %4470
        %v4472 = vsel %vm2552, %v4467, %v4469
        %v4473 = vsel %vm2552, %v4469, %v4471
        %v4477 = vsel %vm564, %v4465, 0
        %4479 = vmatpush.msra.mxu0 0.0
        %4480 = vmatpush.msra.mxu0 0.0
        %4481 = vmatpush.msra.mxu0 0.0
        %4482 = vmatpush.msra.mxu0 0.0
        %4483 = vmatpush.msra.mxu0 0.0
        %4484 = vmatpush.msra.mxu0 0.0
        %4485 = vmatpush.msra.mxu0 0.0
        %4486 = vmatpush.msra.mxu0 0.0
        %4487 = vmatpush.msra.mxu0 0.0
        %4488 = vmatpush.msra.mxu0 0.0
        %4489 = vmatpush.msra.mxu0 0.0
        %4490 = vmatpush.msra.mxu0 0.0
        %4491 = vmatpush.msra.mxu0 0.0
        %4492 = vmatpush.msra.mxu0 0.0
        %4493 = vmatpush.msra.mxu0 0.0
        %4494 = vmatpush.msra.mxu0 %v4472
        %4495 = vmatmul.f32.gmra.mxu0 %v4477
        %v4496 = vpop.f32.mrf.mxu0
        %v4497 = vadd.f32 0.0, %v4496
        %4498 = vdwg.mxu0
        %4499 = vmatpush.msra.mxu0 0.0
        %4500 = vmatpush.msra.mxu0 0.0
        %4501 = vmatpush.msra.mxu0 0.0
        %4502 = vmatpush.msra.mxu0 0.0
        %4503 = vmatpush.msra.mxu0 0.0
        %4504 = vmatpush.msra.mxu0 0.0
        %4505 = vmatpush.msra.mxu0 0.0
        %4506 = vmatpush.msra.mxu0 0.0
        %4507 = vmatpush.msra.mxu0 0.0
        %4508 = vmatpush.msra.mxu0 0.0
        %4509 = vmatpush.msra.mxu0 0.0
        %4510 = vmatpush.msra.mxu0 0.0
        %4511 = vmatpush.msra.mxu0 0.0
        %4512 = vmatpush.msra.mxu0 0.0
        %4513 = vmatpush.msra.mxu0 0.0
        %4514 = vmatpush.msra.mxu0 %v4473
        %4515 = vmatmul.f32.gmra.mxu0 %v4477
        %v4516 = vpop.f32.mrf.mxu0
        %v4517 = vadd.f32 0.0, %v4516
        %4518 = vdwg.mxu0
        %4519 = vmatpush.msra.mxu0 0.0
        %4520 = vmatpush.msra.mxu0 0.0
        %4521 = vmatpush.msra.mxu0 0.0
        %4522 = vmatpush.msra.mxu0 0.0
        %4523 = vmatpush.msra.mxu0 0.0
        %4524 = vmatpush.msra.mxu0 0.0
        %4525 = vmatpush.msra.mxu0 0.0
        %4526 = vmatpush.msra.mxu0 0.0
        %4527 = vmatpush.msra.mxu0 0.0
        %4528 = vmatpush.msra.mxu0 0.0
        %4529 = vmatpush.msra.mxu0 0.0
        %4530 = vmatpush.msra.mxu0 0.0
        %4531 = vmatpush.msra.mxu0 0.0
        %4532 = vmatpush.msra.mxu0 0.0
        %4533 = vmatpush.msra.mxu0 0.0
        %4534 = vmatpush.msra.mxu0 %v4471
        %4535 = vmatmul.f32.gmra.mxu0 %v4477
        %v4536 = vpop.f32.mrf.mxu0
        %v4537 = vadd.f32 0.0, %v4536
        %4538 = vdwg.mxu0
        %v4539 = vadd.f32 %v4422, %v4497
        %v4540 = vadd.f32 %v4442, %v4517
        %v4541 = vadd.f32 %v4462, %v4537
        %4542 = vrot.lane.b32.xlu0 %v4320, 16
        %v4543 = vpop.permute.xlu0 %4542
        %4544 = vrot.lane.b32.xlu0 %v4317, 110
        %v4545 = vpop.permute.xlu0 %4544
        %4546 = vrot.lane.b32.xlu0 %v4318, 110
        %v4547 = vpop.permute.xlu0 %4546
        %4548 = vrot.lane.b32.xlu0 %v4319, 110
        %v4549 = vpop.permute.xlu0 %4548
        %v4550 = vsel %vm2631, %v4545, %v4547
        %v4551 = vsel %vm2631, %v4547, %v4549
        %v4555 = vsel %vm564, %v4543, 0
        %4557 = vmatpush.msra.mxu0 0.0
        %4558 = vmatpush.msra.mxu0 0.0
        %4559 = vmatpush.msra.mxu0 0.0
        %4560 = vmatpush.msra.mxu0 0.0
        %4561 = vmatpush.msra.mxu0 0.0
        %4562 = vmatpush.msra.mxu0 0.0
        %4563 = vmatpush.msra.mxu0 0.0
        %4564 = vmatpush.msra.mxu0 0.0
        %4565 = vmatpush.msra.mxu0 0.0
        %4566 = vmatpush.msra.mxu0 0.0
        %4567 = vmatpush.msra.mxu0 0.0
        %4568 = vmatpush.msra.mxu0 0.0
        %4569 = vmatpush.msra.mxu0 0.0
        %4570 = vmatpush.msra.mxu0 0.0
        %4571 = vmatpush.msra.mxu0 0.0
        %4572 = vmatpush.msra.mxu0 %v4550
        %4573 = vmatmul.f32.gmra.mxu0 %v4555
        %v4574 = vpop.f32.mrf.mxu0
        %v4575 = vadd.f32 0.0, %v4574
        %4576 = vdwg.mxu0
        %4577 = vmatpush.msra.mxu0 0.0
        %4578 = vmatpush.msra.mxu0 0.0
        %4579 = vmatpush.msra.mxu0 0.0
        %4580 = vmatpush.msra.mxu0 0.0
        %4581 = vmatpush.msra.mxu0 0.0
        %4582 = vmatpush.msra.mxu0 0.0
        %4583 = vmatpush.msra.mxu0 0.0
        %4584 = vmatpush.msra.mxu0 0.0
        %4585 = vmatpush.msra.mxu0 0.0
        %4586 = vmatpush.msra.mxu0 0.0
        %4587 = vmatpush.msra.mxu0 0.0
        %4588 = vmatpush.msra.mxu0 0.0
        %4589 = vmatpush.msra.mxu0 0.0
        %4590 = vmatpush.msra.mxu0 0.0
        %4591 = vmatpush.msra.mxu0 0.0
        %4592 = vmatpush.msra.mxu0 %v4551
        %4593 = vmatmul.f32.gmra.mxu0 %v4555
        %v4594 = vpop.f32.mrf.mxu0
        %v4595 = vadd.f32 0.0, %v4594
        %4596 = vdwg.mxu0
        %4597 = vmatpush.msra.mxu0 0.0
        %4598 = vmatpush.msra.mxu0 0.0
        %4599 = vmatpush.msra.mxu0 0.0
        %4600 = vmatpush.msra.mxu0 0.0
        %4601 = vmatpush.msra.mxu0 0.0
        %4602 = vmatpush.msra.mxu0 0.0
        %4603 = vmatpush.msra.mxu0 0.0
        %4604 = vmatpush.msra.mxu0 0.0
        %4605 = vmatpush.msra.mxu0 0.0
        %4606 = vmatpush.msra.mxu0 0.0
        %4607 = vmatpush.msra.mxu0 0.0
        %4608 = vmatpush.msra.mxu0 0.0
        %4609 = vmatpush.msra.mxu0 0.0
        %4610 = vmatpush.msra.mxu0 0.0
        %4611 = vmatpush.msra.mxu0 0.0
        %4612 = vmatpush.msra.mxu0 %v4549
        %4613 = vmatmul.f32.gmra.mxu0 %v4555
        %v4614 = vpop.f32.mrf.mxu0
        %v4615 = vadd.f32 0.0, %v4614
        %4616 = vdwg.mxu0
        %v4617 = vadd.f32 %v4539, %v4575
        %v4618 = vadd.f32 %v4540, %v4595
        %v4619 = vadd.f32 %v4541, %v4615
        %4620 = vrot.lane.b32.xlu0 %v4320, 8
        %v4621 = vpop.permute.xlu0 %4620
        %4622 = vrot.lane.b32.xlu0 %v4317, 109
        %v4623 = vpop.permute.xlu0 %4622
        %4624 = vrot.lane.b32.xlu0 %v4318, 109
        %v4625 = vpop.permute.xlu0 %4624
        %4626 = vrot.lane.b32.xlu0 %v4319, 109
        %v4627 = vpop.permute.xlu0 %4626
        %v4628 = vsel %vm2710, %v4623, %v4625
        %v4629 = vsel %vm2710, %v4625, %v4627
        %v4633 = vsel %vm564, %v4621, 0
        %4635 = vmatpush.msra.mxu0 0.0
        %4636 = vmatpush.msra.mxu0 0.0
        %4637 = vmatpush.msra.mxu0 0.0
        %4638 = vmatpush.msra.mxu0 0.0
        %4639 = vmatpush.msra.mxu0 0.0
        %4640 = vmatpush.msra.mxu0 0.0
        %4641 = vmatpush.msra.mxu0 0.0
        %4642 = vmatpush.msra.mxu0 0.0
        %4643 = vmatpush.msra.mxu0 0.0
        %4644 = vmatpush.msra.mxu0 0.0
        %4645 = vmatpush.msra.mxu0 0.0
        %4646 = vmatpush.msra.mxu0 0.0
        %4647 = vmatpush.msra.mxu0 0.0
        %4648 = vmatpush.msra.mxu0 0.0
        %4649 = vmatpush.msra.mxu0 0.0
        %4650 = vmatpush.msra.mxu0 %v4628
        %4651 = vmatmul.f32.gmra.mxu0 %v4633
        %v4652 = vpop.f32.mrf.mxu0
        %v4653 = vadd.f32 0.0, %v4652
        %4654 = vdwg.mxu0
        %4655 = vmatpush.msra.mxu0 0.0
        %4656 = vmatpush.msra.mxu0 0.0
        %4657 = vmatpush.msra.mxu0 0.0
        %4658 = vmatpush.msra.mxu0 0.0
        %4659 = vmatpush.msra.mxu0 0.0
        %4660 = vmatpush.msra.mxu0 0.0
        %4661 = vmatpush.msra.mxu0 0.0
        %4662 = vmatpush.msra.mxu0 0.0
        %4663 = vmatpush.msra.mxu0 0.0
        %4664 = vmatpush.msra.mxu0 0.0
        %4665 = vmatpush.msra.mxu0 0.0
        %4666 = vmatpush.msra.mxu0 0.0
        %4667 = vmatpush.msra.mxu0 0.0
        %4668 = vmatpush.msra.mxu0 0.0
        %4669 = vmatpush.msra.mxu0 0.0
        %4670 = vmatpush.msra.mxu0 %v4629
        %4671 = vmatmul.f32.gmra.mxu0 %v4633
        %v4672 = vpop.f32.mrf.mxu0
        %v4673 = vadd.f32 0.0, %v4672
        %4674 = vdwg.mxu0
        %4675 = vmatpush.msra.mxu0 0.0
        %4676 = vmatpush.msra.mxu0 0.0
        %4677 = vmatpush.msra.mxu0 0.0
        %4678 = vmatpush.msra.mxu0 0.0
        %4679 = vmatpush.msra.mxu0 0.0
        %4680 = vmatpush.msra.mxu0 0.0
        %4681 = vmatpush.msra.mxu0 0.0
        %4682 = vmatpush.msra.mxu0 0.0
        %4683 = vmatpush.msra.mxu0 0.0
        %4684 = vmatpush.msra.mxu0 0.0
        %4685 = vmatpush.msra.mxu0 0.0
        %4686 = vmatpush.msra.mxu0 0.0
        %4687 = vmatpush.msra.mxu0 0.0
        %4688 = vmatpush.msra.mxu0 0.0
        %4689 = vmatpush.msra.mxu0 0.0
        %4690 = vmatpush.msra.mxu0 %v4627
        %4691 = vmatmul.f32.gmra.mxu0 %v4633
        %v4692 = vpop.f32.mrf.mxu0
        %v4693 = vadd.f32 0.0, %v4692
        %4694 = vdwg.mxu0
        %v4695 = vadd.f32 %v4617, %v4653
        %v4696 = vadd.f32 %v4618, %v4673
        %v4697 = vadd.f32 %v4619, %v4693
        %v4698 = vld [vmem:[%s1 + $0x18] sm:$0xff]
        %4699 = vrot.lane.b32.xlu0 %v4317, 108
        %v4700 = vpop.permute.xlu0 %4699
        %4701 = vrot.lane.b32.xlu0 %v4318, 108
        %v4702 = vpop.permute.xlu0 %4701
        %4703 = vrot.lane.b32.xlu0 %v4319, 108
        %v4704 = vpop.permute.xlu0 %4703
        %v4705 = vsel %vm2789, %v4700, %v4702
        %v4706 = vsel %vm2789, %v4702, %v4704
        %v4711 = vsel %vm564, %v4698, 0
        %4713 = vmatpush.msra.mxu0 0.0
        %4714 = vmatpush.msra.mxu0 0.0
        %4715 = vmatpush.msra.mxu0 0.0
        %4716 = vmatpush.msra.mxu0 0.0
        %4717 = vmatpush.msra.mxu0 0.0
        %4718 = vmatpush.msra.mxu0 0.0
        %4719 = vmatpush.msra.mxu0 0.0
        %4720 = vmatpush.msra.mxu0 0.0
        %4721 = vmatpush.msra.mxu0 0.0
        %4722 = vmatpush.msra.mxu0 0.0
        %4723 = vmatpush.msra.mxu0 0.0
        %4724 = vmatpush.msra.mxu0 0.0
        %4725 = vmatpush.msra.mxu0 0.0
        %4726 = vmatpush.msra.mxu0 0.0
        %4727 = vmatpush.msra.mxu0 0.0
        %4728 = vmatpush.msra.mxu0 %v4705
        %4729 = vmatmul.f32.gmra.mxu0 %v4711
        %v4730 = vpop.f32.mrf.mxu0
        %v4731 = vadd.f32 0.0, %v4730
        %4732 = vdwg.mxu0
        %4733 = vmatpush.msra.mxu0 0.0
        %4734 = vmatpush.msra.mxu0 0.0
        %4735 = vmatpush.msra.mxu0 0.0
        %4736 = vmatpush.msra.mxu0 0.0
        %4737 = vmatpush.msra.mxu0 0.0
        %4738 = vmatpush.msra.mxu0 0.0
        %4739 = vmatpush.msra.mxu0 0.0
        %4740 = vmatpush.msra.mxu0 0.0
        %4741 = vmatpush.msra.mxu0 0.0
        %4742 = vmatpush.msra.mxu0 0.0
        %4743 = vmatpush.msra.mxu0 0.0
        %4744 = vmatpush.msra.mxu0 0.0
        %4745 = vmatpush.msra.mxu0 0.0
        %4746 = vmatpush.msra.mxu0 0.0
        %4747 = vmatpush.msra.mxu0 0.0
        %4748 = vmatpush.msra.mxu0 %v4706
        %4749 = vmatmul.f32.gmra.mxu0 %v4711
        %v4750 = vpop.f32.mrf.mxu0
        %v4751 = vadd.f32 0.0, %v4750
        %4752 = vdwg.mxu0
        %4753 = vmatpush.msra.mxu0 0.0
        %4754 = vmatpush.msra.mxu0 0.0
        %4755 = vmatpush.msra.mxu0 0.0
        %4756 = vmatpush.msra.mxu0 0.0
        %4757 = vmatpush.msra.mxu0 0.0
        %4758 = vmatpush.msra.mxu0 0.0
        %4759 = vmatpush.msra.mxu0 0.0
        %4760 = vmatpush.msra.mxu0 0.0
        %4761 = vmatpush.msra.mxu0 0.0
        %4762 = vmatpush.msra.mxu0 0.0
        %4763 = vmatpush.msra.mxu0 0.0
        %4764 = vmatpush.msra.mxu0 0.0
        %4765 = vmatpush.msra.mxu0 0.0
        %4766 = vmatpush.msra.mxu0 0.0
        %4767 = vmatpush.msra.mxu0 0.0
        %4768 = vmatpush.msra.mxu0 %v4704
        %4769 = vmatmul.f32.gmra.mxu0 %v4711
        %v4770 = vpop.f32.mrf.mxu0
        %v4771 = vadd.f32 0.0, %v4770
        %4772 = vdwg.mxu0
        %v4773 = vadd.f32 %v4695, %v4731
        %v4774 = vadd.f32 %v4696, %v4751
        %v4775 = vadd.f32 %v4697, %v4771
        %4776 = vrot.lane.b32.xlu0 %v4698, 120
        %v4777 = vpop.permute.xlu0 %4776
        %4778 = vrot.lane.b32.xlu0 %v4317, 92
        %v4779 = vpop.permute.xlu0 %4778
        %4780 = vrot.lane.b32.xlu0 %v4318, 92
        %v4781 = vpop.permute.xlu0 %4780
        %4782 = vrot.lane.b32.xlu0 %v4319, 92
        %v4783 = vpop.permute.xlu0 %4782
        %v4784 = vsel %vm2868, %v4779, %v4781
        %v4785 = vsel %vm2868, %v4781, %v4783
        %v4789 = vsel %vm564, %v4777, 0
        %4791 = vmatpush.msra.mxu0 0.0
        %4792 = vmatpush.msra.mxu0 0.0
        %4793 = vmatpush.msra.mxu0 0.0
        %4794 = vmatpush.msra.mxu0 0.0
        %4795 = vmatpush.msra.mxu0 0.0
        %4796 = vmatpush.msra.mxu0 0.0
        %4797 = vmatpush.msra.mxu0 0.0
        %4798 = vmatpush.msra.mxu0 0.0
        %4799 = vmatpush.msra.mxu0 0.0
        %4800 = vmatpush.msra.mxu0 0.0
        %4801 = vmatpush.msra.mxu0 0.0
        %4802 = vmatpush.msra.mxu0 0.0
        %4803 = vmatpush.msra.mxu0 0.0
        %4804 = vmatpush.msra.mxu0 0.0
        %4805 = vmatpush.msra.mxu0 0.0
        %4806 = vmatpush.msra.mxu0 %v4784
        %4807 = vmatmul.f32.gmra.mxu0 %v4789
        %v4808 = vpop.f32.mrf.mxu0
        %v4809 = vadd.f32 0.0, %v4808
        %4810 = vdwg.mxu0
        %4811 = vmatpush.msra.mxu0 0.0
        %4812 = vmatpush.msra.mxu0 0.0
        %4813 = vmatpush.msra.mxu0 0.0
        %4814 = vmatpush.msra.mxu0 0.0
        %4815 = vmatpush.msra.mxu0 0.0
        %4816 = vmatpush.msra.mxu0 0.0
        %4817 = vmatpush.msra.mxu0 0.0
        %4818 = vmatpush.msra.mxu0 0.0
        %4819 = vmatpush.msra.mxu0 0.0
        %4820 = vmatpush.msra.mxu0 0.0
        %4821 = vmatpush.msra.mxu0 0.0
        %4822 = vmatpush.msra.mxu0 0.0
        %4823 = vmatpush.msra.mxu0 0.0
        %4824 = vmatpush.msra.mxu0 0.0
        %4825 = vmatpush.msra.mxu0 0.0
        %4826 = vmatpush.msra.mxu0 %v4785
        %4827 = vmatmul.f32.gmra.mxu0 %v4789
        %v4828 = vpop.f32.mrf.mxu0
        %v4829 = vadd.f32 0.0, %v4828
        %4830 = vdwg.mxu0
        %4831 = vmatpush.msra.mxu0 0.0
        %4832 = vmatpush.msra.mxu0 0.0
        %4833 = vmatpush.msra.mxu0 0.0
        %4834 = vmatpush.msra.mxu0 0.0
        %4835 = vmatpush.msra.mxu0 0.0
        %4836 = vmatpush.msra.mxu0 0.0
        %4837 = vmatpush.msra.mxu0 0.0
        %4838 = vmatpush.msra.mxu0 0.0
        %4839 = vmatpush.msra.mxu0 0.0
        %4840 = vmatpush.msra.mxu0 0.0
        %4841 = vmatpush.msra.mxu0 0.0
        %4842 = vmatpush.msra.mxu0 0.0
        %4843 = vmatpush.msra.mxu0 0.0
        %4844 = vmatpush.msra.mxu0 0.0
        %4845 = vmatpush.msra.mxu0 0.0
        %4846 = vmatpush.msra.mxu0 %v4783
        %4847 = vmatmul.f32.gmra.mxu0 %v4789
        %v4848 = vpop.f32.mrf.mxu0
        %v4849 = vadd.f32 0.0, %v4848
        %4850 = vdwg.mxu0
        %v4851 = vadd.f32 %v4773, %v4809
        %v4852 = vadd.f32 %v4774, %v4829
        %v4853 = vadd.f32 %v4775, %v4849
        %4854 = vrot.lane.b32.xlu0 %v4698, 112
        %v4855 = vpop.permute.xlu0 %4854
        %4856 = vrot.lane.b32.xlu0 %v4317, 91
        %v4857 = vpop.permute.xlu0 %4856
        %4858 = vrot.lane.b32.xlu0 %v4318, 91
        %v4859 = vpop.permute.xlu0 %4858
        %4860 = vrot.lane.b32.xlu0 %v4319, 91
        %v4861 = vpop.permute.xlu0 %4860
        %v4862 = vsel %vm2946, %v4857, %v4859
        %v4863 = vsel %vm2946, %v4859, %v4861
        %v4867 = vsel %vm564, %v4855, 0
        %4869 = vmatpush.msra.mxu0 0.0
        %4870 = vmatpush.msra.mxu0 0.0
        %4871 = vmatpush.msra.mxu0 0.0
        %4872 = vmatpush.msra.mxu0 0.0
        %4873 = vmatpush.msra.mxu0 0.0
        %4874 = vmatpush.msra.mxu0 0.0
        %4875 = vmatpush.msra.mxu0 0.0
        %4876 = vmatpush.msra.mxu0 0.0
        %4877 = vmatpush.msra.mxu0 0.0
        %4878 = vmatpush.msra.mxu0 0.0
        %4879 = vmatpush.msra.mxu0 0.0
        %4880 = vmatpush.msra.mxu0 0.0
        %4881 = vmatpush.msra.mxu0 0.0
        %4882 = vmatpush.msra.mxu0 0.0
        %4883 = vmatpush.msra.mxu0 0.0
        %4884 = vmatpush.msra.mxu0 %v4862
        %4885 = vmatmul.f32.gmra.mxu0 %v4867
        %v4886 = vpop.f32.mrf.mxu0
        %v4887 = vadd.f32 0.0, %v4886
        %4888 = vdwg.mxu0
        %4889 = vmatpush.msra.mxu0 0.0
        %4890 = vmatpush.msra.mxu0 0.0
        %4891 = vmatpush.msra.mxu0 0.0
        %4892 = vmatpush.msra.mxu0 0.0
        %4893 = vmatpush.msra.mxu0 0.0
        %4894 = vmatpush.msra.mxu0 0.0
        %4895 = vmatpush.msra.mxu0 0.0
        %4896 = vmatpush.msra.mxu0 0.0
        %4897 = vmatpush.msra.mxu0 0.0
        %4898 = vmatpush.msra.mxu0 0.0
        %4899 = vmatpush.msra.mxu0 0.0
        %4900 = vmatpush.msra.mxu0 0.0
        %4901 = vmatpush.msra.mxu0 0.0
        %4902 = vmatpush.msra.mxu0 0.0
        %4903 = vmatpush.msra.mxu0 0.0
        %4904 = vmatpush.msra.mxu0 %v4863
        %4905 = vmatmul.f32.gmra.mxu0 %v4867
        %v4906 = vpop.f32.mrf.mxu0
        %v4907 = vadd.f32 0.0, %v4906
        %4908 = vdwg.mxu0
        %4909 = vmatpush.msra.mxu0 0.0
        %4910 = vmatpush.msra.mxu0 0.0
        %4911 = vmatpush.msra.mxu0 0.0
        %4912 = vmatpush.msra.mxu0 0.0
        %4913 = vmatpush.msra.mxu0 0.0
        %4914 = vmatpush.msra.mxu0 0.0
        %4915 = vmatpush.msra.mxu0 0.0
        %4916 = vmatpush.msra.mxu0 0.0
        %4917 = vmatpush.msra.mxu0 0.0
        %4918 = vmatpush.msra.mxu0 0.0
        %4919 = vmatpush.msra.mxu0 0.0
        %4920 = vmatpush.msra.mxu0 0.0
        %4921 = vmatpush.msra.mxu0 0.0
        %4922 = vmatpush.msra.mxu0 0.0
        %4923 = vmatpush.msra.mxu0 0.0
        %4924 = vmatpush.msra.mxu0 %v4861
        %4925 = vmatmul.f32.gmra.mxu0 %v4867
        %v4926 = vpop.f32.mrf.mxu0
        %v4927 = vadd.f32 0.0, %v4926
        %4928 = vdwg.mxu0
        %v4929 = vadd.f32 %v4851, %v4887
        %v4930 = vadd.f32 %v4852, %v4907
        %v4931 = vadd.f32 %v4853, %v4927
        %4932 = vrot.lane.b32.xlu0 %v4698, 104
        %v4933 = vpop.permute.xlu0 %4932
        %4934 = vrot.lane.b32.xlu0 %v4317, 90
        %v4935 = vpop.permute.xlu0 %4934
        %4936 = vrot.lane.b32.xlu0 %v4318, 90
        %v4937 = vpop.permute.xlu0 %4936
        %4938 = vrot.lane.b32.xlu0 %v4319, 90
        %v4939 = vpop.permute.xlu0 %4938
        %v4940 = vsel %vm3026, %v4935, %v4937
        %v4941 = vsel %vm3026, %v4937, %v4939
        %v4945 = vsel %vm564, %v4933, 0
        %4947 = vmatpush.msra.mxu0 0.0
        %4948 = vmatpush.msra.mxu0 0.0
        %4949 = vmatpush.msra.mxu0 0.0
        %4950 = vmatpush.msra.mxu0 0.0
        %4951 = vmatpush.msra.mxu0 0.0
        %4952 = vmatpush.msra.mxu0 0.0
        %4953 = vmatpush.msra.mxu0 0.0
        %4954 = vmatpush.msra.mxu0 0.0
        %4955 = vmatpush.msra.mxu0 0.0
        %4956 = vmatpush.msra.mxu0 0.0
        %4957 = vmatpush.msra.mxu0 0.0
        %4958 = vmatpush.msra.mxu0 0.0
        %4959 = vmatpush.msra.mxu0 0.0
        %4960 = vmatpush.msra.mxu0 0.0
        %4961 = vmatpush.msra.mxu0 0.0
        %4962 = vmatpush.msra.mxu0 %v4940
        %4963 = vmatmul.f32.gmra.mxu0 %v4945
        %v4964 = vpop.f32.mrf.mxu0
        %v4965 = vadd.f32 0.0, %v4964
        %4966 = vdwg.mxu0
        %4967 = vmatpush.msra.mxu0 0.0
        %4968 = vmatpush.msra.mxu0 0.0
        %4969 = vmatpush.msra.mxu0 0.0
        %4970 = vmatpush.msra.mxu0 0.0
        %4971 = vmatpush.msra.mxu0 0.0
        %4972 = vmatpush.msra.mxu0 0.0
        %4973 = vmatpush.msra.mxu0 0.0
        %4974 = vmatpush.msra.mxu0 0.0
        %4975 = vmatpush.msra.mxu0 0.0
        %4976 = vmatpush.msra.mxu0 0.0
        %4977 = vmatpush.msra.mxu0 0.0
        %4978 = vmatpush.msra.mxu0 0.0
        %4979 = vmatpush.msra.mxu0 0.0
        %4980 = vmatpush.msra.mxu0 0.0
        %4981 = vmatpush.msra.mxu0 0.0
        %4982 = vmatpush.msra.mxu0 %v4941
        %4983 = vmatmul.f32.gmra.mxu0 %v4945
        %v4984 = vpop.f32.mrf.mxu0
        %v4985 = vadd.f32 0.0, %v4984
        %4986 = vdwg.mxu0
        %4987 = vmatpush.msra.mxu0 0.0
        %4988 = vmatpush.msra.mxu0 0.0
        %4989 = vmatpush.msra.mxu0 0.0
        %4990 = vmatpush.msra.mxu0 0.0
        %4991 = vmatpush.msra.mxu0 0.0
        %4992 = vmatpush.msra.mxu0 0.0
        %4993 = vmatpush.msra.mxu0 0.0
        %4994 = vmatpush.msra.mxu0 0.0
        %4995 = vmatpush.msra.mxu0 0.0
        %4996 = vmatpush.msra.mxu0 0.0
        %4997 = vmatpush.msra.mxu0 0.0
        %4998 = vmatpush.msra.mxu0 0.0
        %4999 = vmatpush.msra.mxu0 0.0
        %5000 = vmatpush.msra.mxu0 0.0
        %5001 = vmatpush.msra.mxu0 0.0
        %5002 = vmatpush.msra.mxu0 %v4939
        %5003 = vmatmul.f32.gmra.mxu0 %v4945
        %v5004 = vpop.f32.mrf.mxu0
        %v5005 = vadd.f32 0.0, %v5004
        %5006 = vdwg.mxu0
        %v5007 = vadd.f32 %v4929, %v4965
        %v5008 = vadd.f32 %v4930, %v4985
        %v5009 = vadd.f32 %v4931, %v5005
        %5010 = vset.pattern.permute.xlu0 18
        %5011 = vperm.xlu0 %5010, %v4068
        %v5012 = vpop.permute.xlu0 %5011
        %v5014 = vadd.f32 %v5007, %v5012
        %v5015 = vadd.f32 %v5008, %v5012
        %v5016 = vadd.f32 %v5009, %v5012
        %v5017 = vmul.f32 %v5014, %v3106
        %v5018 = vmul.f32 %v5015, %v3107
        %v5019 = vmul.f32 %v5016, %v3108
        %v5020 = vadd.f32 %v5017, %v3112
        %v5021 = vadd.f32 %v5018, %v3113
        %v5022 = vadd.f32 %v5019, %v3114
        %v5023 = vld [vmem:[%s2] sm:$0xff]
        %5024 = vmatpush.msra.mxu0 0.0
        %5025 = vmatpush.msra.mxu0 0.0
        %5026 = vmatpush.msra.mxu0 0.0
        %5027 = vmatpush.msra.mxu0 0.0
        %5028 = vmatpush.msra.mxu0 0.0
        %5029 = vmatpush.msra.mxu0 0.0
        %5030 = vmatpush.msra.mxu0 0.0
        %5031 = vmatpush.msra.mxu0 0.0
        %5032 = vmatpush.msra.mxu0 0.0
        %5033 = vmatpush.msra.mxu0 0.0
        %5034 = vmatpush.msra.mxu0 0.0
        %5035 = vmatpush.msra.mxu0 0.0
        %5036 = vmatpush.msra.mxu0 0.0
        %5037 = vmatpush.msra.mxu0 0.0
        %5038 = vmatpush.msra.mxu0 0.0
        %5039 = vmatpush.msra.mxu0 %v5020
        %5040 = vmatmul.f32.gmra.mxu0 %v565
        %v5041 = vpop.f32.mrf.mxu0
        %v5042 = vadd.f32 0.0, %v5041
        %5043 = vdwg.mxu0
        %5044 = vmatpush.msra.mxu0 0.0
        %5045 = vmatpush.msra.mxu0 0.0
        %5046 = vmatpush.msra.mxu0 0.0
        %5047 = vmatpush.msra.mxu0 0.0
        %5048 = vmatpush.msra.mxu0 0.0
        %5049 = vmatpush.msra.mxu0 0.0
        %5050 = vmatpush.msra.mxu0 0.0
        %5051 = vmatpush.msra.mxu0 0.0
        %5052 = vmatpush.msra.mxu0 0.0
        %5053 = vmatpush.msra.mxu0 0.0
        %5054 = vmatpush.msra.mxu0 0.0
        %5055 = vmatpush.msra.mxu0 0.0
        %5056 = vmatpush.msra.mxu0 0.0
        %5057 = vmatpush.msra.mxu0 0.0
        %5058 = vmatpush.msra.mxu0 0.0
        %5059 = vmatpush.msra.mxu0 %v5021
        %5060 = vmatmul.f32.gmra.mxu0 %v565
        %v5061 = vpop.f32.mrf.mxu0
        %v5062 = vadd.f32 0.0, %v5061
        %5063 = vdwg.mxu0
        %5064 = vmatpush.msra.mxu0 0.0
        %5065 = vmatpush.msra.mxu0 0.0
        %5066 = vmatpush.msra.mxu0 0.0
        %5067 = vmatpush.msra.mxu0 0.0
        %5068 = vmatpush.msra.mxu0 0.0
        %5069 = vmatpush.msra.mxu0 0.0
        %5070 = vmatpush.msra.mxu0 0.0
        %5071 = vmatpush.msra.mxu0 0.0
        %5072 = vmatpush.msra.mxu0 0.0
        %5073 = vmatpush.msra.mxu0 0.0
        %5074 = vmatpush.msra.mxu0 0.0
        %5075 = vmatpush.msra.mxu0 0.0
        %5076 = vmatpush.msra.mxu0 0.0
        %5077 = vmatpush.msra.mxu0 0.0
        %5078 = vmatpush.msra.mxu0 0.0
        %5079 = vmatpush.msra.mxu0 %v5022
        %5080 = vmatmul.f32.gmra.mxu0 %v565
        %v5081 = vpop.f32.mrf.mxu0
        %v5082 = vadd.f32 0.0, %v5081
        %5083 = vdwg.mxu0
        %v5084 = vmul.f32 %v5020, %v5020
        %v5085 = vmul.f32 %v5021, %v5021
        %v5086 = vmul.f32 %v5022, %v5022
        %5087 = vmatpush.msra.mxu0 0.0
        %5088 = vmatpush.msra.mxu0 0.0
        %5089 = vmatpush.msra.mxu0 0.0
        %5090 = vmatpush.msra.mxu0 0.0
        %5091 = vmatpush.msra.mxu0 0.0
        %5092 = vmatpush.msra.mxu0 0.0
        %5093 = vmatpush.msra.mxu0 0.0
        %5094 = vmatpush.msra.mxu0 0.0
        %5095 = vmatpush.msra.mxu0 0.0
        %5096 = vmatpush.msra.mxu0 0.0
        %5097 = vmatpush.msra.mxu0 0.0
        %5098 = vmatpush.msra.mxu0 0.0
        %5099 = vmatpush.msra.mxu0 0.0
        %5100 = vmatpush.msra.mxu0 0.0
        %5101 = vmatpush.msra.mxu0 0.0
        %5102 = vmatpush.msra.mxu0 %v5084
        %5103 = vmatmul.f32.gmra.mxu0 %v565
        %v5104 = vpop.f32.mrf.mxu0
        %v5105 = vadd.f32 0.0, %v5104
        %5106 = vdwg.mxu0
        %5107 = vmatpush.msra.mxu0 0.0
        %5108 = vmatpush.msra.mxu0 0.0
        %5109 = vmatpush.msra.mxu0 0.0
        %5110 = vmatpush.msra.mxu0 0.0
        %5111 = vmatpush.msra.mxu0 0.0
        %5112 = vmatpush.msra.mxu0 0.0
        %5113 = vmatpush.msra.mxu0 0.0
        %5114 = vmatpush.msra.mxu0 0.0
        %5115 = vmatpush.msra.mxu0 0.0
        %5116 = vmatpush.msra.mxu0 0.0
        %5117 = vmatpush.msra.mxu0 0.0
        %5118 = vmatpush.msra.mxu0 0.0
        %5119 = vmatpush.msra.mxu0 0.0
        %5120 = vmatpush.msra.mxu0 0.0
        %5121 = vmatpush.msra.mxu0 0.0
        %5122 = vmatpush.msra.mxu0 %v5085
        %5123 = vmatmul.f32.gmra.mxu0 %v565
        %v5124 = vpop.f32.mrf.mxu0
        %v5125 = vadd.f32 0.0, %v5124
        %5126 = vdwg.mxu0
        %5127 = vmatpush.msra.mxu0 0.0
        %5128 = vmatpush.msra.mxu0 0.0
        %5129 = vmatpush.msra.mxu0 0.0
        %5130 = vmatpush.msra.mxu0 0.0
        %5131 = vmatpush.msra.mxu0 0.0
        %5132 = vmatpush.msra.mxu0 0.0
        %5133 = vmatpush.msra.mxu0 0.0
        %5134 = vmatpush.msra.mxu0 0.0
        %5135 = vmatpush.msra.mxu0 0.0
        %5136 = vmatpush.msra.mxu0 0.0
        %5137 = vmatpush.msra.mxu0 0.0
        %5138 = vmatpush.msra.mxu0 0.0
        %5139 = vmatpush.msra.mxu0 0.0
        %5140 = vmatpush.msra.mxu0 0.0
        %5141 = vmatpush.msra.mxu0 0.0
        %5142 = vmatpush.msra.mxu0 %v5086
        %5143 = vmatmul.f32.gmra.mxu0 %v565
        %v5144 = vpop.f32.mrf.mxu0
        %v5145 = vadd.f32 0.0, %v5144
        %5146 = vdwg.mxu0
        %v5147 = vadd.f32 %v5042, %v5062
        %v5148 = vsel %vm3240, %v5082, 0.0
        %v5149 = vadd.f32 %v5147, %v5148
        %5150 = vadd.xlane.f32.xlu0 %v5149
        %v5151 = vpop.xlane.xlu0 %5150
        %v5152 = vmul.f32 %v5151, 0.001953125
        %v5153 = vadd.f32 %v5105, %v5125
        %v5154 = vsel %vm3240, %v5145, 0.0
        %v5155 = vadd.f32 %v5153, %v5154
        %5156 = vadd.xlane.f32.xlu0 %v5155
        %v5157 = vpop.xlane.xlu0 %5156
        %v5158 = vmul.f32 %v5157, 0.001953125
        %v5159 = vmul.f32 %v5152, %v5152
        %v5160 = vsub.f32 %v5158, %v5159
        %v5161 = vadd.f32 %v5160, 1e-05
        %v5162 = vrsqrt.pop %v5161
        %v5163 = vmul.f32 %v5162, %v5161
        %v5164 = vmul.f32 %v5163, %v5162
        %v5165 = vmul.f32 0.5, %v5164
        %v5166 = vsub.f32 1.5, %v5165
        %v5167 = vmul.f32 %v5162, %v5166
        %vm5168 = vweird.f32 %v5161
        %vm5169 = vweird.f32 %v5162
        %vm5170 = vmor %vm5168, %vm5169
        %v5171 = vsel %vm5170, %v5162, %v5167
        %v5172 = vsub.f32 %v5020, %v5152
        %v5173 = vsub.f32 %v5021, %v5152
        %v5174 = vsub.f32 %v5022, %v5152
        %v5175 = vmul.f32 %v5171, %v5023
        %5177 = vset.pattern.permute.xlu0 19
        %5178 = vperm.xlu0 %5177, %v5175
        %v5179 = vpop.permute.xlu0 %5178
        %v5181 = vmul.f32 %v5172, %v5179
        %v5182 = vmul.f32 %v5173, %v5179
        %v5183 = vmul.f32 %v5174, %v5179
        %5185 = vset.pattern.permute.xlu0 20
        %5186 = vperm.xlu0 %5185, %v5023
        %v5187 = vpop.permute.xlu0 %5186
        %v5189 = vadd.f32 %v5181, %v5187
        %v5190 = vadd.f32 %v5182, %v5187
        %v5191 = vadd.f32 %v5183, %v5187
        %v5192 = vxor.u32 %v5189, 2147483648
        %v5193 = vxor.u32 %v5190, 2147483648
        %v5194 = vxor.u32 %v5191, 2147483648
        %v5195 = vmul.f32 %v5192, 1.442695
        %v5196 = vpow.pop %v5195
        %v5197 = vmul.f32 %v5193, 1.442695
        %v5198 = vpow.pop %v5197
        %v5199 = vmul.f32 %v5194, 1.442695
        %v5200 = vpow.pop %v5199
        %v5201 = vadd.f32 %v5196, 1.0
        %v5202 = vadd.f32 %v5198, 1.0
        %v5203 = vadd.f32 %v5200, 1.0
        %v5204 = vrcp.pop %v5201
        %v5205 = vmul.f32 %v5201, %v5204
        %v5206 = vsub.f32 1.0, %v5205
        %v5207 = vmul.f32 %v5204, %v5206
        %v5208 = vadd.f32 %v5204, %v5207
        %vm5209 = vweird.f32 %v5201
        %vm5210 = vweird.f32 %v5204
        %vm5211 = vmor %vm5209, %vm5210
        %v5212 = vsel %vm5211, %v5204, %v5208
        %v5213 = vand.u32 2147483647, %v5201
        %vm5214 = vcmp.eq.f32.partialorder %v5213, 8.507059e+37
        %v5215 = vand.u32 %v5201, 2147483648
        %v5216 = vor.u32 1.1754944e-38, %v5215
        %v5217 = vsel %vm5214, %v5216, %v5212
        %v5218 = vmul.f32 1.0, %v5217
        %v5219 = vrcp.pop %v5202
        %v5220 = vmul.f32 %v5202, %v5219
        %v5221 = vsub.f32 1.0, %v5220
        %v5222 = vmul.f32 %v5219, %v5221
        %v5223 = vadd.f32 %v5219, %v5222
        %vm5224 = vweird.f32 %v5202
        %vm5225 = vweird.f32 %v5219
        %vm5226 = vmor %vm5224, %vm5225
        %v5227 = vsel %vm5226, %v5219, %v5223
        %v5228 = vand.u32 2147483647, %v5202
        %vm5229 = vcmp.eq.f32.partialorder %v5228, 8.507059e+37
        %v5230 = vand.u32 %v5202, 2147483648
        %v5231 = vor.u32 1.1754944e-38, %v5230
        %v5232 = vsel %vm5229, %v5231, %v5227
        %v5233 = vmul.f32 1.0, %v5232
        %v5234 = vrcp.pop %v5203
        %v5235 = vmul.f32 %v5203, %v5234
        %v5236 = vsub.f32 1.0, %v5235
        %v5237 = vmul.f32 %v5234, %v5236
        %v5238 = vadd.f32 %v5234, %v5237
        %vm5239 = vweird.f32 %v5203
        %vm5240 = vweird.f32 %v5234
        %vm5241 = vmor %vm5239, %vm5240
        %v5242 = vsel %vm5241, %v5234, %v5238
        %v5243 = vand.u32 2147483647, %v5203
        %vm5244 = vcmp.eq.f32.partialorder %v5243, 8.507059e+37
        %v5245 = vand.u32 %v5203, 2147483648
        %v5246 = vor.u32 1.1754944e-38, %v5245
        %v5247 = vsel %vm5244, %v5246, %v5242
        %v5248 = vmul.f32 1.0, %v5247
        %v5249 = vmul.f32 %v5189, %v5218
        %v5250 = vmul.f32 %v5190, %v5233
        %v5251 = vmul.f32 %v5191, %v5248
        %v5252 = vmul.f32 %v5249, %v3106
        %v5253 = vmul.f32 %v5250, %v3107
        %v5254 = vmul.f32 %v5251, %v3108
        %v5255 = vld [vmem:[%s2] sm:$0x7]
        %5259 = vrot.lane.b32.xlu0 %v5252, 19
        %v5260 = vpop.permute.xlu0 %5259
        %5261 = vrot.lane.b32.xlu0 %v5253, 19
        %v5262 = vpop.permute.xlu0 %5261
        %5263 = vrot.lane.b32.xlu0 %v5254, 19
        %v5264 = vpop.permute.xlu0 %5263
        %v5265 = vsel %vm2374, %v5260, %v5262
        %v5266 = vsel %vm2374, %v5262, %v5264
        %5270 = vst.msk [vmem:[#allocation2] sm:$0xff] %vm2391, %v5260
        %5271 = vst [vmem:[#allocation2 + $0x8] sm:$0xff] %v5265
        %5272 = vst.msk [vmem:[#allocation2 + $0x10] sm:$0xff] %vm2394, %v5266
        %v5273 = vld [vmem:[#allocation2] sm:$0xff]
        %v5274 = vld [vmem:[#allocation2 + $0x8] sm:$0xff]
        %v5275 = vld [vmem:[#allocation2 + $0x10] sm:$0xff]
        %v5276 = vld [vmem:[%s1 + $0x18] sm:$0x7]
        %5278 = vrot.lane.b32.xlu0 %v5276, 88
        %v5279 = vpop.permute.xlu0 %5278
        %5283 = vrot.lane.b32.xlu0 %v5273, 127
        %v5284 = vpop.permute.xlu0 %5283
        %5285 = vrot.lane.b32.xlu0 %v5274, 127
        %v5286 = vpop.permute.xlu0 %5285
        %5287 = vrot.lane.b32.xlu0 %v5275, 127
        %v5288 = vpop.permute.xlu0 %5287
        %v5289 = vsel %vm2412, %v5284, %v5286
        %v5290 = vsel %vm2412, %v5286, %v5288
        %v5294 = vsel %vm564, %v5279, 0
        %5296 = vmatpush.msra.mxu0 0.0
        %5297 = vmatpush.msra.mxu0 0.0
        %5298 = vmatpush.msra.mxu0 0.0
        %5299 = vmatpush.msra.mxu0 0.0
        %5300 = vmatpush.msra.mxu0 0.0
        %5301 = vmatpush.msra.mxu0 0.0
        %5302 = vmatpush.msra.mxu0 0.0
        %5303 = vmatpush.msra.mxu0 0.0
        %5304 = vmatpush.msra.mxu0 0.0
        %5305 = vmatpush.msra.mxu0 0.0
        %5306 = vmatpush.msra.mxu0 0.0
        %5307 = vmatpush.msra.mxu0 0.0
        %5308 = vmatpush.msra.mxu0 0.0
        %5309 = vmatpush.msra.mxu0 0.0
        %5310 = vmatpush.msra.mxu0 0.0
        %5311 = vmatpush.msra.mxu0 %v5289
        %5312 = vmatmul.f32.gmra.mxu0 %v5294
        %v5313 = vpop.f32.mrf.mxu0
        %v5314 = vadd.f32 0.0, %v5313
        %5315 = vdwg.mxu0
        %5316 = vmatpush.msra.mxu0 0.0
        %5317 = vmatpush.msra.mxu0 0.0
        %5318 = vmatpush.msra.mxu0 0.0
        %5319 = vmatpush.msra.mxu0 0.0
        %5320 = vmatpush.msra.mxu0 0.0
        %5321 = vmatpush.msra.mxu0 0.0
        %5322 = vmatpush.msra.mxu0 0.0
        %5323 = vmatpush.msra.mxu0 0.0
        %5324 = vmatpush.msra.mxu0 0.0
        %5325 = vmatpush.msra.mxu0 0.0
        %5326 = vmatpush.msra.mxu0 0.0
        %5327 = vmatpush.msra.mxu0 0.0
        %5328 = vmatpush.msra.mxu0 0.0
        %5329 = vmatpush.msra.mxu0 0.0
        %5330 = vmatpush.msra.mxu0 0.0
        %5331 = vmatpush.msra.mxu0 %v5290
        %5332 = vmatmul.f32.gmra.mxu0 %v5294
        %v5333 = vpop.f32.mrf.mxu0
        %v5334 = vadd.f32 0.0, %v5333
        %5335 = vdwg.mxu0
        %5336 = vmatpush.msra.mxu0 0.0
        %5337 = vmatpush.msra.mxu0 0.0
        %5338 = vmatpush.msra.mxu0 0.0
        %5339 = vmatpush.msra.mxu0 0.0
        %5340 = vmatpush.msra.mxu0 0.0
        %5341 = vmatpush.msra.mxu0 0.0
        %5342 = vmatpush.msra.mxu0 0.0
        %5343 = vmatpush.msra.mxu0 0.0
        %5344 = vmatpush.msra.mxu0 0.0
        %5345 = vmatpush.msra.mxu0 0.0
        %5346 = vmatpush.msra.mxu0 0.0
        %5347 = vmatpush.msra.mxu0 0.0
        %5348 = vmatpush.msra.mxu0 0.0
        %5349 = vmatpush.msra.mxu0 0.0
        %5350 = vmatpush.msra.mxu0 0.0
        %5351 = vmatpush.msra.mxu0 %v5288
        %5352 = vmatmul.f32.gmra.mxu0 %v5294
        %v5353 = vpop.f32.mrf.mxu0
        %v5354 = vadd.f32 0.0, %v5353
        %5355 = vdwg.mxu0
        %5356 = vrot.lane.b32.xlu0 %v5276, 96
        %v5357 = vpop.permute.xlu0 %5356
        %v5358 = vsel %vm564, %v5357, 0
        %5360 = vmatpush.msra.mxu0 0.0
        %5361 = vmatpush.msra.mxu0 0.0
        %5362 = vmatpush.msra.mxu0 0.0
        %5363 = vmatpush.msra.mxu0 0.0
        %5364 = vmatpush.msra.mxu0 0.0
        %5365 = vmatpush.msra.mxu0 0.0
        %5366 = vmatpush.msra.mxu0 0.0
        %5367 = vmatpush.msra.mxu0 0.0
        %5368 = vmatpush.msra.mxu0 0.0
        %5369 = vmatpush.msra.mxu0 0.0
        %5370 = vmatpush.msra.mxu0 0.0
        %5371 = vmatpush.msra.mxu0 0.0
        %5372 = vmatpush.msra.mxu0 0.0
        %5373 = vmatpush.msra.mxu0 0.0
        %5374 = vmatpush.msra.mxu0 0.0
        %5375 = vmatpush.msra.mxu0 %v5273
        %5376 = vmatmul.f32.gmra.mxu0 %v5358
        %v5377 = vpop.f32.mrf.mxu0
        %v5378 = vadd.f32 %v5314, %v5377
        %5379 = vdwg.mxu0
        %5380 = vmatpush.msra.mxu0 0.0
        %5381 = vmatpush.msra.mxu0 0.0
        %5382 = vmatpush.msra.mxu0 0.0
        %5383 = vmatpush.msra.mxu0 0.0
        %5384 = vmatpush.msra.mxu0 0.0
        %5385 = vmatpush.msra.mxu0 0.0
        %5386 = vmatpush.msra.mxu0 0.0
        %5387 = vmatpush.msra.mxu0 0.0
        %5388 = vmatpush.msra.mxu0 0.0
        %5389 = vmatpush.msra.mxu0 0.0
        %5390 = vmatpush.msra.mxu0 0.0
        %5391 = vmatpush.msra.mxu0 0.0
        %5392 = vmatpush.msra.mxu0 0.0
        %5393 = vmatpush.msra.mxu0 0.0
        %5394 = vmatpush.msra.mxu0 0.0
        %5395 = vmatpush.msra.mxu0 %v5274
        %5396 = vmatmul.f32.gmra.mxu0 %v5358
        %v5397 = vpop.f32.mrf.mxu0
        %v5398 = vadd.f32 %v5334, %v5397
        %5399 = vdwg.mxu0
        %5400 = vmatpush.msra.mxu0 0.0
        %5401 = vmatpush.msra.mxu0 0.0
        %5402 = vmatpush.msra.mxu0 0.0
        %5403 = vmatpush.msra.mxu0 0.0
        %5404 = vmatpush.msra.mxu0 0.0
        %5405 = vmatpush.msra.mxu0 0.0
        %5406 = vmatpush.msra.mxu0 0.0
        %5407 = vmatpush.msra.mxu0 0.0
        %5408 = vmatpush.msra.mxu0 0.0
        %5409 = vmatpush.msra.mxu0 0.0
        %5410 = vmatpush.msra.mxu0 0.0
        %5411 = vmatpush.msra.mxu0 0.0
        %5412 = vmatpush.msra.mxu0 0.0
        %5413 = vmatpush.msra.mxu0 0.0
        %5414 = vmatpush.msra.mxu0 0.0
        %5415 = vmatpush.msra.mxu0 %v5275
        %5416 = vmatmul.f32.gmra.mxu0 %v5358
        %v5417 = vpop.f32.mrf.mxu0
        %v5418 = vadd.f32 %v5354, %v5417
        %5419 = vdwg.mxu0
        %5420 = vrot.lane.b32.xlu0 %v5276, 80
        %v5421 = vpop.permute.xlu0 %5420
        %5422 = vrot.lane.b32.xlu0 %v5273, 126
        %v5423 = vpop.permute.xlu0 %5422
        %5424 = vrot.lane.b32.xlu0 %v5274, 126
        %v5425 = vpop.permute.xlu0 %5424
        %5426 = vrot.lane.b32.xlu0 %v5275, 126
        %v5427 = vpop.permute.xlu0 %5426
        %v5428 = vsel %vm2552, %v5423, %v5425
        %v5429 = vsel %vm2552, %v5425, %v5427
        %v5433 = vsel %vm564, %v5421, 0
        %5435 = vmatpush.msra.mxu0 0.0
        %5436 = vmatpush.msra.mxu0 0.0
        %5437 = vmatpush.msra.mxu0 0.0
        %5438 = vmatpush.msra.mxu0 0.0
        %5439 = vmatpush.msra.mxu0 0.0
        %5440 = vmatpush.msra.mxu0 0.0
        %5441 = vmatpush.msra.mxu0 0.0
        %5442 = vmatpush.msra.mxu0 0.0
        %5443 = vmatpush.msra.mxu0 0.0
        %5444 = vmatpush.msra.mxu0 0.0
        %5445 = vmatpush.msra.mxu0 0.0
        %5446 = vmatpush.msra.mxu0 0.0
        %5447 = vmatpush.msra.mxu0 0.0
        %5448 = vmatpush.msra.mxu0 0.0
        %5449 = vmatpush.msra.mxu0 0.0
        %5450 = vmatpush.msra.mxu0 %v5428
        %5451 = vmatmul.f32.gmra.mxu0 %v5433
        %v5452 = vpop.f32.mrf.mxu0
        %v5453 = vadd.f32 0.0, %v5452
        %5454 = vdwg.mxu0
        %5455 = vmatpush.msra.mxu0 0.0
        %5456 = vmatpush.msra.mxu0 0.0
        %5457 = vmatpush.msra.mxu0 0.0
        %5458 = vmatpush.msra.mxu0 0.0
        %5459 = vmatpush.msra.mxu0 0.0
        %5460 = vmatpush.msra.mxu0 0.0
        %5461 = vmatpush.msra.mxu0 0.0
        %5462 = vmatpush.msra.mxu0 0.0
        %5463 = vmatpush.msra.mxu0 0.0
        %5464 = vmatpush.msra.mxu0 0.0
        %5465 = vmatpush.msra.mxu0 0.0
        %5466 = vmatpush.msra.mxu0 0.0
        %5467 = vmatpush.msra.mxu0 0.0
        %5468 = vmatpush.msra.mxu0 0.0
        %5469 = vmatpush.msra.mxu0 0.0
        %5470 = vmatpush.msra.mxu0 %v5429
        %5471 = vmatmul.f32.gmra.mxu0 %v5433
        %v5472 = vpop.f32.mrf.mxu0
        %v5473 = vadd.f32 0.0, %v5472
        %5474 = vdwg.mxu0
        %5475 = vmatpush.msra.mxu0 0.0
        %5476 = vmatpush.msra.mxu0 0.0
        %5477 = vmatpush.msra.mxu0 0.0
        %5478 = vmatpush.msra.mxu0 0.0
        %5479 = vmatpush.msra.mxu0 0.0
        %5480 = vmatpush.msra.mxu0 0.0
        %5481 = vmatpush.msra.mxu0 0.0
        %5482 = vmatpush.msra.mxu0 0.0
        %5483 = vmatpush.msra.mxu0 0.0
        %5484 = vmatpush.msra.mxu0 0.0
        %5485 = vmatpush.msra.mxu0 0.0
        %5486 = vmatpush.msra.mxu0 0.0
        %5487 = vmatpush.msra.mxu0 0.0
        %5488 = vmatpush.msra.mxu0 0.0
        %5489 = vmatpush.msra.mxu0 0.0
        %5490 = vmatpush.msra.mxu0 %v5427
        %5491 = vmatmul.f32.gmra.mxu0 %v5433
        %v5492 = vpop.f32.mrf.mxu0
        %v5493 = vadd.f32 0.0, %v5492
        %5494 = vdwg.mxu0
        %v5495 = vadd.f32 %v5378, %v5453
        %v5496 = vadd.f32 %v5398, %v5473
        %v5497 = vadd.f32 %v5418, %v5493
        %5498 = vrot.lane.b32.xlu0 %v5276, 72
        %v5499 = vpop.permute.xlu0 %5498
        %5500 = vrot.lane.b32.xlu0 %v5273, 110
        %v5501 = vpop.permute.xlu0 %5500
        %5502 = vrot.lane.b32.xlu0 %v5274, 110
        %v5503 = vpop.permute.xlu0 %5502
        %5504 = vrot.lane.b32.xlu0 %v5275, 110
        %v5505 = vpop.permute.xlu0 %5504
        %v5506 = vsel %vm2631, %v5501, %v5503
        %v5507 = vsel %vm2631, %v5503, %v5505
        %v5511 = vsel %vm564, %v5499, 0
        %5513 = vmatpush.msra.mxu0 0.0
        %5514 = vmatpush.msra.mxu0 0.0
        %5515 = vmatpush.msra.mxu0 0.0
        %5516 = vmatpush.msra.mxu0 0.0
        %5517 = vmatpush.msra.mxu0 0.0
        %5518 = vmatpush.msra.mxu0 0.0
        %5519 = vmatpush.msra.mxu0 0.0
        %5520 = vmatpush.msra.mxu0 0.0
        %5521 = vmatpush.msra.mxu0 0.0
        %5522 = vmatpush.msra.mxu0 0.0
        %5523 = vmatpush.msra.mxu0 0.0
        %5524 = vmatpush.msra.mxu0 0.0
        %5525 = vmatpush.msra.mxu0 0.0
        %5526 = vmatpush.msra.mxu0 0.0
        %5527 = vmatpush.msra.mxu0 0.0
        %5528 = vmatpush.msra.mxu0 %v5506
        %5529 = vmatmul.f32.gmra.mxu0 %v5511
        %v5530 = vpop.f32.mrf.mxu0
        %v5531 = vadd.f32 0.0, %v5530
        %5532 = vdwg.mxu0
        %5533 = vmatpush.msra.mxu0 0.0
        %5534 = vmatpush.msra.mxu0 0.0
        %5535 = vmatpush.msra.mxu0 0.0
        %5536 = vmatpush.msra.mxu0 0.0
        %5537 = vmatpush.msra.mxu0 0.0
        %5538 = vmatpush.msra.mxu0 0.0
        %5539 = vmatpush.msra.mxu0 0.0
        %5540 = vmatpush.msra.mxu0 0.0
        %5541 = vmatpush.msra.mxu0 0.0
        %5542 = vmatpush.msra.mxu0 0.0
        %5543 = vmatpush.msra.mxu0 0.0
        %5544 = vmatpush.msra.mxu0 0.0
        %5545 = vmatpush.msra.mxu0 0.0
        %5546 = vmatpush.msra.mxu0 0.0
        %5547 = vmatpush.msra.mxu0 0.0
        %5548 = vmatpush.msra.mxu0 %v5507
        %5549 = vmatmul.f32.gmra.mxu0 %v5511
        %v5550 = vpop.f32.mrf.mxu0
        %v5551 = vadd.f32 0.0, %v5550
        %5552 = vdwg.mxu0
        %5553 = vmatpush.msra.mxu0 0.0
        %5554 = vmatpush.msra.mxu0 0.0
        %5555 = vmatpush.msra.mxu0 0.0
        %5556 = vmatpush.msra.mxu0 0.0
        %5557 = vmatpush.msra.mxu0 0.0
        %5558 = vmatpush.msra.mxu0 0.0
        %5559 = vmatpush.msra.mxu0 0.0
        %5560 = vmatpush.msra.mxu0 0.0
        %5561 = vmatpush.msra.mxu0 0.0
        %5562 = vmatpush.msra.mxu0 0.0
        %5563 = vmatpush.msra.mxu0 0.0
        %5564 = vmatpush.msra.mxu0 0.0
        %5565 = vmatpush.msra.mxu0 0.0
        %5566 = vmatpush.msra.mxu0 0.0
        %5567 = vmatpush.msra.mxu0 0.0
        %5568 = vmatpush.msra.mxu0 %v5505
        %5569 = vmatmul.f32.gmra.mxu0 %v5511
        %v5570 = vpop.f32.mrf.mxu0
        %v5571 = vadd.f32 0.0, %v5570
        %5572 = vdwg.mxu0
        %v5573 = vadd.f32 %v5495, %v5531
        %v5574 = vadd.f32 %v5496, %v5551
        %v5575 = vadd.f32 %v5497, %v5571
        %5576 = vrot.lane.b32.xlu0 %v5276, 64
        %v5577 = vpop.permute.xlu0 %5576
        %5578 = vrot.lane.b32.xlu0 %v5273, 109
        %v5579 = vpop.permute.xlu0 %5578
        %5580 = vrot.lane.b32.xlu0 %v5274, 109
        %v5581 = vpop.permute.xlu0 %5580
        %5582 = vrot.lane.b32.xlu0 %v5275, 109
        %v5583 = vpop.permute.xlu0 %5582
        %v5584 = vsel %vm2710, %v5579, %v5581
        %v5585 = vsel %vm2710, %v5581, %v5583
        %v5589 = vsel %vm564, %v5577, 0
        %5591 = vmatpush.msra.mxu0 0.0
        %5592 = vmatpush.msra.mxu0 0.0
        %5593 = vmatpush.msra.mxu0 0.0
        %5594 = vmatpush.msra.mxu0 0.0
        %5595 = vmatpush.msra.mxu0 0.0
        %5596 = vmatpush.msra.mxu0 0.0
        %5597 = vmatpush.msra.mxu0 0.0
        %5598 = vmatpush.msra.mxu0 0.0
        %5599 = vmatpush.msra.mxu0 0.0
        %5600 = vmatpush.msra.mxu0 0.0
        %5601 = vmatpush.msra.mxu0 0.0
        %5602 = vmatpush.msra.mxu0 0.0
        %5603 = vmatpush.msra.mxu0 0.0
        %5604 = vmatpush.msra.mxu0 0.0
        %5605 = vmatpush.msra.mxu0 0.0
        %5606 = vmatpush.msra.mxu0 %v5584
        %5607 = vmatmul.f32.gmra.mxu0 %v5589
        %v5608 = vpop.f32.mrf.mxu0
        %v5609 = vadd.f32 0.0, %v5608
        %5610 = vdwg.mxu0
        %5611 = vmatpush.msra.mxu0 0.0
        %5612 = vmatpush.msra.mxu0 0.0
        %5613 = vmatpush.msra.mxu0 0.0
        %5614 = vmatpush.msra.mxu0 0.0
        %5615 = vmatpush.msra.mxu0 0.0
        %5616 = vmatpush.msra.mxu0 0.0
        %5617 = vmatpush.msra.mxu0 0.0
        %5618 = vmatpush.msra.mxu0 0.0
        %5619 = vmatpush.msra.mxu0 0.0
        %5620 = vmatpush.msra.mxu0 0.0
        %5621 = vmatpush.msra.mxu0 0.0
        %5622 = vmatpush.msra.mxu0 0.0
        %5623 = vmatpush.msra.mxu0 0.0
        %5624 = vmatpush.msra.mxu0 0.0
        %5625 = vmatpush.msra.mxu0 0.0
        %5626 = vmatpush.msra.mxu0 %v5585
        %5627 = vmatmul.f32.gmra.mxu0 %v5589
        %v5628 = vpop.f32.mrf.mxu0
        %v5629 = vadd.f32 0.0, %v5628
        %5630 = vdwg.mxu0
        %5631 = vmatpush.msra.mxu0 0.0
        %5632 = vmatpush.msra.mxu0 0.0
        %5633 = vmatpush.msra.mxu0 0.0
        %5634 = vmatpush.msra.mxu0 0.0
        %5635 = vmatpush.msra.mxu0 0.0
        %5636 = vmatpush.msra.mxu0 0.0
        %5637 = vmatpush.msra.mxu0 0.0
        %5638 = vmatpush.msra.mxu0 0.0
        %5639 = vmatpush.msra.mxu0 0.0
        %5640 = vmatpush.msra.mxu0 0.0
        %5641 = vmatpush.msra.mxu0 0.0
        %5642 = vmatpush.msra.mxu0 0.0
        %5643 = vmatpush.msra.mxu0 0.0
        %5644 = vmatpush.msra.mxu0 0.0
        %5645 = vmatpush.msra.mxu0 0.0
        %5646 = vmatpush.msra.mxu0 %v5583
        %5647 = vmatmul.f32.gmra.mxu0 %v5589
        %v5648 = vpop.f32.mrf.mxu0
        %v5649 = vadd.f32 0.0, %v5648
        %5650 = vdwg.mxu0
        %v5651 = vadd.f32 %v5573, %v5609
        %v5652 = vadd.f32 %v5574, %v5629
        %v5653 = vadd.f32 %v5575, %v5649
        %5654 = vrot.lane.b32.xlu0 %v5276, 56
        %v5655 = vpop.permute.xlu0 %5654
        %5656 = vrot.lane.b32.xlu0 %v5273, 108
        %v5657 = vpop.permute.xlu0 %5656
        %5658 = vrot.lane.b32.xlu0 %v5274, 108
        %v5659 = vpop.permute.xlu0 %5658
        %5660 = vrot.lane.b32.xlu0 %v5275, 108
        %v5661 = vpop.permute.xlu0 %5660
        %v5662 = vsel %vm2789, %v5657, %v5659
        %v5663 = vsel %vm2789, %v5659, %v5661
        %v5667 = vsel %vm564, %v5655, 0
        %5669 = vmatpush.msra.mxu0 0.0
        %5670 = vmatpush.msra.mxu0 0.0
        %5671 = vmatpush.msra.mxu0 0.0
        %5672 = vmatpush.msra.mxu0 0.0
        %5673 = vmatpush.msra.mxu0 0.0
        %5674 = vmatpush.msra.mxu0 0.0
        %5675 = vmatpush.msra.mxu0 0.0
        %5676 = vmatpush.msra.mxu0 0.0
        %5677 = vmatpush.msra.mxu0 0.0
        %5678 = vmatpush.msra.mxu0 0.0
        %5679 = vmatpush.msra.mxu0 0.0
        %5680 = vmatpush.msra.mxu0 0.0
        %5681 = vmatpush.msra.mxu0 0.0
        %5682 = vmatpush.msra.mxu0 0.0
        %5683 = vmatpush.msra.mxu0 0.0
        %5684 = vmatpush.msra.mxu0 %v5662
        %5685 = vmatmul.f32.gmra.mxu0 %v5667
        %v5686 = vpop.f32.mrf.mxu0
        %v5687 = vadd.f32 0.0, %v5686
        %5688 = vdwg.mxu0
        %5689 = vmatpush.msra.mxu0 0.0
        %5690 = vmatpush.msra.mxu0 0.0
        %5691 = vmatpush.msra.mxu0 0.0
        %5692 = vmatpush.msra.mxu0 0.0
        %5693 = vmatpush.msra.mxu0 0.0
        %5694 = vmatpush.msra.mxu0 0.0
        %5695 = vmatpush.msra.mxu0 0.0
        %5696 = vmatpush.msra.mxu0 0.0
        %5697 = vmatpush.msra.mxu0 0.0
        %5698 = vmatpush.msra.mxu0 0.0
        %5699 = vmatpush.msra.mxu0 0.0
        %5700 = vmatpush.msra.mxu0 0.0
        %5701 = vmatpush.msra.mxu0 0.0
        %5702 = vmatpush.msra.mxu0 0.0
        %5703 = vmatpush.msra.mxu0 0.0
        %5704 = vmatpush.msra.mxu0 %v5663
        %5705 = vmatmul.f32.gmra.mxu0 %v5667
        %v5706 = vpop.f32.mrf.mxu0
        %v5707 = vadd.f32 0.0, %v5706
        %5708 = vdwg.mxu0
        %5709 = vmatpush.msra.mxu0 0.0
        %5710 = vmatpush.msra.mxu0 0.0
        %5711 = vmatpush.msra.mxu0 0.0
        %5712 = vmatpush.msra.mxu0 0.0
        %5713 = vmatpush.msra.mxu0 0.0
        %5714 = vmatpush.msra.mxu0 0.0
        %5715 = vmatpush.msra.mxu0 0.0
        %5716 = vmatpush.msra.mxu0 0.0
        %5717 = vmatpush.msra.mxu0 0.0
        %5718 = vmatpush.msra.mxu0 0.0
        %5719 = vmatpush.msra.mxu0 0.0
        %5720 = vmatpush.msra.mxu0 0.0
        %5721 = vmatpush.msra.mxu0 0.0
        %5722 = vmatpush.msra.mxu0 0.0
        %5723 = vmatpush.msra.mxu0 0.0
        %5724 = vmatpush.msra.mxu0 %v5661
        %5725 = vmatmul.f32.gmra.mxu0 %v5667
        %v5726 = vpop.f32.mrf.mxu0
        %v5727 = vadd.f32 0.0, %v5726
        %5728 = vdwg.mxu0
        %v5729 = vadd.f32 %v5651, %v5687
        %v5730 = vadd.f32 %v5652, %v5707
        %v5731 = vadd.f32 %v5653, %v5727
        %5732 = vrot.lane.b32.xlu0 %v5276, 48
        %v5733 = vpop.permute.xlu0 %5732
        %5734 = vrot.lane.b32.xlu0 %v5273, 92
        %v5735 = vpop.permute.xlu0 %5734
        %5736 = vrot.lane.b32.xlu0 %v5274, 92
        %v5737 = vpop.permute.xlu0 %5736
        %5738 = vrot.lane.b32.xlu0 %v5275, 92
        %v5739 = vpop.permute.xlu0 %5738
        %v5740 = vsel %vm2868, %v5735, %v5737
        %v5741 = vsel %vm2868, %v5737, %v5739
        %v5745 = vsel %vm564, %v5733, 0
        %5747 = vmatpush.msra.mxu0 0.0
        %5748 = vmatpush.msra.mxu0 0.0
        %5749 = vmatpush.msra.mxu0 0.0
        %5750 = vmatpush.msra.mxu0 0.0
        %5751 = vmatpush.msra.mxu0 0.0
        %5752 = vmatpush.msra.mxu0 0.0
        %5753 = vmatpush.msra.mxu0 0.0
        %5754 = vmatpush.msra.mxu0 0.0
        %5755 = vmatpush.msra.mxu0 0.0
        %5756 = vmatpush.msra.mxu0 0.0
        %5757 = vmatpush.msra.mxu0 0.0
        %5758 = vmatpush.msra.mxu0 0.0
        %5759 = vmatpush.msra.mxu0 0.0
        %5760 = vmatpush.msra.mxu0 0.0
        %5761 = vmatpush.msra.mxu0 0.0
        %5762 = vmatpush.msra.mxu0 %v5740
        %5763 = vmatmul.f32.gmra.mxu0 %v5745
        %v5764 = vpop.f32.mrf.mxu0
        %v5765 = vadd.f32 0.0, %v5764
        %5766 = vdwg.mxu0
        %5767 = vmatpush.msra.mxu0 0.0
        %5768 = vmatpush.msra.mxu0 0.0
        %5769 = vmatpush.msra.mxu0 0.0
        %5770 = vmatpush.msra.mxu0 0.0
        %5771 = vmatpush.msra.mxu0 0.0
        %5772 = vmatpush.msra.mxu0 0.0
        %5773 = vmatpush.msra.mxu0 0.0
        %5774 = vmatpush.msra.mxu0 0.0
        %5775 = vmatpush.msra.mxu0 0.0
        %5776 = vmatpush.msra.mxu0 0.0
        %5777 = vmatpush.msra.mxu0 0.0
        %5778 = vmatpush.msra.mxu0 0.0
        %5779 = vmatpush.msra.mxu0 0.0
        %5780 = vmatpush.msra.mxu0 0.0
        %5781 = vmatpush.msra.mxu0 0.0
        %5782 = vmatpush.msra.mxu0 %v5741
        %5783 = vmatmul.f32.gmra.mxu0 %v5745
        %v5784 = vpop.f32.mrf.mxu0
        %v5785 = vadd.f32 0.0, %v5784
        %5786 = vdwg.mxu0
        %5787 = vmatpush.msra.mxu0 0.0
        %5788 = vmatpush.msra.mxu0 0.0
        %5789 = vmatpush.msra.mxu0 0.0
        %5790 = vmatpush.msra.mxu0 0.0
        %5791 = vmatpush.msra.mxu0 0.0
        %5792 = vmatpush.msra.mxu0 0.0
        %5793 = vmatpush.msra.mxu0 0.0
        %5794 = vmatpush.msra.mxu0 0.0
        %5795 = vmatpush.msra.mxu0 0.0
        %5796 = vmatpush.msra.mxu0 0.0
        %5797 = vmatpush.msra.mxu0 0.0
        %5798 = vmatpush.msra.mxu0 0.0
        %5799 = vmatpush.msra.mxu0 0.0
        %5800 = vmatpush.msra.mxu0 0.0
        %5801 = vmatpush.msra.mxu0 0.0
        %5802 = vmatpush.msra.mxu0 %v5739
        %5803 = vmatmul.f32.gmra.mxu0 %v5745
        %v5804 = vpop.f32.mrf.mxu0
        %v5805 = vadd.f32 0.0, %v5804
        %5806 = vdwg.mxu0
        %v5807 = vadd.f32 %v5729, %v5765
        %v5808 = vadd.f32 %v5730, %v5785
        %v5809 = vadd.f32 %v5731, %v5805
        %5810 = vrot.lane.b32.xlu0 %v5276, 40
        %v5811 = vpop.permute.xlu0 %5810
        %5812 = vrot.lane.b32.xlu0 %v5273, 91
        %v5813 = vpop.permute.xlu0 %5812
        %5814 = vrot.lane.b32.xlu0 %v5274, 91
        %v5815 = vpop.permute.xlu0 %5814
        %5816 = vrot.lane.b32.xlu0 %v5275, 91
        %v5817 = vpop.permute.xlu0 %5816
        %v5818 = vsel %vm2946, %v5813, %v5815
        %v5819 = vsel %vm2946, %v5815, %v5817
        %v5823 = vsel %vm564, %v5811, 0
        %5825 = vmatpush.msra.mxu0 0.0
        %5826 = vmatpush.msra.mxu0 0.0
        %5827 = vmatpush.msra.mxu0 0.0
        %5828 = vmatpush.msra.mxu0 0.0
        %5829 = vmatpush.msra.mxu0 0.0
        %5830 = vmatpush.msra.mxu0 0.0
        %5831 = vmatpush.msra.mxu0 0.0
        %5832 = vmatpush.msra.mxu0 0.0
        %5833 = vmatpush.msra.mxu0 0.0
        %5834 = vmatpush.msra.mxu0 0.0
        %5835 = vmatpush.msra.mxu0 0.0
        %5836 = vmatpush.msra.mxu0 0.0
        %5837 = vmatpush.msra.mxu0 0.0
        %5838 = vmatpush.msra.mxu0 0.0
        %5839 = vmatpush.msra.mxu0 0.0
        %5840 = vmatpush.msra.mxu0 %v5818
        %5841 = vmatmul.f32.gmra.mxu0 %v5823
        %v5842 = vpop.f32.mrf.mxu0
        %v5843 = vadd.f32 0.0, %v5842
        %5844 = vdwg.mxu0
        %5845 = vmatpush.msra.mxu0 0.0
        %5846 = vmatpush.msra.mxu0 0.0
        %5847 = vmatpush.msra.mxu0 0.0
        %5848 = vmatpush.msra.mxu0 0.0
        %5849 = vmatpush.msra.mxu0 0.0
        %5850 = vmatpush.msra.mxu0 0.0
        %5851 = vmatpush.msra.mxu0 0.0
        %5852 = vmatpush.msra.mxu0 0.0
        %5853 = vmatpush.msra.mxu0 0.0
        %5854 = vmatpush.msra.mxu0 0.0
        %5855 = vmatpush.msra.mxu0 0.0
        %5856 = vmatpush.msra.mxu0 0.0
        %5857 = vmatpush.msra.mxu0 0.0
        %5858 = vmatpush.msra.mxu0 0.0
        %5859 = vmatpush.msra.mxu0 0.0
        %5860 = vmatpush.msra.mxu0 %v5819
        %5861 = vmatmul.f32.gmra.mxu0 %v5823
        %v5862 = vpop.f32.mrf.mxu0
        %v5863 = vadd.f32 0.0, %v5862
        %5864 = vdwg.mxu0
        %5865 = vmatpush.msra.mxu0 0.0
        %5866 = vmatpush.msra.mxu0 0.0
        %5867 = vmatpush.msra.mxu0 0.0
        %5868 = vmatpush.msra.mxu0 0.0
        %5869 = vmatpush.msra.mxu0 0.0
        %5870 = vmatpush.msra.mxu0 0.0
        %5871 = vmatpush.msra.mxu0 0.0
        %5872 = vmatpush.msra.mxu0 0.0
        %5873 = vmatpush.msra.mxu0 0.0
        %5874 = vmatpush.msra.mxu0 0.0
        %5875 = vmatpush.msra.mxu0 0.0
        %5876 = vmatpush.msra.mxu0 0.0
        %5877 = vmatpush.msra.mxu0 0.0
        %5878 = vmatpush.msra.mxu0 0.0
        %5879 = vmatpush.msra.mxu0 0.0
        %5880 = vmatpush.msra.mxu0 %v5817
        %5881 = vmatmul.f32.gmra.mxu0 %v5823
        %v5882 = vpop.f32.mrf.mxu0
        %v5883 = vadd.f32 0.0, %v5882
        %5884 = vdwg.mxu0
        %v5885 = vadd.f32 %v5807, %v5843
        %v5886 = vadd.f32 %v5808, %v5863
        %v5887 = vadd.f32 %v5809, %v5883
        %5888 = vrot.lane.b32.xlu0 %v5276, 32
        %v5889 = vpop.permute.xlu0 %5888
        %5890 = vrot.lane.b32.xlu0 %v5273, 90
        %v5891 = vpop.permute.xlu0 %5890
        %5892 = vrot.lane.b32.xlu0 %v5274, 90
        %v5893 = vpop.permute.xlu0 %5892
        %5894 = vrot.lane.b32.xlu0 %v5275, 90
        %v5895 = vpop.permute.xlu0 %5894
        %v5896 = vsel %vm3026, %v5891, %v5893
        %v5897 = vsel %vm3026, %v5893, %v5895
        %v5901 = vsel %vm564, %v5889, 0
        %5903 = vmatpush.msra.mxu0 0.0
        %5904 = vmatpush.msra.mxu0 0.0
        %5905 = vmatpush.msra.mxu0 0.0
        %5906 = vmatpush.msra.mxu0 0.0
        %5907 = vmatpush.msra.mxu0 0.0
        %5908 = vmatpush.msra.mxu0 0.0
        %5909 = vmatpush.msra.mxu0 0.0
        %5910 = vmatpush.msra.mxu0 0.0
        %5911 = vmatpush.msra.mxu0 0.0
        %5912 = vmatpush.msra.mxu0 0.0
        %5913 = vmatpush.msra.mxu0 0.0
        %5914 = vmatpush.msra.mxu0 0.0
        %5915 = vmatpush.msra.mxu0 0.0
        %5916 = vmatpush.msra.mxu0 0.0
        %5917 = vmatpush.msra.mxu0 0.0
        %5918 = vmatpush.msra.mxu0 %v5896
        %5919 = vmatmul.f32.gmra.mxu0 %v5901
        %v5920 = vpop.f32.mrf.mxu0
        %v5921 = vadd.f32 0.0, %v5920
        %5922 = vdwg.mxu0
        %5923 = vmatpush.msra.mxu0 0.0
        %5924 = vmatpush.msra.mxu0 0.0
        %5925 = vmatpush.msra.mxu0 0.0
        %5926 = vmatpush.msra.mxu0 0.0
        %5927 = vmatpush.msra.mxu0 0.0
        %5928 = vmatpush.msra.mxu0 0.0
        %5929 = vmatpush.msra.mxu0 0.0
        %5930 = vmatpush.msra.mxu0 0.0
        %5931 = vmatpush.msra.mxu0 0.0
        %5932 = vmatpush.msra.mxu0 0.0
        %5933 = vmatpush.msra.mxu0 0.0
        %5934 = vmatpush.msra.mxu0 0.0
        %5935 = vmatpush.msra.mxu0 0.0
        %5936 = vmatpush.msra.mxu0 0.0
        %5937 = vmatpush.msra.mxu0 0.0
        %5938 = vmatpush.msra.mxu0 %v5897
        %5939 = vmatmul.f32.gmra.mxu0 %v5901
        %v5940 = vpop.f32.mrf.mxu0
        %v5941 = vadd.f32 0.0, %v5940
        %5942 = vdwg.mxu0
        %5943 = vmatpush.msra.mxu0 0.0
        %5944 = vmatpush.msra.mxu0 0.0
        %5945 = vmatpush.msra.mxu0 0.0
        %5946 = vmatpush.msra.mxu0 0.0
        %5947 = vmatpush.msra.mxu0 0.0
        %5948 = vmatpush.msra.mxu0 0.0
        %5949 = vmatpush.msra.mxu0 0.0
        %5950 = vmatpush.msra.mxu0 0.0
        %5951 = vmatpush.msra.mxu0 0.0
        %5952 = vmatpush.msra.mxu0 0.0
        %5953 = vmatpush.msra.mxu0 0.0
        %5954 = vmatpush.msra.mxu0 0.0
        %5955 = vmatpush.msra.mxu0 0.0
        %5956 = vmatpush.msra.mxu0 0.0
        %5957 = vmatpush.msra.mxu0 0.0
        %5958 = vmatpush.msra.mxu0 %v5895
        %5959 = vmatmul.f32.gmra.mxu0 %v5901
        %v5960 = vpop.f32.mrf.mxu0
        %v5961 = vadd.f32 0.0, %v5960
        %5962 = vdwg.mxu0
        %v5963 = vadd.f32 %v5885, %v5921
        %v5964 = vadd.f32 %v5886, %v5941
        %v5965 = vadd.f32 %v5887, %v5961
        %5967 = vset.pattern.permute.xlu0 21
        %5968 = vperm.xlu0 %5967, %v5255
        %v5969 = vpop.permute.xlu0 %5968
        %v5971 = vadd.f32 %v5963, %v5969
        %v5972 = vadd.f32 %v5964, %v5969
        %v5973 = vadd.f32 %v5965, %v5969
        %v5974 = vmul.f32 %v5971, %v3106
        %v5975 = vmul.f32 %v5972, %v3107
        %v5976 = vmul.f32 %v5973, %v3108
        %v5979 = vrot.slane %v5975, 4
        %v5980 = vsel %vm259, %v5974, %v5979
        %5982 = vst [vmem:[%s238] sm:$0x77] %v5980
        %vm5983 = vcmask 256000
        %5984 = vst.msk [vmem:[%s238 + $0x8] sm:$0x7] %vm5983, %v5976
        %p5985 = scmp.lt.s32.totalorder %s17, 1
        %s5986 = scalar_select %p5985, %s17, 1
        %s5987 = smul.addr %s5986, 3
        %s5988 = smul.addr %s5987, 4
        %s5989 = scalar_lea.vmem %s5, %s5988
        // Predicated region
        $region45: #{va_decoder_forward.1} parent=39 // pred_check
          %p5990 = pneg %p145
        $region46: #{va_decoder_forward.1} parent=39 // pred_check_branch
          %5992 = sbr.rel (%p5990) target = $region48
        $region47: #{va_decoder_forward.1} parent=39 // pred_region
          _
        $region48: #{va_decoder_forward.1} parent=39 // pred_fallthru
          _
      $region40: #{va_decoder_forward.1} parent=5 // pred_fallthru
        _
      %p5993 = scmp.le.s32.totalorder 2, %s12
      // Predicated region
      $region49: #{va_decoder_forward.1} parent=5 // pred_check
        %p5994 = pneg %p5993
      $region50: #{va_decoder_forward.1} parent=5 // pred_check_branch
        %5996 = sbr.rel (%p5994) target = $region52
      $region51: #{va_decoder_forward.1} parent=5 // pred_region
        %s5997 = ssub.s32 %s12, 2
        // Predicated region
        $region53: #{va_decoder_forward.1} parent=51 // pred_check
          %p5998 = pneg %p151
        $region54: #{va_decoder_forward.1} parent=51 // pred_check_branch
          %6000 = sbr.rel (%p5998) target = $region56
        $region55: #{va_decoder_forward.1} parent=51 // pred_region
          %p6001 = scmp.lt.s32.totalorder %s18, 1
          %s6002 = scalar_select %p6001, %s18, 1
          %s6003 = smul.addr %s6002, 3
          %s6004 = smul.addr %s6003, 4
          %s6005 = scalar_lea.vmem %s5, %s6004
        $region56: #{va_decoder_forward.1} parent=51 // pred_fallthru
          _
      $region52: #{va_decoder_forward.1} parent=5 // pred_fallthru
        _
    $region6: #{va_decoder_forward.1} parent=1 // loop_footer
      %s16 = sadd.s32 1, %s12
    $region7: #{va_decoder_forward.1} parent=1 // loop_footer_branch
      %11 = sbr.rel target = $region3
    $region8: #{va_decoder_forward.1} parent=1 // loop_exit
      _
    %6006 = vsyncpa [#allocation4], 1
    %s6007 = scalar_lea.sflag [#allocation4], 1
    %6008 = vsyncpa %s6007, 1

</llo_original>
